<compile_context>
chip_gen: v6e
topology: v6e:2x2x1
jax: 0.10.0
libtpu: 0.0.40
codegen_flags: <defaults>
</compile_context>

<pallas_src>
import jax
import jax.numpy as jnp
from jax.experimental import pallas as pl
from jax.experimental.pallas import tpu as pltpu


# ----------------------------------------------------------------------------
# Fused kernel: out = (relu(relu(relu(relu(x@W1+b1)@W2+b2)@W3+b3)@W4+b4))@W5+b5
# All weights/biases are VMEM-resident full blocks; activations live in
# vregs/VMEM between layers.  Accumulation is always f32.
# ----------------------------------------------------------------------------
def _mlp_fused_kernel(x_ref, w1_ref, b1_ref, w2_ref, b2_ref, w3_ref, b3_ref,
                      w4_ref, b4_ref, w5_ref, b5_ref, o_ref):
    def dense(h, w_ref, b_ref, relu=True):
        # Cast the activation to the weight dtype: f32 path is a no-op, bf16
        # path becomes a single-pass bf16 x bf16 MXU matmul with f32 accumulate.
        y = jnp.dot(h.astype(w_ref.dtype), w_ref[...],
                    preferred_element_type=jnp.float32) + b_ref[...]
        return jnp.maximum(y, 0.0) if relu else y

    h = dense(x_ref[...], w1_ref, b1_ref)
    h = dense(h, w2_ref, b2_ref)
    h = dense(h, w3_ref, b3_ref)
    h = dense(h, w4_ref, b4_ref)
    o_ref[...] = dense(h, w5_ref, b5_ref, relu=False).astype(o_ref.dtype)


def _const_spec(shape):
    """Full-array block with a constant index_map (resident across the grid).
    Single-buffered when the installed jax supports pipeline_mode."""
    idx = lambda i: (0, 0)
    if hasattr(pl, "Buffered"):
        try:
            return pl.BlockSpec(shape, idx, pipeline_mode=pl.Buffered(buffer_count=1))
        except TypeError:  # older jax without pipeline_mode kwarg
            pass
    return pl.BlockSpec(shape, idx)


def mlp_fused_pallas(x, params, *, tm):
    """Fused 5-layer MLP.  x: (M, 3072) f32 (M % tm == 0).
    params: [(w1,b1),...,(w5p,b5p)] with biases shaped (1, N) and the head
    zero-padded to 128 output columns.  Returns (M, 128) f32."""
    M, K = x.shape
    assert M % tm == 0
    n_out = params[-1][0].shape[1]

    args = [x]
    in_specs = [pl.BlockSpec((tm, K), lambda i: (i, 0))]
    for (w, b) in params:
        kin, nout = w.shape
        args += [w, b]
        in_specs += [_const_spec((kin, nout)), _const_spec((1, nout))]

    return pl.pallas_call(
        _mlp_fused_kernel,
        out_shape=jax.ShapeDtypeStruct((M, n_out), jnp.float32),
        grid_spec=pltpu.PrefetchScalarGridSpec(
            num_scalar_prefetch=0,
            grid=(M // tm,),
            in_specs=in_specs,
            out_specs=pl.BlockSpec((tm, n_out), lambda i: (i, 0)),
        ),
        compiler_params=pltpu.CompilerParams(
            dimension_semantics=("parallel",),      # M tiles shard across TCs (v7x)
            vmem_limit_bytes=48 * 1024 * 1024,
        ),
    )(*args)


# ----------------------------------------------------------------------------
# Parameters, one-time preparation, and forward pass
# ----------------------------------------------------------------------------
def _round_up(x, m):
    return ((x + m - 1) // m) * m


def init_params(key, input_dim=32 * 32 * 3):
    """Synthetic params matching nn.Linear init, stored as (in, out) so the
    kernels compute x @ W."""
    dims = [input_dim, 1024, 512, 256, 128, 10]
    params = []
    for i in range(5):
        key, kw, kb = jax.random.split(key, 3)
        fan_in, fan_out = dims[i], dims[i + 1]
        bound = 1.0 / jnp.sqrt(fan_in)
        w = jax.random.uniform(kw, (fan_in, fan_out), jnp.float32,
                               minval=-bound, maxval=bound)
        b = jax.random.uniform(kb, (fan_out,), jnp.float32,
                               minval=-bound, maxval=bound)
        params.append((w, b))
    return params


def prepare_params(params, weights_dtype=None):
    """One-time preparation (call once, outside the forward):
      * zero-pad the 128->10 head to 128 output columns (lane-dense stores);
      * reshape biases to (1, N);
      * optionally cast weights to `weights_dtype` (e.g. bf16 streaming).
    Biases and accumulation always stay f32."""
    prepped = []
    for i, (w, b) in enumerate(params):
        if i == len(params) - 1:
            pad = _round_up(w.shape[1], 128) - w.shape[1]
            w = jnp.pad(w, ((0, 0), (0, pad)))
            b = jnp.pad(b, (0, pad))
        if weights_dtype is not None:
            w = w.astype(weights_dtype)
        prepped.append((w, b.reshape(1, -1).astype(jnp.float32)))
    return prepped


def mlp_advanced_forward(x_nchw, prepped_params, num_classes=10):
    """Forward pass of MLP_Advanced.  x_nchw: (B, 3, 32, 32) float32.
    `prepped_params` must come from prepare_params()."""
    B = x_nchw.shape[0]
    x = x_nchw.reshape(B, -1).astype(jnp.float32)      # == x.view(x.size(0), -1)

    # Batch padding / tile selection (padded rows sliced off at the end).
    if B <= 256:
        M = max(_round_up(B, 8), 8)
        tm = M
    elif B < 512:
        M = _round_up(B, 128)
        tm = 128
    else:
        M = _round_up(B, 256)
        tm = 256
    if M != B:
        x = jnp.pad(x, ((0, M - B), (0, 0)))

    out = mlp_fused_pallas(x, prepped_params, tm=tm)
    return out[:B, :num_classes]


if __name__ == "__main__":
    key = jax.random.PRNGKey(0)
    kx, kp, kx2 = jax.random.split(key, 3)

    # Small, module-consistent input: batch=2, CIFAR-like NCHW images.
    x = jax.random.normal(kx, (2, 3, 32, 32), jnp.float32)
    params = init_params(kp)

    def ref_forward(x_nchw, ps, compute_dtype=jnp.float32):
        r = x_nchw.reshape(x_nchw.shape[0], -1).astype(jnp.float32)
        for i, (w, b) in enumerate(ps):
            r = jnp.dot(r.astype(compute_dtype), w.astype(compute_dtype),
                        preferred_element_type=jnp.float32) + b
            if i < len(ps) - 1:
                r = jnp.maximum(r, 0.0)
        return r

    # --- f32 weights, tiny batch (single M tile) ---
    prepped_f32 = prepare_params(params)
    out = jax.block_until_ready(mlp_advanced_forward(x, prepped_f32))
    assert out.shape == (2, 10), out.shape
    ref = ref_forward(x, params)
    assert jnp.allclose(out, ref, atol=2e-4, rtol=2e-4)

    # --- bf16 weight streaming (cast once at prepare time; bf16 x bf16 MXU,
    #     f32 accumulate) ---
    prepped_bf16 = prepare_params(params, weights_dtype=jnp.bfloat16)
    out_bf16 = jax.block_until_ready(mlp_advanced_forward(x, prepped_bf16))
    ref_bf16 = ref_forward(x, params, compute_dtype=jnp.bfloat16)
    assert out_bf16.shape == (2, 10)
    assert jnp.allclose(out_bf16, ref_bf16, atol=5e-3, rtol=5e-3)

    # --- f32 weights, multi-tile batch (exercises the M grid + row padding) ---
    x_big = jax.random.normal(kx2, (320, 3, 32, 32), jnp.float32)
    out_big = jax.block_until_ready(mlp_advanced_forward(x_big, prepped_f32))
    assert out_big.shape == (320, 10)
    ref_big = ref_forward(x_big, params)
    assert jnp.allclose(out_big, ref_big, atol=2e-4, rtol=2e-4)

    print("KERNEL_OK")
</pallas_src>

<mosaic_0001>
module attributes {stable_mosaic.version = 11 : i64} {
  func.func @_mlp_fused_kernel(%arg0: i32, %arg1: memref<8x3072xf32, #tpu.memory_space<vmem>>, %arg2: memref<3072x1024xf32, #tpu.memory_space<vmem>>, %arg3: memref<1x1024xf32, #tpu.memory_space<vmem>>, %arg4: memref<1024x512xf32, #tpu.memory_space<vmem>>, %arg5: memref<1x512xf32, #tpu.memory_space<vmem>>, %arg6: memref<512x256xf32, #tpu.memory_space<vmem>>, %arg7: memref<1x256xf32, #tpu.memory_space<vmem>>, %arg8: memref<256x128xf32, #tpu.memory_space<vmem>>, %arg9: memref<1x128xf32, #tpu.memory_space<vmem>>, %arg10: memref<128x128xf32, #tpu.memory_space<vmem>>, %arg11: memref<1x128xf32, #tpu.memory_space<vmem>>, %arg12: memref<8x128xf32, #tpu.memory_space<vmem>>) attributes {dimension_semantics = [#tpu.dimension_semantics<parallel>], iteration_bounds = array<i64: 1>, scalar_prefetch = 0 : i64, scratch_operands = 0 : i64, tpu.core_type = #tpu.core_type<tc>, window_params = [{transform_indices = @transform_0, window_bounds = array<i64: 8, 3072>}, {pipeline_mode = #tpu.pipeline_mode<synchronous>, transform_indices = @transform_1, window_bounds = array<i64: 3072, 1024>}, {pipeline_mode = #tpu.pipeline_mode<synchronous>, transform_indices = @transform_2, window_bounds = array<i64: 1, 1024>}, {pipeline_mode = #tpu.pipeline_mode<synchronous>, transform_indices = @transform_3, window_bounds = array<i64: 1024, 512>}, {pipeline_mode = #tpu.pipeline_mode<synchronous>, transform_indices = @transform_4, window_bounds = array<i64: 1, 512>}, {pipeline_mode = #tpu.pipeline_mode<synchronous>, transform_indices = @transform_5, window_bounds = array<i64: 512, 256>}, {pipeline_mode = #tpu.pipeline_mode<synchronous>, transform_indices = @transform_6, window_bounds = array<i64: 1, 256>}, {pipeline_mode = #tpu.pipeline_mode<synchronous>, transform_indices = @transform_7, window_bounds = array<i64: 256, 128>}, {pipeline_mode = #tpu.pipeline_mode<synchronous>, transform_indices = @transform_8, window_bounds = array<i64: 1, 128>}, {pipeline_mode = #tpu.pipeline_mode<synchronous>, transform_indices = @transform_9, window_bounds = array<i64: 128, 128>}, {pipeline_mode = #tpu.pipeline_mode<synchronous>, transform_indices = @transform_10, window_bounds = array<i64: 1, 128>}, {transform_indices = @transform_11, window_bounds = array<i64: 8, 128>}]} {
    %c0 = arith.constant 0 : index
    %c0_0 = arith.constant 0 : index
    %0 = vector.load %arg1[%c0, %c0_0] : memref<8x3072xf32, #tpu.memory_space<vmem>>, vector<8x3072xf32>
    %c0_1 = arith.constant 0 : index
    %c0_2 = arith.constant 0 : index
    %1 = vector.load %arg2[%c0_1, %c0_2] : memref<3072x1024xf32, #tpu.memory_space<vmem>>, vector<3072x1024xf32>
    %cst = arith.constant dense<0.000000e+00> : vector<8x1024xf32>
    %2 = tpu.matmul %0, %1, %cst {dimension_numbers = #tpu.dot_dimension_numbers<[1], [0], [0], [1], [0, 0, 1, 1], [], []>} : vector<8x3072xf32>, vector<3072x1024xf32>, vector<8x1024xf32> -> vector<8x1024xf32>
    %c0_3 = arith.constant 0 : index
    %c0_4 = arith.constant 0 : index
    %3 = vector.load %arg3[%c0_3, %c0_4] : memref<1x1024xf32, #tpu.memory_space<vmem>>, vector<1x1024xf32>
    %4 = vector.broadcast %3 : vector<1x1024xf32> to vector<8x1024xf32>
    %5 = arith.addf %2, %4 : vector<8x1024xf32>
    %cst_5 = arith.constant 0.000000e+00 : f32
    %6 = vector.broadcast %cst_5 : f32 to vector<8x1024xf32>
    %7 = arith.maximumf %5, %6 : vector<8x1024xf32>
    %c0_6 = arith.constant 0 : index
    %c0_7 = arith.constant 0 : index
    %8 = vector.load %arg4[%c0_6, %c0_7] : memref<1024x512xf32, #tpu.memory_space<vmem>>, vector<1024x512xf32>
    %cst_8 = arith.constant dense<0.000000e+00> : vector<8x512xf32>
    %9 = tpu.matmul %7, %8, %cst_8 {dimension_numbers = #tpu.dot_dimension_numbers<[1], [0], [0], [1], [0, 0, 1, 1], [], []>} : vector<8x1024xf32>, vector<1024x512xf32>, vector<8x512xf32> -> vector<8x512xf32>
    %c0_9 = arith.constant 0 : index
    %c0_10 = arith.constant 0 : index
    %10 = vector.load %arg5[%c0_9, %c0_10] : memref<1x512xf32, #tpu.memory_space<vmem>>, vector<1x512xf32>
    %11 = vector.broadcast %10 : vector<1x512xf32> to vector<8x512xf32>
    %12 = arith.addf %9, %11 : vector<8x512xf32>
    %cst_11 = arith.constant 0.000000e+00 : f32
    %13 = vector.broadcast %cst_11 : f32 to vector<8x512xf32>
    %14 = arith.maximumf %12, %13 : vector<8x512xf32>
    %c0_12 = arith.constant 0 : index
    %c0_13 = arith.constant 0 : index
    %15 = vector.load %arg6[%c0_12, %c0_13] : memref<512x256xf32, #tpu.memory_space<vmem>>, vector<512x256xf32>
    %cst_14 = arith.constant dense<0.000000e+00> : vector<8x256xf32>
    %16 = tpu.matmul %14, %15, %cst_14 {dimension_numbers = #tpu.dot_dimension_numbers<[1], [0], [0], [1], [0, 0, 1, 1], [], []>} : vector<8x512xf32>, vector<512x256xf32>, vector<8x256xf32> -> vector<8x256xf32>
    %c0_15 = arith.constant 0 : index
    %c0_16 = arith.constant 0 : index
    %17 = vector.load %arg7[%c0_15, %c0_16] : memref<1x256xf32, #tpu.memory_space<vmem>>, vector<1x256xf32>
    %18 = vector.broadcast %17 : vector<1x256xf32> to vector<8x256xf32>
    %19 = arith.addf %16, %18 : vector<8x256xf32>
    %cst_17 = arith.constant 0.000000e+00 : f32
    %20 = vector.broadcast %cst_17 : f32 to vector<8x256xf32>
    %21 = arith.maximumf %19, %20 : vector<8x256xf32>
    %c0_18 = arith.constant 0 : index
    %c0_19 = arith.constant 0 : index
    %22 = vector.load %arg8[%c0_18, %c0_19] : memref<256x128xf32, #tpu.memory_space<vmem>>, vector<256x128xf32>
    %cst_20 = arith.constant dense<0.000000e+00> : vector<8x128xf32>
    %23 = tpu.matmul %21, %22, %cst_20 {dimension_numbers = #tpu.dot_dimension_numbers<[1], [0], [0], [1], [0, 0, 1, 1], [], []>} : vector<8x256xf32>, vector<256x128xf32>, vector<8x128xf32> -> vector<8x128xf32>
    %c0_21 = arith.constant 0 : index
    %c0_22 = arith.constant 0 : index
    %24 = vector.load %arg9[%c0_21, %c0_22] : memref<1x128xf32, #tpu.memory_space<vmem>>, vector<1x128xf32>
    %25 = vector.broadcast %24 : vector<1x128xf32> to vector<8x128xf32>
    %26 = arith.addf %23, %25 : vector<8x128xf32>
    %cst_23 = arith.constant 0.000000e+00 : f32
    %27 = vector.broadcast %cst_23 : f32 to vector<8x128xf32>
    %28 = arith.maximumf %26, %27 : vector<8x128xf32>
    %c0_24 = arith.constant 0 : index
    %c0_25 = arith.constant 0 : index
    %29 = vector.load %arg10[%c0_24, %c0_25] : memref<128x128xf32, #tpu.memory_space<vmem>>, vector<128x128xf32>
    %cst_26 = arith.constant dense<0.000000e+00> : vector<8x128xf32>
    %30 = tpu.matmul %28, %29, %cst_26 {dimension_numbers = #tpu.dot_dimension_numbers<[1], [0], [0], [1], [0, 0, 1, 1], [], []>} : vector<8x128xf32>, vector<128x128xf32>, vector<8x128xf32> -> vector<8x128xf32>
    %c0_27 = arith.constant 0 : index
    %c0_28 = arith.constant 0 : index
    %31 = vector.load %arg11[%c0_27, %c0_28] : memref<1x128xf32, #tpu.memory_space<vmem>>, vector<1x128xf32>
    %32 = vector.broadcast %31 : vector<1x128xf32> to vector<8x128xf32>
    %33 = arith.addf %30, %32 : vector<8x128xf32>
    %c0_29 = arith.constant 0 : index
    %c0_30 = arith.constant 0 : index
    %34 = vector.load %arg12[%c0_29, %c0_30] : memref<8x128xf32, #tpu.memory_space<vmem>>, vector<8x128xf32>
    tpu.vector_store %arg12[%c0_29, %c0_30], %33 {strides = array<i32>} : memref<8x128xf32, #tpu.memory_space<vmem>>, vector<8x128xf32>,
    return
  }
  func.func @transform_0(%arg0: i32) -> (i32, i32) {
    %c0_i32 = arith.constant 0 : i32
    %c0_i32_0 = arith.constant 0 : i32
    return %arg0, %c0_i32 : i32, i32
  }
  func.func @transform_1(%arg0: i32) -> (i32, i32) {
    %c0_i32 = arith.constant 0 : i32
    %c0_i32_0 = arith.constant 0 : i32
    %c0_i32_1 = arith.constant 0 : i32
    return %c0_i32, %c0_i32_0 : i32, i32
  }
  func.func @transform_2(%arg0: i32) -> (i32, i32) {
    %c0_i32 = arith.constant 0 : i32
    %c0_i32_0 = arith.constant 0 : i32
    %c0_i32_1 = arith.constant 0 : i32
    return %c0_i32, %c0_i32_0 : i32, i32
  }
  func.func @transform_3(%arg0: i32) -> (i32, i32) {
    %c0_i32 = arith.constant 0 : i32
    %c0_i32_0 = arith.constant 0 : i32
    %c0_i32_1 = arith.constant 0 : i32
    return %c0_i32, %c0_i32_0 : i32, i32
  }
  func.func @transform_4(%arg0: i32) -> (i32, i32) {
    %c0_i32 = arith.constant 0 : i32
    %c0_i32_0 = arith.constant 0 : i32
    %c0_i32_1 = arith.constant 0 : i32
    return %c0_i32, %c0_i32_0 : i32, i32
  }
  func.func @transform_5(%arg0: i32) -> (i32, i32) {
    %c0_i32 = arith.constant 0 : i32
    %c0_i32_0 = arith.constant 0 : i32
    %c0_i32_1 = arith.constant 0 : i32
    return %c0_i32, %c0_i32_0 : i32, i32
  }
  func.func @transform_6(%arg0: i32) -> (i32, i32) {
    %c0_i32 = arith.constant 0 : i32
    %c0_i32_0 = arith.constant 0 : i32
    %c0_i32_1 = arith.constant 0 : i32
    return %c0_i32, %c0_i32_0 : i32, i32
  }
  func.func @transform_7(%arg0: i32) -> (i32, i32) {
    %c0_i32 = arith.constant 0 : i32
    %c0_i32_0 = arith.constant 0 : i32
    %c0_i32_1 = arith.constant 0 : i32
    return %c0_i32, %c0_i32_0 : i32, i32
  }
  func.func @transform_8(%arg0: i32) -> (i32, i32) {
    %c0_i32 = arith.constant 0 : i32
    %c0_i32_0 = arith.constant 0 : i32
    %c0_i32_1 = arith.constant 0 : i32
    return %c0_i32, %c0_i32_0 : i32, i32
  }
  func.func @transform_9(%arg0: i32) -> (i32, i32) {
    %c0_i32 = arith.constant 0 : i32
    %c0_i32_0 = arith.constant 0 : i32
    %c0_i32_1 = arith.constant 0 : i32
    return %c0_i32, %c0_i32_0 : i32, i32
  }
  func.func @transform_10(%arg0: i32) -> (i32, i32) {
    %c0_i32 = arith.constant 0 : i32
    %c0_i32_0 = arith.constant 0 : i32
    %c0_i32_1 = arith.constant 0 : i32
    return %c0_i32, %c0_i32_0 : i32, i32
  }
  func.func @transform_11(%arg0: i32) -> (i32, i32) {
    %c0_i32 = arith.constant 0 : i32
    %c0_i32_0 = arith.constant 0 : i32
    return %arg0, %c0_i32 : i32, i32
  }
}

</mosaic_0001>

<llo_original>
// kernel: tpu_custom_call.1
$region0: #{tpu_custom_call.1}
  #allocation0 [shape = 'u32[]', space=smem, size = 0x4, offset = 0x4, fixed_abs, tag = 'smem constant byte address 0x4 - core index']
  #allocation1 [shape = 'u32[144,128]{1,0:T(1,128)}', space=vmem, size = 0x12000, scoped, tag = 'internal scratch']
  %s0 = inlined_call_operand.hbm [shape: f32[8,3072], index: 0, kind: input, shape index: {}]
  %s1 = inlined_call_operand.hbm [shape: f32[3072,1024], index: 1, kind: input, shape index: {}]
  %s2 = inlined_call_operand.hbm [shape: f32[1,1024], index: 2, kind: input, shape index: {}]
  %s3 = inlined_call_operand.hbm [shape: f32[1024,512], index: 3, kind: input, shape index: {}]
  %s4 = inlined_call_operand.hbm [shape: f32[1,512], index: 4, kind: input, shape index: {}]
  %s5 = inlined_call_operand.hbm [shape: f32[512,256], index: 5, kind: input, shape index: {}]
  %s6 = inlined_call_operand.hbm [shape: f32[1,256], index: 6, kind: input, shape index: {}]
  %s7 = inlined_call_operand.hbm [shape: f32[256,128], index: 7, kind: input, shape index: {}]
  %s8 = inlined_call_operand.hbm [shape: f32[1,128], index: 8, kind: input, shape index: {}]
  %s9 = inlined_call_operand.hbm [shape: f32[128,128], index: 9, kind: input, shape index: {}]
  %s10 = inlined_call_operand.hbm [shape: f32[1,128], index: 10, kind: input, shape index: {}]
  %s11 = inlined_call_operand.hbm [shape: f32[8,128], index: 11, kind: output, shape index: {}]
  %s12 = sld [smem:[#allocation0]]
  $region98: #{tpu_custom_call.1} parent=0
    _
  %s14 = ssub.s32 1, %s12
  %s15 = scalar_select 0, %s14, %s12
  $region1: #{tpu_custom_call.1} parent=0
    #allocation2 [shape = 'u8[98304]{0}', space=vmem, size = 0x18000, scoped, tag = 'input window, operand 0, single buffered']
    #allocation3 [shape = 's32[1]{0}', space=sflag, size = 0x4, scoped, tag = 'scoped memory for tpu_custom_call.1']
    #allocation4 [shape = 's32[1]{0}', space=sflag, size = 0x4, scoped, tag = 'scoped memory for tpu_custom_call.1']
    #allocation5 [shape = 'u8[12582912]{0}', space=vmem, size = 0xc00000, scoped, tag = 'input window, operand 1, single buffered']
    #allocation6 [shape = 's32[1]{0}', space=sflag, size = 0x4, scoped, tag = 'scoped memory for tpu_custom_call.1']
    #allocation7 [shape = 'u8[4096]{0}', space=vmem, size = 0x1000, scoped, tag = 'input window, operand 2, single buffered']
    #allocation8 [shape = 'u8[2097152]{0}', space=vmem, size = 0x200000, scoped, tag = 'input window, operand 3, single buffered']
    #allocation9 [shape = 's32[1]{0}', space=sflag, size = 0x4, scoped, tag = 'scoped memory for tpu_custom_call.1']
    #allocation10 [shape = 'u8[2048]{0}', space=vmem, size = 0x800, scoped, tag = 'input window, operand 4, single buffered']
    #allocation11 [shape = 'u8[524288]{0}', space=vmem, size = 0x80000, scoped, tag = 'input window, operand 5, single buffered']
    #allocation12 [shape = 's32[1]{0}', space=sflag, size = 0x4, scoped, tag = 'scoped memory for tpu_custom_call.1']
    #allocation13 [shape = 'u8[1024]{0}', space=vmem, size = 0x400, scoped, tag = 'input window, operand 6, single buffered']
    #allocation14 [shape = 'u8[131072]{0}', space=vmem, size = 0x20000, scoped, tag = 'input window, operand 7, single buffered']
    #allocation15 [shape = 's32[1]{0}', space=sflag, size = 0x4, scoped, tag = 'scoped memory for tpu_custom_call.1']
    #allocation16 [shape = 'u8[512]{0}', space=vmem, size = 0x400, scoped, tag = 'input window, operand 8, single buffered']
    #allocation17 [shape = 'u8[65536]{0}', space=vmem, size = 0x10000, scoped, tag = 'input window, operand 9, single buffered']
    #allocation18 [shape = 's32[1]{0}', space=sflag, size = 0x4, scoped, tag = 'scoped memory for tpu_custom_call.1']
    #allocation19 [shape = 'u8[512]{0}', space=vmem, size = 0x400, scoped, tag = 'input window, operand 10, single buffered']
    #allocation20 [shape = 'u8[4096]{0}', space=vmem, size = 0x1000, scoped, tag = 'output window, operand 0, single buffered']
    %16 = vsyncpa [#allocation3], 0
    %17 = vsyncpa [#allocation6], 0
    %18 = vsyncpa [#allocation9], 0
    %19 = vsyncpa [#allocation12], 0
    %20 = vsyncpa [#allocation15], 0
    %21 = vsyncpa [#allocation18], 0
    %22 = vsyncpa [#allocation4], 0
    // Predicated region
    $region2: #{tpu_custom_call.1} parent=1 // pred_check
      _
    $region3: #{tpu_custom_call.1} parent=1 // pred_check_branch
      %24 = sbr.rel (0) target = $region5
    $region4: #{tpu_custom_call.1} parent=1 // pred_region
      %s26 = ssub.s32 3072, 3072
      %27 = vsyncadd [#allocation3], %s26
      %s29 = sshll.u32 [#allocation2], 4
      %s30 = int_to_ptr.vmem [resolvable:$true] %s29
      %32 = dma.hbm_to_vmem [thread:$0]  %s0, 3072, %s30, [#allocation3]
    $region5: #{tpu_custom_call.1} parent=1 // pred_fallthru
      _
    // Predicated region
    $region6: #{tpu_custom_call.1} parent=1 // pred_check
      _
    $region7: #{tpu_custom_call.1} parent=1 // pred_check_branch
      %34 = sbr.rel (0) target = $region9
    $region8: #{tpu_custom_call.1} parent=1 // pred_region
      %s36 = ssub.s32 393216, 393216
      %37 = vsyncadd [#allocation6], %s36
      %s38 = sshll.u32 [#allocation5], 4
      %s39 = int_to_ptr.vmem [resolvable:$true] %s38
      %44 = dma.hbm_to_vmem [thread:$0]  %s1, 393216, %s39, [#allocation6], 1024, 1024, 64
    $region9: #{tpu_custom_call.1} parent=1 // pred_fallthru
      _
    // Predicated region
    $region10: #{tpu_custom_call.1} parent=1 // pred_check
      _
    $region11: #{tpu_custom_call.1} parent=1 // pred_check_branch
      %46 = sbr.rel (0) target = $region13
    $region12: #{tpu_custom_call.1} parent=1 // pred_region
      %s48 = ssub.s32 128, 128
      %49 = vsyncadd [#allocation6], %s48
      %s51 = sshll.u32 [#allocation7], 4
      %s52 = int_to_ptr.vmem [resolvable:$true] %s51
      %54 = dma.hbm_to_vmem [thread:$0]  %s2, 128, %s52, [#allocation6]
    $region13: #{tpu_custom_call.1} parent=1 // pred_fallthru
      _
    // Predicated region
    $region14: #{tpu_custom_call.1} parent=1 // pred_check
      _
    $region15: #{tpu_custom_call.1} parent=1 // pred_check_branch
      %56 = sbr.rel (0) target = $region17
    $region16: #{tpu_custom_call.1} parent=1 // pred_region
      %s58 = ssub.s32 65536, 65536
      %59 = vsyncadd [#allocation9], %s58
      %s60 = sshll.u32 [#allocation8], 4
      %s61 = int_to_ptr.vmem [resolvable:$true] %s60
      %66 = dma.hbm_to_vmem [thread:$0]  %s3, 65536, %s61, [#allocation9], 512, 512, 32
    $region17: #{tpu_custom_call.1} parent=1 // pred_fallthru
      _
    // Predicated region
    $region18: #{tpu_custom_call.1} parent=1 // pred_check
      _
    $region19: #{tpu_custom_call.1} parent=1 // pred_check_branch
      %68 = sbr.rel (0) target = $region21
    $region20: #{tpu_custom_call.1} parent=1 // pred_region
      %s70 = ssub.s32 64, 64
      %71 = vsyncadd [#allocation9], %s70
      %s73 = sshll.u32 [#allocation10], 4
      %s74 = int_to_ptr.vmem [resolvable:$true] %s73
      %76 = dma.hbm_to_vmem [thread:$0]  %s4, 64, %s74, [#allocation9]
    $region21: #{tpu_custom_call.1} parent=1 // pred_fallthru
      _
    // Predicated region
    $region22: #{tpu_custom_call.1} parent=1 // pred_check
      _
    $region23: #{tpu_custom_call.1} parent=1 // pred_check_branch
      %78 = sbr.rel (0) target = $region25
    $region24: #{tpu_custom_call.1} parent=1 // pred_region
      %s80 = ssub.s32 16384, 16384
      %81 = vsyncadd [#allocation12], %s80
      %s82 = sshll.u32 [#allocation11], 4
      %s83 = int_to_ptr.vmem [resolvable:$true] %s82
      %88 = dma.hbm_to_vmem [thread:$0]  %s5, 16384, %s83, [#allocation12], 256, 256, 16
    $region25: #{tpu_custom_call.1} parent=1 // pred_fallthru
      _
    // Predicated region
    $region26: #{tpu_custom_call.1} parent=1 // pred_check
      _
    $region27: #{tpu_custom_call.1} parent=1 // pred_check_branch
      %90 = sbr.rel (0) target = $region29
    $region28: #{tpu_custom_call.1} parent=1 // pred_region
      %s92 = ssub.s32 32, 32
      %93 = vsyncadd [#allocation12], %s92
      %s95 = sshll.u32 [#allocation13], 4
      %s96 = int_to_ptr.vmem [resolvable:$true] %s95
      %98 = dma.hbm_to_vmem [thread:$0]  %s6, 32, %s96, [#allocation12]
    $region29: #{tpu_custom_call.1} parent=1 // pred_fallthru
      _
    // Predicated region
    $region30: #{tpu_custom_call.1} parent=1 // pred_check
      _
    $region31: #{tpu_custom_call.1} parent=1 // pred_check_branch
      %100 = sbr.rel (0) target = $region33
    $region32: #{tpu_custom_call.1} parent=1 // pred_region
      %s102 = ssub.s32 4096, 4096
      %103 = vsyncadd [#allocation15], %s102
      %s104 = sshll.u32 [#allocation14], 4
      %s105 = int_to_ptr.vmem [resolvable:$true] %s104
      %110 = dma.hbm_to_vmem [thread:$0]  %s7, 4096, %s105, [#allocation15], 128, 128, 8
    $region33: #{tpu_custom_call.1} parent=1 // pred_fallthru
      _
    // Predicated region
    $region34: #{tpu_custom_call.1} parent=1 // pred_check
      _
    $region35: #{tpu_custom_call.1} parent=1 // pred_check_branch
      %112 = sbr.rel (0) target = $region37
    $region36: #{tpu_custom_call.1} parent=1 // pred_region
      %s114 = ssub.s32 16, 16
      %115 = vsyncadd [#allocation15], %s114
      %s117 = sshll.u32 [#allocation16], 4
      %s118 = int_to_ptr.vmem [resolvable:$true] %s117
      %120 = dma.hbm_to_vmem [thread:$0]  %s8, 16, %s118, [#allocation15]
    $region37: #{tpu_custom_call.1} parent=1 // pred_fallthru
      _
    // Predicated region
    $region38: #{tpu_custom_call.1} parent=1 // pred_check
      _
    $region39: #{tpu_custom_call.1} parent=1 // pred_check_branch
      %122 = sbr.rel (0) target = $region41
    $region40: #{tpu_custom_call.1} parent=1 // pred_region
      %s124 = ssub.s32 2048, 2048
      %125 = vsyncadd [#allocation18], %s124
      %s126 = sshll.u32 [#allocation17], 4
      %s127 = int_to_ptr.vmem [resolvable:$true] %s126
      %132 = dma.hbm_to_vmem [thread:$0]  %s9, 2048, %s127, [#allocation18], 128, 128, 8
    $region41: #{tpu_custom_call.1} parent=1 // pred_fallthru
      _
    // Predicated region
    $region42: #{tpu_custom_call.1} parent=1 // pred_check
      _
    $region43: #{tpu_custom_call.1} parent=1 // pred_check_branch
      %134 = sbr.rel (0) target = $region45
    $region44: #{tpu_custom_call.1} parent=1 // pred_region
      %s136 = ssub.s32 16, 16
      %137 = vsyncadd [#allocation18], %s136
      %s139 = sshll.u32 [#allocation19], 4
      %s140 = int_to_ptr.vmem [resolvable:$true] %s139
      %142 = dma.hbm_to_vmem [thread:$0]  %s10, 16, %s140, [#allocation18]
    $region45: #{tpu_custom_call.1} parent=1 // pred_fallthru
      _
    // Predicated region
    $region46: #{tpu_custom_call.1} parent=1 // pred_check
      _
    $region47: #{tpu_custom_call.1} parent=1 // pred_check_branch
      %144 = sbr.rel (0) target = $region49
    $region48: #{tpu_custom_call.1} parent=1 // pred_region
      %145 = dma.done [#allocation3], 3072
    $region49: #{tpu_custom_call.1} parent=1 // pred_fallthru
      _
    // Predicated region
    $region50: #{tpu_custom_call.1} parent=1 // pred_check
      _
    $region51: #{tpu_custom_call.1} parent=1 // pred_check_branch
      %147 = sbr.rel (0) target = $region53
    $region52: #{tpu_custom_call.1} parent=1 // pred_region
      %148 = dma.done [#allocation6], 393216
    $region53: #{tpu_custom_call.1} parent=1 // pred_fallthru
      _
    // Predicated region
    $region54: #{tpu_custom_call.1} parent=1 // pred_check
      _
    $region55: #{tpu_custom_call.1} parent=1 // pred_check_branch
      %150 = sbr.rel (0) target = $region57
    $region56: #{tpu_custom_call.1} parent=1 // pred_region
      %151 = dma.done [#allocation6], 128
    $region57: #{tpu_custom_call.1} parent=1 // pred_fallthru
      _
    // Predicated region
    $region58: #{tpu_custom_call.1} parent=1 // pred_check
      _
    $region59: #{tpu_custom_call.1} parent=1 // pred_check_branch
      %153 = sbr.rel (0) target = $region61
    $region60: #{tpu_custom_call.1} parent=1 // pred_region
      %154 = dma.done [#allocation9], 65536
    $region61: #{tpu_custom_call.1} parent=1 // pred_fallthru
      _
    // Predicated region
    $region62: #{tpu_custom_call.1} parent=1 // pred_check
      _
    $region63: #{tpu_custom_call.1} parent=1 // pred_check_branch
      %156 = sbr.rel (0) target = $region65
    $region64: #{tpu_custom_call.1} parent=1 // pred_region
      %157 = dma.done [#allocation9], 64
    $region65: #{tpu_custom_call.1} parent=1 // pred_fallthru
      _
    // Predicated region
    $region66: #{tpu_custom_call.1} parent=1 // pred_check
      _
    $region67: #{tpu_custom_call.1} parent=1 // pred_check_branch
      %159 = sbr.rel (0) target = $region69
    $region68: #{tpu_custom_call.1} parent=1 // pred_region
      %160 = dma.done [#allocation12], 16384
    $region69: #{tpu_custom_call.1} parent=1 // pred_fallthru
      _
    // Predicated region
    $region70: #{tpu_custom_call.1} parent=1 // pred_check
      _
    $region71: #{tpu_custom_call.1} parent=1 // pred_check_branch
      %162 = sbr.rel (0) target = $region73
    $region72: #{tpu_custom_call.1} parent=1 // pred_region
      %163 = dma.done [#allocation12], 32
    $region73: #{tpu_custom_call.1} parent=1 // pred_fallthru
      _
    // Predicated region
    $region74: #{tpu_custom_call.1} parent=1 // pred_check
      _
    $region75: #{tpu_custom_call.1} parent=1 // pred_check_branch
      %165 = sbr.rel (0) target = $region77
    $region76: #{tpu_custom_call.1} parent=1 // pred_region
      %166 = dma.done [#allocation15], 4096
    $region77: #{tpu_custom_call.1} parent=1 // pred_fallthru
      _
    // Predicated region
    $region78: #{tpu_custom_call.1} parent=1 // pred_check
      _
    $region79: #{tpu_custom_call.1} parent=1 // pred_check_branch
      %168 = sbr.rel (0) target = $region81
    $region80: #{tpu_custom_call.1} parent=1 // pred_region
      %169 = dma.done [#allocation15], 16
    $region81: #{tpu_custom_call.1} parent=1 // pred_fallthru
      _
    // Predicated region
    $region82: #{tpu_custom_call.1} parent=1 // pred_check
      _
    $region83: #{tpu_custom_call.1} parent=1 // pred_check_branch
      %171 = sbr.rel (0) target = $region85
    $region84: #{tpu_custom_call.1} parent=1 // pred_region
      %172 = dma.done [#allocation18], 2048
    $region85: #{tpu_custom_call.1} parent=1 // pred_fallthru
      _
    // Predicated region
    $region86: #{tpu_custom_call.1} parent=1 // pred_check
      _
    $region87: #{tpu_custom_call.1} parent=1 // pred_check_branch
      %174 = sbr.rel (0) target = $region89
    $region88: #{tpu_custom_call.1} parent=1 // pred_region
      %175 = dma.done [#allocation18], 16
    $region89: #{tpu_custom_call.1} parent=1 // pred_fallthru
      _
    %v176 = vld [vmem:[#allocation2] sm:$0xff]
    %v177 = vld [vmem:[#allocation2 + $0x8] sm:$0xff]
    %v178 = vld [vmem:[#allocation2 + $0x10] sm:$0xff]
    %v179 = vld [vmem:[#allocation2 + $0x18] sm:$0xff]
    %v180 = vld [vmem:[#allocation2 + $0x20] sm:$0xff]
    %v181 = vld [vmem:[#allocation2 + $0x28] sm:$0xff]
    %v182 = vld [vmem:[#allocation2 + $0x30] sm:$0xff]
    %v183 = vld [vmem:[#allocation2 + $0x38] sm:$0xff]
    %v184 = vld [vmem:[#allocation2 + $0x40] sm:$0xff]
    %v185 = vld [vmem:[#allocation2 + $0x48] sm:$0xff]
    %v186 = vld [vmem:[#allocation2 + $0x50] sm:$0xff]
    %v187 = vld [vmem:[#allocation2 + $0x58] sm:$0xff]
    %v188 = vld [vmem:[#allocation2 + $0x60] sm:$0xff]
    %v189 = vld [vmem:[#allocation2 + $0x68] sm:$0xff]
    %v190 = vld [vmem:[#allocation2 + $0x70] sm:$0xff]
    %v191 = vld [vmem:[#allocation2 + $0x78] sm:$0xff]
    %v192 = vld [vmem:[#allocation2 + $0x80] sm:$0xff]
    %v193 = vld [vmem:[#allocation2 + $0x88] sm:$0xff]
    %v194 = vld [vmem:[#allocation2 + $0x90] sm:$0xff]
    %v195 = vld [vmem:[#allocation2 + $0x98] sm:$0xff]
    %v196 = vld [vmem:[#allocation2 + $0xa0] sm:$0xff]
    %v197 = vld [vmem:[#allocation2 + $0xa8] sm:$0xff]
    %v198 = vld [vmem:[#allocation2 + $0xb0] sm:$0xff]
    %v199 = vld [vmem:[#allocation2 + $0xb8] sm:$0xff]
    %v200 = vld [vmem:[#allocation5] sm:$0xff]
    %v201 = vld [vmem:[#allocation5 + $0x8] sm:$0xff]
    %v202 = vld [vmem:[#allocation5 + $0x10] sm:$0xff]
    %v203 = vld [vmem:[#allocation5 + $0x18] sm:$0xff]
    %v204 = vld [vmem:[#allocation5 + $0x20] sm:$0xff]
    %v205 = vld [vmem:[#allocation5 + $0x28] sm:$0xff]
    %v206 = vld [vmem:[#allocation5 + $0x30] sm:$0xff]
    %v207 = vld [vmem:[#allocation5 + $0x38] sm:$0xff]
    %v208 = vld [vmem:[#allocation5 + $0x40] sm:$0xff]
    %v209 = vld [vmem:[#allocation5 + $0x48] sm:$0xff]
    %v210 = vld [vmem:[#allocation5 + $0x50] sm:$0xff]
    %v211 = vld [vmem:[#allocation5 + $0x58] sm:$0xff]
    %v212 = vld [vmem:[#allocation5 + $0x60] sm:$0xff]
    %v213 = vld [vmem:[#allocation5 + $0x68] sm:$0xff]
    %v214 = vld [vmem:[#allocation5 + $0x70] sm:$0xff]
    %v215 = vld [vmem:[#allocation5 + $0x78] sm:$0xff]
    %v216 = vld [vmem:[#allocation5 + $0x80] sm:$0xff]
    %v217 = vld [vmem:[#allocation5 + $0x88] sm:$0xff]
    %v218 = vld [vmem:[#allocation5 + $0x90] sm:$0xff]
    %v219 = vld [vmem:[#allocation5 + $0x98] sm:$0xff]
    %v220 = vld [vmem:[#allocation5 + $0xa0] sm:$0xff]
    %v221 = vld [vmem:[#allocation5 + $0xa8] sm:$0xff]
    %v222 = vld [vmem:[#allocation5 + $0xb0] sm:$0xff]
    %v223 = vld [vmem:[#allocation5 + $0xb8] sm:$0xff]
    %v224 = vld [vmem:[#allocation5 + $0xc0] sm:$0xff]
    %v225 = vld [vmem:[#allocation5 + $0xc8] sm:$0xff]
    %v226 = vld [vmem:[#allocation5 + $0xd0] sm:$0xff]
    %v227 = vld [vmem:[#allocation5 + $0xd8] sm:$0xff]
    %v228 = vld [vmem:[#allocation5 + $0xe0] sm:$0xff]
    %v229 = vld [vmem:[#allocation5 + $0xe8] sm:$0xff]
    %v230 = vld [vmem:[#allocation5 + $0xf0] sm:$0xff]
    %v231 = vld [vmem:[#allocation5 + $0xf8] sm:$0xff]
    %v232 = vld [vmem:[#allocation5 + $0x100] sm:$0xff]
    %v233 = vld [vmem:[#allocation5 + $0x108] sm:$0xff]
    %v234 = vld [vmem:[#allocation5 + $0x110] sm:$0xff]
    %v235 = vld [vmem:[#allocation5 + $0x118] sm:$0xff]
    %v236 = vld [vmem:[#allocation5 + $0x120] sm:$0xff]
    %v237 = vld [vmem:[#allocation5 + $0x128] sm:$0xff]
    %v238 = vld [vmem:[#allocation5 + $0x130] sm:$0xff]
    %v239 = vld [vmem:[#allocation5 + $0x138] sm:$0xff]
    %v240 = vld [vmem:[#allocation5 + $0x140] sm:$0xff]
    %v241 = vld [vmem:[#allocation5 + $0x148] sm:$0xff]
    %v242 = vld [vmem:[#allocation5 + $0x150] sm:$0xff]
    %v243 = vld [vmem:[#allocation5 + $0x158] sm:$0xff]
    %v244 = vld [vmem:[#allocation5 + $0x160] sm:$0xff]
    %v245 = vld [vmem:[#allocation5 + $0x168] sm:$0xff]
    %v246 = vld [vmem:[#allocation5 + $0x170] sm:$0xff]
    %v247 = vld [vmem:[#allocation5 + $0x178] sm:$0xff]
    %v248 = vld [vmem:[#allocation5 + $0x180] sm:$0xff]
    %v249 = vld [vmem:[#allocation5 + $0x188] sm:$0xff]
    %v250 = vld [vmem:[#allocation5 + $0x190] sm:$0xff]
    %v251 = vld [vmem:[#allocation5 + $0x198] sm:$0xff]
    %v252 = vld [vmem:[#allocation5 + $0x1a0] sm:$0xff]
    %v253 = vld [vmem:[#allocation5 + $0x1a8] sm:$0xff]
    %v254 = vld [vmem:[#allocation5 + $0x1b0] sm:$0xff]
    %v255 = vld [vmem:[#allocation5 + $0x1b8] sm:$0xff]
    %v256 = vld [vmem:[#allocation5 + $0x1c0] sm:$0xff]
    %v257 = vld [vmem:[#allocation5 + $0x1c8] sm:$0xff]
    %v258 = vld [vmem:[#allocation5 + $0x1d0] sm:$0xff]
    %v259 = vld [vmem:[#allocation5 + $0x1d8] sm:$0xff]
    %v260 = vld [vmem:[#allocation5 + $0x1e0] sm:$0xff]
    %v261 = vld [vmem:[#allocation5 + $0x1e8] sm:$0xff]
    %v262 = vld [vmem:[#allocation5 + $0x1f0] sm:$0xff]
    %v263 = vld [vmem:[#allocation5 + $0x1f8] sm:$0xff]
    %v264 = vld [vmem:[#allocation5 + $0x200] sm:$0xff]
    %v265 = vld [vmem:[#allocation5 + $0x208] sm:$0xff]
    %v266 = vld [vmem:[#allocation5 + $0x210] sm:$0xff]
    %v267 = vld [vmem:[#allocation5 + $0x218] sm:$0xff]
    %v268 = vld [vmem:[#allocation5 + $0x220] sm:$0xff]
    %v269 = vld [vmem:[#allocation5 + $0x228] sm:$0xff]
    %v270 = vld [vmem:[#allocation5 + $0x230] sm:$0xff]
    %v271 = vld [vmem:[#allocation5 + $0x238] sm:$0xff]
    %v272 = vld [vmem:[#allocation5 + $0x240] sm:$0xff]
    %v273 = vld [vmem:[#allocation5 + $0x248] sm:$0xff]
    %v274 = vld [vmem:[#allocation5 + $0x250] sm:$0xff]
    %v275 = vld [vmem:[#allocation5 + $0x258] sm:$0xff]
    %v276 = vld [vmem:[#allocation5 + $0x260] sm:$0xff]
    %v277 = vld [vmem:[#allocation5 + $0x268] sm:$0xff]
    %v278 = vld [vmem:[#allocation5 + $0x270] sm:$0xff]
    %v279 = vld [vmem:[#allocation5 + $0x278] sm:$0xff]
    %v280 = vld [vmem:[#allocation5 + $0x280] sm:$0xff]
    %v281 = vld [vmem:[#allocation5 + $0x288] sm:$0xff]
    %v282 = vld [vmem:[#allocation5 + $0x290] sm:$0xff]
    %v283 = vld [vmem:[#allocation5 + $0x298] sm:$0xff]
    %v284 = vld [vmem:[#allocation5 + $0x2a0] sm:$0xff]
    %v285 = vld [vmem:[#allocation5 + $0x2a8] sm:$0xff]
    %v286 = vld [vmem:[#allocation5 + $0x2b0] sm:$0xff]
    %v287 = vld [vmem:[#allocation5 + $0x2b8] sm:$0xff]
    %v288 = vld [vmem:[#allocation5 + $0x2c0] sm:$0xff]
    %v289 = vld [vmem:[#allocation5 + $0x2c8] sm:$0xff]
    %v290 = vld [vmem:[#allocation5 + $0x2d0] sm:$0xff]
    %v291 = vld [vmem:[#allocation5 + $0x2d8] sm:$0xff]
    %v292 = vld [vmem:[#allocation5 + $0x2e0] sm:$0xff]
    %v293 = vld [vmem:[#allocation5 + $0x2e8] sm:$0xff]
    %v294 = vld [vmem:[#allocation5 + $0x2f0] sm:$0xff]
    %v295 = vld [vmem:[#allocation5 + $0x2f8] sm:$0xff]
    %v296 = vld [vmem:[#allocation5 + $0x300] sm:$0xff]
    %v297 = vld [vmem:[#allocation5 + $0x308] sm:$0xff]
    %v298 = vld [vmem:[#allocation5 + $0x310] sm:$0xff]
    %v299 = vld [vmem:[#allocation5 + $0x318] sm:$0xff]
    %v300 = vld [vmem:[#allocation5 + $0x320] sm:$0xff]
    %v301 = vld [vmem:[#allocation5 + $0x328] sm:$0xff]
    %v302 = vld [vmem:[#allocation5 + $0x330] sm:$0xff]
    %v303 = vld [vmem:[#allocation5 + $0x338] sm:$0xff]
    %v304 = vld [vmem:[#allocation5 + $0x340] sm:$0xff]
    %v305 = vld [vmem:[#allocation5 + $0x348] sm:$0xff]
    %v306 = vld [vmem:[#allocation5 + $0x350] sm:$0xff]
    %v307 = vld [vmem:[#allocation5 + $0x358] sm:$0xff]
    %v308 = vld [vmem:[#allocation5 + $0x360] sm:$0xff]
    %v309 = vld [vmem:[#allocation5 + $0x368] sm:$0xff]
    %v310 = vld [vmem:[#allocation5 + $0x370] sm:$0xff]
    %v311 = vld [vmem:[#allocation5 + $0x378] sm:$0xff]
    %v312 = vld [vmem:[#allocation5 + $0x380] sm:$0xff]
    %v313 = vld [vmem:[#allocation5 + $0x388] sm:$0xff]
    %v314 = vld [vmem:[#allocation5 + $0x390] sm:$0xff]
    %v315 = vld [vmem:[#allocation5 + $0x398] sm:$0xff]
    %v316 = vld [vmem:[#allocation5 + $0x3a0] sm:$0xff]
    %v317 = vld [vmem:[#allocation5 + $0x3a8] sm:$0xff]
    %v318 = vld [vmem:[#allocation5 + $0x3b0] sm:$0xff]
    %v319 = vld [vmem:[#allocation5 + $0x3b8] sm:$0xff]
    %v320 = vld [vmem:[#allocation5 + $0x3c0] sm:$0xff]
    %v321 = vld [vmem:[#allocation5 + $0x3c8] sm:$0xff]
    %v322 = vld [vmem:[#allocation5 + $0x3d0] sm:$0xff]
    %v323 = vld [vmem:[#allocation5 + $0x3d8] sm:$0xff]
    %v324 = vld [vmem:[#allocation5 + $0x3e0] sm:$0xff]
    %v325 = vld [vmem:[#allocation5 + $0x3e8] sm:$0xff]
    %v326 = vld [vmem:[#allocation5 + $0x3f0] sm:$0xff]
    %v327 = vld [vmem:[#allocation5 + $0x3f8] sm:$0xff]
    %v328 = vld [vmem:[#allocation5 + $0x400] sm:$0xff]
    %v329 = vld [vmem:[#allocation5 + $0x408] sm:$0xff]
    %v330 = vld [vmem:[#allocation5 + $0x410] sm:$0xff]
    %v331 = vld [vmem:[#allocation5 + $0x418] sm:$0xff]
    %v332 = vld [vmem:[#allocation5 + $0x420] sm:$0xff]
    %v333 = vld [vmem:[#allocation5 + $0x428] sm:$0xff]
    %v334 = vld [vmem:[#allocation5 + $0x430] sm:$0xff]
    %v335 = vld [vmem:[#allocation5 + $0x438] sm:$0xff]
    %v336 = vld [vmem:[#allocation5 + $0x440] sm:$0xff]
    %v337 = vld [vmem:[#allocation5 + $0x448] sm:$0xff]
    %v338 = vld [vmem:[#allocation5 + $0x450] sm:$0xff]
    %v339 = vld [vmem:[#allocation5 + $0x458] sm:$0xff]
    %v340 = vld [vmem:[#allocation5 + $0x460] sm:$0xff]
    %v341 = vld [vmem:[#allocation5 + $0x468] sm:$0xff]
    %v342 = vld [vmem:[#allocation5 + $0x470] sm:$0xff]
    %v343 = vld [vmem:[#allocation5 + $0x478] sm:$0xff]
    %v344 = vld [vmem:[#allocation5 + $0x480] sm:$0xff]
    %v345 = vld [vmem:[#allocation5 + $0x488] sm:$0xff]
    %v346 = vld [vmem:[#allocation5 + $0x490] sm:$0xff]
    %v347 = vld [vmem:[#allocation5 + $0x498] sm:$0xff]
    %v348 = vld [vmem:[#allocation5 + $0x4a0] sm:$0xff]
    %v349 = vld [vmem:[#allocation5 + $0x4a8] sm:$0xff]
    %v350 = vld [vmem:[#allocation5 + $0x4b0] sm:$0xff]
    %v351 = vld [vmem:[#allocation5 + $0x4b8] sm:$0xff]
    %v352 = vld [vmem:[#allocation5 + $0x4c0] sm:$0xff]
    %v353 = vld [vmem:[#allocation5 + $0x4c8] sm:$0xff]
    %v354 = vld [vmem:[#allocation5 + $0x4d0] sm:$0xff]
    %v355 = vld [vmem:[#allocation5 + $0x4d8] sm:$0xff]
    %v356 = vld [vmem:[#allocation5 + $0x4e0] sm:$0xff]
    %v357 = vld [vmem:[#allocation5 + $0x4e8] sm:$0xff]
    %v358 = vld [vmem:[#allocation5 + $0x4f0] sm:$0xff]
    %v359 = vld [vmem:[#allocation5 + $0x4f8] sm:$0xff]
    %v360 = vld [vmem:[#allocation5 + $0x500] sm:$0xff]
    %v361 = vld [vmem:[#allocation5 + $0x508] sm:$0xff]
    %v362 = vld [vmem:[#allocation5 + $0x510] sm:$0xff]
    %v363 = vld [vmem:[#allocation5 + $0x518] sm:$0xff]
    %v364 = vld [vmem:[#allocation5 + $0x520] sm:$0xff]
    %v365 = vld [vmem:[#allocation5 + $0x528] sm:$0xff]
    %v366 = vld [vmem:[#allocation5 + $0x530] sm:$0xff]
    %v367 = vld [vmem:[#allocation5 + $0x538] sm:$0xff]
    %v368 = vld [vmem:[#allocation5 + $0x540] sm:$0xff]
    %v369 = vld [vmem:[#allocation5 + $0x548] sm:$0xff]
    %v370 = vld [vmem:[#allocation5 + $0x550] sm:$0xff]
    %v371 = vld [vmem:[#allocation5 + $0x558] sm:$0xff]
    %v372 = vld [vmem:[#allocation5 + $0x560] sm:$0xff]
    %v373 = vld [vmem:[#allocation5 + $0x568] sm:$0xff]
    %v374 = vld [vmem:[#allocation5 + $0x570] sm:$0xff]
    %v375 = vld [vmem:[#allocation5 + $0x578] sm:$0xff]
    %v376 = vld [vmem:[#allocation5 + $0x580] sm:$0xff]
    %v377 = vld [vmem:[#allocation5 + $0x588] sm:$0xff]
    %v378 = vld [vmem:[#allocation5 + $0x590] sm:$0xff]
    %v379 = vld [vmem:[#allocation5 + $0x598] sm:$0xff]
    %v380 = vld [vmem:[#allocation5 + $0x5a0] sm:$0xff]
    %v381 = vld [vmem:[#allocation5 + $0x5a8] sm:$0xff]
    %v382 = vld [vmem:[#allocation5 + $0x5b0] sm:$0xff]
    %v383 = vld [vmem:[#allocation5 + $0x5b8] sm:$0xff]
    %v384 = vld [vmem:[#allocation5 + $0x5c0] sm:$0xff]
    %v385 = vld [vmem:[#allocation5 + $0x5c8] sm:$0xff]
    %v386 = vld [vmem:[#allocation5 + $0x5d0] sm:$0xff]
    %v387 = vld [vmem:[#allocation5 + $0x5d8] sm:$0xff]
    %v388 = vld [vmem:[#allocation5 + $0x5e0] sm:$0xff]
    %v389 = vld [vmem:[#allocation5 + $0x5e8] sm:$0xff]
    %v390 = vld [vmem:[#allocation5 + $0x5f0] sm:$0xff]
    %v391 = vld [vmem:[#allocation5 + $0x5f8] sm:$0xff]
    %v392 = vld [vmem:[#allocation5 + $0x600] sm:$0xff]
    %v393 = vld [vmem:[#allocation5 + $0x608] sm:$0xff]
    %v394 = vld [vmem:[#allocation5 + $0x610] sm:$0xff]
    %v395 = vld [vmem:[#allocation5 + $0x618] sm:$0xff]
    %v396 = vld [vmem:[#allocation5 + $0x620] sm:$0xff]
    %v397 = vld [vmem:[#allocation5 + $0x628] sm:$0xff]
    %v398 = vld [vmem:[#allocation5 + $0x630] sm:$0xff]
    %v399 = vld [vmem:[#allocation5 + $0x638] sm:$0xff]
    %v400 = vld [vmem:[#allocation5 + $0x640] sm:$0xff]
    %v401 = vld [vmem:[#allocation5 + $0x648] sm:$0xff]
    %v402 = vld [vmem:[#allocation5 + $0x650] sm:$0xff]
    %v403 = vld [vmem:[#allocation5 + $0x658] sm:$0xff]
    %v404 = vld [vmem:[#allocation5 + $0x660] sm:$0xff]
    %v405 = vld [vmem:[#allocation5 + $0x668] sm:$0xff]
    %v406 = vld [vmem:[#allocation5 + $0x670] sm:$0xff]
    %v407 = vld [vmem:[#allocation5 + $0x678] sm:$0xff]
    %v408 = vld [vmem:[#allocation5 + $0x680] sm:$0xff]
    %v409 = vld [vmem:[#allocation5 + $0x688] sm:$0xff]
    %v410 = vld [vmem:[#allocation5 + $0x690] sm:$0xff]
    %v411 = vld [vmem:[#allocation5 + $0x698] sm:$0xff]
    %v412 = vld [vmem:[#allocation5 + $0x6a0] sm:$0xff]
    %v413 = vld [vmem:[#allocation5 + $0x6a8] sm:$0xff]
    %v414 = vld [vmem:[#allocation5 + $0x6b0] sm:$0xff]
    %v415 = vld [vmem:[#allocation5 + $0x6b8] sm:$0xff]
    %v416 = vld [vmem:[#allocation5 + $0x6c0] sm:$0xff]
    %v417 = vld [vmem:[#allocation5 + $0x6c8] sm:$0xff]
    %v418 = vld [vmem:[#allocation5 + $0x6d0] sm:$0xff]
    %v419 = vld [vmem:[#allocation5 + $0x6d8] sm:$0xff]
    %v420 = vld [vmem:[#allocation5 + $0x6e0] sm:$0xff]
    %v421 = vld [vmem:[#allocation5 + $0x6e8] sm:$0xff]
    %v422 = vld [vmem:[#allocation5 + $0x6f0] sm:$0xff]
    %v423 = vld [vmem:[#allocation5 + $0x6f8] sm:$0xff]
    %v424 = vld [vmem:[#allocation5 + $0x700] sm:$0xff]
    %v425 = vld [vmem:[#allocation5 + $0x708] sm:$0xff]
    %v426 = vld [vmem:[#allocation5 + $0x710] sm:$0xff]
    %v427 = vld [vmem:[#allocation5 + $0x718] sm:$0xff]
    %v428 = vld [vmem:[#allocation5 + $0x720] sm:$0xff]
    %v429 = vld [vmem:[#allocation5 + $0x728] sm:$0xff]
    %v430 = vld [vmem:[#allocation5 + $0x730] sm:$0xff]
    %v431 = vld [vmem:[#allocation5 + $0x738] sm:$0xff]
    %v432 = vld [vmem:[#allocation5 + $0x740] sm:$0xff]
    %v433 = vld [vmem:[#allocation5 + $0x748] sm:$0xff]
    %v434 = vld [vmem:[#allocation5 + $0x750] sm:$0xff]
    %v435 = vld [vmem:[#allocation5 + $0x758] sm:$0xff]
    %v436 = vld [vmem:[#allocation5 + $0x760] sm:$0xff]
    %v437 = vld [vmem:[#allocation5 + $0x768] sm:$0xff]
    %v438 = vld [vmem:[#allocation5 + $0x770] sm:$0xff]
    %v439 = vld [vmem:[#allocation5 + $0x778] sm:$0xff]
    %v440 = vld [vmem:[#allocation5 + $0x780] sm:$0xff]
    %v441 = vld [vmem:[#allocation5 + $0x788] sm:$0xff]
    %v442 = vld [vmem:[#allocation5 + $0x790] sm:$0xff]
    %v443 = vld [vmem:[#allocation5 + $0x798] sm:$0xff]
    %v444 = vld [vmem:[#allocation5 + $0x7a0] sm:$0xff]
    %v445 = vld [vmem:[#allocation5 + $0x7a8] sm:$0xff]
    %v446 = vld [vmem:[#allocation5 + $0x7b0] sm:$0xff]
    %v447 = vld [vmem:[#allocation5 + $0x7b8] sm:$0xff]
    %v448 = vld [vmem:[#allocation5 + $0x7c0] sm:$0xff]
    %v449 = vld [vmem:[#allocation5 + $0x7c8] sm:$0xff]
    %v450 = vld [vmem:[#allocation5 + $0x7d0] sm:$0xff]
    %v451 = vld [vmem:[#allocation5 + $0x7d8] sm:$0xff]
    %v452 = vld [vmem:[#allocation5 + $0x7e0] sm:$0xff]
    %v453 = vld [vmem:[#allocation5 + $0x7e8] sm:$0xff]
    %v454 = vld [vmem:[#allocation5 + $0x7f0] sm:$0xff]
    %v455 = vld [vmem:[#allocation5 + $0x7f8] sm:$0xff]
    %v456 = vld [vmem:[#allocation5 + $0x800] sm:$0xff]
    %v457 = vld [vmem:[#allocation5 + $0x808] sm:$0xff]
    %v458 = vld [vmem:[#allocation5 + $0x810] sm:$0xff]
    %v459 = vld [vmem:[#allocation5 + $0x818] sm:$0xff]
    %v460 = vld [vmem:[#allocation5 + $0x820] sm:$0xff]
    %v461 = vld [vmem:[#allocation5 + $0x828] sm:$0xff]
    %v462 = vld [vmem:[#allocation5 + $0x830] sm:$0xff]
    %v463 = vld [vmem:[#allocation5 + $0x838] sm:$0xff]
    %v464 = vld [vmem:[#allocation5 + $0x840] sm:$0xff]
    %v465 = vld [vmem:[#allocation5 + $0x848] sm:$0xff]
    %v466 = vld [vmem:[#allocation5 + $0x850] sm:$0xff]
    %v467 = vld [vmem:[#allocation5 + $0x858] sm:$0xff]
    %v468 = vld [vmem:[#allocation5 + $0x860] sm:$0xff]
    %v469 = vld [vmem:[#allocation5 + $0x868] sm:$0xff]
    %v470 = vld [vmem:[#allocation5 + $0x870] sm:$0xff]
    %v471 = vld [vmem:[#allocation5 + $0x878] sm:$0xff]
    %v472 = vld [vmem:[#allocation5 + $0x880] sm:$0xff]
    %v473 = vld [vmem:[#allocation5 + $0x888] sm:$0xff]
    %v474 = vld [vmem:[#allocation5 + $0x890] sm:$0xff]
    %v475 = vld [vmem:[#allocation5 + $0x898] sm:$0xff]
    %v476 = vld [vmem:[#allocation5 + $0x8a0] sm:$0xff]
    %v477 = vld [vmem:[#allocation5 + $0x8a8] sm:$0xff]
    %v478 = vld [vmem:[#allocation5 + $0x8b0] sm:$0xff]
    %v479 = vld [vmem:[#allocation5 + $0x8b8] sm:$0xff]
    %v480 = vld [vmem:[#allocation5 + $0x8c0] sm:$0xff]
    %v481 = vld [vmem:[#allocation5 + $0x8c8] sm:$0xff]
    %v482 = vld [vmem:[#allocation5 + $0x8d0] sm:$0xff]
    %v483 = vld [vmem:[#allocation5 + $0x8d8] sm:$0xff]
    %v484 = vld [vmem:[#allocation5 + $0x8e0] sm:$0xff]
    %v485 = vld [vmem:[#allocation5 + $0x8e8] sm:$0xff]
    %v486 = vld [vmem:[#allocation5 + $0x8f0] sm:$0xff]
    %v487 = vld [vmem:[#allocation5 + $0x8f8] sm:$0xff]
    %v488 = vld [vmem:[#allocation5 + $0x900] sm:$0xff]
    %v489 = vld [vmem:[#allocation5 + $0x908] sm:$0xff]
    %v490 = vld [vmem:[#allocation5 + $0x910] sm:$0xff]
    %v491 = vld [vmem:[#allocation5 + $0x918] sm:$0xff]
    %v492 = vld [vmem:[#allocation5 + $0x920] sm:$0xff]
    %v493 = vld [vmem:[#allocation5 + $0x928] sm:$0xff]
    %v494 = vld [vmem:[#allocation5 + $0x930] sm:$0xff]
    %v495 = vld [vmem:[#allocation5 + $0x938] sm:$0xff]
    %v496 = vld [vmem:[#allocation5 + $0x940] sm:$0xff]
    %v497 = vld [vmem:[#allocation5 + $0x948] sm:$0xff]
    %v498 = vld [vmem:[#allocation5 + $0x950] sm:$0xff]
    %v499 = vld [vmem:[#allocation5 + $0x958] sm:$0xff]
    %v500 = vld [vmem:[#allocation5 + $0x960] sm:$0xff]
    %v501 = vld [vmem:[#allocation5 + $0x968] sm:$0xff]
    %v502 = vld [vmem:[#allocation5 + $0x970] sm:$0xff]
    %v503 = vld [vmem:[#allocation5 + $0x978] sm:$0xff]
    %v504 = vld [vmem:[#allocation5 + $0x980] sm:$0xff]
    %v505 = vld [vmem:[#allocation5 + $0x988] sm:$0xff]
    %v506 = vld [vmem:[#allocation5 + $0x990] sm:$0xff]
    %v507 = vld [vmem:[#allocation5 + $0x998] sm:$0xff]
    %v508 = vld [vmem:[#allocation5 + $0x9a0] sm:$0xff]
    %v509 = vld [vmem:[#allocation5 + $0x9a8] sm:$0xff]
    %v510 = vld [vmem:[#allocation5 + $0x9b0] sm:$0xff]
    %v511 = vld [vmem:[#allocation5 + $0x9b8] sm:$0xff]
    %v512 = vld [vmem:[#allocation5 + $0x9c0] sm:$0xff]
    %v513 = vld [vmem:[#allocation5 + $0x9c8] sm:$0xff]
    %v514 = vld [vmem:[#allocation5 + $0x9d0] sm:$0xff]
    %v515 = vld [vmem:[#allocation5 + $0x9d8] sm:$0xff]
    %v516 = vld [vmem:[#allocation5 + $0x9e0] sm:$0xff]
    %v517 = vld [vmem:[#allocation5 + $0x9e8] sm:$0xff]
    %v518 = vld [vmem:[#allocation5 + $0x9f0] sm:$0xff]
    %v519 = vld [vmem:[#allocation5 + $0x9f8] sm:$0xff]
    %v520 = vld [vmem:[#allocation5 + $0xa00] sm:$0xff]
    %v521 = vld [vmem:[#allocation5 + $0xa08] sm:$0xff]
    %v522 = vld [vmem:[#allocation5 + $0xa10] sm:$0xff]
    %v523 = vld [vmem:[#allocation5 + $0xa18] sm:$0xff]
    %v524 = vld [vmem:[#allocation5 + $0xa20] sm:$0xff]
    %v525 = vld [vmem:[#allocation5 + $0xa28] sm:$0xff]
    %v526 = vld [vmem:[#allocation5 + $0xa30] sm:$0xff]
    %v527 = vld [vmem:[#allocation5 + $0xa38] sm:$0xff]
    %v528 = vld [vmem:[#allocation5 + $0xa40] sm:$0xff]
    %v529 = vld [vmem:[#allocation5 + $0xa48] sm:$0xff]
    %v530 = vld [vmem:[#allocation5 + $0xa50] sm:$0xff]
    %v531 = vld [vmem:[#allocation5 + $0xa58] sm:$0xff]
    %v532 = vld [vmem:[#allocation5 + $0xa60] sm:$0xff]
    %v533 = vld [vmem:[#allocation5 + $0xa68] sm:$0xff]
    %v534 = vld [vmem:[#allocation5 + $0xa70] sm:$0xff]
    %v535 = vld [vmem:[#allocation5 + $0xa78] sm:$0xff]
    %v536 = vld [vmem:[#allocation5 + $0xa80] sm:$0xff]
    %v537 = vld [vmem:[#allocation5 + $0xa88] sm:$0xff]
    %v538 = vld [vmem:[#allocation5 + $0xa90] sm:$0xff]
    %v539 = vld [vmem:[#allocation5 + $0xa98] sm:$0xff]
    %v540 = vld [vmem:[#allocation5 + $0xaa0] sm:$0xff]
    %v541 = vld [vmem:[#allocation5 + $0xaa8] sm:$0xff]
    %v542 = vld [vmem:[#allocation5 + $0xab0] sm:$0xff]
    %v543 = vld [vmem:[#allocation5 + $0xab8] sm:$0xff]
    %v544 = vld [vmem:[#allocation5 + $0xac0] sm:$0xff]
    %v545 = vld [vmem:[#allocation5 + $0xac8] sm:$0xff]
    %v546 = vld [vmem:[#allocation5 + $0xad0] sm:$0xff]
    %v547 = vld [vmem:[#allocation5 + $0xad8] sm:$0xff]
    %v548 = vld [vmem:[#allocation5 + $0xae0] sm:$0xff]
    %v549 = vld [vmem:[#allocation5 + $0xae8] sm:$0xff]
    %v550 = vld [vmem:[#allocation5 + $0xaf0] sm:$0xff]
    %v551 = vld [vmem:[#allocation5 + $0xaf8] sm:$0xff]
    %v552 = vld [vmem:[#allocation5 + $0xb00] sm:$0xff]
    %v553 = vld [vmem:[#allocation5 + $0xb08] sm:$0xff]
    %v554 = vld [vmem:[#allocation5 + $0xb10] sm:$0xff]
    %v555 = vld [vmem:[#allocation5 + $0xb18] sm:$0xff]
    %v556 = vld [vmem:[#allocation5 + $0xb20] sm:$0xff]
    %v557 = vld [vmem:[#allocation5 + $0xb28] sm:$0xff]
    %v558 = vld [vmem:[#allocation5 + $0xb30] sm:$0xff]
    %v559 = vld [vmem:[#allocation5 + $0xb38] sm:$0xff]
    %v560 = vld [vmem:[#allocation5 + $0xb40] sm:$0xff]
    %v561 = vld [vmem:[#allocation5 + $0xb48] sm:$0xff]
    %v562 = vld [vmem:[#allocation5 + $0xb50] sm:$0xff]
    %v563 = vld [vmem:[#allocation5 + $0xb58] sm:$0xff]
    %v564 = vld [vmem:[#allocation5 + $0xb60] sm:$0xff]
    %v565 = vld [vmem:[#allocation5 + $0xb68] sm:$0xff]
    %v566 = vld [vmem:[#allocation5 + $0xb70] sm:$0xff]
    %v567 = vld [vmem:[#allocation5 + $0xb78] sm:$0xff]
    %v568 = vld [vmem:[#allocation5 + $0xb80] sm:$0xff]
    %v569 = vld [vmem:[#allocation5 + $0xb88] sm:$0xff]
    %v570 = vld [vmem:[#allocation5 + $0xb90] sm:$0xff]
    %v571 = vld [vmem:[#allocation5 + $0xb98] sm:$0xff]
    %v572 = vld [vmem:[#allocation5 + $0xba0] sm:$0xff]
    %v573 = vld [vmem:[#allocation5 + $0xba8] sm:$0xff]
    %v574 = vld [vmem:[#allocation5 + $0xbb0] sm:$0xff]
    %v575 = vld [vmem:[#allocation5 + $0xbb8] sm:$0xff]
    %v576 = vld [vmem:[#allocation5 + $0xbc0] sm:$0xff]
    %v577 = vld [vmem:[#allocation5 + $0xbc8] sm:$0xff]
    %v578 = vld [vmem:[#allocation5 + $0xbd0] sm:$0xff]
    %v579 = vld [vmem:[#allocation5 + $0xbd8] sm:$0xff]
    %v580 = vld [vmem:[#allocation5 + $0xbe0] sm:$0xff]
    %v581 = vld [vmem:[#allocation5 + $0xbe8] sm:$0xff]
    %v582 = vld [vmem:[#allocation5 + $0xbf0] sm:$0xff]
    %v583 = vld [vmem:[#allocation5 + $0xbf8] sm:$0xff]
    %v584 = vld [vmem:[#allocation5 + $0xc00] sm:$0xff]
    %v585 = vld [vmem:[#allocation5 + $0xc08] sm:$0xff]
    %v586 = vld [vmem:[#allocation5 + $0xc10] sm:$0xff]
    %v587 = vld [vmem:[#allocation5 + $0xc18] sm:$0xff]
    %v588 = vld [vmem:[#allocation5 + $0xc20] sm:$0xff]
    %v589 = vld [vmem:[#allocation5 + $0xc28] sm:$0xff]
    %v590 = vld [vmem:[#allocation5 + $0xc30] sm:$0xff]
    %v591 = vld [vmem:[#allocation5 + $0xc38] sm:$0xff]
    %v592 = vld [vmem:[#allocation5 + $0xc40] sm:$0xff]
    %v593 = vld [vmem:[#allocation5 + $0xc48] sm:$0xff]
    %v594 = vld [vmem:[#allocation5 + $0xc50] sm:$0xff]
    %v595 = vld [vmem:[#allocation5 + $0xc58] sm:$0xff]
    %v596 = vld [vmem:[#allocation5 + $0xc60] sm:$0xff]
    %v597 = vld [vmem:[#allocation5 + $0xc68] sm:$0xff]
    %v598 = vld [vmem:[#allocation5 + $0xc70] sm:$0xff]
    %v599 = vld [vmem:[#allocation5 + $0xc78] sm:$0xff]
    %v600 = vld [vmem:[#allocation5 + $0xc80] sm:$0xff]
    %v601 = vld [vmem:[#allocation5 + $0xc88] sm:$0xff]
    %v602 = vld [vmem:[#allocation5 + $0xc90] sm:$0xff]
    %v603 = vld [vmem:[#allocation5 + $0xc98] sm:$0xff]
    %v604 = vld [vmem:[#allocation5 + $0xca0] sm:$0xff]
    %v605 = vld [vmem:[#allocation5 + $0xca8] sm:$0xff]
    %v606 = vld [vmem:[#allocation5 + $0xcb0] sm:$0xff]
    %v607 = vld [vmem:[#allocation5 + $0xcb8] sm:$0xff]
    %v608 = vld [vmem:[#allocation5 + $0xcc0] sm:$0xff]
    %v609 = vld [vmem:[#allocation5 + $0xcc8] sm:$0xff]
    %v610 = vld [vmem:[#allocation5 + $0xcd0] sm:$0xff]
    %v611 = vld [vmem:[#allocation5 + $0xcd8] sm:$0xff]
    %v612 = vld [vmem:[#allocation5 + $0xce0] sm:$0xff]
    %v613 = vld [vmem:[#allocation5 + $0xce8] sm:$0xff]
    %v614 = vld [vmem:[#allocation5 + $0xcf0] sm:$0xff]
    %v615 = vld [vmem:[#allocation5 + $0xcf8] sm:$0xff]
    %v616 = vld [vmem:[#allocation5 + $0xd00] sm:$0xff]
    %v617 = vld [vmem:[#allocation5 + $0xd08] sm:$0xff]
    %v618 = vld [vmem:[#allocation5 + $0xd10] sm:$0xff]
    %v619 = vld [vmem:[#allocation5 + $0xd18] sm:$0xff]
    %v620 = vld [vmem:[#allocation5 + $0xd20] sm:$0xff]
    %v621 = vld [vmem:[#allocation5 + $0xd28] sm:$0xff]
    %v622 = vld [vmem:[#allocation5 + $0xd30] sm:$0xff]
    %v623 = vld [vmem:[#allocation5 + $0xd38] sm:$0xff]
    %v624 = vld [vmem:[#allocation5 + $0xd40] sm:$0xff]
    %v625 = vld [vmem:[#allocation5 + $0xd48] sm:$0xff]
    %v626 = vld [vmem:[#allocation5 + $0xd50] sm:$0xff]
    %v627 = vld [vmem:[#allocation5 + $0xd58] sm:$0xff]
    %v628 = vld [vmem:[#allocation5 + $0xd60] sm:$0xff]
    %v629 = vld [vmem:[#allocation5 + $0xd68] sm:$0xff]
    %v630 = vld [vmem:[#allocation5 + $0xd70] sm:$0xff]
    %v631 = vld [vmem:[#allocation5 + $0xd78] sm:$0xff]
    %v632 = vld [vmem:[#allocation5 + $0xd80] sm:$0xff]
    %v633 = vld [vmem:[#allocation5 + $0xd88] sm:$0xff]
    %v634 = vld [vmem:[#allocation5 + $0xd90] sm:$0xff]
    %v635 = vld [vmem:[#allocation5 + $0xd98] sm:$0xff]
    %v636 = vld [vmem:[#allocation5 + $0xda0] sm:$0xff]
    %v637 = vld [vmem:[#allocation5 + $0xda8] sm:$0xff]
    %v638 = vld [vmem:[#allocation5 + $0xdb0] sm:$0xff]
    %v639 = vld [vmem:[#allocation5 + $0xdb8] sm:$0xff]
    %v640 = vld [vmem:[#allocation5 + $0xdc0] sm:$0xff]
    %v641 = vld [vmem:[#allocation5 + $0xdc8] sm:$0xff]
    %v642 = vld [vmem:[#allocation5 + $0xdd0] sm:$0xff]
    %v643 = vld [vmem:[#allocation5 + $0xdd8] sm:$0xff]
    %v644 = vld [vmem:[#allocation5 + $0xde0] sm:$0xff]
    %v645 = vld [vmem:[#allocation5 + $0xde8] sm:$0xff]
    %v646 = vld [vmem:[#allocation5 + $0xdf0] sm:$0xff]
    %v647 = vld [vmem:[#allocation5 + $0xdf8] sm:$0xff]
    %v648 = vld [vmem:[#allocation5 + $0xe00] sm:$0xff]
    %v649 = vld [vmem:[#allocation5 + $0xe08] sm:$0xff]
    %v650 = vld [vmem:[#allocation5 + $0xe10] sm:$0xff]
    %v651 = vld [vmem:[#allocation5 + $0xe18] sm:$0xff]
    %v652 = vld [vmem:[#allocation5 + $0xe20] sm:$0xff]
    %v653 = vld [vmem:[#allocation5 + $0xe28] sm:$0xff]
    %v654 = vld [vmem:[#allocation5 + $0xe30] sm:$0xff]
    %v655 = vld [vmem:[#allocation5 + $0xe38] sm:$0xff]
    %v656 = vld [vmem:[#allocation5 + $0xe40] sm:$0xff]
    %v657 = vld [vmem:[#allocation5 + $0xe48] sm:$0xff]
    %v658 = vld [vmem:[#allocation5 + $0xe50] sm:$0xff]
    %v659 = vld [vmem:[#allocation5 + $0xe58] sm:$0xff]
    %v660 = vld [vmem:[#allocation5 + $0xe60] sm:$0xff]
    %v661 = vld [vmem:[#allocation5 + $0xe68] sm:$0xff]
    %v662 = vld [vmem:[#allocation5 + $0xe70] sm:$0xff]
    %v663 = vld [vmem:[#allocation5 + $0xe78] sm:$0xff]
    %v664 = vld [vmem:[#allocation5 + $0xe80] sm:$0xff]
    %v665 = vld [vmem:[#allocation5 + $0xe88] sm:$0xff]
    %v666 = vld [vmem:[#allocation5 + $0xe90] sm:$0xff]
    %v667 = vld [vmem:[#allocation5 + $0xe98] sm:$0xff]
    %v668 = vld [vmem:[#allocation5 + $0xea0] sm:$0xff]
    %v669 = vld [vmem:[#allocation5 + $0xea8] sm:$0xff]
    %v670 = vld [vmem:[#allocation5 + $0xeb0] sm:$0xff]
    %v671 = vld [vmem:[#allocation5 + $0xeb8] sm:$0xff]
    %v672 = vld [vmem:[#allocation5 + $0xec0] sm:$0xff]
    %v673 = vld [vmem:[#allocation5 + $0xec8] sm:$0xff]
    %v674 = vld [vmem:[#allocation5 + $0xed0] sm:$0xff]
    %v675 = vld [vmem:[#allocation5 + $0xed8] sm:$0xff]
    %v676 = vld [vmem:[#allocation5 + $0xee0] sm:$0xff]
    %v677 = vld [vmem:[#allocation5 + $0xee8] sm:$0xff]
    %v678 = vld [vmem:[#allocation5 + $0xef0] sm:$0xff]
    %v679 = vld [vmem:[#allocation5 + $0xef8] sm:$0xff]
    %v680 = vld [vmem:[#allocation5 + $0xf00] sm:$0xff]
    %v681 = vld [vmem:[#allocation5 + $0xf08] sm:$0xff]
    %v682 = vld [vmem:[#allocation5 + $0xf10] sm:$0xff]
    %v683 = vld [vmem:[#allocation5 + $0xf18] sm:$0xff]
    %v684 = vld [vmem:[#allocation5 + $0xf20] sm:$0xff]
    %v685 = vld [vmem:[#allocation5 + $0xf28] sm:$0xff]
    %v686 = vld [vmem:[#allocation5 + $0xf30] sm:$0xff]
    %v687 = vld [vmem:[#allocation5 + $0xf38] sm:$0xff]
    %v688 = vld [vmem:[#allocation5 + $0xf40] sm:$0xff]
    %v689 = vld [vmem:[#allocation5 + $0xf48] sm:$0xff]
    %v690 = vld [vmem:[#allocation5 + $0xf50] sm:$0xff]
    %v691 = vld [vmem:[#allocation5 + $0xf58] sm:$0xff]
    %v692 = vld [vmem:[#allocation5 + $0xf60] sm:$0xff]
    %v693 = vld [vmem:[#allocation5 + $0xf68] sm:$0xff]
    %v694 = vld [vmem:[#allocation5 + $0xf70] sm:$0xff]
    %v695 = vld [vmem:[#allocation5 + $0xf78] sm:$0xff]
    %v696 = vld [vmem:[#allocation5 + $0xf80] sm:$0xff]
    %v697 = vld [vmem:[#allocation5 + $0xf88] sm:$0xff]
    %v698 = vld [vmem:[#allocation5 + $0xf90] sm:$0xff]
    %v699 = vld [vmem:[#allocation5 + $0xf98] sm:$0xff]
    %v700 = vld [vmem:[#allocation5 + $0xfa0] sm:$0xff]
    %v701 = vld [vmem:[#allocation5 + $0xfa8] sm:$0xff]
    %v702 = vld [vmem:[#allocation5 + $0xfb0] sm:$0xff]
    %v703 = vld [vmem:[#allocation5 + $0xfb8] sm:$0xff]
    %v704 = vld [vmem:[#allocation5 + $0xfc0] sm:$0xff]
    %v705 = vld [vmem:[#allocation5 + $0xfc8] sm:$0xff]
    %v706 = vld [vmem:[#allocation5 + $0xfd0] sm:$0xff]
    %v707 = vld [vmem:[#allocation5 + $0xfd8] sm:$0xff]
    %v708 = vld [vmem:[#allocation5 + $0xfe0] sm:$0xff]
    %v709 = vld [vmem:[#allocation5 + $0xfe8] sm:$0xff]
    %v710 = vld [vmem:[#allocation5 + $0xff0] sm:$0xff]
    %v711 = vld [vmem:[#allocation5 + $0xff8] sm:$0xff]
    %v712 = vld [vmem:[#allocation5 + $0x1000] sm:$0xff]
    %v713 = vld [vmem:[#allocation5 + $0x1008] sm:$0xff]
    %v714 = vld [vmem:[#allocation5 + $0x1010] sm:$0xff]
    %v715 = vld [vmem:[#allocation5 + $0x1018] sm:$0xff]
    %v716 = vld [vmem:[#allocation5 + $0x1020] sm:$0xff]
    %v717 = vld [vmem:[#allocation5 + $0x1028] sm:$0xff]
    %v718 = vld [vmem:[#allocation5 + $0x1030] sm:$0xff]
    %v719 = vld [vmem:[#allocation5 + $0x1038] sm:$0xff]
    %v720 = vld [vmem:[#allocation5 + $0x1040] sm:$0xff]
    %v721 = vld [vmem:[#allocation5 + $0x1048] sm:$0xff]
    %v722 = vld [vmem:[#allocation5 + $0x1050] sm:$0xff]
    %v723 = vld [vmem:[#allocation5 + $0x1058] sm:$0xff]
    %v724 = vld [vmem:[#allocation5 + $0x1060] sm:$0xff]
    %v725 = vld [vmem:[#allocation5 + $0x1068] sm:$0xff]
    %v726 = vld [vmem:[#allocation5 + $0x1070] sm:$0xff]
    %v727 = vld [vmem:[#allocation5 + $0x1078] sm:$0xff]
    %v728 = vld [vmem:[#allocation5 + $0x1080] sm:$0xff]
    %v729 = vld [vmem:[#allocation5 + $0x1088] sm:$0xff]
    %v730 = vld [vmem:[#allocation5 + $0x1090] sm:$0xff]
    %v731 = vld [vmem:[#allocation5 + $0x1098] sm:$0xff]
    %v732 = vld [vmem:[#allocation5 + $0x10a0] sm:$0xff]
    %v733 = vld [vmem:[#allocation5 + $0x10a8] sm:$0xff]
    %v734 = vld [vmem:[#allocation5 + $0x10b0] sm:$0xff]
    %v735 = vld [vmem:[#allocation5 + $0x10b8] sm:$0xff]
    %v736 = vld [vmem:[#allocation5 + $0x10c0] sm:$0xff]
    %v737 = vld [vmem:[#allocation5 + $0x10c8] sm:$0xff]
    %v738 = vld [vmem:[#allocation5 + $0x10d0] sm:$0xff]
    %v739 = vld [vmem:[#allocation5 + $0x10d8] sm:$0xff]
    %v740 = vld [vmem:[#allocation5 + $0x10e0] sm:$0xff]
    %v741 = vld [vmem:[#allocation5 + $0x10e8] sm:$0xff]
    %v742 = vld [vmem:[#allocation5 + $0x10f0] sm:$0xff]
    %v743 = vld [vmem:[#allocation5 + $0x10f8] sm:$0xff]
    %v744 = vld [vmem:[#allocation5 + $0x1100] sm:$0xff]
    %v745 = vld [vmem:[#allocation5 + $0x1108] sm:$0xff]
    %v746 = vld [vmem:[#allocation5 + $0x1110] sm:$0xff]
    %v747 = vld [vmem:[#allocation5 + $0x1118] sm:$0xff]
    %v748 = vld [vmem:[#allocation5 + $0x1120] sm:$0xff]
    %v749 = vld [vmem:[#allocation5 + $0x1128] sm:$0xff]
    %v750 = vld [vmem:[#allocation5 + $0x1130] sm:$0xff]
    %v751 = vld [vmem:[#allocation5 + $0x1138] sm:$0xff]
    %v752 = vld [vmem:[#allocation5 + $0x1140] sm:$0xff]
    %v753 = vld [vmem:[#allocation5 + $0x1148] sm:$0xff]
    %v754 = vld [vmem:[#allocation5 + $0x1150] sm:$0xff]
    %v755 = vld [vmem:[#allocation5 + $0x1158] sm:$0xff]
    %v756 = vld [vmem:[#allocation5 + $0x1160] sm:$0xff]
    %v757 = vld [vmem:[#allocation5 + $0x1168] sm:$0xff]
    %v758 = vld [vmem:[#allocation5 + $0x1170] sm:$0xff]
    %v759 = vld [vmem:[#allocation5 + $0x1178] sm:$0xff]
    %v760 = vld [vmem:[#allocation5 + $0x1180] sm:$0xff]
    %v761 = vld [vmem:[#allocation5 + $0x1188] sm:$0xff]
    %v762 = vld [vmem:[#allocation5 + $0x1190] sm:$0xff]
    %v763 = vld [vmem:[#allocation5 + $0x1198] sm:$0xff]
    %v764 = vld [vmem:[#allocation5 + $0x11a0] sm:$0xff]
    %v765 = vld [vmem:[#allocation5 + $0x11a8] sm:$0xff]
    %v766 = vld [vmem:[#allocation5 + $0x11b0] sm:$0xff]
    %v767 = vld [vmem:[#allocation5 + $0x11b8] sm:$0xff]
    %v768 = vld [vmem:[#allocation5 + $0x11c0] sm:$0xff]
    %v769 = vld [vmem:[#allocation5 + $0x11c8] sm:$0xff]
    %v770 = vld [vmem:[#allocation5 + $0x11d0] sm:$0xff]
    %v771 = vld [vmem:[#allocation5 + $0x11d8] sm:$0xff]
    %v772 = vld [vmem:[#allocation5 + $0x11e0] sm:$0xff]
    %v773 = vld [vmem:[#allocation5 + $0x11e8] sm:$0xff]
    %v774 = vld [vmem:[#allocation5 + $0x11f0] sm:$0xff]
    %v775 = vld [vmem:[#allocation5 + $0x11f8] sm:$0xff]
    %v776 = vld [vmem:[#allocation5 + $0x1200] sm:$0xff]
    %v777 = vld [vmem:[#allocation5 + $0x1208] sm:$0xff]
    %v778 = vld [vmem:[#allocation5 + $0x1210] sm:$0xff]
    %v779 = vld [vmem:[#allocation5 + $0x1218] sm:$0xff]
    %v780 = vld [vmem:[#allocation5 + $0x1220] sm:$0xff]
    %v781 = vld [vmem:[#allocation5 + $0x1228] sm:$0xff]
    %v782 = vld [vmem:[#allocation5 + $0x1230] sm:$0xff]
    %v783 = vld [vmem:[#allocation5 + $0x1238] sm:$0xff]
    %v784 = vld [vmem:[#allocation5 + $0x1240] sm:$0xff]
    %v785 = vld [vmem:[#allocation5 + $0x1248] sm:$0xff]
    %v786 = vld [vmem:[#allocation5 + $0x1250] sm:$0xff]
    %v787 = vld [vmem:[#allocation5 + $0x1258] sm:$0xff]
    %v788 = vld [vmem:[#allocation5 + $0x1260] sm:$0xff]
    %v789 = vld [vmem:[#allocation5 + $0x1268] sm:$0xff]
    %v790 = vld [vmem:[#allocation5 + $0x1270] sm:$0xff]
    %v791 = vld [vmem:[#allocation5 + $0x1278] sm:$0xff]
    %v792 = vld [vmem:[#allocation5 + $0x1280] sm:$0xff]
    %v793 = vld [vmem:[#allocation5 + $0x1288] sm:$0xff]
    %v794 = vld [vmem:[#allocation5 + $0x1290] sm:$0xff]
    %v795 = vld [vmem:[#allocation5 + $0x1298] sm:$0xff]
    %v796 = vld [vmem:[#allocation5 + $0x12a0] sm:$0xff]
    %v797 = vld [vmem:[#allocation5 + $0x12a8] sm:$0xff]
    %v798 = vld [vmem:[#allocation5 + $0x12b0] sm:$0xff]
    %v799 = vld [vmem:[#allocation5 + $0x12b8] sm:$0xff]
    %v800 = vld [vmem:[#allocation5 + $0x12c0] sm:$0xff]
    %v801 = vld [vmem:[#allocation5 + $0x12c8] sm:$0xff]
    %v802 = vld [vmem:[#allocation5 + $0x12d0] sm:$0xff]
    %v803 = vld [vmem:[#allocation5 + $0x12d8] sm:$0xff]
    %v804 = vld [vmem:[#allocation5 + $0x12e0] sm:$0xff]
    %v805 = vld [vmem:[#allocation5 + $0x12e8] sm:$0xff]
    %v806 = vld [vmem:[#allocation5 + $0x12f0] sm:$0xff]
    %v807 = vld [vmem:[#allocation5 + $0x12f8] sm:$0xff]
    %v808 = vld [vmem:[#allocation5 + $0x1300] sm:$0xff]
    %v809 = vld [vmem:[#allocation5 + $0x1308] sm:$0xff]
    %v810 = vld [vmem:[#allocation5 + $0x1310] sm:$0xff]
    %v811 = vld [vmem:[#allocation5 + $0x1318] sm:$0xff]
    %v812 = vld [vmem:[#allocation5 + $0x1320] sm:$0xff]
    %v813 = vld [vmem:[#allocation5 + $0x1328] sm:$0xff]
    %v814 = vld [vmem:[#allocation5 + $0x1330] sm:$0xff]
    %v815 = vld [vmem:[#allocation5 + $0x1338] sm:$0xff]
    %v816 = vld [vmem:[#allocation5 + $0x1340] sm:$0xff]
    %v817 = vld [vmem:[#allocation5 + $0x1348] sm:$0xff]
    %v818 = vld [vmem:[#allocation5 + $0x1350] sm:$0xff]
    %v819 = vld [vmem:[#allocation5 + $0x1358] sm:$0xff]
    %v820 = vld [vmem:[#allocation5 + $0x1360] sm:$0xff]
    %v821 = vld [vmem:[#allocation5 + $0x1368] sm:$0xff]
    %v822 = vld [vmem:[#allocation5 + $0x1370] sm:$0xff]
    %v823 = vld [vmem:[#allocation5 + $0x1378] sm:$0xff]
    %v824 = vld [vmem:[#allocation5 + $0x1380] sm:$0xff]
    %v825 = vld [vmem:[#allocation5 + $0x1388] sm:$0xff]
    %v826 = vld [vmem:[#allocation5 + $0x1390] sm:$0xff]
    %v827 = vld [vmem:[#allocation5 + $0x1398] sm:$0xff]
    %v828 = vld [vmem:[#allocation5 + $0x13a0] sm:$0xff]
    %v829 = vld [vmem:[#allocation5 + $0x13a8] sm:$0xff]
    %v830 = vld [vmem:[#allocation5 + $0x13b0] sm:$0xff]
    %v831 = vld [vmem:[#allocation5 + $0x13b8] sm:$0xff]
    %v832 = vld [vmem:[#allocation5 + $0x13c0] sm:$0xff]
    %v833 = vld [vmem:[#allocation5 + $0x13c8] sm:$0xff]
    %v834 = vld [vmem:[#allocation5 + $0x13d0] sm:$0xff]
    %v835 = vld [vmem:[#allocation5 + $0x13d8] sm:$0xff]
    %v836 = vld [vmem:[#allocation5 + $0x13e0] sm:$0xff]
    %v837 = vld [vmem:[#allocation5 + $0x13e8] sm:$0xff]
    %v838 = vld [vmem:[#allocation5 + $0x13f0] sm:$0xff]
    %v839 = vld [vmem:[#allocation5 + $0x13f8] sm:$0xff]
    %v840 = vld [vmem:[#allocation5 + $0x1400] sm:$0xff]
    %v841 = vld [vmem:[#allocation5 + $0x1408] sm:$0xff]
    %v842 = vld [vmem:[#allocation5 + $0x1410] sm:$0xff]
    %v843 = vld [vmem:[#allocation5 + $0x1418] sm:$0xff]
    %v844 = vld [vmem:[#allocation5 + $0x1420] sm:$0xff]
    %v845 = vld [vmem:[#allocation5 + $0x1428] sm:$0xff]
    %v846 = vld [vmem:[#allocation5 + $0x1430] sm:$0xff]
    %v847 = vld [vmem:[#allocation5 + $0x1438] sm:$0xff]
    %v848 = vld [vmem:[#allocation5 + $0x1440] sm:$0xff]
    %v849 = vld [vmem:[#allocation5 + $0x1448] sm:$0xff]
    %v850 = vld [vmem:[#allocation5 + $0x1450] sm:$0xff]
    %v851 = vld [vmem:[#allocation5 + $0x1458] sm:$0xff]
    %v852 = vld [vmem:[#allocation5 + $0x1460] sm:$0xff]
    %v853 = vld [vmem:[#allocation5 + $0x1468] sm:$0xff]
    %v854 = vld [vmem:[#allocation5 + $0x1470] sm:$0xff]
    %v855 = vld [vmem:[#allocation5 + $0x1478] sm:$0xff]
    %v856 = vld [vmem:[#allocation5 + $0x1480] sm:$0xff]
    %v857 = vld [vmem:[#allocation5 + $0x1488] sm:$0xff]
    %v858 = vld [vmem:[#allocation5 + $0x1490] sm:$0xff]
    %v859 = vld [vmem:[#allocation5 + $0x1498] sm:$0xff]
    %v860 = vld [vmem:[#allocation5 + $0x14a0] sm:$0xff]
    %v861 = vld [vmem:[#allocation5 + $0x14a8] sm:$0xff]
    %v862 = vld [vmem:[#allocation5 + $0x14b0] sm:$0xff]
    %v863 = vld [vmem:[#allocation5 + $0x14b8] sm:$0xff]
    %v864 = vld [vmem:[#allocation5 + $0x14c0] sm:$0xff]
    %v865 = vld [vmem:[#allocation5 + $0x14c8] sm:$0xff]
    %v866 = vld [vmem:[#allocation5 + $0x14d0] sm:$0xff]
    %v867 = vld [vmem:[#allocation5 + $0x14d8] sm:$0xff]
    %v868 = vld [vmem:[#allocation5 + $0x14e0] sm:$0xff]
    %v869 = vld [vmem:[#allocation5 + $0x14e8] sm:$0xff]
    %v870 = vld [vmem:[#allocation5 + $0x14f0] sm:$0xff]
    %v871 = vld [vmem:[#allocation5 + $0x14f8] sm:$0xff]
    %v872 = vld [vmem:[#allocation5 + $0x1500] sm:$0xff]
    %v873 = vld [vmem:[#allocation5 + $0x1508] sm:$0xff]
    %v874 = vld [vmem:[#allocation5 + $0x1510] sm:$0xff]
    %v875 = vld [vmem:[#allocation5 + $0x1518] sm:$0xff]
    %v876 = vld [vmem:[#allocation5 + $0x1520] sm:$0xff]
    %v877 = vld [vmem:[#allocation5 + $0x1528] sm:$0xff]
    %v878 = vld [vmem:[#allocation5 + $0x1530] sm:$0xff]
    %v879 = vld [vmem:[#allocation5 + $0x1538] sm:$0xff]
    %v880 = vld [vmem:[#allocation5 + $0x1540] sm:$0xff]
    %v881 = vld [vmem:[#allocation5 + $0x1548] sm:$0xff]
    %v882 = vld [vmem:[#allocation5 + $0x1550] sm:$0xff]
    %v883 = vld [vmem:[#allocation5 + $0x1558] sm:$0xff]
    %v884 = vld [vmem:[#allocation5 + $0x1560] sm:$0xff]
    %v885 = vld [vmem:[#allocation5 + $0x1568] sm:$0xff]
    %v886 = vld [vmem:[#allocation5 + $0x1570] sm:$0xff]
    %v887 = vld [vmem:[#allocation5 + $0x1578] sm:$0xff]
    %v888 = vld [vmem:[#allocation5 + $0x1580] sm:$0xff]
    %v889 = vld [vmem:[#allocation5 + $0x1588] sm:$0xff]
    %v890 = vld [vmem:[#allocation5 + $0x1590] sm:$0xff]
    %v891 = vld [vmem:[#allocation5 + $0x1598] sm:$0xff]
    %v892 = vld [vmem:[#allocation5 + $0x15a0] sm:$0xff]
    %v893 = vld [vmem:[#allocation5 + $0x15a8] sm:$0xff]
    %v894 = vld [vmem:[#allocation5 + $0x15b0] sm:$0xff]
    %v895 = vld [vmem:[#allocation5 + $0x15b8] sm:$0xff]
    %v896 = vld [vmem:[#allocation5 + $0x15c0] sm:$0xff]
    %v897 = vld [vmem:[#allocation5 + $0x15c8] sm:$0xff]
    %v898 = vld [vmem:[#allocation5 + $0x15d0] sm:$0xff]
    %v899 = vld [vmem:[#allocation5 + $0x15d8] sm:$0xff]
    %v900 = vld [vmem:[#allocation5 + $0x15e0] sm:$0xff]
    %v901 = vld [vmem:[#allocation5 + $0x15e8] sm:$0xff]
    %v902 = vld [vmem:[#allocation5 + $0x15f0] sm:$0xff]
    %v903 = vld [vmem:[#allocation5 + $0x15f8] sm:$0xff]
    %v904 = vld [vmem:[#allocation5 + $0x1600] sm:$0xff]
    %v905 = vld [vmem:[#allocation5 + $0x1608] sm:$0xff]
    %v906 = vld [vmem:[#allocation5 + $0x1610] sm:$0xff]
    %v907 = vld [vmem:[#allocation5 + $0x1618] sm:$0xff]
    %v908 = vld [vmem:[#allocation5 + $0x1620] sm:$0xff]
    %v909 = vld [vmem:[#allocation5 + $0x1628] sm:$0xff]
    %v910 = vld [vmem:[#allocation5 + $0x1630] sm:$0xff]
    %v911 = vld [vmem:[#allocation5 + $0x1638] sm:$0xff]
    %v912 = vld [vmem:[#allocation5 + $0x1640] sm:$0xff]
    %v913 = vld [vmem:[#allocation5 + $0x1648] sm:$0xff]
    %v914 = vld [vmem:[#allocation5 + $0x1650] sm:$0xff]
    %v915 = vld [vmem:[#allocation5 + $0x1658] sm:$0xff]
    %v916 = vld [vmem:[#allocation5 + $0x1660] sm:$0xff]
    %v917 = vld [vmem:[#allocation5 + $0x1668] sm:$0xff]
    %v918 = vld [vmem:[#allocation5 + $0x1670] sm:$0xff]
    %v919 = vld [vmem:[#allocation5 + $0x1678] sm:$0xff]
    %v920 = vld [vmem:[#allocation5 + $0x1680] sm:$0xff]
    %v921 = vld [vmem:[#allocation5 + $0x1688] sm:$0xff]
    %v922 = vld [vmem:[#allocation5 + $0x1690] sm:$0xff]
    %v923 = vld [vmem:[#allocation5 + $0x1698] sm:$0xff]
    %v924 = vld [vmem:[#allocation5 + $0x16a0] sm:$0xff]
    %v925 = vld [vmem:[#allocation5 + $0x16a8] sm:$0xff]
    %v926 = vld [vmem:[#allocation5 + $0x16b0] sm:$0xff]
    %v927 = vld [vmem:[#allocation5 + $0x16b8] sm:$0xff]
    %v928 = vld [vmem:[#allocation5 + $0x16c0] sm:$0xff]
    %v929 = vld [vmem:[#allocation5 + $0x16c8] sm:$0xff]
    %v930 = vld [vmem:[#allocation5 + $0x16d0] sm:$0xff]
    %v931 = vld [vmem:[#allocation5 + $0x16d8] sm:$0xff]
    %v932 = vld [vmem:[#allocation5 + $0x16e0] sm:$0xff]
    %v933 = vld [vmem:[#allocation5 + $0x16e8] sm:$0xff]
    %v934 = vld [vmem:[#allocation5 + $0x16f0] sm:$0xff]
    %v935 = vld [vmem:[#allocation5 + $0x16f8] sm:$0xff]
    %v936 = vld [vmem:[#allocation5 + $0x1700] sm:$0xff]
    %v937 = vld [vmem:[#allocation5 + $0x1708] sm:$0xff]
    %v938 = vld [vmem:[#allocation5 + $0x1710] sm:$0xff]
    %v939 = vld [vmem:[#allocation5 + $0x1718] sm:$0xff]
    %v940 = vld [vmem:[#allocation5 + $0x1720] sm:$0xff]
    %v941 = vld [vmem:[#allocation5 + $0x1728] sm:$0xff]
    %v942 = vld [vmem:[#allocation5 + $0x1730] sm:$0xff]
    %v943 = vld [vmem:[#allocation5 + $0x1738] sm:$0xff]
    %v944 = vld [vmem:[#allocation5 + $0x1740] sm:$0xff]
    %v945 = vld [vmem:[#allocation5 + $0x1748] sm:$0xff]
    %v946 = vld [vmem:[#allocation5 + $0x1750] sm:$0xff]
    %v947 = vld [vmem:[#allocation5 + $0x1758] sm:$0xff]
    %v948 = vld [vmem:[#allocation5 + $0x1760] sm:$0xff]
    %v949 = vld [vmem:[#allocation5 + $0x1768] sm:$0xff]
    %v950 = vld [vmem:[#allocation5 + $0x1770] sm:$0xff]
    %v951 = vld [vmem:[#allocation5 + $0x1778] sm:$0xff]
    %v952 = vld [vmem:[#allocation5 + $0x1780] sm:$0xff]
    %v953 = vld [vmem:[#allocation5 + $0x1788] sm:$0xff]
    %v954 = vld [vmem:[#allocation5 + $0x1790] sm:$0xff]
    %v955 = vld [vmem:[#allocation5 + $0x1798] sm:$0xff]
    %v956 = vld [vmem:[#allocation5 + $0x17a0] sm:$0xff]
    %v957 = vld [vmem:[#allocation5 + $0x17a8] sm:$0xff]
    %v958 = vld [vmem:[#allocation5 + $0x17b0] sm:$0xff]
    %v959 = vld [vmem:[#allocation5 + $0x17b8] sm:$0xff]
    %v960 = vld [vmem:[#allocation5 + $0x17c0] sm:$0xff]
    %v961 = vld [vmem:[#allocation5 + $0x17c8] sm:$0xff]
    %v962 = vld [vmem:[#allocation5 + $0x17d0] sm:$0xff]
    %v963 = vld [vmem:[#allocation5 + $0x17d8] sm:$0xff]
    %v964 = vld [vmem:[#allocation5 + $0x17e0] sm:$0xff]
    %v965 = vld [vmem:[#allocation5 + $0x17e8] sm:$0xff]
    %v966 = vld [vmem:[#allocation5 + $0x17f0] sm:$0xff]
    %v967 = vld [vmem:[#allocation5 + $0x17f8] sm:$0xff]
    %v968 = vld [vmem:[#allocation5 + $0x1800] sm:$0xff]
    %v969 = vld [vmem:[#allocation5 + $0x1808] sm:$0xff]
    %v970 = vld [vmem:[#allocation5 + $0x1810] sm:$0xff]
    %v971 = vld [vmem:[#allocation5 + $0x1818] sm:$0xff]
    %v972 = vld [vmem:[#allocation5 + $0x1820] sm:$0xff]
    %v973 = vld [vmem:[#allocation5 + $0x1828] sm:$0xff]
    %v974 = vld [vmem:[#allocation5 + $0x1830] sm:$0xff]
    %v975 = vld [vmem:[#allocation5 + $0x1838] sm:$0xff]
    %v976 = vld [vmem:[#allocation5 + $0x1840] sm:$0xff]
    %v977 = vld [vmem:[#allocation5 + $0x1848] sm:$0xff]
    %v978 = vld [vmem:[#allocation5 + $0x1850] sm:$0xff]
    %v979 = vld [vmem:[#allocation5 + $0x1858] sm:$0xff]
    %v980 = vld [vmem:[#allocation5 + $0x1860] sm:$0xff]
    %v981 = vld [vmem:[#allocation5 + $0x1868] sm:$0xff]
    %v982 = vld [vmem:[#allocation5 + $0x1870] sm:$0xff]
    %v983 = vld [vmem:[#allocation5 + $0x1878] sm:$0xff]
    %v984 = vld [vmem:[#allocation5 + $0x1880] sm:$0xff]
    %v985 = vld [vmem:[#allocation5 + $0x1888] sm:$0xff]
    %v986 = vld [vmem:[#allocation5 + $0x1890] sm:$0xff]
    %v987 = vld [vmem:[#allocation5 + $0x1898] sm:$0xff]
    %v988 = vld [vmem:[#allocation5 + $0x18a0] sm:$0xff]
    %v989 = vld [vmem:[#allocation5 + $0x18a8] sm:$0xff]
    %v990 = vld [vmem:[#allocation5 + $0x18b0] sm:$0xff]
    %v991 = vld [vmem:[#allocation5 + $0x18b8] sm:$0xff]
    %v992 = vld [vmem:[#allocation5 + $0x18c0] sm:$0xff]
    %v993 = vld [vmem:[#allocation5 + $0x18c8] sm:$0xff]
    %v994 = vld [vmem:[#allocation5 + $0x18d0] sm:$0xff]
    %v995 = vld [vmem:[#allocation5 + $0x18d8] sm:$0xff]
    %v996 = vld [vmem:[#allocation5 + $0x18e0] sm:$0xff]
    %v997 = vld [vmem:[#allocation5 + $0x18e8] sm:$0xff]
    %v998 = vld [vmem:[#allocation5 + $0x18f0] sm:$0xff]
    %v999 = vld [vmem:[#allocation5 + $0x18f8] sm:$0xff]
    %v1000 = vld [vmem:[#allocation5 + $0x1900] sm:$0xff]
    %v1001 = vld [vmem:[#allocation5 + $0x1908] sm:$0xff]
    %v1002 = vld [vmem:[#allocation5 + $0x1910] sm:$0xff]
    %v1003 = vld [vmem:[#allocation5 + $0x1918] sm:$0xff]
    %v1004 = vld [vmem:[#allocation5 + $0x1920] sm:$0xff]
    %v1005 = vld [vmem:[#allocation5 + $0x1928] sm:$0xff]
    %v1006 = vld [vmem:[#allocation5 + $0x1930] sm:$0xff]
    %v1007 = vld [vmem:[#allocation5 + $0x1938] sm:$0xff]
    %v1008 = vld [vmem:[#allocation5 + $0x1940] sm:$0xff]
    %v1009 = vld [vmem:[#allocation5 + $0x1948] sm:$0xff]
    %v1010 = vld [vmem:[#allocation5 + $0x1950] sm:$0xff]
    %v1011 = vld [vmem:[#allocation5 + $0x1958] sm:$0xff]
    %v1012 = vld [vmem:[#allocation5 + $0x1960] sm:$0xff]
    %v1013 = vld [vmem:[#allocation5 + $0x1968] sm:$0xff]
    %v1014 = vld [vmem:[#allocation5 + $0x1970] sm:$0xff]
    %v1015 = vld [vmem:[#allocation5 + $0x1978] sm:$0xff]
    %v1016 = vld [vmem:[#allocation5 + $0x1980] sm:$0xff]
    %v1017 = vld [vmem:[#allocation5 + $0x1988] sm:$0xff]
    %v1018 = vld [vmem:[#allocation5 + $0x1990] sm:$0xff]
    %v1019 = vld [vmem:[#allocation5 + $0x1998] sm:$0xff]
    %v1020 = vld [vmem:[#allocation5 + $0x19a0] sm:$0xff]
    %v1021 = vld [vmem:[#allocation5 + $0x19a8] sm:$0xff]
    %v1022 = vld [vmem:[#allocation5 + $0x19b0] sm:$0xff]
    %v1023 = vld [vmem:[#allocation5 + $0x19b8] sm:$0xff]
    %v1024 = vld [vmem:[#allocation5 + $0x19c0] sm:$0xff]
    %v1025 = vld [vmem:[#allocation5 + $0x19c8] sm:$0xff]
    %v1026 = vld [vmem:[#allocation5 + $0x19d0] sm:$0xff]
    %v1027 = vld [vmem:[#allocation5 + $0x19d8] sm:$0xff]
    %v1028 = vld [vmem:[#allocation5 + $0x19e0] sm:$0xff]
    %v1029 = vld [vmem:[#allocation5 + $0x19e8] sm:$0xff]
    %v1030 = vld [vmem:[#allocation5 + $0x19f0] sm:$0xff]
    %v1031 = vld [vmem:[#allocation5 + $0x19f8] sm:$0xff]
    %v1032 = vld [vmem:[#allocation5 + $0x1a00] sm:$0xff]
    %v1033 = vld [vmem:[#allocation5 + $0x1a08] sm:$0xff]
    %v1034 = vld [vmem:[#allocation5 + $0x1a10] sm:$0xff]
    %v1035 = vld [vmem:[#allocation5 + $0x1a18] sm:$0xff]
    %v1036 = vld [vmem:[#allocation5 + $0x1a20] sm:$0xff]
    %v1037 = vld [vmem:[#allocation5 + $0x1a28] sm:$0xff]
    %v1038 = vld [vmem:[#allocation5 + $0x1a30] sm:$0xff]
    %v1039 = vld [vmem:[#allocation5 + $0x1a38] sm:$0xff]
    %v1040 = vld [vmem:[#allocation5 + $0x1a40] sm:$0xff]
    %v1041 = vld [vmem:[#allocation5 + $0x1a48] sm:$0xff]
    %v1042 = vld [vmem:[#allocation5 + $0x1a50] sm:$0xff]
    %v1043 = vld [vmem:[#allocation5 + $0x1a58] sm:$0xff]
    %v1044 = vld [vmem:[#allocation5 + $0x1a60] sm:$0xff]
    %v1045 = vld [vmem:[#allocation5 + $0x1a68] sm:$0xff]
    %v1046 = vld [vmem:[#allocation5 + $0x1a70] sm:$0xff]
    %v1047 = vld [vmem:[#allocation5 + $0x1a78] sm:$0xff]
    %v1048 = vld [vmem:[#allocation5 + $0x1a80] sm:$0xff]
    %v1049 = vld [vmem:[#allocation5 + $0x1a88] sm:$0xff]
    %v1050 = vld [vmem:[#allocation5 + $0x1a90] sm:$0xff]
    %v1051 = vld [vmem:[#allocation5 + $0x1a98] sm:$0xff]
    %v1052 = vld [vmem:[#allocation5 + $0x1aa0] sm:$0xff]
    %v1053 = vld [vmem:[#allocation5 + $0x1aa8] sm:$0xff]
    %v1054 = vld [vmem:[#allocation5 + $0x1ab0] sm:$0xff]
    %v1055 = vld [vmem:[#allocation5 + $0x1ab8] sm:$0xff]
    %v1056 = vld [vmem:[#allocation5 + $0x1ac0] sm:$0xff]
    %v1057 = vld [vmem:[#allocation5 + $0x1ac8] sm:$0xff]
    %v1058 = vld [vmem:[#allocation5 + $0x1ad0] sm:$0xff]
    %v1059 = vld [vmem:[#allocation5 + $0x1ad8] sm:$0xff]
    %v1060 = vld [vmem:[#allocation5 + $0x1ae0] sm:$0xff]
    %v1061 = vld [vmem:[#allocation5 + $0x1ae8] sm:$0xff]
    %v1062 = vld [vmem:[#allocation5 + $0x1af0] sm:$0xff]
    %v1063 = vld [vmem:[#allocation5 + $0x1af8] sm:$0xff]
    %v1064 = vld [vmem:[#allocation5 + $0x1b00] sm:$0xff]
    %v1065 = vld [vmem:[#allocation5 + $0x1b08] sm:$0xff]
    %v1066 = vld [vmem:[#allocation5 + $0x1b10] sm:$0xff]
    %v1067 = vld [vmem:[#allocation5 + $0x1b18] sm:$0xff]
    %v1068 = vld [vmem:[#allocation5 + $0x1b20] sm:$0xff]
    %v1069 = vld [vmem:[#allocation5 + $0x1b28] sm:$0xff]
    %v1070 = vld [vmem:[#allocation5 + $0x1b30] sm:$0xff]
    %v1071 = vld [vmem:[#allocation5 + $0x1b38] sm:$0xff]
    %v1072 = vld [vmem:[#allocation5 + $0x1b40] sm:$0xff]
    %v1073 = vld [vmem:[#allocation5 + $0x1b48] sm:$0xff]
    %v1074 = vld [vmem:[#allocation5 + $0x1b50] sm:$0xff]
    %v1075 = vld [vmem:[#allocation5 + $0x1b58] sm:$0xff]
    %v1076 = vld [vmem:[#allocation5 + $0x1b60] sm:$0xff]
    %v1077 = vld [vmem:[#allocation5 + $0x1b68] sm:$0xff]
    %v1078 = vld [vmem:[#allocation5 + $0x1b70] sm:$0xff]
    %v1079 = vld [vmem:[#allocation5 + $0x1b78] sm:$0xff]
    %v1080 = vld [vmem:[#allocation5 + $0x1b80] sm:$0xff]
    %v1081 = vld [vmem:[#allocation5 + $0x1b88] sm:$0xff]
    %v1082 = vld [vmem:[#allocation5 + $0x1b90] sm:$0xff]
    %v1083 = vld [vmem:[#allocation5 + $0x1b98] sm:$0xff]
    %v1084 = vld [vmem:[#allocation5 + $0x1ba0] sm:$0xff]
    %v1085 = vld [vmem:[#allocation5 + $0x1ba8] sm:$0xff]
    %v1086 = vld [vmem:[#allocation5 + $0x1bb0] sm:$0xff]
    %v1087 = vld [vmem:[#allocation5 + $0x1bb8] sm:$0xff]
    %v1088 = vld [vmem:[#allocation5 + $0x1bc0] sm:$0xff]
    %v1089 = vld [vmem:[#allocation5 + $0x1bc8] sm:$0xff]
    %v1090 = vld [vmem:[#allocation5 + $0x1bd0] sm:$0xff]
    %v1091 = vld [vmem:[#allocation5 + $0x1bd8] sm:$0xff]
    %v1092 = vld [vmem:[#allocation5 + $0x1be0] sm:$0xff]
    %v1093 = vld [vmem:[#allocation5 + $0x1be8] sm:$0xff]
    %v1094 = vld [vmem:[#allocation5 + $0x1bf0] sm:$0xff]
    %v1095 = vld [vmem:[#allocation5 + $0x1bf8] sm:$0xff]
    %v1096 = vld [vmem:[#allocation5 + $0x1c00] sm:$0xff]
    %v1097 = vld [vmem:[#allocation5 + $0x1c08] sm:$0xff]
    %v1098 = vld [vmem:[#allocation5 + $0x1c10] sm:$0xff]
    %v1099 = vld [vmem:[#allocation5 + $0x1c18] sm:$0xff]
    %v1100 = vld [vmem:[#allocation5 + $0x1c20] sm:$0xff]
    %v1101 = vld [vmem:[#allocation5 + $0x1c28] sm:$0xff]
    %v1102 = vld [vmem:[#allocation5 + $0x1c30] sm:$0xff]
    %v1103 = vld [vmem:[#allocation5 + $0x1c38] sm:$0xff]
    %v1104 = vld [vmem:[#allocation5 + $0x1c40] sm:$0xff]
    %v1105 = vld [vmem:[#allocation5 + $0x1c48] sm:$0xff]
    %v1106 = vld [vmem:[#allocation5 + $0x1c50] sm:$0xff]
    %v1107 = vld [vmem:[#allocation5 + $0x1c58] sm:$0xff]
    %v1108 = vld [vmem:[#allocation5 + $0x1c60] sm:$0xff]
    %v1109 = vld [vmem:[#allocation5 + $0x1c68] sm:$0xff]
    %v1110 = vld [vmem:[#allocation5 + $0x1c70] sm:$0xff]
    %v1111 = vld [vmem:[#allocation5 + $0x1c78] sm:$0xff]
    %v1112 = vld [vmem:[#allocation5 + $0x1c80] sm:$0xff]
    %v1113 = vld [vmem:[#allocation5 + $0x1c88] sm:$0xff]
    %v1114 = vld [vmem:[#allocation5 + $0x1c90] sm:$0xff]
    %v1115 = vld [vmem:[#allocation5 + $0x1c98] sm:$0xff]
    %v1116 = vld [vmem:[#allocation5 + $0x1ca0] sm:$0xff]
    %v1117 = vld [vmem:[#allocation5 + $0x1ca8] sm:$0xff]
    %v1118 = vld [vmem:[#allocation5 + $0x1cb0] sm:$0xff]
    %v1119 = vld [vmem:[#allocation5 + $0x1cb8] sm:$0xff]
    %v1120 = vld [vmem:[#allocation5 + $0x1cc0] sm:$0xff]
    %v1121 = vld [vmem:[#allocation5 + $0x1cc8] sm:$0xff]
    %v1122 = vld [vmem:[#allocation5 + $0x1cd0] sm:$0xff]
    %v1123 = vld [vmem:[#allocation5 + $0x1cd8] sm:$0xff]
    %v1124 = vld [vmem:[#allocation5 + $0x1ce0] sm:$0xff]
    %v1125 = vld [vmem:[#allocation5 + $0x1ce8] sm:$0xff]
    %v1126 = vld [vmem:[#allocation5 + $0x1cf0] sm:$0xff]
    %v1127 = vld [vmem:[#allocation5 + $0x1cf8] sm:$0xff]
    %v1128 = vld [vmem:[#allocation5 + $0x1d00] sm:$0xff]
    %v1129 = vld [vmem:[#allocation5 + $0x1d08] sm:$0xff]
    %v1130 = vld [vmem:[#allocation5 + $0x1d10] sm:$0xff]
    %v1131 = vld [vmem:[#allocation5 + $0x1d18] sm:$0xff]
    %v1132 = vld [vmem:[#allocation5 + $0x1d20] sm:$0xff]
    %v1133 = vld [vmem:[#allocation5 + $0x1d28] sm:$0xff]
    %v1134 = vld [vmem:[#allocation5 + $0x1d30] sm:$0xff]
    %v1135 = vld [vmem:[#allocation5 + $0x1d38] sm:$0xff]
    %v1136 = vld [vmem:[#allocation5 + $0x1d40] sm:$0xff]
    %v1137 = vld [vmem:[#allocation5 + $0x1d48] sm:$0xff]
    %v1138 = vld [vmem:[#allocation5 + $0x1d50] sm:$0xff]
    %v1139 = vld [vmem:[#allocation5 + $0x1d58] sm:$0xff]
    %v1140 = vld [vmem:[#allocation5 + $0x1d60] sm:$0xff]
    %v1141 = vld [vmem:[#allocation5 + $0x1d68] sm:$0xff]
    %v1142 = vld [vmem:[#allocation5 + $0x1d70] sm:$0xff]
    %v1143 = vld [vmem:[#allocation5 + $0x1d78] sm:$0xff]
    %v1144 = vld [vmem:[#allocation5 + $0x1d80] sm:$0xff]
    %v1145 = vld [vmem:[#allocation5 + $0x1d88] sm:$0xff]
    %v1146 = vld [vmem:[#allocation5 + $0x1d90] sm:$0xff]
    %v1147 = vld [vmem:[#allocation5 + $0x1d98] sm:$0xff]
    %v1148 = vld [vmem:[#allocation5 + $0x1da0] sm:$0xff]
    %v1149 = vld [vmem:[#allocation5 + $0x1da8] sm:$0xff]
    %v1150 = vld [vmem:[#allocation5 + $0x1db0] sm:$0xff]
    %v1151 = vld [vmem:[#allocation5 + $0x1db8] sm:$0xff]
    %v1152 = vld [vmem:[#allocation5 + $0x1dc0] sm:$0xff]
    %v1153 = vld [vmem:[#allocation5 + $0x1dc8] sm:$0xff]
    %v1154 = vld [vmem:[#allocation5 + $0x1dd0] sm:$0xff]
    %v1155 = vld [vmem:[#allocation5 + $0x1dd8] sm:$0xff]
    %v1156 = vld [vmem:[#allocation5 + $0x1de0] sm:$0xff]
    %v1157 = vld [vmem:[#allocation5 + $0x1de8] sm:$0xff]
    %v1158 = vld [vmem:[#allocation5 + $0x1df0] sm:$0xff]
    %v1159 = vld [vmem:[#allocation5 + $0x1df8] sm:$0xff]
    %v1160 = vld [vmem:[#allocation5 + $0x1e00] sm:$0xff]
    %v1161 = vld [vmem:[#allocation5 + $0x1e08] sm:$0xff]
    %v1162 = vld [vmem:[#allocation5 + $0x1e10] sm:$0xff]
    %v1163 = vld [vmem:[#allocation5 + $0x1e18] sm:$0xff]
    %v1164 = vld [vmem:[#allocation5 + $0x1e20] sm:$0xff]
    %v1165 = vld [vmem:[#allocation5 + $0x1e28] sm:$0xff]
    %v1166 = vld [vmem:[#allocation5 + $0x1e30] sm:$0xff]
    %v1167 = vld [vmem:[#allocation5 + $0x1e38] sm:$0xff]
    %v1168 = vld [vmem:[#allocation5 + $0x1e40] sm:$0xff]
    %v1169 = vld [vmem:[#allocation5 + $0x1e48] sm:$0xff]
    %v1170 = vld [vmem:[#allocation5 + $0x1e50] sm:$0xff]
    %v1171 = vld [vmem:[#allocation5 + $0x1e58] sm:$0xff]
    %v1172 = vld [vmem:[#allocation5 + $0x1e60] sm:$0xff]
    %v1173 = vld [vmem:[#allocation5 + $0x1e68] sm:$0xff]
    %v1174 = vld [vmem:[#allocation5 + $0x1e70] sm:$0xff]
    %v1175 = vld [vmem:[#allocation5 + $0x1e78] sm:$0xff]
    %v1176 = vld [vmem:[#allocation5 + $0x1e80] sm:$0xff]
    %v1177 = vld [vmem:[#allocation5 + $0x1e88] sm:$0xff]
    %v1178 = vld [vmem:[#allocation5 + $0x1e90] sm:$0xff]
    %v1179 = vld [vmem:[#allocation5 + $0x1e98] sm:$0xff]
    %v1180 = vld [vmem:[#allocation5 + $0x1ea0] sm:$0xff]
    %v1181 = vld [vmem:[#allocation5 + $0x1ea8] sm:$0xff]
    %v1182 = vld [vmem:[#allocation5 + $0x1eb0] sm:$0xff]
    %v1183 = vld [vmem:[#allocation5 + $0x1eb8] sm:$0xff]
    %v1184 = vld [vmem:[#allocation5 + $0x1ec0] sm:$0xff]
    %v1185 = vld [vmem:[#allocation5 + $0x1ec8] sm:$0xff]
    %v1186 = vld [vmem:[#allocation5 + $0x1ed0] sm:$0xff]
    %v1187 = vld [vmem:[#allocation5 + $0x1ed8] sm:$0xff]
    %v1188 = vld [vmem:[#allocation5 + $0x1ee0] sm:$0xff]
    %v1189 = vld [vmem:[#allocation5 + $0x1ee8] sm:$0xff]
    %v1190 = vld [vmem:[#allocation5 + $0x1ef0] sm:$0xff]
    %v1191 = vld [vmem:[#allocation5 + $0x1ef8] sm:$0xff]
    %v1192 = vld [vmem:[#allocation5 + $0x1f00] sm:$0xff]
    %v1193 = vld [vmem:[#allocation5 + $0x1f08] sm:$0xff]
    %v1194 = vld [vmem:[#allocation5 + $0x1f10] sm:$0xff]
    %v1195 = vld [vmem:[#allocation5 + $0x1f18] sm:$0xff]
    %v1196 = vld [vmem:[#allocation5 + $0x1f20] sm:$0xff]
    %v1197 = vld [vmem:[#allocation5 + $0x1f28] sm:$0xff]
    %v1198 = vld [vmem:[#allocation5 + $0x1f30] sm:$0xff]
    %v1199 = vld [vmem:[#allocation5 + $0x1f38] sm:$0xff]
    %v1200 = vld [vmem:[#allocation5 + $0x1f40] sm:$0xff]
    %v1201 = vld [vmem:[#allocation5 + $0x1f48] sm:$0xff]
    %v1202 = vld [vmem:[#allocation5 + $0x1f50] sm:$0xff]
    %v1203 = vld [vmem:[#allocation5 + $0x1f58] sm:$0xff]
    %v1204 = vld [vmem:[#allocation5 + $0x1f60] sm:$0xff]
    %v1205 = vld [vmem:[#allocation5 + $0x1f68] sm:$0xff]
    %v1206 = vld [vmem:[#allocation5 + $0x1f70] sm:$0xff]
    %v1207 = vld [vmem:[#allocation5 + $0x1f78] sm:$0xff]
    %v1208 = vld [vmem:[#allocation5 + $0x1f80] sm:$0xff]
    %v1209 = vld [vmem:[#allocation5 + $0x1f88] sm:$0xff]
    %v1210 = vld [vmem:[#allocation5 + $0x1f90] sm:$0xff]
    %v1211 = vld [vmem:[#allocation5 + $0x1f98] sm:$0xff]
    %v1212 = vld [vmem:[#allocation5 + $0x1fa0] sm:$0xff]
    %v1213 = vld [vmem:[#allocation5 + $0x1fa8] sm:$0xff]
    %v1214 = vld [vmem:[#allocation5 + $0x1fb0] sm:$0xff]
    %v1215 = vld [vmem:[#allocation5 + $0x1fb8] sm:$0xff]
    %v1216 = vld [vmem:[#allocation5 + $0x1fc0] sm:$0xff]
    %v1217 = vld [vmem:[#allocation5 + $0x1fc8] sm:$0xff]
    %v1218 = vld [vmem:[#allocation5 + $0x1fd0] sm:$0xff]
    %v1219 = vld [vmem:[#allocation5 + $0x1fd8] sm:$0xff]
    %v1220 = vld [vmem:[#allocation5 + $0x1fe0] sm:$0xff]
    %v1221 = vld [vmem:[#allocation5 + $0x1fe8] sm:$0xff]
    %v1222 = vld [vmem:[#allocation5 + $0x1ff0] sm:$0xff]
    %v1223 = vld [vmem:[#allocation5 + $0x1ff8] sm:$0xff]
    %v1224 = vld [vmem:[#allocation5 + $0x2000] sm:$0xff]
    %v1225 = vld [vmem:[#allocation5 + $0x2008] sm:$0xff]
    %v1226 = vld [vmem:[#allocation5 + $0x2010] sm:$0xff]
    %v1227 = vld [vmem:[#allocation5 + $0x2018] sm:$0xff]
    %v1228 = vld [vmem:[#allocation5 + $0x2020] sm:$0xff]
    %v1229 = vld [vmem:[#allocation5 + $0x2028] sm:$0xff]
    %v1230 = vld [vmem:[#allocation5 + $0x2030] sm:$0xff]
    %v1231 = vld [vmem:[#allocation5 + $0x2038] sm:$0xff]
    %v1232 = vld [vmem:[#allocation5 + $0x2040] sm:$0xff]
    %v1233 = vld [vmem:[#allocation5 + $0x2048] sm:$0xff]
    %v1234 = vld [vmem:[#allocation5 + $0x2050] sm:$0xff]
    %v1235 = vld [vmem:[#allocation5 + $0x2058] sm:$0xff]
    %v1236 = vld [vmem:[#allocation5 + $0x2060] sm:$0xff]
    %v1237 = vld [vmem:[#allocation5 + $0x2068] sm:$0xff]
    %v1238 = vld [vmem:[#allocation5 + $0x2070] sm:$0xff]
    %v1239 = vld [vmem:[#allocation5 + $0x2078] sm:$0xff]
    %v1240 = vld [vmem:[#allocation5 + $0x2080] sm:$0xff]
    %v1241 = vld [vmem:[#allocation5 + $0x2088] sm:$0xff]
    %v1242 = vld [vmem:[#allocation5 + $0x2090] sm:$0xff]
    %v1243 = vld [vmem:[#allocation5 + $0x2098] sm:$0xff]
    %v1244 = vld [vmem:[#allocation5 + $0x20a0] sm:$0xff]
    %v1245 = vld [vmem:[#allocation5 + $0x20a8] sm:$0xff]
    %v1246 = vld [vmem:[#allocation5 + $0x20b0] sm:$0xff]
    %v1247 = vld [vmem:[#allocation5 + $0x20b8] sm:$0xff]
    %v1248 = vld [vmem:[#allocation5 + $0x20c0] sm:$0xff]
    %v1249 = vld [vmem:[#allocation5 + $0x20c8] sm:$0xff]
    %v1250 = vld [vmem:[#allocation5 + $0x20d0] sm:$0xff]
    %v1251 = vld [vmem:[#allocation5 + $0x20d8] sm:$0xff]
    %v1252 = vld [vmem:[#allocation5 + $0x20e0] sm:$0xff]
    %v1253 = vld [vmem:[#allocation5 + $0x20e8] sm:$0xff]
    %v1254 = vld [vmem:[#allocation5 + $0x20f0] sm:$0xff]
    %v1255 = vld [vmem:[#allocation5 + $0x20f8] sm:$0xff]
    %v1256 = vld [vmem:[#allocation5 + $0x2100] sm:$0xff]
    %v1257 = vld [vmem:[#allocation5 + $0x2108] sm:$0xff]
    %v1258 = vld [vmem:[#allocation5 + $0x2110] sm:$0xff]
    %v1259 = vld [vmem:[#allocation5 + $0x2118] sm:$0xff]
    %v1260 = vld [vmem:[#allocation5 + $0x2120] sm:$0xff]
    %v1261 = vld [vmem:[#allocation5 + $0x2128] sm:$0xff]
    %v1262 = vld [vmem:[#allocation5 + $0x2130] sm:$0xff]
    %v1263 = vld [vmem:[#allocation5 + $0x2138] sm:$0xff]
    %v1264 = vld [vmem:[#allocation5 + $0x2140] sm:$0xff]
    %v1265 = vld [vmem:[#allocation5 + $0x2148] sm:$0xff]
    %v1266 = vld [vmem:[#allocation5 + $0x2150] sm:$0xff]
    %v1267 = vld [vmem:[#allocation5 + $0x2158] sm:$0xff]
    %v1268 = vld [vmem:[#allocation5 + $0x2160] sm:$0xff]
    %v1269 = vld [vmem:[#allocation5 + $0x2168] sm:$0xff]
    %v1270 = vld [vmem:[#allocation5 + $0x2170] sm:$0xff]
    %v1271 = vld [vmem:[#allocation5 + $0x2178] sm:$0xff]
    %v1272 = vld [vmem:[#allocation5 + $0x2180] sm:$0xff]
    %v1273 = vld [vmem:[#allocation5 + $0x2188] sm:$0xff]
    %v1274 = vld [vmem:[#allocation5 + $0x2190] sm:$0xff]
    %v1275 = vld [vmem:[#allocation5 + $0x2198] sm:$0xff]
    %v1276 = vld [vmem:[#allocation5 + $0x21a0] sm:$0xff]
    %v1277 = vld [vmem:[#allocation5 + $0x21a8] sm:$0xff]
    %v1278 = vld [vmem:[#allocation5 + $0x21b0] sm:$0xff]
    %v1279 = vld [vmem:[#allocation5 + $0x21b8] sm:$0xff]
    %v1280 = vld [vmem:[#allocation5 + $0x21c0] sm:$0xff]
    %v1281 = vld [vmem:[#allocation5 + $0x21c8] sm:$0xff]
    %v1282 = vld [vmem:[#allocation5 + $0x21d0] sm:$0xff]
    %v1283 = vld [vmem:[#allocation5 + $0x21d8] sm:$0xff]
    %v1284 = vld [vmem:[#allocation5 + $0x21e0] sm:$0xff]
    %v1285 = vld [vmem:[#allocation5 + $0x21e8] sm:$0xff]
    %v1286 = vld [vmem:[#allocation5 + $0x21f0] sm:$0xff]
    %v1287 = vld [vmem:[#allocation5 + $0x21f8] sm:$0xff]
    %v1288 = vld [vmem:[#allocation5 + $0x2200] sm:$0xff]
    %v1289 = vld [vmem:[#allocation5 + $0x2208] sm:$0xff]
    %v1290 = vld [vmem:[#allocation5 + $0x2210] sm:$0xff]
    %v1291 = vld [vmem:[#allocation5 + $0x2218] sm:$0xff]
    %v1292 = vld [vmem:[#allocation5 + $0x2220] sm:$0xff]
    %v1293 = vld [vmem:[#allocation5 + $0x2228] sm:$0xff]
    %v1294 = vld [vmem:[#allocation5 + $0x2230] sm:$0xff]
    %v1295 = vld [vmem:[#allocation5 + $0x2238] sm:$0xff]
    %v1296 = vld [vmem:[#allocation5 + $0x2240] sm:$0xff]
    %v1297 = vld [vmem:[#allocation5 + $0x2248] sm:$0xff]
    %v1298 = vld [vmem:[#allocation5 + $0x2250] sm:$0xff]
    %v1299 = vld [vmem:[#allocation5 + $0x2258] sm:$0xff]
    %v1300 = vld [vmem:[#allocation5 + $0x2260] sm:$0xff]
    %v1301 = vld [vmem:[#allocation5 + $0x2268] sm:$0xff]
    %v1302 = vld [vmem:[#allocation5 + $0x2270] sm:$0xff]
    %v1303 = vld [vmem:[#allocation5 + $0x2278] sm:$0xff]
    %v1304 = vld [vmem:[#allocation5 + $0x2280] sm:$0xff]
    %v1305 = vld [vmem:[#allocation5 + $0x2288] sm:$0xff]
    %v1306 = vld [vmem:[#allocation5 + $0x2290] sm:$0xff]
    %v1307 = vld [vmem:[#allocation5 + $0x2298] sm:$0xff]
    %v1308 = vld [vmem:[#allocation5 + $0x22a0] sm:$0xff]
    %v1309 = vld [vmem:[#allocation5 + $0x22a8] sm:$0xff]
    %v1310 = vld [vmem:[#allocation5 + $0x22b0] sm:$0xff]
    %v1311 = vld [vmem:[#allocation5 + $0x22b8] sm:$0xff]
    %v1312 = vld [vmem:[#allocation5 + $0x22c0] sm:$0xff]
    %v1313 = vld [vmem:[#allocation5 + $0x22c8] sm:$0xff]
    %v1314 = vld [vmem:[#allocation5 + $0x22d0] sm:$0xff]
    %v1315 = vld [vmem:[#allocation5 + $0x22d8] sm:$0xff]
    %v1316 = vld [vmem:[#allocation5 + $0x22e0] sm:$0xff]
    %v1317 = vld [vmem:[#allocation5 + $0x22e8] sm:$0xff]
    %v1318 = vld [vmem:[#allocation5 + $0x22f0] sm:$0xff]
    %v1319 = vld [vmem:[#allocation5 + $0x22f8] sm:$0xff]
    %v1320 = vld [vmem:[#allocation5 + $0x2300] sm:$0xff]
    %v1321 = vld [vmem:[#allocation5 + $0x2308] sm:$0xff]
    %v1322 = vld [vmem:[#allocation5 + $0x2310] sm:$0xff]
    %v1323 = vld [vmem:[#allocation5 + $0x2318] sm:$0xff]
    %v1324 = vld [vmem:[#allocation5 + $0x2320] sm:$0xff]
    %v1325 = vld [vmem:[#allocation5 + $0x2328] sm:$0xff]
    %v1326 = vld [vmem:[#allocation5 + $0x2330] sm:$0xff]
    %v1327 = vld [vmem:[#allocation5 + $0x2338] sm:$0xff]
    %v1328 = vld [vmem:[#allocation5 + $0x2340] sm:$0xff]
    %v1329 = vld [vmem:[#allocation5 + $0x2348] sm:$0xff]
    %v1330 = vld [vmem:[#allocation5 + $0x2350] sm:$0xff]
    %v1331 = vld [vmem:[#allocation5 + $0x2358] sm:$0xff]
    %v1332 = vld [vmem:[#allocation5 + $0x2360] sm:$0xff]
    %v1333 = vld [vmem:[#allocation5 + $0x2368] sm:$0xff]
    %v1334 = vld [vmem:[#allocation5 + $0x2370] sm:$0xff]
    %v1335 = vld [vmem:[#allocation5 + $0x2378] sm:$0xff]
    %v1336 = vld [vmem:[#allocation5 + $0x2380] sm:$0xff]
    %v1337 = vld [vmem:[#allocation5 + $0x2388] sm:$0xff]
    %v1338 = vld [vmem:[#allocation5 + $0x2390] sm:$0xff]
    %v1339 = vld [vmem:[#allocation5 + $0x2398] sm:$0xff]
    %v1340 = vld [vmem:[#allocation5 + $0x23a0] sm:$0xff]
    %v1341 = vld [vmem:[#allocation5 + $0x23a8] sm:$0xff]
    %v1342 = vld [vmem:[#allocation5 + $0x23b0] sm:$0xff]
    %v1343 = vld [vmem:[#allocation5 + $0x23b8] sm:$0xff]
    %v1344 = vld [vmem:[#allocation5 + $0x23c0] sm:$0xff]
    %v1345 = vld [vmem:[#allocation5 + $0x23c8] sm:$0xff]
    %v1346 = vld [vmem:[#allocation5 + $0x23d0] sm:$0xff]
    %v1347 = vld [vmem:[#allocation5 + $0x23d8] sm:$0xff]
    %v1348 = vld [vmem:[#allocation5 + $0x23e0] sm:$0xff]
    %v1349 = vld [vmem:[#allocation5 + $0x23e8] sm:$0xff]
    %v1350 = vld [vmem:[#allocation5 + $0x23f0] sm:$0xff]
    %v1351 = vld [vmem:[#allocation5 + $0x23f8] sm:$0xff]
    %v1352 = vld [vmem:[#allocation5 + $0x2400] sm:$0xff]
    %v1353 = vld [vmem:[#allocation5 + $0x2408] sm:$0xff]
    %v1354 = vld [vmem:[#allocation5 + $0x2410] sm:$0xff]
    %v1355 = vld [vmem:[#allocation5 + $0x2418] sm:$0xff]
    %v1356 = vld [vmem:[#allocation5 + $0x2420] sm:$0xff]
    %v1357 = vld [vmem:[#allocation5 + $0x2428] sm:$0xff]
    %v1358 = vld [vmem:[#allocation5 + $0x2430] sm:$0xff]
    %v1359 = vld [vmem:[#allocation5 + $0x2438] sm:$0xff]
    %v1360 = vld [vmem:[#allocation5 + $0x2440] sm:$0xff]
    %v1361 = vld [vmem:[#allocation5 + $0x2448] sm:$0xff]
    %v1362 = vld [vmem:[#allocation5 + $0x2450] sm:$0xff]
    %v1363 = vld [vmem:[#allocation5 + $0x2458] sm:$0xff]
    %v1364 = vld [vmem:[#allocation5 + $0x2460] sm:$0xff]
    %v1365 = vld [vmem:[#allocation5 + $0x2468] sm:$0xff]
    %v1366 = vld [vmem:[#allocation5 + $0x2470] sm:$0xff]
    %v1367 = vld [vmem:[#allocation5 + $0x2478] sm:$0xff]
    %v1368 = vld [vmem:[#allocation5 + $0x2480] sm:$0xff]
    %v1369 = vld [vmem:[#allocation5 + $0x2488] sm:$0xff]
    %v1370 = vld [vmem:[#allocation5 + $0x2490] sm:$0xff]
    %v1371 = vld [vmem:[#allocation5 + $0x2498] sm:$0xff]
    %v1372 = vld [vmem:[#allocation5 + $0x24a0] sm:$0xff]
    %v1373 = vld [vmem:[#allocation5 + $0x24a8] sm:$0xff]
    %v1374 = vld [vmem:[#allocation5 + $0x24b0] sm:$0xff]
    %v1375 = vld [vmem:[#allocation5 + $0x24b8] sm:$0xff]
    %v1376 = vld [vmem:[#allocation5 + $0x24c0] sm:$0xff]
    %v1377 = vld [vmem:[#allocation5 + $0x24c8] sm:$0xff]
    %v1378 = vld [vmem:[#allocation5 + $0x24d0] sm:$0xff]
    %v1379 = vld [vmem:[#allocation5 + $0x24d8] sm:$0xff]
    %v1380 = vld [vmem:[#allocation5 + $0x24e0] sm:$0xff]
    %v1381 = vld [vmem:[#allocation5 + $0x24e8] sm:$0xff]
    %v1382 = vld [vmem:[#allocation5 + $0x24f0] sm:$0xff]
    %v1383 = vld [vmem:[#allocation5 + $0x24f8] sm:$0xff]
    %v1384 = vld [vmem:[#allocation5 + $0x2500] sm:$0xff]
    %v1385 = vld [vmem:[#allocation5 + $0x2508] sm:$0xff]
    %v1386 = vld [vmem:[#allocation5 + $0x2510] sm:$0xff]
    %v1387 = vld [vmem:[#allocation5 + $0x2518] sm:$0xff]
    %v1388 = vld [vmem:[#allocation5 + $0x2520] sm:$0xff]
    %v1389 = vld [vmem:[#allocation5 + $0x2528] sm:$0xff]
    %v1390 = vld [vmem:[#allocation5 + $0x2530] sm:$0xff]
    %v1391 = vld [vmem:[#allocation5 + $0x2538] sm:$0xff]
    %v1392 = vld [vmem:[#allocation5 + $0x2540] sm:$0xff]
    %v1393 = vld [vmem:[#allocation5 + $0x2548] sm:$0xff]
    %v1394 = vld [vmem:[#allocation5 + $0x2550] sm:$0xff]
    %v1395 = vld [vmem:[#allocation5 + $0x2558] sm:$0xff]
    %v1396 = vld [vmem:[#allocation5 + $0x2560] sm:$0xff]
    %v1397 = vld [vmem:[#allocation5 + $0x2568] sm:$0xff]
    %v1398 = vld [vmem:[#allocation5 + $0x2570] sm:$0xff]
    %v1399 = vld [vmem:[#allocation5 + $0x2578] sm:$0xff]
    %v1400 = vld [vmem:[#allocation5 + $0x2580] sm:$0xff]
    %v1401 = vld [vmem:[#allocation5 + $0x2588] sm:$0xff]
    %v1402 = vld [vmem:[#allocation5 + $0x2590] sm:$0xff]
    %v1403 = vld [vmem:[#allocation5 + $0x2598] sm:$0xff]
    %v1404 = vld [vmem:[#allocation5 + $0x25a0] sm:$0xff]
    %v1405 = vld [vmem:[#allocation5 + $0x25a8] sm:$0xff]
    %v1406 = vld [vmem:[#allocation5 + $0x25b0] sm:$0xff]
    %v1407 = vld [vmem:[#allocation5 + $0x25b8] sm:$0xff]
    %v1408 = vld [vmem:[#allocation5 + $0x25c0] sm:$0xff]
    %v1409 = vld [vmem:[#allocation5 + $0x25c8] sm:$0xff]
    %v1410 = vld [vmem:[#allocation5 + $0x25d0] sm:$0xff]
    %v1411 = vld [vmem:[#allocation5 + $0x25d8] sm:$0xff]
    %v1412 = vld [vmem:[#allocation5 + $0x25e0] sm:$0xff]
    %v1413 = vld [vmem:[#allocation5 + $0x25e8] sm:$0xff]
    %v1414 = vld [vmem:[#allocation5 + $0x25f0] sm:$0xff]
    %v1415 = vld [vmem:[#allocation5 + $0x25f8] sm:$0xff]
    %v1416 = vld [vmem:[#allocation5 + $0x2600] sm:$0xff]
    %v1417 = vld [vmem:[#allocation5 + $0x2608] sm:$0xff]
    %v1418 = vld [vmem:[#allocation5 + $0x2610] sm:$0xff]
    %v1419 = vld [vmem:[#allocation5 + $0x2618] sm:$0xff]
    %v1420 = vld [vmem:[#allocation5 + $0x2620] sm:$0xff]
    %v1421 = vld [vmem:[#allocation5 + $0x2628] sm:$0xff]
    %v1422 = vld [vmem:[#allocation5 + $0x2630] sm:$0xff]
    %v1423 = vld [vmem:[#allocation5 + $0x2638] sm:$0xff]
    %v1424 = vld [vmem:[#allocation5 + $0x2640] sm:$0xff]
    %v1425 = vld [vmem:[#allocation5 + $0x2648] sm:$0xff]
    %v1426 = vld [vmem:[#allocation5 + $0x2650] sm:$0xff]
    %v1427 = vld [vmem:[#allocation5 + $0x2658] sm:$0xff]
    %v1428 = vld [vmem:[#allocation5 + $0x2660] sm:$0xff]
    %v1429 = vld [vmem:[#allocation5 + $0x2668] sm:$0xff]
    %v1430 = vld [vmem:[#allocation5 + $0x2670] sm:$0xff]
    %v1431 = vld [vmem:[#allocation5 + $0x2678] sm:$0xff]
    %v1432 = vld [vmem:[#allocation5 + $0x2680] sm:$0xff]
    %v1433 = vld [vmem:[#allocation5 + $0x2688] sm:$0xff]
    %v1434 = vld [vmem:[#allocation5 + $0x2690] sm:$0xff]
    %v1435 = vld [vmem:[#allocation5 + $0x2698] sm:$0xff]
    %v1436 = vld [vmem:[#allocation5 + $0x26a0] sm:$0xff]
    %v1437 = vld [vmem:[#allocation5 + $0x26a8] sm:$0xff]
    %v1438 = vld [vmem:[#allocation5 + $0x26b0] sm:$0xff]
    %v1439 = vld [vmem:[#allocation5 + $0x26b8] sm:$0xff]
    %v1440 = vld [vmem:[#allocation5 + $0x26c0] sm:$0xff]
    %v1441 = vld [vmem:[#allocation5 + $0x26c8] sm:$0xff]
    %v1442 = vld [vmem:[#allocation5 + $0x26d0] sm:$0xff]
    %v1443 = vld [vmem:[#allocation5 + $0x26d8] sm:$0xff]
    %v1444 = vld [vmem:[#allocation5 + $0x26e0] sm:$0xff]
    %v1445 = vld [vmem:[#allocation5 + $0x26e8] sm:$0xff]
    %v1446 = vld [vmem:[#allocation5 + $0x26f0] sm:$0xff]
    %v1447 = vld [vmem:[#allocation5 + $0x26f8] sm:$0xff]
    %v1448 = vld [vmem:[#allocation5 + $0x2700] sm:$0xff]
    %v1449 = vld [vmem:[#allocation5 + $0x2708] sm:$0xff]
    %v1450 = vld [vmem:[#allocation5 + $0x2710] sm:$0xff]
    %v1451 = vld [vmem:[#allocation5 + $0x2718] sm:$0xff]
    %v1452 = vld [vmem:[#allocation5 + $0x2720] sm:$0xff]
    %v1453 = vld [vmem:[#allocation5 + $0x2728] sm:$0xff]
    %v1454 = vld [vmem:[#allocation5 + $0x2730] sm:$0xff]
    %v1455 = vld [vmem:[#allocation5 + $0x2738] sm:$0xff]
    %v1456 = vld [vmem:[#allocation5 + $0x2740] sm:$0xff]
    %v1457 = vld [vmem:[#allocation5 + $0x2748] sm:$0xff]
    %v1458 = vld [vmem:[#allocation5 + $0x2750] sm:$0xff]
    %v1459 = vld [vmem:[#allocation5 + $0x2758] sm:$0xff]
    %v1460 = vld [vmem:[#allocation5 + $0x2760] sm:$0xff]
    %v1461 = vld [vmem:[#allocation5 + $0x2768] sm:$0xff]
    %v1462 = vld [vmem:[#allocation5 + $0x2770] sm:$0xff]
    %v1463 = vld [vmem:[#allocation5 + $0x2778] sm:$0xff]
    %v1464 = vld [vmem:[#allocation5 + $0x2780] sm:$0xff]
    %v1465 = vld [vmem:[#allocation5 + $0x2788] sm:$0xff]
    %v1466 = vld [vmem:[#allocation5 + $0x2790] sm:$0xff]
    %v1467 = vld [vmem:[#allocation5 + $0x2798] sm:$0xff]
    %v1468 = vld [vmem:[#allocation5 + $0x27a0] sm:$0xff]
    %v1469 = vld [vmem:[#allocation5 + $0x27a8] sm:$0xff]
    %v1470 = vld [vmem:[#allocation5 + $0x27b0] sm:$0xff]
    %v1471 = vld [vmem:[#allocation5 + $0x27b8] sm:$0xff]
    %v1472 = vld [vmem:[#allocation5 + $0x27c0] sm:$0xff]
    %v1473 = vld [vmem:[#allocation5 + $0x27c8] sm:$0xff]
    %v1474 = vld [vmem:[#allocation5 + $0x27d0] sm:$0xff]
    %v1475 = vld [vmem:[#allocation5 + $0x27d8] sm:$0xff]
    %v1476 = vld [vmem:[#allocation5 + $0x27e0] sm:$0xff]
    %v1477 = vld [vmem:[#allocation5 + $0x27e8] sm:$0xff]
    %v1478 = vld [vmem:[#allocation5 + $0x27f0] sm:$0xff]
    %v1479 = vld [vmem:[#allocation5 + $0x27f8] sm:$0xff]
    %v1480 = vld [vmem:[#allocation5 + $0x2800] sm:$0xff]
    %v1481 = vld [vmem:[#allocation5 + $0x2808] sm:$0xff]
    %v1482 = vld [vmem:[#allocation5 + $0x2810] sm:$0xff]
    %v1483 = vld [vmem:[#allocation5 + $0x2818] sm:$0xff]
    %v1484 = vld [vmem:[#allocation5 + $0x2820] sm:$0xff]
    %v1485 = vld [vmem:[#allocation5 + $0x2828] sm:$0xff]
    %v1486 = vld [vmem:[#allocation5 + $0x2830] sm:$0xff]
    %v1487 = vld [vmem:[#allocation5 + $0x2838] sm:$0xff]
    %v1488 = vld [vmem:[#allocation5 + $0x2840] sm:$0xff]
    %v1489 = vld [vmem:[#allocation5 + $0x2848] sm:$0xff]
    %v1490 = vld [vmem:[#allocation5 + $0x2850] sm:$0xff]
    %v1491 = vld [vmem:[#allocation5 + $0x2858] sm:$0xff]
    %v1492 = vld [vmem:[#allocation5 + $0x2860] sm:$0xff]
    %v1493 = vld [vmem:[#allocation5 + $0x2868] sm:$0xff]
    %v1494 = vld [vmem:[#allocation5 + $0x2870] sm:$0xff]
    %v1495 = vld [vmem:[#allocation5 + $0x2878] sm:$0xff]
    %v1496 = vld [vmem:[#allocation5 + $0x2880] sm:$0xff]
    %v1497 = vld [vmem:[#allocation5 + $0x2888] sm:$0xff]
    %v1498 = vld [vmem:[#allocation5 + $0x2890] sm:$0xff]
    %v1499 = vld [vmem:[#allocation5 + $0x2898] sm:$0xff]
    %v1500 = vld [vmem:[#allocation5 + $0x28a0] sm:$0xff]
    %v1501 = vld [vmem:[#allocation5 + $0x28a8] sm:$0xff]
    %v1502 = vld [vmem:[#allocation5 + $0x28b0] sm:$0xff]
    %v1503 = vld [vmem:[#allocation5 + $0x28b8] sm:$0xff]
    %v1504 = vld [vmem:[#allocation5 + $0x28c0] sm:$0xff]
    %v1505 = vld [vmem:[#allocation5 + $0x28c8] sm:$0xff]
    %v1506 = vld [vmem:[#allocation5 + $0x28d0] sm:$0xff]
    %v1507 = vld [vmem:[#allocation5 + $0x28d8] sm:$0xff]
    %v1508 = vld [vmem:[#allocation5 + $0x28e0] sm:$0xff]
    %v1509 = vld [vmem:[#allocation5 + $0x28e8] sm:$0xff]
    %v1510 = vld [vmem:[#allocation5 + $0x28f0] sm:$0xff]
    %v1511 = vld [vmem:[#allocation5 + $0x28f8] sm:$0xff]
    %v1512 = vld [vmem:[#allocation5 + $0x2900] sm:$0xff]
    %v1513 = vld [vmem:[#allocation5 + $0x2908] sm:$0xff]
    %v1514 = vld [vmem:[#allocation5 + $0x2910] sm:$0xff]
    %v1515 = vld [vmem:[#allocation5 + $0x2918] sm:$0xff]
    %v1516 = vld [vmem:[#allocation5 + $0x2920] sm:$0xff]
    %v1517 = vld [vmem:[#allocation5 + $0x2928] sm:$0xff]
    %v1518 = vld [vmem:[#allocation5 + $0x2930] sm:$0xff]
    %v1519 = vld [vmem:[#allocation5 + $0x2938] sm:$0xff]
    %v1520 = vld [vmem:[#allocation5 + $0x2940] sm:$0xff]
    %v1521 = vld [vmem:[#allocation5 + $0x2948] sm:$0xff]
    %v1522 = vld [vmem:[#allocation5 + $0x2950] sm:$0xff]
    %v1523 = vld [vmem:[#allocation5 + $0x2958] sm:$0xff]
    %v1524 = vld [vmem:[#allocation5 + $0x2960] sm:$0xff]
    %v1525 = vld [vmem:[#allocation5 + $0x2968] sm:$0xff]
    %v1526 = vld [vmem:[#allocation5 + $0x2970] sm:$0xff]
    %v1527 = vld [vmem:[#allocation5 + $0x2978] sm:$0xff]
    %v1528 = vld [vmem:[#allocation5 + $0x2980] sm:$0xff]
    %v1529 = vld [vmem:[#allocation5 + $0x2988] sm:$0xff]
    %v1530 = vld [vmem:[#allocation5 + $0x2990] sm:$0xff]
    %v1531 = vld [vmem:[#allocation5 + $0x2998] sm:$0xff]
    %v1532 = vld [vmem:[#allocation5 + $0x29a0] sm:$0xff]
    %v1533 = vld [vmem:[#allocation5 + $0x29a8] sm:$0xff]
    %v1534 = vld [vmem:[#allocation5 + $0x29b0] sm:$0xff]
    %v1535 = vld [vmem:[#allocation5 + $0x29b8] sm:$0xff]
    %v1536 = vld [vmem:[#allocation5 + $0x29c0] sm:$0xff]
    %v1537 = vld [vmem:[#allocation5 + $0x29c8] sm:$0xff]
    %v1538 = vld [vmem:[#allocation5 + $0x29d0] sm:$0xff]
    %v1539 = vld [vmem:[#allocation5 + $0x29d8] sm:$0xff]
    %v1540 = vld [vmem:[#allocation5 + $0x29e0] sm:$0xff]
    %v1541 = vld [vmem:[#allocation5 + $0x29e8] sm:$0xff]
    %v1542 = vld [vmem:[#allocation5 + $0x29f0] sm:$0xff]
    %v1543 = vld [vmem:[#allocation5 + $0x29f8] sm:$0xff]
    %v1544 = vld [vmem:[#allocation5 + $0x2a00] sm:$0xff]
    %v1545 = vld [vmem:[#allocation5 + $0x2a08] sm:$0xff]
    %v1546 = vld [vmem:[#allocation5 + $0x2a10] sm:$0xff]
    %v1547 = vld [vmem:[#allocation5 + $0x2a18] sm:$0xff]
    %v1548 = vld [vmem:[#allocation5 + $0x2a20] sm:$0xff]
    %v1549 = vld [vmem:[#allocation5 + $0x2a28] sm:$0xff]
    %v1550 = vld [vmem:[#allocation5 + $0x2a30] sm:$0xff]
    %v1551 = vld [vmem:[#allocation5 + $0x2a38] sm:$0xff]
    %v1552 = vld [vmem:[#allocation5 + $0x2a40] sm:$0xff]
    %v1553 = vld [vmem:[#allocation5 + $0x2a48] sm:$0xff]
    %v1554 = vld [vmem:[#allocation5 + $0x2a50] sm:$0xff]
    %v1555 = vld [vmem:[#allocation5 + $0x2a58] sm:$0xff]
    %v1556 = vld [vmem:[#allocation5 + $0x2a60] sm:$0xff]
    %v1557 = vld [vmem:[#allocation5 + $0x2a68] sm:$0xff]
    %v1558 = vld [vmem:[#allocation5 + $0x2a70] sm:$0xff]
    %v1559 = vld [vmem:[#allocation5 + $0x2a78] sm:$0xff]
    %v1560 = vld [vmem:[#allocation5 + $0x2a80] sm:$0xff]
    %v1561 = vld [vmem:[#allocation5 + $0x2a88] sm:$0xff]
    %v1562 = vld [vmem:[#allocation5 + $0x2a90] sm:$0xff]
    %v1563 = vld [vmem:[#allocation5 + $0x2a98] sm:$0xff]
    %v1564 = vld [vmem:[#allocation5 + $0x2aa0] sm:$0xff]
    %v1565 = vld [vmem:[#allocation5 + $0x2aa8] sm:$0xff]
    %v1566 = vld [vmem:[#allocation5 + $0x2ab0] sm:$0xff]
    %v1567 = vld [vmem:[#allocation5 + $0x2ab8] sm:$0xff]
    %v1568 = vld [vmem:[#allocation5 + $0x2ac0] sm:$0xff]
    %v1569 = vld [vmem:[#allocation5 + $0x2ac8] sm:$0xff]
    %v1570 = vld [vmem:[#allocation5 + $0x2ad0] sm:$0xff]
    %v1571 = vld [vmem:[#allocation5 + $0x2ad8] sm:$0xff]
    %v1572 = vld [vmem:[#allocation5 + $0x2ae0] sm:$0xff]
    %v1573 = vld [vmem:[#allocation5 + $0x2ae8] sm:$0xff]
    %v1574 = vld [vmem:[#allocation5 + $0x2af0] sm:$0xff]
    %v1575 = vld [vmem:[#allocation5 + $0x2af8] sm:$0xff]
    %v1576 = vld [vmem:[#allocation5 + $0x2b00] sm:$0xff]
    %v1577 = vld [vmem:[#allocation5 + $0x2b08] sm:$0xff]
    %v1578 = vld [vmem:[#allocation5 + $0x2b10] sm:$0xff]
    %v1579 = vld [vmem:[#allocation5 + $0x2b18] sm:$0xff]
    %v1580 = vld [vmem:[#allocation5 + $0x2b20] sm:$0xff]
    %v1581 = vld [vmem:[#allocation5 + $0x2b28] sm:$0xff]
    %v1582 = vld [vmem:[#allocation5 + $0x2b30] sm:$0xff]
    %v1583 = vld [vmem:[#allocation5 + $0x2b38] sm:$0xff]
    %v1584 = vld [vmem:[#allocation5 + $0x2b40] sm:$0xff]
    %v1585 = vld [vmem:[#allocation5 + $0x2b48] sm:$0xff]
    %v1586 = vld [vmem:[#allocation5 + $0x2b50] sm:$0xff]
    %v1587 = vld [vmem:[#allocation5 + $0x2b58] sm:$0xff]
    %v1588 = vld [vmem:[#allocation5 + $0x2b60] sm:$0xff]
    %v1589 = vld [vmem:[#allocation5 + $0x2b68] sm:$0xff]
    %v1590 = vld [vmem:[#allocation5 + $0x2b70] sm:$0xff]
    %v1591 = vld [vmem:[#allocation5 + $0x2b78] sm:$0xff]
    %v1592 = vld [vmem:[#allocation5 + $0x2b80] sm:$0xff]
    %v1593 = vld [vmem:[#allocation5 + $0x2b88] sm:$0xff]
    %v1594 = vld [vmem:[#allocation5 + $0x2b90] sm:$0xff]
    %v1595 = vld [vmem:[#allocation5 + $0x2b98] sm:$0xff]
    %v1596 = vld [vmem:[#allocation5 + $0x2ba0] sm:$0xff]
    %v1597 = vld [vmem:[#allocation5 + $0x2ba8] sm:$0xff]
    %v1598 = vld [vmem:[#allocation5 + $0x2bb0] sm:$0xff]
    %v1599 = vld [vmem:[#allocation5 + $0x2bb8] sm:$0xff]
    %v1600 = vld [vmem:[#allocation5 + $0x2bc0] sm:$0xff]
    %v1601 = vld [vmem:[#allocation5 + $0x2bc8] sm:$0xff]
    %v1602 = vld [vmem:[#allocation5 + $0x2bd0] sm:$0xff]
    %v1603 = vld [vmem:[#allocation5 + $0x2bd8] sm:$0xff]
    %v1604 = vld [vmem:[#allocation5 + $0x2be0] sm:$0xff]
    %v1605 = vld [vmem:[#allocation5 + $0x2be8] sm:$0xff]
    %v1606 = vld [vmem:[#allocation5 + $0x2bf0] sm:$0xff]
    %v1607 = vld [vmem:[#allocation5 + $0x2bf8] sm:$0xff]
    %v1608 = vld [vmem:[#allocation5 + $0x2c00] sm:$0xff]
    %v1609 = vld [vmem:[#allocation5 + $0x2c08] sm:$0xff]
    %v1610 = vld [vmem:[#allocation5 + $0x2c10] sm:$0xff]
    %v1611 = vld [vmem:[#allocation5 + $0x2c18] sm:$0xff]
    %v1612 = vld [vmem:[#allocation5 + $0x2c20] sm:$0xff]
    %v1613 = vld [vmem:[#allocation5 + $0x2c28] sm:$0xff]
    %v1614 = vld [vmem:[#allocation5 + $0x2c30] sm:$0xff]
    %v1615 = vld [vmem:[#allocation5 + $0x2c38] sm:$0xff]
    %v1616 = vld [vmem:[#allocation5 + $0x2c40] sm:$0xff]
    %v1617 = vld [vmem:[#allocation5 + $0x2c48] sm:$0xff]
    %v1618 = vld [vmem:[#allocation5 + $0x2c50] sm:$0xff]
    %v1619 = vld [vmem:[#allocation5 + $0x2c58] sm:$0xff]
    %v1620 = vld [vmem:[#allocation5 + $0x2c60] sm:$0xff]
    %v1621 = vld [vmem:[#allocation5 + $0x2c68] sm:$0xff]
    %v1622 = vld [vmem:[#allocation5 + $0x2c70] sm:$0xff]
    %v1623 = vld [vmem:[#allocation5 + $0x2c78] sm:$0xff]
    %v1624 = vld [vmem:[#allocation5 + $0x2c80] sm:$0xff]
    %v1625 = vld [vmem:[#allocation5 + $0x2c88] sm:$0xff]
    %v1626 = vld [vmem:[#allocation5 + $0x2c90] sm:$0xff]
    %v1627 = vld [vmem:[#allocation5 + $0x2c98] sm:$0xff]
    %v1628 = vld [vmem:[#allocation5 + $0x2ca0] sm:$0xff]
    %v1629 = vld [vmem:[#allocation5 + $0x2ca8] sm:$0xff]
    %v1630 = vld [vmem:[#allocation5 + $0x2cb0] sm:$0xff]
    %v1631 = vld [vmem:[#allocation5 + $0x2cb8] sm:$0xff]
    %v1632 = vld [vmem:[#allocation5 + $0x2cc0] sm:$0xff]
    %v1633 = vld [vmem:[#allocation5 + $0x2cc8] sm:$0xff]
    %v1634 = vld [vmem:[#allocation5 + $0x2cd0] sm:$0xff]
    %v1635 = vld [vmem:[#allocation5 + $0x2cd8] sm:$0xff]
    %v1636 = vld [vmem:[#allocation5 + $0x2ce0] sm:$0xff]
    %v1637 = vld [vmem:[#allocation5 + $0x2ce8] sm:$0xff]
    %v1638 = vld [vmem:[#allocation5 + $0x2cf0] sm:$0xff]
    %v1639 = vld [vmem:[#allocation5 + $0x2cf8] sm:$0xff]
    %v1640 = vld [vmem:[#allocation5 + $0x2d00] sm:$0xff]
    %v1641 = vld [vmem:[#allocation5 + $0x2d08] sm:$0xff]
    %v1642 = vld [vmem:[#allocation5 + $0x2d10] sm:$0xff]
    %v1643 = vld [vmem:[#allocation5 + $0x2d18] sm:$0xff]
    %v1644 = vld [vmem:[#allocation5 + $0x2d20] sm:$0xff]
    %v1645 = vld [vmem:[#allocation5 + $0x2d28] sm:$0xff]
    %v1646 = vld [vmem:[#allocation5 + $0x2d30] sm:$0xff]
    %v1647 = vld [vmem:[#allocation5 + $0x2d38] sm:$0xff]
    %v1648 = vld [vmem:[#allocation5 + $0x2d40] sm:$0xff]
    %v1649 = vld [vmem:[#allocation5 + $0x2d48] sm:$0xff]
    %v1650 = vld [vmem:[#allocation5 + $0x2d50] sm:$0xff]
    %v1651 = vld [vmem:[#allocation5 + $0x2d58] sm:$0xff]
    %v1652 = vld [vmem:[#allocation5 + $0x2d60] sm:$0xff]
    %v1653 = vld [vmem:[#allocation5 + $0x2d68] sm:$0xff]
    %v1654 = vld [vmem:[#allocation5 + $0x2d70] sm:$0xff]
    %v1655 = vld [vmem:[#allocation5 + $0x2d78] sm:$0xff]
    %v1656 = vld [vmem:[#allocation5 + $0x2d80] sm:$0xff]
    %v1657 = vld [vmem:[#allocation5 + $0x2d88] sm:$0xff]
    %v1658 = vld [vmem:[#allocation5 + $0x2d90] sm:$0xff]
    %v1659 = vld [vmem:[#allocation5 + $0x2d98] sm:$0xff]
    %v1660 = vld [vmem:[#allocation5 + $0x2da0] sm:$0xff]
    %v1661 = vld [vmem:[#allocation5 + $0x2da8] sm:$0xff]
    %v1662 = vld [vmem:[#allocation5 + $0x2db0] sm:$0xff]
    %v1663 = vld [vmem:[#allocation5 + $0x2db8] sm:$0xff]
    %v1664 = vld [vmem:[#allocation5 + $0x2dc0] sm:$0xff]
    %v1665 = vld [vmem:[#allocation5 + $0x2dc8] sm:$0xff]
    %v1666 = vld [vmem:[#allocation5 + $0x2dd0] sm:$0xff]
    %v1667 = vld [vmem:[#allocation5 + $0x2dd8] sm:$0xff]
    %v1668 = vld [vmem:[#allocation5 + $0x2de0] sm:$0xff]
    %v1669 = vld [vmem:[#allocation5 + $0x2de8] sm:$0xff]
    %v1670 = vld [vmem:[#allocation5 + $0x2df0] sm:$0xff]
    %v1671 = vld [vmem:[#allocation5 + $0x2df8] sm:$0xff]
    %v1672 = vld [vmem:[#allocation5 + $0x2e00] sm:$0xff]
    %v1673 = vld [vmem:[#allocation5 + $0x2e08] sm:$0xff]
    %v1674 = vld [vmem:[#allocation5 + $0x2e10] sm:$0xff]
    %v1675 = vld [vmem:[#allocation5 + $0x2e18] sm:$0xff]
    %v1676 = vld [vmem:[#allocation5 + $0x2e20] sm:$0xff]
    %v1677 = vld [vmem:[#allocation5 + $0x2e28] sm:$0xff]
    %v1678 = vld [vmem:[#allocation5 + $0x2e30] sm:$0xff]
    %v1679 = vld [vmem:[#allocation5 + $0x2e38] sm:$0xff]
    %v1680 = vld [vmem:[#allocation5 + $0x2e40] sm:$0xff]
    %v1681 = vld [vmem:[#allocation5 + $0x2e48] sm:$0xff]
    %v1682 = vld [vmem:[#allocation5 + $0x2e50] sm:$0xff]
    %v1683 = vld [vmem:[#allocation5 + $0x2e58] sm:$0xff]
    %v1684 = vld [vmem:[#allocation5 + $0x2e60] sm:$0xff]
    %v1685 = vld [vmem:[#allocation5 + $0x2e68] sm:$0xff]
    %v1686 = vld [vmem:[#allocation5 + $0x2e70] sm:$0xff]
    %v1687 = vld [vmem:[#allocation5 + $0x2e78] sm:$0xff]
    %v1688 = vld [vmem:[#allocation5 + $0x2e80] sm:$0xff]
    %v1689 = vld [vmem:[#allocation5 + $0x2e88] sm:$0xff]
    %v1690 = vld [vmem:[#allocation5 + $0x2e90] sm:$0xff]
    %v1691 = vld [vmem:[#allocation5 + $0x2e98] sm:$0xff]
    %v1692 = vld [vmem:[#allocation5 + $0x2ea0] sm:$0xff]
    %v1693 = vld [vmem:[#allocation5 + $0x2ea8] sm:$0xff]
    %v1694 = vld [vmem:[#allocation5 + $0x2eb0] sm:$0xff]
    %v1695 = vld [vmem:[#allocation5 + $0x2eb8] sm:$0xff]
    %v1696 = vld [vmem:[#allocation5 + $0x2ec0] sm:$0xff]
    %v1697 = vld [vmem:[#allocation5 + $0x2ec8] sm:$0xff]
    %v1698 = vld [vmem:[#allocation5 + $0x2ed0] sm:$0xff]
    %v1699 = vld [vmem:[#allocation5 + $0x2ed8] sm:$0xff]
    %v1700 = vld [vmem:[#allocation5 + $0x2ee0] sm:$0xff]
    %v1701 = vld [vmem:[#allocation5 + $0x2ee8] sm:$0xff]
    %v1702 = vld [vmem:[#allocation5 + $0x2ef0] sm:$0xff]
    %v1703 = vld [vmem:[#allocation5 + $0x2ef8] sm:$0xff]
    %v1704 = vld [vmem:[#allocation5 + $0x2f00] sm:$0xff]
    %v1705 = vld [vmem:[#allocation5 + $0x2f08] sm:$0xff]
    %v1706 = vld [vmem:[#allocation5 + $0x2f10] sm:$0xff]
    %v1707 = vld [vmem:[#allocation5 + $0x2f18] sm:$0xff]
    %v1708 = vld [vmem:[#allocation5 + $0x2f20] sm:$0xff]
    %v1709 = vld [vmem:[#allocation5 + $0x2f28] sm:$0xff]
    %v1710 = vld [vmem:[#allocation5 + $0x2f30] sm:$0xff]
    %v1711 = vld [vmem:[#allocation5 + $0x2f38] sm:$0xff]
    %v1712 = vld [vmem:[#allocation5 + $0x2f40] sm:$0xff]
    %v1713 = vld [vmem:[#allocation5 + $0x2f48] sm:$0xff]
    %v1714 = vld [vmem:[#allocation5 + $0x2f50] sm:$0xff]
    %v1715 = vld [vmem:[#allocation5 + $0x2f58] sm:$0xff]
    %v1716 = vld [vmem:[#allocation5 + $0x2f60] sm:$0xff]
    %v1717 = vld [vmem:[#allocation5 + $0x2f68] sm:$0xff]
    %v1718 = vld [vmem:[#allocation5 + $0x2f70] sm:$0xff]
    %v1719 = vld [vmem:[#allocation5 + $0x2f78] sm:$0xff]
    %v1720 = vld [vmem:[#allocation5 + $0x2f80] sm:$0xff]
    %v1721 = vld [vmem:[#allocation5 + $0x2f88] sm:$0xff]
    %v1722 = vld [vmem:[#allocation5 + $0x2f90] sm:$0xff]
    %v1723 = vld [vmem:[#allocation5 + $0x2f98] sm:$0xff]
    %v1724 = vld [vmem:[#allocation5 + $0x2fa0] sm:$0xff]
    %v1725 = vld [vmem:[#allocation5 + $0x2fa8] sm:$0xff]
    %v1726 = vld [vmem:[#allocation5 + $0x2fb0] sm:$0xff]
    %v1727 = vld [vmem:[#allocation5 + $0x2fb8] sm:$0xff]
    %v1728 = vld [vmem:[#allocation5 + $0x2fc0] sm:$0xff]
    %v1729 = vld [vmem:[#allocation5 + $0x2fc8] sm:$0xff]
    %v1730 = vld [vmem:[#allocation5 + $0x2fd0] sm:$0xff]
    %v1731 = vld [vmem:[#allocation5 + $0x2fd8] sm:$0xff]
    %v1732 = vld [vmem:[#allocation5 + $0x2fe0] sm:$0xff]
    %v1733 = vld [vmem:[#allocation5 + $0x2fe8] sm:$0xff]
    %v1734 = vld [vmem:[#allocation5 + $0x2ff0] sm:$0xff]
    %v1735 = vld [vmem:[#allocation5 + $0x2ff8] sm:$0xff]
    %v1736 = vld [vmem:[#allocation5 + $0x3000] sm:$0xff]
    %v1737 = vld [vmem:[#allocation5 + $0x3008] sm:$0xff]
    %v1738 = vld [vmem:[#allocation5 + $0x3010] sm:$0xff]
    %v1739 = vld [vmem:[#allocation5 + $0x3018] sm:$0xff]
    %v1740 = vld [vmem:[#allocation5 + $0x3020] sm:$0xff]
    %v1741 = vld [vmem:[#allocation5 + $0x3028] sm:$0xff]
    %v1742 = vld [vmem:[#allocation5 + $0x3030] sm:$0xff]
    %v1743 = vld [vmem:[#allocation5 + $0x3038] sm:$0xff]
    %v1744 = vld [vmem:[#allocation5 + $0x3040] sm:$0xff]
    %v1745 = vld [vmem:[#allocation5 + $0x3048] sm:$0xff]
    %v1746 = vld [vmem:[#allocation5 + $0x3050] sm:$0xff]
    %v1747 = vld [vmem:[#allocation5 + $0x3058] sm:$0xff]
    %v1748 = vld [vmem:[#allocation5 + $0x3060] sm:$0xff]
    %v1749 = vld [vmem:[#allocation5 + $0x3068] sm:$0xff]
    %v1750 = vld [vmem:[#allocation5 + $0x3070] sm:$0xff]
    %v1751 = vld [vmem:[#allocation5 + $0x3078] sm:$0xff]
    %v1752 = vld [vmem:[#allocation5 + $0x3080] sm:$0xff]
    %v1753 = vld [vmem:[#allocation5 + $0x3088] sm:$0xff]
    %v1754 = vld [vmem:[#allocation5 + $0x3090] sm:$0xff]
    %v1755 = vld [vmem:[#allocation5 + $0x3098] sm:$0xff]
    %v1756 = vld [vmem:[#allocation5 + $0x30a0] sm:$0xff]
    %v1757 = vld [vmem:[#allocation5 + $0x30a8] sm:$0xff]
    %v1758 = vld [vmem:[#allocation5 + $0x30b0] sm:$0xff]
    %v1759 = vld [vmem:[#allocation5 + $0x30b8] sm:$0xff]
    %v1760 = vld [vmem:[#allocation5 + $0x30c0] sm:$0xff]
    %v1761 = vld [vmem:[#allocation5 + $0x30c8] sm:$0xff]
    %v1762 = vld [vmem:[#allocation5 + $0x30d0] sm:$0xff]
    %v1763 = vld [vmem:[#allocation5 + $0x30d8] sm:$0xff]
    %v1764 = vld [vmem:[#allocation5 + $0x30e0] sm:$0xff]
    %v1765 = vld [vmem:[#allocation5 + $0x30e8] sm:$0xff]
    %v1766 = vld [vmem:[#allocation5 + $0x30f0] sm:$0xff]
    %v1767 = vld [vmem:[#allocation5 + $0x30f8] sm:$0xff]
    %v1768 = vld [vmem:[#allocation5 + $0x3100] sm:$0xff]
    %v1769 = vld [vmem:[#allocation5 + $0x3108] sm:$0xff]
    %v1770 = vld [vmem:[#allocation5 + $0x3110] sm:$0xff]
    %v1771 = vld [vmem:[#allocation5 + $0x3118] sm:$0xff]
    %v1772 = vld [vmem:[#allocation5 + $0x3120] sm:$0xff]
    %v1773 = vld [vmem:[#allocation5 + $0x3128] sm:$0xff]
    %v1774 = vld [vmem:[#allocation5 + $0x3130] sm:$0xff]
    %v1775 = vld [vmem:[#allocation5 + $0x3138] sm:$0xff]
    %v1776 = vld [vmem:[#allocation5 + $0x3140] sm:$0xff]
    %v1777 = vld [vmem:[#allocation5 + $0x3148] sm:$0xff]
    %v1778 = vld [vmem:[#allocation5 + $0x3150] sm:$0xff]
    %v1779 = vld [vmem:[#allocation5 + $0x3158] sm:$0xff]
    %v1780 = vld [vmem:[#allocation5 + $0x3160] sm:$0xff]
    %v1781 = vld [vmem:[#allocation5 + $0x3168] sm:$0xff]
    %v1782 = vld [vmem:[#allocation5 + $0x3170] sm:$0xff]
    %v1783 = vld [vmem:[#allocation5 + $0x3178] sm:$0xff]
    %v1784 = vld [vmem:[#allocation5 + $0x3180] sm:$0xff]
    %v1785 = vld [vmem:[#allocation5 + $0x3188] sm:$0xff]
    %v1786 = vld [vmem:[#allocation5 + $0x3190] sm:$0xff]
    %v1787 = vld [vmem:[#allocation5 + $0x3198] sm:$0xff]
    %v1788 = vld [vmem:[#allocation5 + $0x31a0] sm:$0xff]
    %v1789 = vld [vmem:[#allocation5 + $0x31a8] sm:$0xff]
    %v1790 = vld [vmem:[#allocation5 + $0x31b0] sm:$0xff]
    %v1791 = vld [vmem:[#allocation5 + $0x31b8] sm:$0xff]
    %v1792 = vld [vmem:[#allocation5 + $0x31c0] sm:$0xff]
    %v1793 = vld [vmem:[#allocation5 + $0x31c8] sm:$0xff]
    %v1794 = vld [vmem:[#allocation5 + $0x31d0] sm:$0xff]
    %v1795 = vld [vmem:[#allocation5 + $0x31d8] sm:$0xff]
    %v1796 = vld [vmem:[#allocation5 + $0x31e0] sm:$0xff]
    %v1797 = vld [vmem:[#allocation5 + $0x31e8] sm:$0xff]
    %v1798 = vld [vmem:[#allocation5 + $0x31f0] sm:$0xff]
    %v1799 = vld [vmem:[#allocation5 + $0x31f8] sm:$0xff]
    %v1800 = vld [vmem:[#allocation5 + $0x3200] sm:$0xff]
    %v1801 = vld [vmem:[#allocation5 + $0x3208] sm:$0xff]
    %v1802 = vld [vmem:[#allocation5 + $0x3210] sm:$0xff]
    %v1803 = vld [vmem:[#allocation5 + $0x3218] sm:$0xff]
    %v1804 = vld [vmem:[#allocation5 + $0x3220] sm:$0xff]
    %v1805 = vld [vmem:[#allocation5 + $0x3228] sm:$0xff]
    %v1806 = vld [vmem:[#allocation5 + $0x3230] sm:$0xff]
    %v1807 = vld [vmem:[#allocation5 + $0x3238] sm:$0xff]
    %v1808 = vld [vmem:[#allocation5 + $0x3240] sm:$0xff]
    %v1809 = vld [vmem:[#allocation5 + $0x3248] sm:$0xff]
    %v1810 = vld [vmem:[#allocation5 + $0x3250] sm:$0xff]
    %v1811 = vld [vmem:[#allocation5 + $0x3258] sm:$0xff]
    %v1812 = vld [vmem:[#allocation5 + $0x3260] sm:$0xff]
    %v1813 = vld [vmem:[#allocation5 + $0x3268] sm:$0xff]
    %v1814 = vld [vmem:[#allocation5 + $0x3270] sm:$0xff]
    %v1815 = vld [vmem:[#allocation5 + $0x3278] sm:$0xff]
    %v1816 = vld [vmem:[#allocation5 + $0x3280] sm:$0xff]
    %v1817 = vld [vmem:[#allocation5 + $0x3288] sm:$0xff]
    %v1818 = vld [vmem:[#allocation5 + $0x3290] sm:$0xff]
    %v1819 = vld [vmem:[#allocation5 + $0x3298] sm:$0xff]
    %v1820 = vld [vmem:[#allocation5 + $0x32a0] sm:$0xff]
    %v1821 = vld [vmem:[#allocation5 + $0x32a8] sm:$0xff]
    %v1822 = vld [vmem:[#allocation5 + $0x32b0] sm:$0xff]
    %v1823 = vld [vmem:[#allocation5 + $0x32b8] sm:$0xff]
    %v1824 = vld [vmem:[#allocation5 + $0x32c0] sm:$0xff]
    %v1825 = vld [vmem:[#allocation5 + $0x32c8] sm:$0xff]
    %v1826 = vld [vmem:[#allocation5 + $0x32d0] sm:$0xff]
    %v1827 = vld [vmem:[#allocation5 + $0x32d8] sm:$0xff]
    %v1828 = vld [vmem:[#allocation5 + $0x32e0] sm:$0xff]
    %v1829 = vld [vmem:[#allocation5 + $0x32e8] sm:$0xff]
    %v1830 = vld [vmem:[#allocation5 + $0x32f0] sm:$0xff]
    %v1831 = vld [vmem:[#allocation5 + $0x32f8] sm:$0xff]
    %v1832 = vld [vmem:[#allocation5 + $0x3300] sm:$0xff]
    %v1833 = vld [vmem:[#allocation5 + $0x3308] sm:$0xff]
    %v1834 = vld [vmem:[#allocation5 + $0x3310] sm:$0xff]
    %v1835 = vld [vmem:[#allocation5 + $0x3318] sm:$0xff]
    %v1836 = vld [vmem:[#allocation5 + $0x3320] sm:$0xff]
    %v1837 = vld [vmem:[#allocation5 + $0x3328] sm:$0xff]
    %v1838 = vld [vmem:[#allocation5 + $0x3330] sm:$0xff]
    %v1839 = vld [vmem:[#allocation5 + $0x3338] sm:$0xff]
    %v1840 = vld [vmem:[#allocation5 + $0x3340] sm:$0xff]
    %v1841 = vld [vmem:[#allocation5 + $0x3348] sm:$0xff]
    %v1842 = vld [vmem:[#allocation5 + $0x3350] sm:$0xff]
    %v1843 = vld [vmem:[#allocation5 + $0x3358] sm:$0xff]
    %v1844 = vld [vmem:[#allocation5 + $0x3360] sm:$0xff]
    %v1845 = vld [vmem:[#allocation5 + $0x3368] sm:$0xff]
    %v1846 = vld [vmem:[#allocation5 + $0x3370] sm:$0xff]
    %v1847 = vld [vmem:[#allocation5 + $0x3378] sm:$0xff]
    %v1848 = vld [vmem:[#allocation5 + $0x3380] sm:$0xff]
    %v1849 = vld [vmem:[#allocation5 + $0x3388] sm:$0xff]
    %v1850 = vld [vmem:[#allocation5 + $0x3390] sm:$0xff]
    %v1851 = vld [vmem:[#allocation5 + $0x3398] sm:$0xff]
    %v1852 = vld [vmem:[#allocation5 + $0x33a0] sm:$0xff]
    %v1853 = vld [vmem:[#allocation5 + $0x33a8] sm:$0xff]
    %v1854 = vld [vmem:[#allocation5 + $0x33b0] sm:$0xff]
    %v1855 = vld [vmem:[#allocation5 + $0x33b8] sm:$0xff]
    %v1856 = vld [vmem:[#allocation5 + $0x33c0] sm:$0xff]
    %v1857 = vld [vmem:[#allocation5 + $0x33c8] sm:$0xff]
    %v1858 = vld [vmem:[#allocation5 + $0x33d0] sm:$0xff]
    %v1859 = vld [vmem:[#allocation5 + $0x33d8] sm:$0xff]
    %v1860 = vld [vmem:[#allocation5 + $0x33e0] sm:$0xff]
    %v1861 = vld [vmem:[#allocation5 + $0x33e8] sm:$0xff]
    %v1862 = vld [vmem:[#allocation5 + $0x33f0] sm:$0xff]
    %v1863 = vld [vmem:[#allocation5 + $0x33f8] sm:$0xff]
    %v1864 = vld [vmem:[#allocation5 + $0x3400] sm:$0xff]
    %v1865 = vld [vmem:[#allocation5 + $0x3408] sm:$0xff]
    %v1866 = vld [vmem:[#allocation5 + $0x3410] sm:$0xff]
    %v1867 = vld [vmem:[#allocation5 + $0x3418] sm:$0xff]
    %v1868 = vld [vmem:[#allocation5 + $0x3420] sm:$0xff]
    %v1869 = vld [vmem:[#allocation5 + $0x3428] sm:$0xff]
    %v1870 = vld [vmem:[#allocation5 + $0x3430] sm:$0xff]
    %v1871 = vld [vmem:[#allocation5 + $0x3438] sm:$0xff]
    %v1872 = vld [vmem:[#allocation5 + $0x3440] sm:$0xff]
    %v1873 = vld [vmem:[#allocation5 + $0x3448] sm:$0xff]
    %v1874 = vld [vmem:[#allocation5 + $0x3450] sm:$0xff]
    %v1875 = vld [vmem:[#allocation5 + $0x3458] sm:$0xff]
    %v1876 = vld [vmem:[#allocation5 + $0x3460] sm:$0xff]
    %v1877 = vld [vmem:[#allocation5 + $0x3468] sm:$0xff]
    %v1878 = vld [vmem:[#allocation5 + $0x3470] sm:$0xff]
    %v1879 = vld [vmem:[#allocation5 + $0x3478] sm:$0xff]
    %v1880 = vld [vmem:[#allocation5 + $0x3480] sm:$0xff]
    %v1881 = vld [vmem:[#allocation5 + $0x3488] sm:$0xff]
    %v1882 = vld [vmem:[#allocation5 + $0x3490] sm:$0xff]
    %v1883 = vld [vmem:[#allocation5 + $0x3498] sm:$0xff]
    %v1884 = vld [vmem:[#allocation5 + $0x34a0] sm:$0xff]
    %v1885 = vld [vmem:[#allocation5 + $0x34a8] sm:$0xff]
    %v1886 = vld [vmem:[#allocation5 + $0x34b0] sm:$0xff]
    %v1887 = vld [vmem:[#allocation5 + $0x34b8] sm:$0xff]
    %v1888 = vld [vmem:[#allocation5 + $0x34c0] sm:$0xff]
    %v1889 = vld [vmem:[#allocation5 + $0x34c8] sm:$0xff]
    %v1890 = vld [vmem:[#allocation5 + $0x34d0] sm:$0xff]
    %v1891 = vld [vmem:[#allocation5 + $0x34d8] sm:$0xff]
    %v1892 = vld [vmem:[#allocation5 + $0x34e0] sm:$0xff]
    %v1893 = vld [vmem:[#allocation5 + $0x34e8] sm:$0xff]
    %v1894 = vld [vmem:[#allocation5 + $0x34f0] sm:$0xff]
    %v1895 = vld [vmem:[#allocation5 + $0x34f8] sm:$0xff]
    %v1896 = vld [vmem:[#allocation5 + $0x3500] sm:$0xff]
    %v1897 = vld [vmem:[#allocation5 + $0x3508] sm:$0xff]
    %v1898 = vld [vmem:[#allocation5 + $0x3510] sm:$0xff]
    %v1899 = vld [vmem:[#allocation5 + $0x3518] sm:$0xff]
    %v1900 = vld [vmem:[#allocation5 + $0x3520] sm:$0xff]
    %v1901 = vld [vmem:[#allocation5 + $0x3528] sm:$0xff]
    %v1902 = vld [vmem:[#allocation5 + $0x3530] sm:$0xff]
    %v1903 = vld [vmem:[#allocation5 + $0x3538] sm:$0xff]
    %v1904 = vld [vmem:[#allocation5 + $0x3540] sm:$0xff]
    %v1905 = vld [vmem:[#allocation5 + $0x3548] sm:$0xff]
    %v1906 = vld [vmem:[#allocation5 + $0x3550] sm:$0xff]
    %v1907 = vld [vmem:[#allocation5 + $0x3558] sm:$0xff]
    %v1908 = vld [vmem:[#allocation5 + $0x3560] sm:$0xff]
    %v1909 = vld [vmem:[#allocation5 + $0x3568] sm:$0xff]
    %v1910 = vld [vmem:[#allocation5 + $0x3570] sm:$0xff]
    %v1911 = vld [vmem:[#allocation5 + $0x3578] sm:$0xff]
    %v1912 = vld [vmem:[#allocation5 + $0x3580] sm:$0xff]
    %v1913 = vld [vmem:[#allocation5 + $0x3588] sm:$0xff]
    %v1914 = vld [vmem:[#allocation5 + $0x3590] sm:$0xff]
    %v1915 = vld [vmem:[#allocation5 + $0x3598] sm:$0xff]
    %v1916 = vld [vmem:[#allocation5 + $0x35a0] sm:$0xff]
    %v1917 = vld [vmem:[#allocation5 + $0x35a8] sm:$0xff]
    %v1918 = vld [vmem:[#allocation5 + $0x35b0] sm:$0xff]
    %v1919 = vld [vmem:[#allocation5 + $0x35b8] sm:$0xff]
    %v1920 = vld [vmem:[#allocation5 + $0x35c0] sm:$0xff]
    %v1921 = vld [vmem:[#allocation5 + $0x35c8] sm:$0xff]
    %v1922 = vld [vmem:[#allocation5 + $0x35d0] sm:$0xff]
    %v1923 = vld [vmem:[#allocation5 + $0x35d8] sm:$0xff]
    %v1924 = vld [vmem:[#allocation5 + $0x35e0] sm:$0xff]
    %v1925 = vld [vmem:[#allocation5 + $0x35e8] sm:$0xff]
    %v1926 = vld [vmem:[#allocation5 + $0x35f0] sm:$0xff]
    %v1927 = vld [vmem:[#allocation5 + $0x35f8] sm:$0xff]
    %v1928 = vld [vmem:[#allocation5 + $0x3600] sm:$0xff]
    %v1929 = vld [vmem:[#allocation5 + $0x3608] sm:$0xff]
    %v1930 = vld [vmem:[#allocation5 + $0x3610] sm:$0xff]
    %v1931 = vld [vmem:[#allocation5 + $0x3618] sm:$0xff]
    %v1932 = vld [vmem:[#allocation5 + $0x3620] sm:$0xff]
    %v1933 = vld [vmem:[#allocation5 + $0x3628] sm:$0xff]
    %v1934 = vld [vmem:[#allocation5 + $0x3630] sm:$0xff]
    %v1935 = vld [vmem:[#allocation5 + $0x3638] sm:$0xff]
    %v1936 = vld [vmem:[#allocation5 + $0x3640] sm:$0xff]
    %v1937 = vld [vmem:[#allocation5 + $0x3648] sm:$0xff]
    %v1938 = vld [vmem:[#allocation5 + $0x3650] sm:$0xff]
    %v1939 = vld [vmem:[#allocation5 + $0x3658] sm:$0xff]
    %v1940 = vld [vmem:[#allocation5 + $0x3660] sm:$0xff]
    %v1941 = vld [vmem:[#allocation5 + $0x3668] sm:$0xff]
    %v1942 = vld [vmem:[#allocation5 + $0x3670] sm:$0xff]
    %v1943 = vld [vmem:[#allocation5 + $0x3678] sm:$0xff]
    %v1944 = vld [vmem:[#allocation5 + $0x3680] sm:$0xff]
    %v1945 = vld [vmem:[#allocation5 + $0x3688] sm:$0xff]
    %v1946 = vld [vmem:[#allocation5 + $0x3690] sm:$0xff]
    %v1947 = vld [vmem:[#allocation5 + $0x3698] sm:$0xff]
    %v1948 = vld [vmem:[#allocation5 + $0x36a0] sm:$0xff]
    %v1949 = vld [vmem:[#allocation5 + $0x36a8] sm:$0xff]
    %v1950 = vld [vmem:[#allocation5 + $0x36b0] sm:$0xff]
    %v1951 = vld [vmem:[#allocation5 + $0x36b8] sm:$0xff]
    %v1952 = vld [vmem:[#allocation5 + $0x36c0] sm:$0xff]
    %v1953 = vld [vmem:[#allocation5 + $0x36c8] sm:$0xff]
    %v1954 = vld [vmem:[#allocation5 + $0x36d0] sm:$0xff]
    %v1955 = vld [vmem:[#allocation5 + $0x36d8] sm:$0xff]
    %v1956 = vld [vmem:[#allocation5 + $0x36e0] sm:$0xff]
    %v1957 = vld [vmem:[#allocation5 + $0x36e8] sm:$0xff]
    %v1958 = vld [vmem:[#allocation5 + $0x36f0] sm:$0xff]
    %v1959 = vld [vmem:[#allocation5 + $0x36f8] sm:$0xff]
    %v1960 = vld [vmem:[#allocation5 + $0x3700] sm:$0xff]
    %v1961 = vld [vmem:[#allocation5 + $0x3708] sm:$0xff]
    %v1962 = vld [vmem:[#allocation5 + $0x3710] sm:$0xff]
    %v1963 = vld [vmem:[#allocation5 + $0x3718] sm:$0xff]
    %v1964 = vld [vmem:[#allocation5 + $0x3720] sm:$0xff]
    %v1965 = vld [vmem:[#allocation5 + $0x3728] sm:$0xff]
    %v1966 = vld [vmem:[#allocation5 + $0x3730] sm:$0xff]
    %v1967 = vld [vmem:[#allocation5 + $0x3738] sm:$0xff]
    %v1968 = vld [vmem:[#allocation5 + $0x3740] sm:$0xff]
    %v1969 = vld [vmem:[#allocation5 + $0x3748] sm:$0xff]
    %v1970 = vld [vmem:[#allocation5 + $0x3750] sm:$0xff]
    %v1971 = vld [vmem:[#allocation5 + $0x3758] sm:$0xff]
    %v1972 = vld [vmem:[#allocation5 + $0x3760] sm:$0xff]
    %v1973 = vld [vmem:[#allocation5 + $0x3768] sm:$0xff]
    %v1974 = vld [vmem:[#allocation5 + $0x3770] sm:$0xff]
    %v1975 = vld [vmem:[#allocation5 + $0x3778] sm:$0xff]
    %v1976 = vld [vmem:[#allocation5 + $0x3780] sm:$0xff]
    %v1977 = vld [vmem:[#allocation5 + $0x3788] sm:$0xff]
    %v1978 = vld [vmem:[#allocation5 + $0x3790] sm:$0xff]
    %v1979 = vld [vmem:[#allocation5 + $0x3798] sm:$0xff]
    %v1980 = vld [vmem:[#allocation5 + $0x37a0] sm:$0xff]
    %v1981 = vld [vmem:[#allocation5 + $0x37a8] sm:$0xff]
    %v1982 = vld [vmem:[#allocation5 + $0x37b0] sm:$0xff]
    %v1983 = vld [vmem:[#allocation5 + $0x37b8] sm:$0xff]
    %v1984 = vld [vmem:[#allocation5 + $0x37c0] sm:$0xff]
    %v1985 = vld [vmem:[#allocation5 + $0x37c8] sm:$0xff]
    %v1986 = vld [vmem:[#allocation5 + $0x37d0] sm:$0xff]
    %v1987 = vld [vmem:[#allocation5 + $0x37d8] sm:$0xff]
    %v1988 = vld [vmem:[#allocation5 + $0x37e0] sm:$0xff]
    %v1989 = vld [vmem:[#allocation5 + $0x37e8] sm:$0xff]
    %v1990 = vld [vmem:[#allocation5 + $0x37f0] sm:$0xff]
    %v1991 = vld [vmem:[#allocation5 + $0x37f8] sm:$0xff]
    %v1992 = vld [vmem:[#allocation5 + $0x3800] sm:$0xff]
    %v1993 = vld [vmem:[#allocation5 + $0x3808] sm:$0xff]
    %v1994 = vld [vmem:[#allocation5 + $0x3810] sm:$0xff]
    %v1995 = vld [vmem:[#allocation5 + $0x3818] sm:$0xff]
    %v1996 = vld [vmem:[#allocation5 + $0x3820] sm:$0xff]
    %v1997 = vld [vmem:[#allocation5 + $0x3828] sm:$0xff]
    %v1998 = vld [vmem:[#allocation5 + $0x3830] sm:$0xff]
    %v1999 = vld [vmem:[#allocation5 + $0x3838] sm:$0xff]
    %v2000 = vld [vmem:[#allocation5 + $0x3840] sm:$0xff]
    %v2001 = vld [vmem:[#allocation5 + $0x3848] sm:$0xff]
    %v2002 = vld [vmem:[#allocation5 + $0x3850] sm:$0xff]
    %v2003 = vld [vmem:[#allocation5 + $0x3858] sm:$0xff]
    %v2004 = vld [vmem:[#allocation5 + $0x3860] sm:$0xff]
    %v2005 = vld [vmem:[#allocation5 + $0x3868] sm:$0xff]
    %v2006 = vld [vmem:[#allocation5 + $0x3870] sm:$0xff]
    %v2007 = vld [vmem:[#allocation5 + $0x3878] sm:$0xff]
    %v2008 = vld [vmem:[#allocation5 + $0x3880] sm:$0xff]
    %v2009 = vld [vmem:[#allocation5 + $0x3888] sm:$0xff]
    %v2010 = vld [vmem:[#allocation5 + $0x3890] sm:$0xff]
    %v2011 = vld [vmem:[#allocation5 + $0x3898] sm:$0xff]
    %v2012 = vld [vmem:[#allocation5 + $0x38a0] sm:$0xff]
    %v2013 = vld [vmem:[#allocation5 + $0x38a8] sm:$0xff]
    %v2014 = vld [vmem:[#allocation5 + $0x38b0] sm:$0xff]
    %v2015 = vld [vmem:[#allocation5 + $0x38b8] sm:$0xff]
    %v2016 = vld [vmem:[#allocation5 + $0x38c0] sm:$0xff]
    %v2017 = vld [vmem:[#allocation5 + $0x38c8] sm:$0xff]
    %v2018 = vld [vmem:[#allocation5 + $0x38d0] sm:$0xff]
    %v2019 = vld [vmem:[#allocation5 + $0x38d8] sm:$0xff]
    %v2020 = vld [vmem:[#allocation5 + $0x38e0] sm:$0xff]
    %v2021 = vld [vmem:[#allocation5 + $0x38e8] sm:$0xff]
    %v2022 = vld [vmem:[#allocation5 + $0x38f0] sm:$0xff]
    %v2023 = vld [vmem:[#allocation5 + $0x38f8] sm:$0xff]
    %v2024 = vld [vmem:[#allocation5 + $0x3900] sm:$0xff]
    %v2025 = vld [vmem:[#allocation5 + $0x3908] sm:$0xff]
    %v2026 = vld [vmem:[#allocation5 + $0x3910] sm:$0xff]
    %v2027 = vld [vmem:[#allocation5 + $0x3918] sm:$0xff]
    %v2028 = vld [vmem:[#allocation5 + $0x3920] sm:$0xff]
    %v2029 = vld [vmem:[#allocation5 + $0x3928] sm:$0xff]
    %v2030 = vld [vmem:[#allocation5 + $0x3930] sm:$0xff]
    %v2031 = vld [vmem:[#allocation5 + $0x3938] sm:$0xff]
    %v2032 = vld [vmem:[#allocation5 + $0x3940] sm:$0xff]
    %v2033 = vld [vmem:[#allocation5 + $0x3948] sm:$0xff]
    %v2034 = vld [vmem:[#allocation5 + $0x3950] sm:$0xff]
    %v2035 = vld [vmem:[#allocation5 + $0x3958] sm:$0xff]
    %v2036 = vld [vmem:[#allocation5 + $0x3960] sm:$0xff]
    %v2037 = vld [vmem:[#allocation5 + $0x3968] sm:$0xff]
    %v2038 = vld [vmem:[#allocation5 + $0x3970] sm:$0xff]
    %v2039 = vld [vmem:[#allocation5 + $0x3978] sm:$0xff]
    %v2040 = vld [vmem:[#allocation5 + $0x3980] sm:$0xff]
    %v2041 = vld [vmem:[#allocation5 + $0x3988] sm:$0xff]
    %v2042 = vld [vmem:[#allocation5 + $0x3990] sm:$0xff]
    %v2043 = vld [vmem:[#allocation5 + $0x3998] sm:$0xff]
    %v2044 = vld [vmem:[#allocation5 + $0x39a0] sm:$0xff]
    %v2045 = vld [vmem:[#allocation5 + $0x39a8] sm:$0xff]
    %v2046 = vld [vmem:[#allocation5 + $0x39b0] sm:$0xff]
    %v2047 = vld [vmem:[#allocation5 + $0x39b8] sm:$0xff]
    %v2048 = vld [vmem:[#allocation5 + $0x39c0] sm:$0xff]
    %v2049 = vld [vmem:[#allocation5 + $0x39c8] sm:$0xff]
    %v2050 = vld [vmem:[#allocation5 + $0x39d0] sm:$0xff]
    %v2051 = vld [vmem:[#allocation5 + $0x39d8] sm:$0xff]
    %v2052 = vld [vmem:[#allocation5 + $0x39e0] sm:$0xff]
    %v2053 = vld [vmem:[#allocation5 + $0x39e8] sm:$0xff]
    %v2054 = vld [vmem:[#allocation5 + $0x39f0] sm:$0xff]
    %v2055 = vld [vmem:[#allocation5 + $0x39f8] sm:$0xff]
    %v2056 = vld [vmem:[#allocation5 + $0x3a00] sm:$0xff]
    %v2057 = vld [vmem:[#allocation5 + $0x3a08] sm:$0xff]
    %v2058 = vld [vmem:[#allocation5 + $0x3a10] sm:$0xff]
    %v2059 = vld [vmem:[#allocation5 + $0x3a18] sm:$0xff]
    %v2060 = vld [vmem:[#allocation5 + $0x3a20] sm:$0xff]
    %v2061 = vld [vmem:[#allocation5 + $0x3a28] sm:$0xff]
    %v2062 = vld [vmem:[#allocation5 + $0x3a30] sm:$0xff]
    %v2063 = vld [vmem:[#allocation5 + $0x3a38] sm:$0xff]
    %v2064 = vld [vmem:[#allocation5 + $0x3a40] sm:$0xff]
    %v2065 = vld [vmem:[#allocation5 + $0x3a48] sm:$0xff]
    %v2066 = vld [vmem:[#allocation5 + $0x3a50] sm:$0xff]
    %v2067 = vld [vmem:[#allocation5 + $0x3a58] sm:$0xff]
    %v2068 = vld [vmem:[#allocation5 + $0x3a60] sm:$0xff]
    %v2069 = vld [vmem:[#allocation5 + $0x3a68] sm:$0xff]
    %v2070 = vld [vmem:[#allocation5 + $0x3a70] sm:$0xff]
    %v2071 = vld [vmem:[#allocation5 + $0x3a78] sm:$0xff]
    %v2072 = vld [vmem:[#allocation5 + $0x3a80] sm:$0xff]
    %v2073 = vld [vmem:[#allocation5 + $0x3a88] sm:$0xff]
    %v2074 = vld [vmem:[#allocation5 + $0x3a90] sm:$0xff]
    %v2075 = vld [vmem:[#allocation5 + $0x3a98] sm:$0xff]
    %v2076 = vld [vmem:[#allocation5 + $0x3aa0] sm:$0xff]
    %v2077 = vld [vmem:[#allocation5 + $0x3aa8] sm:$0xff]
    %v2078 = vld [vmem:[#allocation5 + $0x3ab0] sm:$0xff]
    %v2079 = vld [vmem:[#allocation5 + $0x3ab8] sm:$0xff]
    %v2080 = vld [vmem:[#allocation5 + $0x3ac0] sm:$0xff]
    %v2081 = vld [vmem:[#allocation5 + $0x3ac8] sm:$0xff]
    %v2082 = vld [vmem:[#allocation5 + $0x3ad0] sm:$0xff]
    %v2083 = vld [vmem:[#allocation5 + $0x3ad8] sm:$0xff]
    %v2084 = vld [vmem:[#allocation5 + $0x3ae0] sm:$0xff]
    %v2085 = vld [vmem:[#allocation5 + $0x3ae8] sm:$0xff]
    %v2086 = vld [vmem:[#allocation5 + $0x3af0] sm:$0xff]
    %v2087 = vld [vmem:[#allocation5 + $0x3af8] sm:$0xff]
    %v2088 = vld [vmem:[#allocation5 + $0x3b00] sm:$0xff]
    %v2089 = vld [vmem:[#allocation5 + $0x3b08] sm:$0xff]
    %v2090 = vld [vmem:[#allocation5 + $0x3b10] sm:$0xff]
    %v2091 = vld [vmem:[#allocation5 + $0x3b18] sm:$0xff]
    %v2092 = vld [vmem:[#allocation5 + $0x3b20] sm:$0xff]
    %v2093 = vld [vmem:[#allocation5 + $0x3b28] sm:$0xff]
    %v2094 = vld [vmem:[#allocation5 + $0x3b30] sm:$0xff]
    %v2095 = vld [vmem:[#allocation5 + $0x3b38] sm:$0xff]
    %v2096 = vld [vmem:[#allocation5 + $0x3b40] sm:$0xff]
    %v2097 = vld [vmem:[#allocation5 + $0x3b48] sm:$0xff]
    %v2098 = vld [vmem:[#allocation5 + $0x3b50] sm:$0xff]
    %v2099 = vld [vmem:[#allocation5 + $0x3b58] sm:$0xff]
    %v2100 = vld [vmem:[#allocation5 + $0x3b60] sm:$0xff]
    %v2101 = vld [vmem:[#allocation5 + $0x3b68] sm:$0xff]
    %v2102 = vld [vmem:[#allocation5 + $0x3b70] sm:$0xff]
    %v2103 = vld [vmem:[#allocation5 + $0x3b78] sm:$0xff]
    %v2104 = vld [vmem:[#allocation5 + $0x3b80] sm:$0xff]
    %v2105 = vld [vmem:[#allocation5 + $0x3b88] sm:$0xff]
    %v2106 = vld [vmem:[#allocation5 + $0x3b90] sm:$0xff]
    %v2107 = vld [vmem:[#allocation5 + $0x3b98] sm:$0xff]
    %v2108 = vld [vmem:[#allocation5 + $0x3ba0] sm:$0xff]
    %v2109 = vld [vmem:[#allocation5 + $0x3ba8] sm:$0xff]
    %v2110 = vld [vmem:[#allocation5 + $0x3bb0] sm:$0xff]
    %v2111 = vld [vmem:[#allocation5 + $0x3bb8] sm:$0xff]
    %v2112 = vld [vmem:[#allocation5 + $0x3bc0] sm:$0xff]
    %v2113 = vld [vmem:[#allocation5 + $0x3bc8] sm:$0xff]
    %v2114 = vld [vmem:[#allocation5 + $0x3bd0] sm:$0xff]
    %v2115 = vld [vmem:[#allocation5 + $0x3bd8] sm:$0xff]
    %v2116 = vld [vmem:[#allocation5 + $0x3be0] sm:$0xff]
    %v2117 = vld [vmem:[#allocation5 + $0x3be8] sm:$0xff]
    %v2118 = vld [vmem:[#allocation5 + $0x3bf0] sm:$0xff]
    %v2119 = vld [vmem:[#allocation5 + $0x3bf8] sm:$0xff]
    %v2120 = vld [vmem:[#allocation5 + $0x3c00] sm:$0xff]
    %v2121 = vld [vmem:[#allocation5 + $0x3c08] sm:$0xff]
    %v2122 = vld [vmem:[#allocation5 + $0x3c10] sm:$0xff]
    %v2123 = vld [vmem:[#allocation5 + $0x3c18] sm:$0xff]
    %v2124 = vld [vmem:[#allocation5 + $0x3c20] sm:$0xff]
    %v2125 = vld [vmem:[#allocation5 + $0x3c28] sm:$0xff]
    %v2126 = vld [vmem:[#allocation5 + $0x3c30] sm:$0xff]
    %v2127 = vld [vmem:[#allocation5 + $0x3c38] sm:$0xff]
    %v2128 = vld [vmem:[#allocation5 + $0x3c40] sm:$0xff]
    %v2129 = vld [vmem:[#allocation5 + $0x3c48] sm:$0xff]
    %v2130 = vld [vmem:[#allocation5 + $0x3c50] sm:$0xff]
    %v2131 = vld [vmem:[#allocation5 + $0x3c58] sm:$0xff]
    %v2132 = vld [vmem:[#allocation5 + $0x3c60] sm:$0xff]
    %v2133 = vld [vmem:[#allocation5 + $0x3c68] sm:$0xff]
    %v2134 = vld [vmem:[#allocation5 + $0x3c70] sm:$0xff]
    %v2135 = vld [vmem:[#allocation5 + $0x3c78] sm:$0xff]
    %v2136 = vld [vmem:[#allocation5 + $0x3c80] sm:$0xff]
    %v2137 = vld [vmem:[#allocation5 + $0x3c88] sm:$0xff]
    %v2138 = vld [vmem:[#allocation5 + $0x3c90] sm:$0xff]
    %v2139 = vld [vmem:[#allocation5 + $0x3c98] sm:$0xff]
    %v2140 = vld [vmem:[#allocation5 + $0x3ca0] sm:$0xff]
    %v2141 = vld [vmem:[#allocation5 + $0x3ca8] sm:$0xff]
    %v2142 = vld [vmem:[#allocation5 + $0x3cb0] sm:$0xff]
    %v2143 = vld [vmem:[#allocation5 + $0x3cb8] sm:$0xff]
    %v2144 = vld [vmem:[#allocation5 + $0x3cc0] sm:$0xff]
    %v2145 = vld [vmem:[#allocation5 + $0x3cc8] sm:$0xff]
    %v2146 = vld [vmem:[#allocation5 + $0x3cd0] sm:$0xff]
    %v2147 = vld [vmem:[#allocation5 + $0x3cd8] sm:$0xff]
    %v2148 = vld [vmem:[#allocation5 + $0x3ce0] sm:$0xff]
    %v2149 = vld [vmem:[#allocation5 + $0x3ce8] sm:$0xff]
    %v2150 = vld [vmem:[#allocation5 + $0x3cf0] sm:$0xff]
    %v2151 = vld [vmem:[#allocation5 + $0x3cf8] sm:$0xff]
    %v2152 = vld [vmem:[#allocation5 + $0x3d00] sm:$0xff]
    %v2153 = vld [vmem:[#allocation5 + $0x3d08] sm:$0xff]
    %v2154 = vld [vmem:[#allocation5 + $0x3d10] sm:$0xff]
    %v2155 = vld [vmem:[#allocation5 + $0x3d18] sm:$0xff]
    %v2156 = vld [vmem:[#allocation5 + $0x3d20] sm:$0xff]
    %v2157 = vld [vmem:[#allocation5 + $0x3d28] sm:$0xff]
    %v2158 = vld [vmem:[#allocation5 + $0x3d30] sm:$0xff]
    %v2159 = vld [vmem:[#allocation5 + $0x3d38] sm:$0xff]
    %v2160 = vld [vmem:[#allocation5 + $0x3d40] sm:$0xff]
    %v2161 = vld [vmem:[#allocation5 + $0x3d48] sm:$0xff]
    %v2162 = vld [vmem:[#allocation5 + $0x3d50] sm:$0xff]
    %v2163 = vld [vmem:[#allocation5 + $0x3d58] sm:$0xff]
    %v2164 = vld [vmem:[#allocation5 + $0x3d60] sm:$0xff]
    %v2165 = vld [vmem:[#allocation5 + $0x3d68] sm:$0xff]
    %v2166 = vld [vmem:[#allocation5 + $0x3d70] sm:$0xff]
    %v2167 = vld [vmem:[#allocation5 + $0x3d78] sm:$0xff]
    %v2168 = vld [vmem:[#allocation5 + $0x3d80] sm:$0xff]
    %v2169 = vld [vmem:[#allocation5 + $0x3d88] sm:$0xff]
    %v2170 = vld [vmem:[#allocation5 + $0x3d90] sm:$0xff]
    %v2171 = vld [vmem:[#allocation5 + $0x3d98] sm:$0xff]
    %v2172 = vld [vmem:[#allocation5 + $0x3da0] sm:$0xff]
    %v2173 = vld [vmem:[#allocation5 + $0x3da8] sm:$0xff]
    %v2174 = vld [vmem:[#allocation5 + $0x3db0] sm:$0xff]
    %v2175 = vld [vmem:[#allocation5 + $0x3db8] sm:$0xff]
    %v2176 = vld [vmem:[#allocation5 + $0x3dc0] sm:$0xff]
    %v2177 = vld [vmem:[#allocation5 + $0x3dc8] sm:$0xff]
    %v2178 = vld [vmem:[#allocation5 + $0x3dd0] sm:$0xff]
    %v2179 = vld [vmem:[#allocation5 + $0x3dd8] sm:$0xff]
    %v2180 = vld [vmem:[#allocation5 + $0x3de0] sm:$0xff]
    %v2181 = vld [vmem:[#allocation5 + $0x3de8] sm:$0xff]
    %v2182 = vld [vmem:[#allocation5 + $0x3df0] sm:$0xff]
    %v2183 = vld [vmem:[#allocation5 + $0x3df8] sm:$0xff]
    %v2184 = vld [vmem:[#allocation5 + $0x3e00] sm:$0xff]
    %v2185 = vld [vmem:[#allocation5 + $0x3e08] sm:$0xff]
    %v2186 = vld [vmem:[#allocation5 + $0x3e10] sm:$0xff]
    %v2187 = vld [vmem:[#allocation5 + $0x3e18] sm:$0xff]
    %v2188 = vld [vmem:[#allocation5 + $0x3e20] sm:$0xff]
    %v2189 = vld [vmem:[#allocation5 + $0x3e28] sm:$0xff]
    %v2190 = vld [vmem:[#allocation5 + $0x3e30] sm:$0xff]
    %v2191 = vld [vmem:[#allocation5 + $0x3e38] sm:$0xff]
    %v2192 = vld [vmem:[#allocation5 + $0x3e40] sm:$0xff]
    %v2193 = vld [vmem:[#allocation5 + $0x3e48] sm:$0xff]
    %v2194 = vld [vmem:[#allocation5 + $0x3e50] sm:$0xff]
    %v2195 = vld [vmem:[#allocation5 + $0x3e58] sm:$0xff]
    %v2196 = vld [vmem:[#allocation5 + $0x3e60] sm:$0xff]
    %v2197 = vld [vmem:[#allocation5 + $0x3e68] sm:$0xff]
    %v2198 = vld [vmem:[#allocation5 + $0x3e70] sm:$0xff]
    %v2199 = vld [vmem:[#allocation5 + $0x3e78] sm:$0xff]
    %v2200 = vld [vmem:[#allocation5 + $0x3e80] sm:$0xff]
    %v2201 = vld [vmem:[#allocation5 + $0x3e88] sm:$0xff]
    %v2202 = vld [vmem:[#allocation5 + $0x3e90] sm:$0xff]
    %v2203 = vld [vmem:[#allocation5 + $0x3e98] sm:$0xff]
    %v2204 = vld [vmem:[#allocation5 + $0x3ea0] sm:$0xff]
    %v2205 = vld [vmem:[#allocation5 + $0x3ea8] sm:$0xff]
    %v2206 = vld [vmem:[#allocation5 + $0x3eb0] sm:$0xff]
    %v2207 = vld [vmem:[#allocation5 + $0x3eb8] sm:$0xff]
    %v2208 = vld [vmem:[#allocation5 + $0x3ec0] sm:$0xff]
    %v2209 = vld [vmem:[#allocation5 + $0x3ec8] sm:$0xff]
    %v2210 = vld [vmem:[#allocation5 + $0x3ed0] sm:$0xff]
    %v2211 = vld [vmem:[#allocation5 + $0x3ed8] sm:$0xff]
    %v2212 = vld [vmem:[#allocation5 + $0x3ee0] sm:$0xff]
    %v2213 = vld [vmem:[#allocation5 + $0x3ee8] sm:$0xff]
    %v2214 = vld [vmem:[#allocation5 + $0x3ef0] sm:$0xff]
    %v2215 = vld [vmem:[#allocation5 + $0x3ef8] sm:$0xff]
    %v2216 = vld [vmem:[#allocation5 + $0x3f00] sm:$0xff]
    %v2217 = vld [vmem:[#allocation5 + $0x3f08] sm:$0xff]
    %v2218 = vld [vmem:[#allocation5 + $0x3f10] sm:$0xff]
    %v2219 = vld [vmem:[#allocation5 + $0x3f18] sm:$0xff]
    %v2220 = vld [vmem:[#allocation5 + $0x3f20] sm:$0xff]
    %v2221 = vld [vmem:[#allocation5 + $0x3f28] sm:$0xff]
    %v2222 = vld [vmem:[#allocation5 + $0x3f30] sm:$0xff]
    %v2223 = vld [vmem:[#allocation5 + $0x3f38] sm:$0xff]
    %v2224 = vld [vmem:[#allocation5 + $0x3f40] sm:$0xff]
    %v2225 = vld [vmem:[#allocation5 + $0x3f48] sm:$0xff]
    %v2226 = vld [vmem:[#allocation5 + $0x3f50] sm:$0xff]
    %v2227 = vld [vmem:[#allocation5 + $0x3f58] sm:$0xff]
    %v2228 = vld [vmem:[#allocation5 + $0x3f60] sm:$0xff]
    %v2229 = vld [vmem:[#allocation5 + $0x3f68] sm:$0xff]
    %v2230 = vld [vmem:[#allocation5 + $0x3f70] sm:$0xff]
    %v2231 = vld [vmem:[#allocation5 + $0x3f78] sm:$0xff]
    %v2232 = vld [vmem:[#allocation5 + $0x3f80] sm:$0xff]
    %v2233 = vld [vmem:[#allocation5 + $0x3f88] sm:$0xff]
    %v2234 = vld [vmem:[#allocation5 + $0x3f90] sm:$0xff]
    %v2235 = vld [vmem:[#allocation5 + $0x3f98] sm:$0xff]
    %v2236 = vld [vmem:[#allocation5 + $0x3fa0] sm:$0xff]
    %v2237 = vld [vmem:[#allocation5 + $0x3fa8] sm:$0xff]
    %v2238 = vld [vmem:[#allocation5 + $0x3fb0] sm:$0xff]
    %v2239 = vld [vmem:[#allocation5 + $0x3fb8] sm:$0xff]
    %v2240 = vld [vmem:[#allocation5 + $0x3fc0] sm:$0xff]
    %v2241 = vld [vmem:[#allocation5 + $0x3fc8] sm:$0xff]
    %v2242 = vld [vmem:[#allocation5 + $0x3fd0] sm:$0xff]
    %v2243 = vld [vmem:[#allocation5 + $0x3fd8] sm:$0xff]
    %v2244 = vld [vmem:[#allocation5 + $0x3fe0] sm:$0xff]
    %v2245 = vld [vmem:[#allocation5 + $0x3fe8] sm:$0xff]
    %v2246 = vld [vmem:[#allocation5 + $0x3ff0] sm:$0xff]
    %v2247 = vld [vmem:[#allocation5 + $0x3ff8] sm:$0xff]
    %v2248 = vld [vmem:[#allocation5 + $0x4000] sm:$0xff]
    %v2249 = vld [vmem:[#allocation5 + $0x4008] sm:$0xff]
    %v2250 = vld [vmem:[#allocation5 + $0x4010] sm:$0xff]
    %v2251 = vld [vmem:[#allocation5 + $0x4018] sm:$0xff]
    %v2252 = vld [vmem:[#allocation5 + $0x4020] sm:$0xff]
    %v2253 = vld [vmem:[#allocation5 + $0x4028] sm:$0xff]
    %v2254 = vld [vmem:[#allocation5 + $0x4030] sm:$0xff]
    %v2255 = vld [vmem:[#allocation5 + $0x4038] sm:$0xff]
    %v2256 = vld [vmem:[#allocation5 + $0x4040] sm:$0xff]
    %v2257 = vld [vmem:[#allocation5 + $0x4048] sm:$0xff]
    %v2258 = vld [vmem:[#allocation5 + $0x4050] sm:$0xff]
    %v2259 = vld [vmem:[#allocation5 + $0x4058] sm:$0xff]
    %v2260 = vld [vmem:[#allocation5 + $0x4060] sm:$0xff]
    %v2261 = vld [vmem:[#allocation5 + $0x4068] sm:$0xff]
    %v2262 = vld [vmem:[#allocation5 + $0x4070] sm:$0xff]
    %v2263 = vld [vmem:[#allocation5 + $0x4078] sm:$0xff]
    %v2264 = vld [vmem:[#allocation5 + $0x4080] sm:$0xff]
    %v2265 = vld [vmem:[#allocation5 + $0x4088] sm:$0xff]
    %v2266 = vld [vmem:[#allocation5 + $0x4090] sm:$0xff]
    %v2267 = vld [vmem:[#allocation5 + $0x4098] sm:$0xff]
    %v2268 = vld [vmem:[#allocation5 + $0x40a0] sm:$0xff]
    %v2269 = vld [vmem:[#allocation5 + $0x40a8] sm:$0xff]
    %v2270 = vld [vmem:[#allocation5 + $0x40b0] sm:$0xff]
    %v2271 = vld [vmem:[#allocation5 + $0x40b8] sm:$0xff]
    %v2272 = vld [vmem:[#allocation5 + $0x40c0] sm:$0xff]
    %v2273 = vld [vmem:[#allocation5 + $0x40c8] sm:$0xff]
    %v2274 = vld [vmem:[#allocation5 + $0x40d0] sm:$0xff]
    %v2275 = vld [vmem:[#allocation5 + $0x40d8] sm:$0xff]
    %v2276 = vld [vmem:[#allocation5 + $0x40e0] sm:$0xff]
    %v2277 = vld [vmem:[#allocation5 + $0x40e8] sm:$0xff]
    %v2278 = vld [vmem:[#allocation5 + $0x40f0] sm:$0xff]
    %v2279 = vld [vmem:[#allocation5 + $0x40f8] sm:$0xff]
    %v2280 = vld [vmem:[#allocation5 + $0x4100] sm:$0xff]
    %v2281 = vld [vmem:[#allocation5 + $0x4108] sm:$0xff]
    %v2282 = vld [vmem:[#allocation5 + $0x4110] sm:$0xff]
    %v2283 = vld [vmem:[#allocation5 + $0x4118] sm:$0xff]
    %v2284 = vld [vmem:[#allocation5 + $0x4120] sm:$0xff]
    %v2285 = vld [vmem:[#allocation5 + $0x4128] sm:$0xff]
    %v2286 = vld [vmem:[#allocation5 + $0x4130] sm:$0xff]
    %v2287 = vld [vmem:[#allocation5 + $0x4138] sm:$0xff]
    %v2288 = vld [vmem:[#allocation5 + $0x4140] sm:$0xff]
    %v2289 = vld [vmem:[#allocation5 + $0x4148] sm:$0xff]
    %v2290 = vld [vmem:[#allocation5 + $0x4150] sm:$0xff]
    %v2291 = vld [vmem:[#allocation5 + $0x4158] sm:$0xff]
    %v2292 = vld [vmem:[#allocation5 + $0x4160] sm:$0xff]
    %v2293 = vld [vmem:[#allocation5 + $0x4168] sm:$0xff]
    %v2294 = vld [vmem:[#allocation5 + $0x4170] sm:$0xff]
    %v2295 = vld [vmem:[#allocation5 + $0x4178] sm:$0xff]
    %v2296 = vld [vmem:[#allocation5 + $0x4180] sm:$0xff]
    %v2297 = vld [vmem:[#allocation5 + $0x4188] sm:$0xff]
    %v2298 = vld [vmem:[#allocation5 + $0x4190] sm:$0xff]
    %v2299 = vld [vmem:[#allocation5 + $0x4198] sm:$0xff]
    %v2300 = vld [vmem:[#allocation5 + $0x41a0] sm:$0xff]
    %v2301 = vld [vmem:[#allocation5 + $0x41a8] sm:$0xff]
    %v2302 = vld [vmem:[#allocation5 + $0x41b0] sm:$0xff]
    %v2303 = vld [vmem:[#allocation5 + $0x41b8] sm:$0xff]
    %v2304 = vld [vmem:[#allocation5 + $0x41c0] sm:$0xff]
    %v2305 = vld [vmem:[#allocation5 + $0x41c8] sm:$0xff]
    %v2306 = vld [vmem:[#allocation5 + $0x41d0] sm:$0xff]
    %v2307 = vld [vmem:[#allocation5 + $0x41d8] sm:$0xff]
    %v2308 = vld [vmem:[#allocation5 + $0x41e0] sm:$0xff]
    %v2309 = vld [vmem:[#allocation5 + $0x41e8] sm:$0xff]
    %v2310 = vld [vmem:[#allocation5 + $0x41f0] sm:$0xff]
    %v2311 = vld [vmem:[#allocation5 + $0x41f8] sm:$0xff]
    %v2312 = vld [vmem:[#allocation5 + $0x4200] sm:$0xff]
    %v2313 = vld [vmem:[#allocation5 + $0x4208] sm:$0xff]
    %v2314 = vld [vmem:[#allocation5 + $0x4210] sm:$0xff]
    %v2315 = vld [vmem:[#allocation5 + $0x4218] sm:$0xff]
    %v2316 = vld [vmem:[#allocation5 + $0x4220] sm:$0xff]
    %v2317 = vld [vmem:[#allocation5 + $0x4228] sm:$0xff]
    %v2318 = vld [vmem:[#allocation5 + $0x4230] sm:$0xff]
    %v2319 = vld [vmem:[#allocation5 + $0x4238] sm:$0xff]
    %v2320 = vld [vmem:[#allocation5 + $0x4240] sm:$0xff]
    %v2321 = vld [vmem:[#allocation5 + $0x4248] sm:$0xff]
    %v2322 = vld [vmem:[#allocation5 + $0x4250] sm:$0xff]
    %v2323 = vld [vmem:[#allocation5 + $0x4258] sm:$0xff]
    %v2324 = vld [vmem:[#allocation5 + $0x4260] sm:$0xff]
    %v2325 = vld [vmem:[#allocation5 + $0x4268] sm:$0xff]
    %v2326 = vld [vmem:[#allocation5 + $0x4270] sm:$0xff]
    %v2327 = vld [vmem:[#allocation5 + $0x4278] sm:$0xff]
    %v2328 = vld [vmem:[#allocation5 + $0x4280] sm:$0xff]
    %v2329 = vld [vmem:[#allocation5 + $0x4288] sm:$0xff]
    %v2330 = vld [vmem:[#allocation5 + $0x4290] sm:$0xff]
    %v2331 = vld [vmem:[#allocation5 + $0x4298] sm:$0xff]
    %v2332 = vld [vmem:[#allocation5 + $0x42a0] sm:$0xff]
    %v2333 = vld [vmem:[#allocation5 + $0x42a8] sm:$0xff]
    %v2334 = vld [vmem:[#allocation5 + $0x42b0] sm:$0xff]
    %v2335 = vld [vmem:[#allocation5 + $0x42b8] sm:$0xff]
    %v2336 = vld [vmem:[#allocation5 + $0x42c0] sm:$0xff]
    %v2337 = vld [vmem:[#allocation5 + $0x42c8] sm:$0xff]
    %v2338 = vld [vmem:[#allocation5 + $0x42d0] sm:$0xff]
    %v2339 = vld [vmem:[#allocation5 + $0x42d8] sm:$0xff]
    %v2340 = vld [vmem:[#allocation5 + $0x42e0] sm:$0xff]
    %v2341 = vld [vmem:[#allocation5 + $0x42e8] sm:$0xff]
    %v2342 = vld [vmem:[#allocation5 + $0x42f0] sm:$0xff]
    %v2343 = vld [vmem:[#allocation5 + $0x42f8] sm:$0xff]
    %v2344 = vld [vmem:[#allocation5 + $0x4300] sm:$0xff]
    %v2345 = vld [vmem:[#allocation5 + $0x4308] sm:$0xff]
    %v2346 = vld [vmem:[#allocation5 + $0x4310] sm:$0xff]
    %v2347 = vld [vmem:[#allocation5 + $0x4318] sm:$0xff]
    %v2348 = vld [vmem:[#allocation5 + $0x4320] sm:$0xff]
    %v2349 = vld [vmem:[#allocation5 + $0x4328] sm:$0xff]
    %v2350 = vld [vmem:[#allocation5 + $0x4330] sm:$0xff]
    %v2351 = vld [vmem:[#allocation5 + $0x4338] sm:$0xff]
    %v2352 = vld [vmem:[#allocation5 + $0x4340] sm:$0xff]
    %v2353 = vld [vmem:[#allocation5 + $0x4348] sm:$0xff]
    %v2354 = vld [vmem:[#allocation5 + $0x4350] sm:$0xff]
    %v2355 = vld [vmem:[#allocation5 + $0x4358] sm:$0xff]
    %v2356 = vld [vmem:[#allocation5 + $0x4360] sm:$0xff]
    %v2357 = vld [vmem:[#allocation5 + $0x4368] sm:$0xff]
    %v2358 = vld [vmem:[#allocation5 + $0x4370] sm:$0xff]
    %v2359 = vld [vmem:[#allocation5 + $0x4378] sm:$0xff]
    %v2360 = vld [vmem:[#allocation5 + $0x4380] sm:$0xff]
    %v2361 = vld [vmem:[#allocation5 + $0x4388] sm:$0xff]
    %v2362 = vld [vmem:[#allocation5 + $0x4390] sm:$0xff]
    %v2363 = vld [vmem:[#allocation5 + $0x4398] sm:$0xff]
    %v2364 = vld [vmem:[#allocation5 + $0x43a0] sm:$0xff]
    %v2365 = vld [vmem:[#allocation5 + $0x43a8] sm:$0xff]
    %v2366 = vld [vmem:[#allocation5 + $0x43b0] sm:$0xff]
    %v2367 = vld [vmem:[#allocation5 + $0x43b8] sm:$0xff]
    %v2368 = vld [vmem:[#allocation5 + $0x43c0] sm:$0xff]
    %v2369 = vld [vmem:[#allocation5 + $0x43c8] sm:$0xff]
    %v2370 = vld [vmem:[#allocation5 + $0x43d0] sm:$0xff]
    %v2371 = vld [vmem:[#allocation5 + $0x43d8] sm:$0xff]
    %v2372 = vld [vmem:[#allocation5 + $0x43e0] sm:$0xff]
    %v2373 = vld [vmem:[#allocation5 + $0x43e8] sm:$0xff]
    %v2374 = vld [vmem:[#allocation5 + $0x43f0] sm:$0xff]
    %v2375 = vld [vmem:[#allocation5 + $0x43f8] sm:$0xff]
    %v2376 = vld [vmem:[#allocation5 + $0x4400] sm:$0xff]
    %v2377 = vld [vmem:[#allocation5 + $0x4408] sm:$0xff]
    %v2378 = vld [vmem:[#allocation5 + $0x4410] sm:$0xff]
    %v2379 = vld [vmem:[#allocation5 + $0x4418] sm:$0xff]
    %v2380 = vld [vmem:[#allocation5 + $0x4420] sm:$0xff]
    %v2381 = vld [vmem:[#allocation5 + $0x4428] sm:$0xff]
    %v2382 = vld [vmem:[#allocation5 + $0x4430] sm:$0xff]
    %v2383 = vld [vmem:[#allocation5 + $0x4438] sm:$0xff]
    %v2384 = vld [vmem:[#allocation5 + $0x4440] sm:$0xff]
    %v2385 = vld [vmem:[#allocation5 + $0x4448] sm:$0xff]
    %v2386 = vld [vmem:[#allocation5 + $0x4450] sm:$0xff]
    %v2387 = vld [vmem:[#allocation5 + $0x4458] sm:$0xff]
    %v2388 = vld [vmem:[#allocation5 + $0x4460] sm:$0xff]
    %v2389 = vld [vmem:[#allocation5 + $0x4468] sm:$0xff]
    %v2390 = vld [vmem:[#allocation5 + $0x4470] sm:$0xff]
    %v2391 = vld [vmem:[#allocation5 + $0x4478] sm:$0xff]
    %v2392 = vld [vmem:[#allocation5 + $0x4480] sm:$0xff]
    %v2393 = vld [vmem:[#allocation5 + $0x4488] sm:$0xff]
    %v2394 = vld [vmem:[#allocation5 + $0x4490] sm:$0xff]
    %v2395 = vld [vmem:[#allocation5 + $0x4498] sm:$0xff]
    %v2396 = vld [vmem:[#allocation5 + $0x44a0] sm:$0xff]
    %v2397 = vld [vmem:[#allocation5 + $0x44a8] sm:$0xff]
    %v2398 = vld [vmem:[#allocation5 + $0x44b0] sm:$0xff]
    %v2399 = vld [vmem:[#allocation5 + $0x44b8] sm:$0xff]
    %v2400 = vld [vmem:[#allocation5 + $0x44c0] sm:$0xff]
    %v2401 = vld [vmem:[#allocation5 + $0x44c8] sm:$0xff]
    %v2402 = vld [vmem:[#allocation5 + $0x44d0] sm:$0xff]
    %v2403 = vld [vmem:[#allocation5 + $0x44d8] sm:$0xff]
    %v2404 = vld [vmem:[#allocation5 + $0x44e0] sm:$0xff]
    %v2405 = vld [vmem:[#allocation5 + $0x44e8] sm:$0xff]
    %v2406 = vld [vmem:[#allocation5 + $0x44f0] sm:$0xff]
    %v2407 = vld [vmem:[#allocation5 + $0x44f8] sm:$0xff]
    %v2408 = vld [vmem:[#allocation5 + $0x4500] sm:$0xff]
    %v2409 = vld [vmem:[#allocation5 + $0x4508] sm:$0xff]
    %v2410 = vld [vmem:[#allocation5 + $0x4510] sm:$0xff]
    %v2411 = vld [vmem:[#allocation5 + $0x4518] sm:$0xff]
    %v2412 = vld [vmem:[#allocation5 + $0x4520] sm:$0xff]
    %v2413 = vld [vmem:[#allocation5 + $0x4528] sm:$0xff]
    %v2414 = vld [vmem:[#allocation5 + $0x4530] sm:$0xff]
    %v2415 = vld [vmem:[#allocation5 + $0x4538] sm:$0xff]
    %v2416 = vld [vmem:[#allocation5 + $0x4540] sm:$0xff]
    %v2417 = vld [vmem:[#allocation5 + $0x4548] sm:$0xff]
    %v2418 = vld [vmem:[#allocation5 + $0x4550] sm:$0xff]
    %v2419 = vld [vmem:[#allocation5 + $0x4558] sm:$0xff]
    %v2420 = vld [vmem:[#allocation5 + $0x4560] sm:$0xff]
    %v2421 = vld [vmem:[#allocation5 + $0x4568] sm:$0xff]
    %v2422 = vld [vmem:[#allocation5 + $0x4570] sm:$0xff]
    %v2423 = vld [vmem:[#allocation5 + $0x4578] sm:$0xff]
    %v2424 = vld [vmem:[#allocation5 + $0x4580] sm:$0xff]
    %v2425 = vld [vmem:[#allocation5 + $0x4588] sm:$0xff]
    %v2426 = vld [vmem:[#allocation5 + $0x4590] sm:$0xff]
    %v2427 = vld [vmem:[#allocation5 + $0x4598] sm:$0xff]
    %v2428 = vld [vmem:[#allocation5 + $0x45a0] sm:$0xff]
    %v2429 = vld [vmem:[#allocation5 + $0x45a8] sm:$0xff]
    %v2430 = vld [vmem:[#allocation5 + $0x45b0] sm:$0xff]
    %v2431 = vld [vmem:[#allocation5 + $0x45b8] sm:$0xff]
    %v2432 = vld [vmem:[#allocation5 + $0x45c0] sm:$0xff]
    %v2433 = vld [vmem:[#allocation5 + $0x45c8] sm:$0xff]
    %v2434 = vld [vmem:[#allocation5 + $0x45d0] sm:$0xff]
    %v2435 = vld [vmem:[#allocation5 + $0x45d8] sm:$0xff]
    %v2436 = vld [vmem:[#allocation5 + $0x45e0] sm:$0xff]
    %v2437 = vld [vmem:[#allocation5 + $0x45e8] sm:$0xff]
    %v2438 = vld [vmem:[#allocation5 + $0x45f0] sm:$0xff]
    %v2439 = vld [vmem:[#allocation5 + $0x45f8] sm:$0xff]
    %v2440 = vld [vmem:[#allocation5 + $0x4600] sm:$0xff]
    %v2441 = vld [vmem:[#allocation5 + $0x4608] sm:$0xff]
    %v2442 = vld [vmem:[#allocation5 + $0x4610] sm:$0xff]
    %v2443 = vld [vmem:[#allocation5 + $0x4618] sm:$0xff]
    %v2444 = vld [vmem:[#allocation5 + $0x4620] sm:$0xff]
    %v2445 = vld [vmem:[#allocation5 + $0x4628] sm:$0xff]
    %v2446 = vld [vmem:[#allocation5 + $0x4630] sm:$0xff]
    %v2447 = vld [vmem:[#allocation5 + $0x4638] sm:$0xff]
    %v2448 = vld [vmem:[#allocation5 + $0x4640] sm:$0xff]
    %v2449 = vld [vmem:[#allocation5 + $0x4648] sm:$0xff]
    %v2450 = vld [vmem:[#allocation5 + $0x4650] sm:$0xff]
    %v2451 = vld [vmem:[#allocation5 + $0x4658] sm:$0xff]
    %v2452 = vld [vmem:[#allocation5 + $0x4660] sm:$0xff]
    %v2453 = vld [vmem:[#allocation5 + $0x4668] sm:$0xff]
    %v2454 = vld [vmem:[#allocation5 + $0x4670] sm:$0xff]
    %v2455 = vld [vmem:[#allocation5 + $0x4678] sm:$0xff]
    %v2456 = vld [vmem:[#allocation5 + $0x4680] sm:$0xff]
    %v2457 = vld [vmem:[#allocation5 + $0x4688] sm:$0xff]
    %v2458 = vld [vmem:[#allocation5 + $0x4690] sm:$0xff]
    %v2459 = vld [vmem:[#allocation5 + $0x4698] sm:$0xff]
    %v2460 = vld [vmem:[#allocation5 + $0x46a0] sm:$0xff]
    %v2461 = vld [vmem:[#allocation5 + $0x46a8] sm:$0xff]
    %v2462 = vld [vmem:[#allocation5 + $0x46b0] sm:$0xff]
    %v2463 = vld [vmem:[#allocation5 + $0x46b8] sm:$0xff]
    %v2464 = vld [vmem:[#allocation5 + $0x46c0] sm:$0xff]
    %v2465 = vld [vmem:[#allocation5 + $0x46c8] sm:$0xff]
    %v2466 = vld [vmem:[#allocation5 + $0x46d0] sm:$0xff]
    %v2467 = vld [vmem:[#allocation5 + $0x46d8] sm:$0xff]
    %v2468 = vld [vmem:[#allocation5 + $0x46e0] sm:$0xff]
    %v2469 = vld [vmem:[#allocation5 + $0x46e8] sm:$0xff]
    %v2470 = vld [vmem:[#allocation5 + $0x46f0] sm:$0xff]
    %v2471 = vld [vmem:[#allocation5 + $0x46f8] sm:$0xff]
    %v2472 = vld [vmem:[#allocation5 + $0x4700] sm:$0xff]
    %v2473 = vld [vmem:[#allocation5 + $0x4708] sm:$0xff]
    %v2474 = vld [vmem:[#allocation5 + $0x4710] sm:$0xff]
    %v2475 = vld [vmem:[#allocation5 + $0x4718] sm:$0xff]
    %v2476 = vld [vmem:[#allocation5 + $0x4720] sm:$0xff]
    %v2477 = vld [vmem:[#allocation5 + $0x4728] sm:$0xff]
    %v2478 = vld [vmem:[#allocation5 + $0x4730] sm:$0xff]
    %v2479 = vld [vmem:[#allocation5 + $0x4738] sm:$0xff]
    %v2480 = vld [vmem:[#allocation5 + $0x4740] sm:$0xff]
    %v2481 = vld [vmem:[#allocation5 + $0x4748] sm:$0xff]
    %v2482 = vld [vmem:[#allocation5 + $0x4750] sm:$0xff]
    %v2483 = vld [vmem:[#allocation5 + $0x4758] sm:$0xff]
    %v2484 = vld [vmem:[#allocation5 + $0x4760] sm:$0xff]
    %v2485 = vld [vmem:[#allocation5 + $0x4768] sm:$0xff]
    %v2486 = vld [vmem:[#allocation5 + $0x4770] sm:$0xff]
    %v2487 = vld [vmem:[#allocation5 + $0x4778] sm:$0xff]
    %v2488 = vld [vmem:[#allocation5 + $0x4780] sm:$0xff]
    %v2489 = vld [vmem:[#allocation5 + $0x4788] sm:$0xff]
    %v2490 = vld [vmem:[#allocation5 + $0x4790] sm:$0xff]
    %v2491 = vld [vmem:[#allocation5 + $0x4798] sm:$0xff]
    %v2492 = vld [vmem:[#allocation5 + $0x47a0] sm:$0xff]
    %v2493 = vld [vmem:[#allocation5 + $0x47a8] sm:$0xff]
    %v2494 = vld [vmem:[#allocation5 + $0x47b0] sm:$0xff]
    %v2495 = vld [vmem:[#allocation5 + $0x47b8] sm:$0xff]
    %v2496 = vld [vmem:[#allocation5 + $0x47c0] sm:$0xff]
    %v2497 = vld [vmem:[#allocation5 + $0x47c8] sm:$0xff]
    %v2498 = vld [vmem:[#allocation5 + $0x47d0] sm:$0xff]
    %v2499 = vld [vmem:[#allocation5 + $0x47d8] sm:$0xff]
    %v2500 = vld [vmem:[#allocation5 + $0x47e0] sm:$0xff]
    %v2501 = vld [vmem:[#allocation5 + $0x47e8] sm:$0xff]
    %v2502 = vld [vmem:[#allocation5 + $0x47f0] sm:$0xff]
    %v2503 = vld [vmem:[#allocation5 + $0x47f8] sm:$0xff]
    %v2504 = vld [vmem:[#allocation5 + $0x4800] sm:$0xff]
    %v2505 = vld [vmem:[#allocation5 + $0x4808] sm:$0xff]
    %v2506 = vld [vmem:[#allocation5 + $0x4810] sm:$0xff]
    %v2507 = vld [vmem:[#allocation5 + $0x4818] sm:$0xff]
    %v2508 = vld [vmem:[#allocation5 + $0x4820] sm:$0xff]
    %v2509 = vld [vmem:[#allocation5 + $0x4828] sm:$0xff]
    %v2510 = vld [vmem:[#allocation5 + $0x4830] sm:$0xff]
    %v2511 = vld [vmem:[#allocation5 + $0x4838] sm:$0xff]
    %v2512 = vld [vmem:[#allocation5 + $0x4840] sm:$0xff]
    %v2513 = vld [vmem:[#allocation5 + $0x4848] sm:$0xff]
    %v2514 = vld [vmem:[#allocation5 + $0x4850] sm:$0xff]
    %v2515 = vld [vmem:[#allocation5 + $0x4858] sm:$0xff]
    %v2516 = vld [vmem:[#allocation5 + $0x4860] sm:$0xff]
    %v2517 = vld [vmem:[#allocation5 + $0x4868] sm:$0xff]
    %v2518 = vld [vmem:[#allocation5 + $0x4870] sm:$0xff]
    %v2519 = vld [vmem:[#allocation5 + $0x4878] sm:$0xff]
    %v2520 = vld [vmem:[#allocation5 + $0x4880] sm:$0xff]
    %v2521 = vld [vmem:[#allocation5 + $0x4888] sm:$0xff]
    %v2522 = vld [vmem:[#allocation5 + $0x4890] sm:$0xff]
    %v2523 = vld [vmem:[#allocation5 + $0x4898] sm:$0xff]
    %v2524 = vld [vmem:[#allocation5 + $0x48a0] sm:$0xff]
    %v2525 = vld [vmem:[#allocation5 + $0x48a8] sm:$0xff]
    %v2526 = vld [vmem:[#allocation5 + $0x48b0] sm:$0xff]
    %v2527 = vld [vmem:[#allocation5 + $0x48b8] sm:$0xff]
    %v2528 = vld [vmem:[#allocation5 + $0x48c0] sm:$0xff]
    %v2529 = vld [vmem:[#allocation5 + $0x48c8] sm:$0xff]
    %v2530 = vld [vmem:[#allocation5 + $0x48d0] sm:$0xff]
    %v2531 = vld [vmem:[#allocation5 + $0x48d8] sm:$0xff]
    %v2532 = vld [vmem:[#allocation5 + $0x48e0] sm:$0xff]
    %v2533 = vld [vmem:[#allocation5 + $0x48e8] sm:$0xff]
    %v2534 = vld [vmem:[#allocation5 + $0x48f0] sm:$0xff]
    %v2535 = vld [vmem:[#allocation5 + $0x48f8] sm:$0xff]
    %v2536 = vld [vmem:[#allocation5 + $0x4900] sm:$0xff]
    %v2537 = vld [vmem:[#allocation5 + $0x4908] sm:$0xff]
    %v2538 = vld [vmem:[#allocation5 + $0x4910] sm:$0xff]
    %v2539 = vld [vmem:[#allocation5 + $0x4918] sm:$0xff]
    %v2540 = vld [vmem:[#allocation5 + $0x4920] sm:$0xff]
    %v2541 = vld [vmem:[#allocation5 + $0x4928] sm:$0xff]
    %v2542 = vld [vmem:[#allocation5 + $0x4930] sm:$0xff]
    %v2543 = vld [vmem:[#allocation5 + $0x4938] sm:$0xff]
    %v2544 = vld [vmem:[#allocation5 + $0x4940] sm:$0xff]
    %v2545 = vld [vmem:[#allocation5 + $0x4948] sm:$0xff]
    %v2546 = vld [vmem:[#allocation5 + $0x4950] sm:$0xff]
    %v2547 = vld [vmem:[#allocation5 + $0x4958] sm:$0xff]
    %v2548 = vld [vmem:[#allocation5 + $0x4960] sm:$0xff]
    %v2549 = vld [vmem:[#allocation5 + $0x4968] sm:$0xff]
    %v2550 = vld [vmem:[#allocation5 + $0x4970] sm:$0xff]
    %v2551 = vld [vmem:[#allocation5 + $0x4978] sm:$0xff]
    %v2552 = vld [vmem:[#allocation5 + $0x4980] sm:$0xff]
    %v2553 = vld [vmem:[#allocation5 + $0x4988] sm:$0xff]
    %v2554 = vld [vmem:[#allocation5 + $0x4990] sm:$0xff]
    %v2555 = vld [vmem:[#allocation5 + $0x4998] sm:$0xff]
    %v2556 = vld [vmem:[#allocation5 + $0x49a0] sm:$0xff]
    %v2557 = vld [vmem:[#allocation5 + $0x49a8] sm:$0xff]
    %v2558 = vld [vmem:[#allocation5 + $0x49b0] sm:$0xff]
    %v2559 = vld [vmem:[#allocation5 + $0x49b8] sm:$0xff]
    %v2560 = vld [vmem:[#allocation5 + $0x49c0] sm:$0xff]
    %v2561 = vld [vmem:[#allocation5 + $0x49c8] sm:$0xff]
    %v2562 = vld [vmem:[#allocation5 + $0x49d0] sm:$0xff]
    %v2563 = vld [vmem:[#allocation5 + $0x49d8] sm:$0xff]
    %v2564 = vld [vmem:[#allocation5 + $0x49e0] sm:$0xff]
    %v2565 = vld [vmem:[#allocation5 + $0x49e8] sm:$0xff]
    %v2566 = vld [vmem:[#allocation5 + $0x49f0] sm:$0xff]
    %v2567 = vld [vmem:[#allocation5 + $0x49f8] sm:$0xff]
    %v2568 = vld [vmem:[#allocation5 + $0x4a00] sm:$0xff]
    %v2569 = vld [vmem:[#allocation5 + $0x4a08] sm:$0xff]
    %v2570 = vld [vmem:[#allocation5 + $0x4a10] sm:$0xff]
    %v2571 = vld [vmem:[#allocation5 + $0x4a18] sm:$0xff]
    %v2572 = vld [vmem:[#allocation5 + $0x4a20] sm:$0xff]
    %v2573 = vld [vmem:[#allocation5 + $0x4a28] sm:$0xff]
    %v2574 = vld [vmem:[#allocation5 + $0x4a30] sm:$0xff]
    %v2575 = vld [vmem:[#allocation5 + $0x4a38] sm:$0xff]
    %v2576 = vld [vmem:[#allocation5 + $0x4a40] sm:$0xff]
    %v2577 = vld [vmem:[#allocation5 + $0x4a48] sm:$0xff]
    %v2578 = vld [vmem:[#allocation5 + $0x4a50] sm:$0xff]
    %v2579 = vld [vmem:[#allocation5 + $0x4a58] sm:$0xff]
    %v2580 = vld [vmem:[#allocation5 + $0x4a60] sm:$0xff]
    %v2581 = vld [vmem:[#allocation5 + $0x4a68] sm:$0xff]
    %v2582 = vld [vmem:[#allocation5 + $0x4a70] sm:$0xff]
    %v2583 = vld [vmem:[#allocation5 + $0x4a78] sm:$0xff]
    %v2584 = vld [vmem:[#allocation5 + $0x4a80] sm:$0xff]
    %v2585 = vld [vmem:[#allocation5 + $0x4a88] sm:$0xff]
    %v2586 = vld [vmem:[#allocation5 + $0x4a90] sm:$0xff]
    %v2587 = vld [vmem:[#allocation5 + $0x4a98] sm:$0xff]
    %v2588 = vld [vmem:[#allocation5 + $0x4aa0] sm:$0xff]
    %v2589 = vld [vmem:[#allocation5 + $0x4aa8] sm:$0xff]
    %v2590 = vld [vmem:[#allocation5 + $0x4ab0] sm:$0xff]
    %v2591 = vld [vmem:[#allocation5 + $0x4ab8] sm:$0xff]
    %v2592 = vld [vmem:[#allocation5 + $0x4ac0] sm:$0xff]
    %v2593 = vld [vmem:[#allocation5 + $0x4ac8] sm:$0xff]
    %v2594 = vld [vmem:[#allocation5 + $0x4ad0] sm:$0xff]
    %v2595 = vld [vmem:[#allocation5 + $0x4ad8] sm:$0xff]
    %v2596 = vld [vmem:[#allocation5 + $0x4ae0] sm:$0xff]
    %v2597 = vld [vmem:[#allocation5 + $0x4ae8] sm:$0xff]
    %v2598 = vld [vmem:[#allocation5 + $0x4af0] sm:$0xff]
    %v2599 = vld [vmem:[#allocation5 + $0x4af8] sm:$0xff]
    %v2600 = vld [vmem:[#allocation5 + $0x4b00] sm:$0xff]
    %v2601 = vld [vmem:[#allocation5 + $0x4b08] sm:$0xff]
    %v2602 = vld [vmem:[#allocation5 + $0x4b10] sm:$0xff]
    %v2603 = vld [vmem:[#allocation5 + $0x4b18] sm:$0xff]
    %v2604 = vld [vmem:[#allocation5 + $0x4b20] sm:$0xff]
    %v2605 = vld [vmem:[#allocation5 + $0x4b28] sm:$0xff]
    %v2606 = vld [vmem:[#allocation5 + $0x4b30] sm:$0xff]
    %v2607 = vld [vmem:[#allocation5 + $0x4b38] sm:$0xff]
    %v2608 = vld [vmem:[#allocation5 + $0x4b40] sm:$0xff]
    %v2609 = vld [vmem:[#allocation5 + $0x4b48] sm:$0xff]
    %v2610 = vld [vmem:[#allocation5 + $0x4b50] sm:$0xff]
    %v2611 = vld [vmem:[#allocation5 + $0x4b58] sm:$0xff]
    %v2612 = vld [vmem:[#allocation5 + $0x4b60] sm:$0xff]
    %v2613 = vld [vmem:[#allocation5 + $0x4b68] sm:$0xff]
    %v2614 = vld [vmem:[#allocation5 + $0x4b70] sm:$0xff]
    %v2615 = vld [vmem:[#allocation5 + $0x4b78] sm:$0xff]
    %v2616 = vld [vmem:[#allocation5 + $0x4b80] sm:$0xff]
    %v2617 = vld [vmem:[#allocation5 + $0x4b88] sm:$0xff]
    %v2618 = vld [vmem:[#allocation5 + $0x4b90] sm:$0xff]
    %v2619 = vld [vmem:[#allocation5 + $0x4b98] sm:$0xff]
    %v2620 = vld [vmem:[#allocation5 + $0x4ba0] sm:$0xff]
    %v2621 = vld [vmem:[#allocation5 + $0x4ba8] sm:$0xff]
    %v2622 = vld [vmem:[#allocation5 + $0x4bb0] sm:$0xff]
    %v2623 = vld [vmem:[#allocation5 + $0x4bb8] sm:$0xff]
    %v2624 = vld [vmem:[#allocation5 + $0x4bc0] sm:$0xff]
    %v2625 = vld [vmem:[#allocation5 + $0x4bc8] sm:$0xff]
    %v2626 = vld [vmem:[#allocation5 + $0x4bd0] sm:$0xff]
    %v2627 = vld [vmem:[#allocation5 + $0x4bd8] sm:$0xff]
    %v2628 = vld [vmem:[#allocation5 + $0x4be0] sm:$0xff]
    %v2629 = vld [vmem:[#allocation5 + $0x4be8] sm:$0xff]
    %v2630 = vld [vmem:[#allocation5 + $0x4bf0] sm:$0xff]
    %v2631 = vld [vmem:[#allocation5 + $0x4bf8] sm:$0xff]
    %v2632 = vld [vmem:[#allocation5 + $0x4c00] sm:$0xff]
    %v2633 = vld [vmem:[#allocation5 + $0x4c08] sm:$0xff]
    %v2634 = vld [vmem:[#allocation5 + $0x4c10] sm:$0xff]
    %v2635 = vld [vmem:[#allocation5 + $0x4c18] sm:$0xff]
    %v2636 = vld [vmem:[#allocation5 + $0x4c20] sm:$0xff]
    %v2637 = vld [vmem:[#allocation5 + $0x4c28] sm:$0xff]
    %v2638 = vld [vmem:[#allocation5 + $0x4c30] sm:$0xff]
    %v2639 = vld [vmem:[#allocation5 + $0x4c38] sm:$0xff]
    %v2640 = vld [vmem:[#allocation5 + $0x4c40] sm:$0xff]
    %v2641 = vld [vmem:[#allocation5 + $0x4c48] sm:$0xff]
    %v2642 = vld [vmem:[#allocation5 + $0x4c50] sm:$0xff]
    %v2643 = vld [vmem:[#allocation5 + $0x4c58] sm:$0xff]
    %v2644 = vld [vmem:[#allocation5 + $0x4c60] sm:$0xff]
    %v2645 = vld [vmem:[#allocation5 + $0x4c68] sm:$0xff]
    %v2646 = vld [vmem:[#allocation5 + $0x4c70] sm:$0xff]
    %v2647 = vld [vmem:[#allocation5 + $0x4c78] sm:$0xff]
    %v2648 = vld [vmem:[#allocation5 + $0x4c80] sm:$0xff]
    %v2649 = vld [vmem:[#allocation5 + $0x4c88] sm:$0xff]
    %v2650 = vld [vmem:[#allocation5 + $0x4c90] sm:$0xff]
    %v2651 = vld [vmem:[#allocation5 + $0x4c98] sm:$0xff]
    %v2652 = vld [vmem:[#allocation5 + $0x4ca0] sm:$0xff]
    %v2653 = vld [vmem:[#allocation5 + $0x4ca8] sm:$0xff]
    %v2654 = vld [vmem:[#allocation5 + $0x4cb0] sm:$0xff]
    %v2655 = vld [vmem:[#allocation5 + $0x4cb8] sm:$0xff]
    %v2656 = vld [vmem:[#allocation5 + $0x4cc0] sm:$0xff]
    %v2657 = vld [vmem:[#allocation5 + $0x4cc8] sm:$0xff]
    %v2658 = vld [vmem:[#allocation5 + $0x4cd0] sm:$0xff]
    %v2659 = vld [vmem:[#allocation5 + $0x4cd8] sm:$0xff]
    %v2660 = vld [vmem:[#allocation5 + $0x4ce0] sm:$0xff]
    %v2661 = vld [vmem:[#allocation5 + $0x4ce8] sm:$0xff]
    %v2662 = vld [vmem:[#allocation5 + $0x4cf0] sm:$0xff]
    %v2663 = vld [vmem:[#allocation5 + $0x4cf8] sm:$0xff]
    %v2664 = vld [vmem:[#allocation5 + $0x4d00] sm:$0xff]
    %v2665 = vld [vmem:[#allocation5 + $0x4d08] sm:$0xff]
    %v2666 = vld [vmem:[#allocation5 + $0x4d10] sm:$0xff]
    %v2667 = vld [vmem:[#allocation5 + $0x4d18] sm:$0xff]
    %v2668 = vld [vmem:[#allocation5 + $0x4d20] sm:$0xff]
    %v2669 = vld [vmem:[#allocation5 + $0x4d28] sm:$0xff]
    %v2670 = vld [vmem:[#allocation5 + $0x4d30] sm:$0xff]
    %v2671 = vld [vmem:[#allocation5 + $0x4d38] sm:$0xff]
    %v2672 = vld [vmem:[#allocation5 + $0x4d40] sm:$0xff]
    %v2673 = vld [vmem:[#allocation5 + $0x4d48] sm:$0xff]
    %v2674 = vld [vmem:[#allocation5 + $0x4d50] sm:$0xff]
    %v2675 = vld [vmem:[#allocation5 + $0x4d58] sm:$0xff]
    %v2676 = vld [vmem:[#allocation5 + $0x4d60] sm:$0xff]
    %v2677 = vld [vmem:[#allocation5 + $0x4d68] sm:$0xff]
    %v2678 = vld [vmem:[#allocation5 + $0x4d70] sm:$0xff]
    %v2679 = vld [vmem:[#allocation5 + $0x4d78] sm:$0xff]
    %v2680 = vld [vmem:[#allocation5 + $0x4d80] sm:$0xff]
    %v2681 = vld [vmem:[#allocation5 + $0x4d88] sm:$0xff]
    %v2682 = vld [vmem:[#allocation5 + $0x4d90] sm:$0xff]
    %v2683 = vld [vmem:[#allocation5 + $0x4d98] sm:$0xff]
    %v2684 = vld [vmem:[#allocation5 + $0x4da0] sm:$0xff]
    %v2685 = vld [vmem:[#allocation5 + $0x4da8] sm:$0xff]
    %v2686 = vld [vmem:[#allocation5 + $0x4db0] sm:$0xff]
    %v2687 = vld [vmem:[#allocation5 + $0x4db8] sm:$0xff]
    %v2688 = vld [vmem:[#allocation5 + $0x4dc0] sm:$0xff]
    %v2689 = vld [vmem:[#allocation5 + $0x4dc8] sm:$0xff]
    %v2690 = vld [vmem:[#allocation5 + $0x4dd0] sm:$0xff]
    %v2691 = vld [vmem:[#allocation5 + $0x4dd8] sm:$0xff]
    %v2692 = vld [vmem:[#allocation5 + $0x4de0] sm:$0xff]
    %v2693 = vld [vmem:[#allocation5 + $0x4de8] sm:$0xff]
    %v2694 = vld [vmem:[#allocation5 + $0x4df0] sm:$0xff]
    %v2695 = vld [vmem:[#allocation5 + $0x4df8] sm:$0xff]
    %v2696 = vld [vmem:[#allocation5 + $0x4e00] sm:$0xff]
    %v2697 = vld [vmem:[#allocation5 + $0x4e08] sm:$0xff]
    %v2698 = vld [vmem:[#allocation5 + $0x4e10] sm:$0xff]
    %v2699 = vld [vmem:[#allocation5 + $0x4e18] sm:$0xff]
    %v2700 = vld [vmem:[#allocation5 + $0x4e20] sm:$0xff]
    %v2701 = vld [vmem:[#allocation5 + $0x4e28] sm:$0xff]
    %v2702 = vld [vmem:[#allocation5 + $0x4e30] sm:$0xff]
    %v2703 = vld [vmem:[#allocation5 + $0x4e38] sm:$0xff]
    %v2704 = vld [vmem:[#allocation5 + $0x4e40] sm:$0xff]
    %v2705 = vld [vmem:[#allocation5 + $0x4e48] sm:$0xff]
    %v2706 = vld [vmem:[#allocation5 + $0x4e50] sm:$0xff]
    %v2707 = vld [vmem:[#allocation5 + $0x4e58] sm:$0xff]
    %v2708 = vld [vmem:[#allocation5 + $0x4e60] sm:$0xff]
    %v2709 = vld [vmem:[#allocation5 + $0x4e68] sm:$0xff]
    %v2710 = vld [vmem:[#allocation5 + $0x4e70] sm:$0xff]
    %v2711 = vld [vmem:[#allocation5 + $0x4e78] sm:$0xff]
    %v2712 = vld [vmem:[#allocation5 + $0x4e80] sm:$0xff]
    %v2713 = vld [vmem:[#allocation5 + $0x4e88] sm:$0xff]
    %v2714 = vld [vmem:[#allocation5 + $0x4e90] sm:$0xff]
    %v2715 = vld [vmem:[#allocation5 + $0x4e98] sm:$0xff]
    %v2716 = vld [vmem:[#allocation5 + $0x4ea0] sm:$0xff]
    %v2717 = vld [vmem:[#allocation5 + $0x4ea8] sm:$0xff]
    %v2718 = vld [vmem:[#allocation5 + $0x4eb0] sm:$0xff]
    %v2719 = vld [vmem:[#allocation5 + $0x4eb8] sm:$0xff]
    %v2720 = vld [vmem:[#allocation5 + $0x4ec0] sm:$0xff]
    %v2721 = vld [vmem:[#allocation5 + $0x4ec8] sm:$0xff]
    %v2722 = vld [vmem:[#allocation5 + $0x4ed0] sm:$0xff]
    %v2723 = vld [vmem:[#allocation5 + $0x4ed8] sm:$0xff]
    %v2724 = vld [vmem:[#allocation5 + $0x4ee0] sm:$0xff]
    %v2725 = vld [vmem:[#allocation5 + $0x4ee8] sm:$0xff]
    %v2726 = vld [vmem:[#allocation5 + $0x4ef0] sm:$0xff]
    %v2727 = vld [vmem:[#allocation5 + $0x4ef8] sm:$0xff]
    %v2728 = vld [vmem:[#allocation5 + $0x4f00] sm:$0xff]
    %v2729 = vld [vmem:[#allocation5 + $0x4f08] sm:$0xff]
    %v2730 = vld [vmem:[#allocation5 + $0x4f10] sm:$0xff]
    %v2731 = vld [vmem:[#allocation5 + $0x4f18] sm:$0xff]
    %v2732 = vld [vmem:[#allocation5 + $0x4f20] sm:$0xff]
    %v2733 = vld [vmem:[#allocation5 + $0x4f28] sm:$0xff]
    %v2734 = vld [vmem:[#allocation5 + $0x4f30] sm:$0xff]
    %v2735 = vld [vmem:[#allocation5 + $0x4f38] sm:$0xff]
    %v2736 = vld [vmem:[#allocation5 + $0x4f40] sm:$0xff]
    %v2737 = vld [vmem:[#allocation5 + $0x4f48] sm:$0xff]
    %v2738 = vld [vmem:[#allocation5 + $0x4f50] sm:$0xff]
    %v2739 = vld [vmem:[#allocation5 + $0x4f58] sm:$0xff]
    %v2740 = vld [vmem:[#allocation5 + $0x4f60] sm:$0xff]
    %v2741 = vld [vmem:[#allocation5 + $0x4f68] sm:$0xff]
    %v2742 = vld [vmem:[#allocation5 + $0x4f70] sm:$0xff]
    %v2743 = vld [vmem:[#allocation5 + $0x4f78] sm:$0xff]
    %v2744 = vld [vmem:[#allocation5 + $0x4f80] sm:$0xff]
    %v2745 = vld [vmem:[#allocation5 + $0x4f88] sm:$0xff]
    %v2746 = vld [vmem:[#allocation5 + $0x4f90] sm:$0xff]
    %v2747 = vld [vmem:[#allocation5 + $0x4f98] sm:$0xff]
    %v2748 = vld [vmem:[#allocation5 + $0x4fa0] sm:$0xff]
    %v2749 = vld [vmem:[#allocation5 + $0x4fa8] sm:$0xff]
    %v2750 = vld [vmem:[#allocation5 + $0x4fb0] sm:$0xff]
    %v2751 = vld [vmem:[#allocation5 + $0x4fb8] sm:$0xff]
    %v2752 = vld [vmem:[#allocation5 + $0x4fc0] sm:$0xff]
    %v2753 = vld [vmem:[#allocation5 + $0x4fc8] sm:$0xff]
    %v2754 = vld [vmem:[#allocation5 + $0x4fd0] sm:$0xff]
    %v2755 = vld [vmem:[#allocation5 + $0x4fd8] sm:$0xff]
    %v2756 = vld [vmem:[#allocation5 + $0x4fe0] sm:$0xff]
    %v2757 = vld [vmem:[#allocation5 + $0x4fe8] sm:$0xff]
    %v2758 = vld [vmem:[#allocation5 + $0x4ff0] sm:$0xff]
    %v2759 = vld [vmem:[#allocation5 + $0x4ff8] sm:$0xff]
    %v2760 = vld [vmem:[#allocation5 + $0x5000] sm:$0xff]
    %v2761 = vld [vmem:[#allocation5 + $0x5008] sm:$0xff]
    %v2762 = vld [vmem:[#allocation5 + $0x5010] sm:$0xff]
    %v2763 = vld [vmem:[#allocation5 + $0x5018] sm:$0xff]
    %v2764 = vld [vmem:[#allocation5 + $0x5020] sm:$0xff]
    %v2765 = vld [vmem:[#allocation5 + $0x5028] sm:$0xff]
    %v2766 = vld [vmem:[#allocation5 + $0x5030] sm:$0xff]
    %v2767 = vld [vmem:[#allocation5 + $0x5038] sm:$0xff]
    %v2768 = vld [vmem:[#allocation5 + $0x5040] sm:$0xff]
    %v2769 = vld [vmem:[#allocation5 + $0x5048] sm:$0xff]
    %v2770 = vld [vmem:[#allocation5 + $0x5050] sm:$0xff]
    %v2771 = vld [vmem:[#allocation5 + $0x5058] sm:$0xff]
    %v2772 = vld [vmem:[#allocation5 + $0x5060] sm:$0xff]
    %v2773 = vld [vmem:[#allocation5 + $0x5068] sm:$0xff]
    %v2774 = vld [vmem:[#allocation5 + $0x5070] sm:$0xff]
    %v2775 = vld [vmem:[#allocation5 + $0x5078] sm:$0xff]
    %v2776 = vld [vmem:[#allocation5 + $0x5080] sm:$0xff]
    %v2777 = vld [vmem:[#allocation5 + $0x5088] sm:$0xff]
    %v2778 = vld [vmem:[#allocation5 + $0x5090] sm:$0xff]
    %v2779 = vld [vmem:[#allocation5 + $0x5098] sm:$0xff]
    %v2780 = vld [vmem:[#allocation5 + $0x50a0] sm:$0xff]
    %v2781 = vld [vmem:[#allocation5 + $0x50a8] sm:$0xff]
    %v2782 = vld [vmem:[#allocation5 + $0x50b0] sm:$0xff]
    %v2783 = vld [vmem:[#allocation5 + $0x50b8] sm:$0xff]
    %v2784 = vld [vmem:[#allocation5 + $0x50c0] sm:$0xff]
    %v2785 = vld [vmem:[#allocation5 + $0x50c8] sm:$0xff]
    %v2786 = vld [vmem:[#allocation5 + $0x50d0] sm:$0xff]
    %v2787 = vld [vmem:[#allocation5 + $0x50d8] sm:$0xff]
    %v2788 = vld [vmem:[#allocation5 + $0x50e0] sm:$0xff]
    %v2789 = vld [vmem:[#allocation5 + $0x50e8] sm:$0xff]
    %v2790 = vld [vmem:[#allocation5 + $0x50f0] sm:$0xff]
    %v2791 = vld [vmem:[#allocation5 + $0x50f8] sm:$0xff]
    %v2792 = vld [vmem:[#allocation5 + $0x5100] sm:$0xff]
    %v2793 = vld [vmem:[#allocation5 + $0x5108] sm:$0xff]
    %v2794 = vld [vmem:[#allocation5 + $0x5110] sm:$0xff]
    %v2795 = vld [vmem:[#allocation5 + $0x5118] sm:$0xff]
    %v2796 = vld [vmem:[#allocation5 + $0x5120] sm:$0xff]
    %v2797 = vld [vmem:[#allocation5 + $0x5128] sm:$0xff]
    %v2798 = vld [vmem:[#allocation5 + $0x5130] sm:$0xff]
    %v2799 = vld [vmem:[#allocation5 + $0x5138] sm:$0xff]
    %v2800 = vld [vmem:[#allocation5 + $0x5140] sm:$0xff]
    %v2801 = vld [vmem:[#allocation5 + $0x5148] sm:$0xff]
    %v2802 = vld [vmem:[#allocation5 + $0x5150] sm:$0xff]
    %v2803 = vld [vmem:[#allocation5 + $0x5158] sm:$0xff]
    %v2804 = vld [vmem:[#allocation5 + $0x5160] sm:$0xff]
    %v2805 = vld [vmem:[#allocation5 + $0x5168] sm:$0xff]
    %v2806 = vld [vmem:[#allocation5 + $0x5170] sm:$0xff]
    %v2807 = vld [vmem:[#allocation5 + $0x5178] sm:$0xff]
    %v2808 = vld [vmem:[#allocation5 + $0x5180] sm:$0xff]
    %v2809 = vld [vmem:[#allocation5 + $0x5188] sm:$0xff]
    %v2810 = vld [vmem:[#allocation5 + $0x5190] sm:$0xff]
    %v2811 = vld [vmem:[#allocation5 + $0x5198] sm:$0xff]
    %v2812 = vld [vmem:[#allocation5 + $0x51a0] sm:$0xff]
    %v2813 = vld [vmem:[#allocation5 + $0x51a8] sm:$0xff]
    %v2814 = vld [vmem:[#allocation5 + $0x51b0] sm:$0xff]
    %v2815 = vld [vmem:[#allocation5 + $0x51b8] sm:$0xff]
    %v2816 = vld [vmem:[#allocation5 + $0x51c0] sm:$0xff]
    %v2817 = vld [vmem:[#allocation5 + $0x51c8] sm:$0xff]
    %v2818 = vld [vmem:[#allocation5 + $0x51d0] sm:$0xff]
    %v2819 = vld [vmem:[#allocation5 + $0x51d8] sm:$0xff]
    %v2820 = vld [vmem:[#allocation5 + $0x51e0] sm:$0xff]
    %v2821 = vld [vmem:[#allocation5 + $0x51e8] sm:$0xff]
    %v2822 = vld [vmem:[#allocation5 + $0x51f0] sm:$0xff]
    %v2823 = vld [vmem:[#allocation5 + $0x51f8] sm:$0xff]
    %v2824 = vld [vmem:[#allocation5 + $0x5200] sm:$0xff]
    %v2825 = vld [vmem:[#allocation5 + $0x5208] sm:$0xff]
    %v2826 = vld [vmem:[#allocation5 + $0x5210] sm:$0xff]
    %v2827 = vld [vmem:[#allocation5 + $0x5218] sm:$0xff]
    %v2828 = vld [vmem:[#allocation5 + $0x5220] sm:$0xff]
    %v2829 = vld [vmem:[#allocation5 + $0x5228] sm:$0xff]
    %v2830 = vld [vmem:[#allocation5 + $0x5230] sm:$0xff]
    %v2831 = vld [vmem:[#allocation5 + $0x5238] sm:$0xff]
    %v2832 = vld [vmem:[#allocation5 + $0x5240] sm:$0xff]
    %v2833 = vld [vmem:[#allocation5 + $0x5248] sm:$0xff]
    %v2834 = vld [vmem:[#allocation5 + $0x5250] sm:$0xff]
    %v2835 = vld [vmem:[#allocation5 + $0x5258] sm:$0xff]
    %v2836 = vld [vmem:[#allocation5 + $0x5260] sm:$0xff]
    %v2837 = vld [vmem:[#allocation5 + $0x5268] sm:$0xff]
    %v2838 = vld [vmem:[#allocation5 + $0x5270] sm:$0xff]
    %v2839 = vld [vmem:[#allocation5 + $0x5278] sm:$0xff]
    %v2840 = vld [vmem:[#allocation5 + $0x5280] sm:$0xff]
    %v2841 = vld [vmem:[#allocation5 + $0x5288] sm:$0xff]
    %v2842 = vld [vmem:[#allocation5 + $0x5290] sm:$0xff]
    %v2843 = vld [vmem:[#allocation5 + $0x5298] sm:$0xff]
    %v2844 = vld [vmem:[#allocation5 + $0x52a0] sm:$0xff]
    %v2845 = vld [vmem:[#allocation5 + $0x52a8] sm:$0xff]
    %v2846 = vld [vmem:[#allocation5 + $0x52b0] sm:$0xff]
    %v2847 = vld [vmem:[#allocation5 + $0x52b8] sm:$0xff]
    %v2848 = vld [vmem:[#allocation5 + $0x52c0] sm:$0xff]
    %v2849 = vld [vmem:[#allocation5 + $0x52c8] sm:$0xff]
    %v2850 = vld [vmem:[#allocation5 + $0x52d0] sm:$0xff]
    %v2851 = vld [vmem:[#allocation5 + $0x52d8] sm:$0xff]
    %v2852 = vld [vmem:[#allocation5 + $0x52e0] sm:$0xff]
    %v2853 = vld [vmem:[#allocation5 + $0x52e8] sm:$0xff]
    %v2854 = vld [vmem:[#allocation5 + $0x52f0] sm:$0xff]
    %v2855 = vld [vmem:[#allocation5 + $0x52f8] sm:$0xff]
    %v2856 = vld [vmem:[#allocation5 + $0x5300] sm:$0xff]
    %v2857 = vld [vmem:[#allocation5 + $0x5308] sm:$0xff]
    %v2858 = vld [vmem:[#allocation5 + $0x5310] sm:$0xff]
    %v2859 = vld [vmem:[#allocation5 + $0x5318] sm:$0xff]
    %v2860 = vld [vmem:[#allocation5 + $0x5320] sm:$0xff]
    %v2861 = vld [vmem:[#allocation5 + $0x5328] sm:$0xff]
    %v2862 = vld [vmem:[#allocation5 + $0x5330] sm:$0xff]
    %v2863 = vld [vmem:[#allocation5 + $0x5338] sm:$0xff]
    %v2864 = vld [vmem:[#allocation5 + $0x5340] sm:$0xff]
    %v2865 = vld [vmem:[#allocation5 + $0x5348] sm:$0xff]
    %v2866 = vld [vmem:[#allocation5 + $0x5350] sm:$0xff]
    %v2867 = vld [vmem:[#allocation5 + $0x5358] sm:$0xff]
    %v2868 = vld [vmem:[#allocation5 + $0x5360] sm:$0xff]
    %v2869 = vld [vmem:[#allocation5 + $0x5368] sm:$0xff]
    %v2870 = vld [vmem:[#allocation5 + $0x5370] sm:$0xff]
    %v2871 = vld [vmem:[#allocation5 + $0x5378] sm:$0xff]
    %v2872 = vld [vmem:[#allocation5 + $0x5380] sm:$0xff]
    %v2873 = vld [vmem:[#allocation5 + $0x5388] sm:$0xff]
    %v2874 = vld [vmem:[#allocation5 + $0x5390] sm:$0xff]
    %v2875 = vld [vmem:[#allocation5 + $0x5398] sm:$0xff]
    %v2876 = vld [vmem:[#allocation5 + $0x53a0] sm:$0xff]
    %v2877 = vld [vmem:[#allocation5 + $0x53a8] sm:$0xff]
    %v2878 = vld [vmem:[#allocation5 + $0x53b0] sm:$0xff]
    %v2879 = vld [vmem:[#allocation5 + $0x53b8] sm:$0xff]
    %v2880 = vld [vmem:[#allocation5 + $0x53c0] sm:$0xff]
    %v2881 = vld [vmem:[#allocation5 + $0x53c8] sm:$0xff]
    %v2882 = vld [vmem:[#allocation5 + $0x53d0] sm:$0xff]
    %v2883 = vld [vmem:[#allocation5 + $0x53d8] sm:$0xff]
    %v2884 = vld [vmem:[#allocation5 + $0x53e0] sm:$0xff]
    %v2885 = vld [vmem:[#allocation5 + $0x53e8] sm:$0xff]
    %v2886 = vld [vmem:[#allocation5 + $0x53f0] sm:$0xff]
    %v2887 = vld [vmem:[#allocation5 + $0x53f8] sm:$0xff]
    %v2888 = vld [vmem:[#allocation5 + $0x5400] sm:$0xff]
    %v2889 = vld [vmem:[#allocation5 + $0x5408] sm:$0xff]
    %v2890 = vld [vmem:[#allocation5 + $0x5410] sm:$0xff]
    %v2891 = vld [vmem:[#allocation5 + $0x5418] sm:$0xff]
    %v2892 = vld [vmem:[#allocation5 + $0x5420] sm:$0xff]
    %v2893 = vld [vmem:[#allocation5 + $0x5428] sm:$0xff]
    %v2894 = vld [vmem:[#allocation5 + $0x5430] sm:$0xff]
    %v2895 = vld [vmem:[#allocation5 + $0x5438] sm:$0xff]
    %v2896 = vld [vmem:[#allocation5 + $0x5440] sm:$0xff]
    %v2897 = vld [vmem:[#allocation5 + $0x5448] sm:$0xff]
    %v2898 = vld [vmem:[#allocation5 + $0x5450] sm:$0xff]
    %v2899 = vld [vmem:[#allocation5 + $0x5458] sm:$0xff]
    %v2900 = vld [vmem:[#allocation5 + $0x5460] sm:$0xff]
    %v2901 = vld [vmem:[#allocation5 + $0x5468] sm:$0xff]
    %v2902 = vld [vmem:[#allocation5 + $0x5470] sm:$0xff]
    %v2903 = vld [vmem:[#allocation5 + $0x5478] sm:$0xff]
    %v2904 = vld [vmem:[#allocation5 + $0x5480] sm:$0xff]
    %v2905 = vld [vmem:[#allocation5 + $0x5488] sm:$0xff]
    %v2906 = vld [vmem:[#allocation5 + $0x5490] sm:$0xff]
    %v2907 = vld [vmem:[#allocation5 + $0x5498] sm:$0xff]
    %v2908 = vld [vmem:[#allocation5 + $0x54a0] sm:$0xff]
    %v2909 = vld [vmem:[#allocation5 + $0x54a8] sm:$0xff]
    %v2910 = vld [vmem:[#allocation5 + $0x54b0] sm:$0xff]
    %v2911 = vld [vmem:[#allocation5 + $0x54b8] sm:$0xff]
    %v2912 = vld [vmem:[#allocation5 + $0x54c0] sm:$0xff]
    %v2913 = vld [vmem:[#allocation5 + $0x54c8] sm:$0xff]
    %v2914 = vld [vmem:[#allocation5 + $0x54d0] sm:$0xff]
    %v2915 = vld [vmem:[#allocation5 + $0x54d8] sm:$0xff]
    %v2916 = vld [vmem:[#allocation5 + $0x54e0] sm:$0xff]
    %v2917 = vld [vmem:[#allocation5 + $0x54e8] sm:$0xff]
    %v2918 = vld [vmem:[#allocation5 + $0x54f0] sm:$0xff]
    %v2919 = vld [vmem:[#allocation5 + $0x54f8] sm:$0xff]
    %v2920 = vld [vmem:[#allocation5 + $0x5500] sm:$0xff]
    %v2921 = vld [vmem:[#allocation5 + $0x5508] sm:$0xff]
    %v2922 = vld [vmem:[#allocation5 + $0x5510] sm:$0xff]
    %v2923 = vld [vmem:[#allocation5 + $0x5518] sm:$0xff]
    %v2924 = vld [vmem:[#allocation5 + $0x5520] sm:$0xff]
    %v2925 = vld [vmem:[#allocation5 + $0x5528] sm:$0xff]
    %v2926 = vld [vmem:[#allocation5 + $0x5530] sm:$0xff]
    %v2927 = vld [vmem:[#allocation5 + $0x5538] sm:$0xff]
    %v2928 = vld [vmem:[#allocation5 + $0x5540] sm:$0xff]
    %v2929 = vld [vmem:[#allocation5 + $0x5548] sm:$0xff]
    %v2930 = vld [vmem:[#allocation5 + $0x5550] sm:$0xff]
    %v2931 = vld [vmem:[#allocation5 + $0x5558] sm:$0xff]
    %v2932 = vld [vmem:[#allocation5 + $0x5560] sm:$0xff]
    %v2933 = vld [vmem:[#allocation5 + $0x5568] sm:$0xff]
    %v2934 = vld [vmem:[#allocation5 + $0x5570] sm:$0xff]
    %v2935 = vld [vmem:[#allocation5 + $0x5578] sm:$0xff]
    %v2936 = vld [vmem:[#allocation5 + $0x5580] sm:$0xff]
    %v2937 = vld [vmem:[#allocation5 + $0x5588] sm:$0xff]
    %v2938 = vld [vmem:[#allocation5 + $0x5590] sm:$0xff]
    %v2939 = vld [vmem:[#allocation5 + $0x5598] sm:$0xff]
    %v2940 = vld [vmem:[#allocation5 + $0x55a0] sm:$0xff]
    %v2941 = vld [vmem:[#allocation5 + $0x55a8] sm:$0xff]
    %v2942 = vld [vmem:[#allocation5 + $0x55b0] sm:$0xff]
    %v2943 = vld [vmem:[#allocation5 + $0x55b8] sm:$0xff]
    %v2944 = vld [vmem:[#allocation5 + $0x55c0] sm:$0xff]
    %v2945 = vld [vmem:[#allocation5 + $0x55c8] sm:$0xff]
    %v2946 = vld [vmem:[#allocation5 + $0x55d0] sm:$0xff]
    %v2947 = vld [vmem:[#allocation5 + $0x55d8] sm:$0xff]
    %v2948 = vld [vmem:[#allocation5 + $0x55e0] sm:$0xff]
    %v2949 = vld [vmem:[#allocation5 + $0x55e8] sm:$0xff]
    %v2950 = vld [vmem:[#allocation5 + $0x55f0] sm:$0xff]
    %v2951 = vld [vmem:[#allocation5 + $0x55f8] sm:$0xff]
    %v2952 = vld [vmem:[#allocation5 + $0x5600] sm:$0xff]
    %v2953 = vld [vmem:[#allocation5 + $0x5608] sm:$0xff]
    %v2954 = vld [vmem:[#allocation5 + $0x5610] sm:$0xff]
    %v2955 = vld [vmem:[#allocation5 + $0x5618] sm:$0xff]
    %v2956 = vld [vmem:[#allocation5 + $0x5620] sm:$0xff]
    %v2957 = vld [vmem:[#allocation5 + $0x5628] sm:$0xff]
    %v2958 = vld [vmem:[#allocation5 + $0x5630] sm:$0xff]
    %v2959 = vld [vmem:[#allocation5 + $0x5638] sm:$0xff]
    %v2960 = vld [vmem:[#allocation5 + $0x5640] sm:$0xff]
    %v2961 = vld [vmem:[#allocation5 + $0x5648] sm:$0xff]
    %v2962 = vld [vmem:[#allocation5 + $0x5650] sm:$0xff]
    %v2963 = vld [vmem:[#allocation5 + $0x5658] sm:$0xff]
    %v2964 = vld [vmem:[#allocation5 + $0x5660] sm:$0xff]
    %v2965 = vld [vmem:[#allocation5 + $0x5668] sm:$0xff]
    %v2966 = vld [vmem:[#allocation5 + $0x5670] sm:$0xff]
    %v2967 = vld [vmem:[#allocation5 + $0x5678] sm:$0xff]
    %v2968 = vld [vmem:[#allocation5 + $0x5680] sm:$0xff]
    %v2969 = vld [vmem:[#allocation5 + $0x5688] sm:$0xff]
    %v2970 = vld [vmem:[#allocation5 + $0x5690] sm:$0xff]
    %v2971 = vld [vmem:[#allocation5 + $0x5698] sm:$0xff]
    %v2972 = vld [vmem:[#allocation5 + $0x56a0] sm:$0xff]
    %v2973 = vld [vmem:[#allocation5 + $0x56a8] sm:$0xff]
    %v2974 = vld [vmem:[#allocation5 + $0x56b0] sm:$0xff]
    %v2975 = vld [vmem:[#allocation5 + $0x56b8] sm:$0xff]
    %v2976 = vld [vmem:[#allocation5 + $0x56c0] sm:$0xff]
    %v2977 = vld [vmem:[#allocation5 + $0x56c8] sm:$0xff]
    %v2978 = vld [vmem:[#allocation5 + $0x56d0] sm:$0xff]
    %v2979 = vld [vmem:[#allocation5 + $0x56d8] sm:$0xff]
    %v2980 = vld [vmem:[#allocation5 + $0x56e0] sm:$0xff]
    %v2981 = vld [vmem:[#allocation5 + $0x56e8] sm:$0xff]
    %v2982 = vld [vmem:[#allocation5 + $0x56f0] sm:$0xff]
    %v2983 = vld [vmem:[#allocation5 + $0x56f8] sm:$0xff]
    %v2984 = vld [vmem:[#allocation5 + $0x5700] sm:$0xff]
    %v2985 = vld [vmem:[#allocation5 + $0x5708] sm:$0xff]
    %v2986 = vld [vmem:[#allocation5 + $0x5710] sm:$0xff]
    %v2987 = vld [vmem:[#allocation5 + $0x5718] sm:$0xff]
    %v2988 = vld [vmem:[#allocation5 + $0x5720] sm:$0xff]
    %v2989 = vld [vmem:[#allocation5 + $0x5728] sm:$0xff]
    %v2990 = vld [vmem:[#allocation5 + $0x5730] sm:$0xff]
    %v2991 = vld [vmem:[#allocation5 + $0x5738] sm:$0xff]
    %v2992 = vld [vmem:[#allocation5 + $0x5740] sm:$0xff]
    %v2993 = vld [vmem:[#allocation5 + $0x5748] sm:$0xff]
    %v2994 = vld [vmem:[#allocation5 + $0x5750] sm:$0xff]
    %v2995 = vld [vmem:[#allocation5 + $0x5758] sm:$0xff]
    %v2996 = vld [vmem:[#allocation5 + $0x5760] sm:$0xff]
    %v2997 = vld [vmem:[#allocation5 + $0x5768] sm:$0xff]
    %v2998 = vld [vmem:[#allocation5 + $0x5770] sm:$0xff]
    %v2999 = vld [vmem:[#allocation5 + $0x5778] sm:$0xff]
    %v3000 = vld [vmem:[#allocation5 + $0x5780] sm:$0xff]
    %v3001 = vld [vmem:[#allocation5 + $0x5788] sm:$0xff]
    %v3002 = vld [vmem:[#allocation5 + $0x5790] sm:$0xff]
    %v3003 = vld [vmem:[#allocation5 + $0x5798] sm:$0xff]
    %v3004 = vld [vmem:[#allocation5 + $0x57a0] sm:$0xff]
    %v3005 = vld [vmem:[#allocation5 + $0x57a8] sm:$0xff]
    %v3006 = vld [vmem:[#allocation5 + $0x57b0] sm:$0xff]
    %v3007 = vld [vmem:[#allocation5 + $0x57b8] sm:$0xff]
    %v3008 = vld [vmem:[#allocation5 + $0x57c0] sm:$0xff]
    %v3009 = vld [vmem:[#allocation5 + $0x57c8] sm:$0xff]
    %v3010 = vld [vmem:[#allocation5 + $0x57d0] sm:$0xff]
    %v3011 = vld [vmem:[#allocation5 + $0x57d8] sm:$0xff]
    %v3012 = vld [vmem:[#allocation5 + $0x57e0] sm:$0xff]
    %v3013 = vld [vmem:[#allocation5 + $0x57e8] sm:$0xff]
    %v3014 = vld [vmem:[#allocation5 + $0x57f0] sm:$0xff]
    %v3015 = vld [vmem:[#allocation5 + $0x57f8] sm:$0xff]
    %v3016 = vld [vmem:[#allocation5 + $0x5800] sm:$0xff]
    %v3017 = vld [vmem:[#allocation5 + $0x5808] sm:$0xff]
    %v3018 = vld [vmem:[#allocation5 + $0x5810] sm:$0xff]
    %v3019 = vld [vmem:[#allocation5 + $0x5818] sm:$0xff]
    %v3020 = vld [vmem:[#allocation5 + $0x5820] sm:$0xff]
    %v3021 = vld [vmem:[#allocation5 + $0x5828] sm:$0xff]
    %v3022 = vld [vmem:[#allocation5 + $0x5830] sm:$0xff]
    %v3023 = vld [vmem:[#allocation5 + $0x5838] sm:$0xff]
    %v3024 = vld [vmem:[#allocation5 + $0x5840] sm:$0xff]
    %v3025 = vld [vmem:[#allocation5 + $0x5848] sm:$0xff]
    %v3026 = vld [vmem:[#allocation5 + $0x5850] sm:$0xff]
    %v3027 = vld [vmem:[#allocation5 + $0x5858] sm:$0xff]
    %v3028 = vld [vmem:[#allocation5 + $0x5860] sm:$0xff]
    %v3029 = vld [vmem:[#allocation5 + $0x5868] sm:$0xff]
    %v3030 = vld [vmem:[#allocation5 + $0x5870] sm:$0xff]
    %v3031 = vld [vmem:[#allocation5 + $0x5878] sm:$0xff]
    %v3032 = vld [vmem:[#allocation5 + $0x5880] sm:$0xff]
    %v3033 = vld [vmem:[#allocation5 + $0x5888] sm:$0xff]
    %v3034 = vld [vmem:[#allocation5 + $0x5890] sm:$0xff]
    %v3035 = vld [vmem:[#allocation5 + $0x5898] sm:$0xff]
    %v3036 = vld [vmem:[#allocation5 + $0x58a0] sm:$0xff]
    %v3037 = vld [vmem:[#allocation5 + $0x58a8] sm:$0xff]
    %v3038 = vld [vmem:[#allocation5 + $0x58b0] sm:$0xff]
    %v3039 = vld [vmem:[#allocation5 + $0x58b8] sm:$0xff]
    %v3040 = vld [vmem:[#allocation5 + $0x58c0] sm:$0xff]
    %v3041 = vld [vmem:[#allocation5 + $0x58c8] sm:$0xff]
    %v3042 = vld [vmem:[#allocation5 + $0x58d0] sm:$0xff]
    %v3043 = vld [vmem:[#allocation5 + $0x58d8] sm:$0xff]
    %v3044 = vld [vmem:[#allocation5 + $0x58e0] sm:$0xff]
    %v3045 = vld [vmem:[#allocation5 + $0x58e8] sm:$0xff]
    %v3046 = vld [vmem:[#allocation5 + $0x58f0] sm:$0xff]
    %v3047 = vld [vmem:[#allocation5 + $0x58f8] sm:$0xff]
    %v3048 = vld [vmem:[#allocation5 + $0x5900] sm:$0xff]
    %v3049 = vld [vmem:[#allocation5 + $0x5908] sm:$0xff]
    %v3050 = vld [vmem:[#allocation5 + $0x5910] sm:$0xff]
    %v3051 = vld [vmem:[#allocation5 + $0x5918] sm:$0xff]
    %v3052 = vld [vmem:[#allocation5 + $0x5920] sm:$0xff]
    %v3053 = vld [vmem:[#allocation5 + $0x5928] sm:$0xff]
    %v3054 = vld [vmem:[#allocation5 + $0x5930] sm:$0xff]
    %v3055 = vld [vmem:[#allocation5 + $0x5938] sm:$0xff]
    %v3056 = vld [vmem:[#allocation5 + $0x5940] sm:$0xff]
    %v3057 = vld [vmem:[#allocation5 + $0x5948] sm:$0xff]
    %v3058 = vld [vmem:[#allocation5 + $0x5950] sm:$0xff]
    %v3059 = vld [vmem:[#allocation5 + $0x5958] sm:$0xff]
    %v3060 = vld [vmem:[#allocation5 + $0x5960] sm:$0xff]
    %v3061 = vld [vmem:[#allocation5 + $0x5968] sm:$0xff]
    %v3062 = vld [vmem:[#allocation5 + $0x5970] sm:$0xff]
    %v3063 = vld [vmem:[#allocation5 + $0x5978] sm:$0xff]
    %v3064 = vld [vmem:[#allocation5 + $0x5980] sm:$0xff]
    %v3065 = vld [vmem:[#allocation5 + $0x5988] sm:$0xff]
    %v3066 = vld [vmem:[#allocation5 + $0x5990] sm:$0xff]
    %v3067 = vld [vmem:[#allocation5 + $0x5998] sm:$0xff]
    %v3068 = vld [vmem:[#allocation5 + $0x59a0] sm:$0xff]
    %v3069 = vld [vmem:[#allocation5 + $0x59a8] sm:$0xff]
    %v3070 = vld [vmem:[#allocation5 + $0x59b0] sm:$0xff]
    %v3071 = vld [vmem:[#allocation5 + $0x59b8] sm:$0xff]
    %v3072 = vld [vmem:[#allocation5 + $0x59c0] sm:$0xff]
    %v3073 = vld [vmem:[#allocation5 + $0x59c8] sm:$0xff]
    %v3074 = vld [vmem:[#allocation5 + $0x59d0] sm:$0xff]
    %v3075 = vld [vmem:[#allocation5 + $0x59d8] sm:$0xff]
    %v3076 = vld [vmem:[#allocation5 + $0x59e0] sm:$0xff]
    %v3077 = vld [vmem:[#allocation5 + $0x59e8] sm:$0xff]
    %v3078 = vld [vmem:[#allocation5 + $0x59f0] sm:$0xff]
    %v3079 = vld [vmem:[#allocation5 + $0x59f8] sm:$0xff]
    %v3080 = vld [vmem:[#allocation5 + $0x5a00] sm:$0xff]
    %v3081 = vld [vmem:[#allocation5 + $0x5a08] sm:$0xff]
    %v3082 = vld [vmem:[#allocation5 + $0x5a10] sm:$0xff]
    %v3083 = vld [vmem:[#allocation5 + $0x5a18] sm:$0xff]
    %v3084 = vld [vmem:[#allocation5 + $0x5a20] sm:$0xff]
    %v3085 = vld [vmem:[#allocation5 + $0x5a28] sm:$0xff]
    %v3086 = vld [vmem:[#allocation5 + $0x5a30] sm:$0xff]
    %v3087 = vld [vmem:[#allocation5 + $0x5a38] sm:$0xff]
    %v3088 = vld [vmem:[#allocation5 + $0x5a40] sm:$0xff]
    %v3089 = vld [vmem:[#allocation5 + $0x5a48] sm:$0xff]
    %v3090 = vld [vmem:[#allocation5 + $0x5a50] sm:$0xff]
    %v3091 = vld [vmem:[#allocation5 + $0x5a58] sm:$0xff]
    %v3092 = vld [vmem:[#allocation5 + $0x5a60] sm:$0xff]
    %v3093 = vld [vmem:[#allocation5 + $0x5a68] sm:$0xff]
    %v3094 = vld [vmem:[#allocation5 + $0x5a70] sm:$0xff]
    %v3095 = vld [vmem:[#allocation5 + $0x5a78] sm:$0xff]
    %v3096 = vld [vmem:[#allocation5 + $0x5a80] sm:$0xff]
    %v3097 = vld [vmem:[#allocation5 + $0x5a88] sm:$0xff]
    %v3098 = vld [vmem:[#allocation5 + $0x5a90] sm:$0xff]
    %v3099 = vld [vmem:[#allocation5 + $0x5a98] sm:$0xff]
    %v3100 = vld [vmem:[#allocation5 + $0x5aa0] sm:$0xff]
    %v3101 = vld [vmem:[#allocation5 + $0x5aa8] sm:$0xff]
    %v3102 = vld [vmem:[#allocation5 + $0x5ab0] sm:$0xff]
    %v3103 = vld [vmem:[#allocation5 + $0x5ab8] sm:$0xff]
    %v3104 = vld [vmem:[#allocation5 + $0x5ac0] sm:$0xff]
    %v3105 = vld [vmem:[#allocation5 + $0x5ac8] sm:$0xff]
    %v3106 = vld [vmem:[#allocation5 + $0x5ad0] sm:$0xff]
    %v3107 = vld [vmem:[#allocation5 + $0x5ad8] sm:$0xff]
    %v3108 = vld [vmem:[#allocation5 + $0x5ae0] sm:$0xff]
    %v3109 = vld [vmem:[#allocation5 + $0x5ae8] sm:$0xff]
    %v3110 = vld [vmem:[#allocation5 + $0x5af0] sm:$0xff]
    %v3111 = vld [vmem:[#allocation5 + $0x5af8] sm:$0xff]
    %v3112 = vld [vmem:[#allocation5 + $0x5b00] sm:$0xff]
    %v3113 = vld [vmem:[#allocation5 + $0x5b08] sm:$0xff]
    %v3114 = vld [vmem:[#allocation5 + $0x5b10] sm:$0xff]
    %v3115 = vld [vmem:[#allocation5 + $0x5b18] sm:$0xff]
    %v3116 = vld [vmem:[#allocation5 + $0x5b20] sm:$0xff]
    %v3117 = vld [vmem:[#allocation5 + $0x5b28] sm:$0xff]
    %v3118 = vld [vmem:[#allocation5 + $0x5b30] sm:$0xff]
    %v3119 = vld [vmem:[#allocation5 + $0x5b38] sm:$0xff]
    %v3120 = vld [vmem:[#allocation5 + $0x5b40] sm:$0xff]
    %v3121 = vld [vmem:[#allocation5 + $0x5b48] sm:$0xff]
    %v3122 = vld [vmem:[#allocation5 + $0x5b50] sm:$0xff]
    %v3123 = vld [vmem:[#allocation5 + $0x5b58] sm:$0xff]
    %v3124 = vld [vmem:[#allocation5 + $0x5b60] sm:$0xff]
    %v3125 = vld [vmem:[#allocation5 + $0x5b68] sm:$0xff]
    %v3126 = vld [vmem:[#allocation5 + $0x5b70] sm:$0xff]
    %v3127 = vld [vmem:[#allocation5 + $0x5b78] sm:$0xff]
    %v3128 = vld [vmem:[#allocation5 + $0x5b80] sm:$0xff]
    %v3129 = vld [vmem:[#allocation5 + $0x5b88] sm:$0xff]
    %v3130 = vld [vmem:[#allocation5 + $0x5b90] sm:$0xff]
    %v3131 = vld [vmem:[#allocation5 + $0x5b98] sm:$0xff]
    %v3132 = vld [vmem:[#allocation5 + $0x5ba0] sm:$0xff]
    %v3133 = vld [vmem:[#allocation5 + $0x5ba8] sm:$0xff]
    %v3134 = vld [vmem:[#allocation5 + $0x5bb0] sm:$0xff]
    %v3135 = vld [vmem:[#allocation5 + $0x5bb8] sm:$0xff]
    %v3136 = vld [vmem:[#allocation5 + $0x5bc0] sm:$0xff]
    %v3137 = vld [vmem:[#allocation5 + $0x5bc8] sm:$0xff]
    %v3138 = vld [vmem:[#allocation5 + $0x5bd0] sm:$0xff]
    %v3139 = vld [vmem:[#allocation5 + $0x5bd8] sm:$0xff]
    %v3140 = vld [vmem:[#allocation5 + $0x5be0] sm:$0xff]
    %v3141 = vld [vmem:[#allocation5 + $0x5be8] sm:$0xff]
    %v3142 = vld [vmem:[#allocation5 + $0x5bf0] sm:$0xff]
    %v3143 = vld [vmem:[#allocation5 + $0x5bf8] sm:$0xff]
    %v3144 = vld [vmem:[#allocation5 + $0x5c00] sm:$0xff]
    %v3145 = vld [vmem:[#allocation5 + $0x5c08] sm:$0xff]
    %v3146 = vld [vmem:[#allocation5 + $0x5c10] sm:$0xff]
    %v3147 = vld [vmem:[#allocation5 + $0x5c18] sm:$0xff]
    %v3148 = vld [vmem:[#allocation5 + $0x5c20] sm:$0xff]
    %v3149 = vld [vmem:[#allocation5 + $0x5c28] sm:$0xff]
    %v3150 = vld [vmem:[#allocation5 + $0x5c30] sm:$0xff]
    %v3151 = vld [vmem:[#allocation5 + $0x5c38] sm:$0xff]
    %v3152 = vld [vmem:[#allocation5 + $0x5c40] sm:$0xff]
    %v3153 = vld [vmem:[#allocation5 + $0x5c48] sm:$0xff]
    %v3154 = vld [vmem:[#allocation5 + $0x5c50] sm:$0xff]
    %v3155 = vld [vmem:[#allocation5 + $0x5c58] sm:$0xff]
    %v3156 = vld [vmem:[#allocation5 + $0x5c60] sm:$0xff]
    %v3157 = vld [vmem:[#allocation5 + $0x5c68] sm:$0xff]
    %v3158 = vld [vmem:[#allocation5 + $0x5c70] sm:$0xff]
    %v3159 = vld [vmem:[#allocation5 + $0x5c78] sm:$0xff]
    %v3160 = vld [vmem:[#allocation5 + $0x5c80] sm:$0xff]
    %v3161 = vld [vmem:[#allocation5 + $0x5c88] sm:$0xff]
    %v3162 = vld [vmem:[#allocation5 + $0x5c90] sm:$0xff]
    %v3163 = vld [vmem:[#allocation5 + $0x5c98] sm:$0xff]
    %v3164 = vld [vmem:[#allocation5 + $0x5ca0] sm:$0xff]
    %v3165 = vld [vmem:[#allocation5 + $0x5ca8] sm:$0xff]
    %v3166 = vld [vmem:[#allocation5 + $0x5cb0] sm:$0xff]
    %v3167 = vld [vmem:[#allocation5 + $0x5cb8] sm:$0xff]
    %v3168 = vld [vmem:[#allocation5 + $0x5cc0] sm:$0xff]
    %v3169 = vld [vmem:[#allocation5 + $0x5cc8] sm:$0xff]
    %v3170 = vld [vmem:[#allocation5 + $0x5cd0] sm:$0xff]
    %v3171 = vld [vmem:[#allocation5 + $0x5cd8] sm:$0xff]
    %v3172 = vld [vmem:[#allocation5 + $0x5ce0] sm:$0xff]
    %v3173 = vld [vmem:[#allocation5 + $0x5ce8] sm:$0xff]
    %v3174 = vld [vmem:[#allocation5 + $0x5cf0] sm:$0xff]
    %v3175 = vld [vmem:[#allocation5 + $0x5cf8] sm:$0xff]
    %v3176 = vld [vmem:[#allocation5 + $0x5d00] sm:$0xff]
    %v3177 = vld [vmem:[#allocation5 + $0x5d08] sm:$0xff]
    %v3178 = vld [vmem:[#allocation5 + $0x5d10] sm:$0xff]
    %v3179 = vld [vmem:[#allocation5 + $0x5d18] sm:$0xff]
    %v3180 = vld [vmem:[#allocation5 + $0x5d20] sm:$0xff]
    %v3181 = vld [vmem:[#allocation5 + $0x5d28] sm:$0xff]
    %v3182 = vld [vmem:[#allocation5 + $0x5d30] sm:$0xff]
    %v3183 = vld [vmem:[#allocation5 + $0x5d38] sm:$0xff]
    %v3184 = vld [vmem:[#allocation5 + $0x5d40] sm:$0xff]
    %v3185 = vld [vmem:[#allocation5 + $0x5d48] sm:$0xff]
    %v3186 = vld [vmem:[#allocation5 + $0x5d50] sm:$0xff]
    %v3187 = vld [vmem:[#allocation5 + $0x5d58] sm:$0xff]
    %v3188 = vld [vmem:[#allocation5 + $0x5d60] sm:$0xff]
    %v3189 = vld [vmem:[#allocation5 + $0x5d68] sm:$0xff]
    %v3190 = vld [vmem:[#allocation5 + $0x5d70] sm:$0xff]
    %v3191 = vld [vmem:[#allocation5 + $0x5d78] sm:$0xff]
    %v3192 = vld [vmem:[#allocation5 + $0x5d80] sm:$0xff]
    %v3193 = vld [vmem:[#allocation5 + $0x5d88] sm:$0xff]
    %v3194 = vld [vmem:[#allocation5 + $0x5d90] sm:$0xff]
    %v3195 = vld [vmem:[#allocation5 + $0x5d98] sm:$0xff]
    %v3196 = vld [vmem:[#allocation5 + $0x5da0] sm:$0xff]
    %v3197 = vld [vmem:[#allocation5 + $0x5da8] sm:$0xff]
    %v3198 = vld [vmem:[#allocation5 + $0x5db0] sm:$0xff]
    %v3199 = vld [vmem:[#allocation5 + $0x5db8] sm:$0xff]
    %v3200 = vld [vmem:[#allocation5 + $0x5dc0] sm:$0xff]
    %v3201 = vld [vmem:[#allocation5 + $0x5dc8] sm:$0xff]
    %v3202 = vld [vmem:[#allocation5 + $0x5dd0] sm:$0xff]
    %v3203 = vld [vmem:[#allocation5 + $0x5dd8] sm:$0xff]
    %v3204 = vld [vmem:[#allocation5 + $0x5de0] sm:$0xff]
    %v3205 = vld [vmem:[#allocation5 + $0x5de8] sm:$0xff]
    %v3206 = vld [vmem:[#allocation5 + $0x5df0] sm:$0xff]
    %v3207 = vld [vmem:[#allocation5 + $0x5df8] sm:$0xff]
    %v3208 = vld [vmem:[#allocation5 + $0x5e00] sm:$0xff]
    %v3209 = vld [vmem:[#allocation5 + $0x5e08] sm:$0xff]
    %v3210 = vld [vmem:[#allocation5 + $0x5e10] sm:$0xff]
    %v3211 = vld [vmem:[#allocation5 + $0x5e18] sm:$0xff]
    %v3212 = vld [vmem:[#allocation5 + $0x5e20] sm:$0xff]
    %v3213 = vld [vmem:[#allocation5 + $0x5e28] sm:$0xff]
    %v3214 = vld [vmem:[#allocation5 + $0x5e30] sm:$0xff]
    %v3215 = vld [vmem:[#allocation5 + $0x5e38] sm:$0xff]
    %v3216 = vld [vmem:[#allocation5 + $0x5e40] sm:$0xff]
    %v3217 = vld [vmem:[#allocation5 + $0x5e48] sm:$0xff]
    %v3218 = vld [vmem:[#allocation5 + $0x5e50] sm:$0xff]
    %v3219 = vld [vmem:[#allocation5 + $0x5e58] sm:$0xff]
    %v3220 = vld [vmem:[#allocation5 + $0x5e60] sm:$0xff]
    %v3221 = vld [vmem:[#allocation5 + $0x5e68] sm:$0xff]
    %v3222 = vld [vmem:[#allocation5 + $0x5e70] sm:$0xff]
    %v3223 = vld [vmem:[#allocation5 + $0x5e78] sm:$0xff]
    %v3224 = vld [vmem:[#allocation5 + $0x5e80] sm:$0xff]
    %v3225 = vld [vmem:[#allocation5 + $0x5e88] sm:$0xff]
    %v3226 = vld [vmem:[#allocation5 + $0x5e90] sm:$0xff]
    %v3227 = vld [vmem:[#allocation5 + $0x5e98] sm:$0xff]
    %v3228 = vld [vmem:[#allocation5 + $0x5ea0] sm:$0xff]
    %v3229 = vld [vmem:[#allocation5 + $0x5ea8] sm:$0xff]
    %v3230 = vld [vmem:[#allocation5 + $0x5eb0] sm:$0xff]
    %v3231 = vld [vmem:[#allocation5 + $0x5eb8] sm:$0xff]
    %v3232 = vld [vmem:[#allocation5 + $0x5ec0] sm:$0xff]
    %v3233 = vld [vmem:[#allocation5 + $0x5ec8] sm:$0xff]
    %v3234 = vld [vmem:[#allocation5 + $0x5ed0] sm:$0xff]
    %v3235 = vld [vmem:[#allocation5 + $0x5ed8] sm:$0xff]
    %v3236 = vld [vmem:[#allocation5 + $0x5ee0] sm:$0xff]
    %v3237 = vld [vmem:[#allocation5 + $0x5ee8] sm:$0xff]
    %v3238 = vld [vmem:[#allocation5 + $0x5ef0] sm:$0xff]
    %v3239 = vld [vmem:[#allocation5 + $0x5ef8] sm:$0xff]
    %v3240 = vld [vmem:[#allocation5 + $0x5f00] sm:$0xff]
    %v3241 = vld [vmem:[#allocation5 + $0x5f08] sm:$0xff]
    %v3242 = vld [vmem:[#allocation5 + $0x5f10] sm:$0xff]
    %v3243 = vld [vmem:[#allocation5 + $0x5f18] sm:$0xff]
    %v3244 = vld [vmem:[#allocation5 + $0x5f20] sm:$0xff]
    %v3245 = vld [vmem:[#allocation5 + $0x5f28] sm:$0xff]
    %v3246 = vld [vmem:[#allocation5 + $0x5f30] sm:$0xff]
    %v3247 = vld [vmem:[#allocation5 + $0x5f38] sm:$0xff]
    %v3248 = vld [vmem:[#allocation5 + $0x5f40] sm:$0xff]
    %v3249 = vld [vmem:[#allocation5 + $0x5f48] sm:$0xff]
    %v3250 = vld [vmem:[#allocation5 + $0x5f50] sm:$0xff]
    %v3251 = vld [vmem:[#allocation5 + $0x5f58] sm:$0xff]
    %v3252 = vld [vmem:[#allocation5 + $0x5f60] sm:$0xff]
    %v3253 = vld [vmem:[#allocation5 + $0x5f68] sm:$0xff]
    %v3254 = vld [vmem:[#allocation5 + $0x5f70] sm:$0xff]
    %v3255 = vld [vmem:[#allocation5 + $0x5f78] sm:$0xff]
    %v3256 = vld [vmem:[#allocation5 + $0x5f80] sm:$0xff]
    %v3257 = vld [vmem:[#allocation5 + $0x5f88] sm:$0xff]
    %v3258 = vld [vmem:[#allocation5 + $0x5f90] sm:$0xff]
    %v3259 = vld [vmem:[#allocation5 + $0x5f98] sm:$0xff]
    %v3260 = vld [vmem:[#allocation5 + $0x5fa0] sm:$0xff]
    %v3261 = vld [vmem:[#allocation5 + $0x5fa8] sm:$0xff]
    %v3262 = vld [vmem:[#allocation5 + $0x5fb0] sm:$0xff]
    %v3263 = vld [vmem:[#allocation5 + $0x5fb8] sm:$0xff]
    %v3264 = vld [vmem:[#allocation5 + $0x5fc0] sm:$0xff]
    %v3265 = vld [vmem:[#allocation5 + $0x5fc8] sm:$0xff]
    %v3266 = vld [vmem:[#allocation5 + $0x5fd0] sm:$0xff]
    %v3267 = vld [vmem:[#allocation5 + $0x5fd8] sm:$0xff]
    %v3268 = vld [vmem:[#allocation5 + $0x5fe0] sm:$0xff]
    %v3269 = vld [vmem:[#allocation5 + $0x5fe8] sm:$0xff]
    %v3270 = vld [vmem:[#allocation5 + $0x5ff0] sm:$0xff]
    %v3271 = vld [vmem:[#allocation5 + $0x5ff8] sm:$0xff]
    %v3272 = vld [vmem:[#allocation7] sm:$0xff]
    %v3274 = vlaneseq
    %v3275 = vshrl.u32 %v3274, 7
    %v3276 = vsub.s32 0, %v3275
    %v3277 = vrot.slane %v3272, %v3276
    %v3278 = vlaneseq
    %v3279 = vshrl.u32 %v3278, 7
    %v3280 = vsub.s32 1, %v3279
    %v3281 = vrot.slane %v3272, %v3280
    %v3282 = vlaneseq
    %v3283 = vshrl.u32 %v3282, 7
    %v3284 = vsub.s32 2, %v3283
    %v3285 = vrot.slane %v3272, %v3284
    %v3286 = vlaneseq
    %v3287 = vshrl.u32 %v3286, 7
    %v3288 = vsub.s32 3, %v3287
    %v3289 = vrot.slane %v3272, %v3288
    %v3290 = vlaneseq
    %v3291 = vshrl.u32 %v3290, 7
    %v3292 = vsub.s32 4, %v3291
    %v3293 = vrot.slane %v3272, %v3292
    %v3294 = vlaneseq
    %v3295 = vshrl.u32 %v3294, 7
    %v3296 = vsub.s32 5, %v3295
    %v3297 = vrot.slane %v3272, %v3296
    %v3298 = vlaneseq
    %v3299 = vshrl.u32 %v3298, 7
    %v3300 = vsub.s32 6, %v3299
    %v3301 = vrot.slane %v3272, %v3300
    %v3302 = vlaneseq
    %v3303 = vshrl.u32 %v3302, 7
    %v3304 = vsub.s32 7, %v3303
    %v3305 = vrot.slane %v3272, %v3304
    %3314 = vmatprep.subr.mxu0 %v321
    %3315 = vmatpush1.msra.mxu0 %v320
    %3316 = vmatprep.subr.mxu0 %v313
    %3317 = vmatpush1.msra.mxu0 %v312
    %3318 = vmatprep.subr.mxu0 %v305
    %3319 = vmatpush1.msra.mxu0 %v304
    %3320 = vmatprep.subr.mxu0 %v297
    %3321 = vmatpush1.msra.mxu0 %v296
    %3322 = vmatprep.subr.mxu0 %v289
    %3323 = vmatpush1.msra.mxu0 %v288
    %3324 = vmatprep.subr.mxu0 %v281
    %3325 = vmatpush1.msra.mxu0 %v280
    %3326 = vmatprep.subr.mxu0 %v273
    %3327 = vmatpush1.msra.mxu0 %v272
    %3328 = vmatprep.subr.mxu0 %v265
    %3329 = vmatpush1.msra.mxu0 %v264
    %3330 = vmatprep.subr.mxu0 %v257
    %3331 = vmatpush1.msra.mxu0 %v256
    %3332 = vmatprep.subr.mxu0 %v249
    %3333 = vmatpush1.msra.mxu0 %v248
    %3334 = vmatprep.subr.mxu0 %v241
    %3335 = vmatpush1.msra.mxu0 %v240
    %3336 = vmatprep.subr.mxu0 %v233
    %3337 = vmatpush1.msra.mxu0 %v232
    %3338 = vmatprep.subr.mxu0 %v225
    %3339 = vmatpush1.msra.mxu0 %v224
    %3340 = vmatprep.subr.mxu0 %v217
    %3341 = vmatpush1.msra.mxu0 %v216
    %3342 = vmatprep.subr.mxu0 %v209
    %3343 = vmatpush1.msra.mxu0 %v208
    %3344 = vmatprep.subr.mxu0 %v201
    %3345 = vmatpush1.msra.mxu0 %v200
    %3346 = vmatprep.subr.mxu0 %v449
    %3347 = vmatpush2.msra.mxu0 %v448
    %3348 = vmatprep.subr.mxu0 %v441
    %3349 = vmatpush2.msra.mxu0 %v440
    %3350 = vmatprep.subr.mxu0 %v433
    %3351 = vmatpush2.msra.mxu0 %v432
    %3352 = vmatprep.subr.mxu0 %v425
    %3353 = vmatpush2.msra.mxu0 %v424
    %3354 = vmatprep.subr.mxu0 %v417
    %3355 = vmatpush2.msra.mxu0 %v416
    %3356 = vmatprep.subr.mxu0 %v409
    %3357 = vmatpush2.msra.mxu0 %v408
    %3358 = vmatprep.subr.mxu0 %v401
    %3359 = vmatpush2.msra.mxu0 %v400
    %3360 = vmatprep.subr.mxu0 %v393
    %3361 = vmatpush2.msra.mxu0 %v392
    %3362 = vmatprep.subr.mxu0 %v385
    %3363 = vmatpush2.msra.mxu0 %v384
    %3364 = vmatprep.subr.mxu0 %v377
    %3365 = vmatpush2.msra.mxu0 %v376
    %3366 = vmatprep.subr.mxu0 %v369
    %3367 = vmatpush2.msra.mxu0 %v368
    %3368 = vmatprep.subr.mxu0 %v361
    %3369 = vmatpush2.msra.mxu0 %v360
    %3370 = vmatprep.subr.mxu0 %v353
    %3371 = vmatpush2.msra.mxu0 %v352
    %3372 = vmatprep.subr.mxu0 %v345
    %3373 = vmatpush2.msra.mxu0 %v344
    %3374 = vmatprep.subr.mxu0 %v337
    %3375 = vmatpush2.msra.mxu0 %v336
    %3376 = vmatprep.subr.mxu0 %v329
    %3377 = vmatpush2.msra.mxu0 %v328
    %3378 = vmatprep.mubr.f32.mxu0 %v177
    %3379 = vmatmul.mubr.f32.gmra.mxu0 %v176
    %v3380 = vpop.f32.mrf.mxu0
    %v3381 = vadd.f32 %v3277, %v3380
    %v3382 = vpop.f32.mrf.mxu0
    %v3383 = vadd.f32 %v3281, %v3382
    %3384 = vdwg.mxu0
    %3385 = vmatprep.subr.mxu0 %v577
    %3386 = vmatpush1.msra.mxu0 %v576
    %3387 = vmatprep.subr.mxu0 %v569
    %3388 = vmatpush1.msra.mxu0 %v568
    %3389 = vmatprep.subr.mxu0 %v561
    %3390 = vmatpush1.msra.mxu0 %v560
    %3391 = vmatprep.subr.mxu0 %v553
    %3392 = vmatpush1.msra.mxu0 %v552
    %3393 = vmatprep.subr.mxu0 %v545
    %3394 = vmatpush1.msra.mxu0 %v544
    %3395 = vmatprep.subr.mxu0 %v537
    %3396 = vmatpush1.msra.mxu0 %v536
    %3397 = vmatprep.subr.mxu0 %v529
    %3398 = vmatpush1.msra.mxu0 %v528
    %3399 = vmatprep.subr.mxu0 %v521
    %3400 = vmatpush1.msra.mxu0 %v520
    %3401 = vmatprep.subr.mxu0 %v513
    %3402 = vmatpush1.msra.mxu0 %v512
    %3403 = vmatprep.subr.mxu0 %v505
    %3404 = vmatpush1.msra.mxu0 %v504
    %3405 = vmatprep.subr.mxu0 %v497
    %3406 = vmatpush1.msra.mxu0 %v496
    %3407 = vmatprep.subr.mxu0 %v489
    %3408 = vmatpush1.msra.mxu0 %v488
    %3409 = vmatprep.subr.mxu0 %v481
    %3410 = vmatpush1.msra.mxu0 %v480
    %3411 = vmatprep.subr.mxu0 %v473
    %3412 = vmatpush1.msra.mxu0 %v472
    %3413 = vmatprep.subr.mxu0 %v465
    %3414 = vmatpush1.msra.mxu0 %v464
    %3415 = vmatprep.subr.mxu0 %v457
    %3416 = vmatpush1.msra.mxu0 %v456
    %3417 = vmatprep.subr.mxu0 %v705
    %3418 = vmatpush2.msra.mxu0 %v704
    %3419 = vmatprep.subr.mxu0 %v697
    %3420 = vmatpush2.msra.mxu0 %v696
    %3421 = vmatprep.subr.mxu0 %v689
    %3422 = vmatpush2.msra.mxu0 %v688
    %3423 = vmatprep.subr.mxu0 %v681
    %3424 = vmatpush2.msra.mxu0 %v680
    %3425 = vmatprep.subr.mxu0 %v673
    %3426 = vmatpush2.msra.mxu0 %v672
    %3427 = vmatprep.subr.mxu0 %v665
    %3428 = vmatpush2.msra.mxu0 %v664
    %3429 = vmatprep.subr.mxu0 %v657
    %3430 = vmatpush2.msra.mxu0 %v656
    %3431 = vmatprep.subr.mxu0 %v649
    %3432 = vmatpush2.msra.mxu0 %v648
    %3433 = vmatprep.subr.mxu0 %v641
    %3434 = vmatpush2.msra.mxu0 %v640
    %3435 = vmatprep.subr.mxu0 %v633
    %3436 = vmatpush2.msra.mxu0 %v632
    %3437 = vmatprep.subr.mxu0 %v625
    %3438 = vmatpush2.msra.mxu0 %v624
    %3439 = vmatprep.subr.mxu0 %v617
    %3440 = vmatpush2.msra.mxu0 %v616
    %3441 = vmatprep.subr.mxu0 %v609
    %3442 = vmatpush2.msra.mxu0 %v608
    %3443 = vmatprep.subr.mxu0 %v601
    %3444 = vmatpush2.msra.mxu0 %v600
    %3445 = vmatprep.subr.mxu0 %v593
    %3446 = vmatpush2.msra.mxu0 %v592
    %3447 = vmatprep.subr.mxu0 %v585
    %3448 = vmatpush2.msra.mxu0 %v584
    %3449 = vmatprep.mubr.f32.mxu0 %v179
    %3450 = vmatmul.mubr.f32.gmra.mxu0 %v178
    %v3451 = vpop.f32.mrf.mxu0
    %v3452 = vadd.f32 %v3381, %v3451
    %v3453 = vpop.f32.mrf.mxu0
    %v3454 = vadd.f32 %v3383, %v3453
    %3455 = vdwg.mxu0
    %3456 = vmatprep.subr.mxu0 %v833
    %3457 = vmatpush1.msra.mxu0 %v832
    %3458 = vmatprep.subr.mxu0 %v825
    %3459 = vmatpush1.msra.mxu0 %v824
    %3460 = vmatprep.subr.mxu0 %v817
    %3461 = vmatpush1.msra.mxu0 %v816
    %3462 = vmatprep.subr.mxu0 %v809
    %3463 = vmatpush1.msra.mxu0 %v808
    %3464 = vmatprep.subr.mxu0 %v801
    %3465 = vmatpush1.msra.mxu0 %v800
    %3466 = vmatprep.subr.mxu0 %v793
    %3467 = vmatpush1.msra.mxu0 %v792
    %3468 = vmatprep.subr.mxu0 %v785
    %3469 = vmatpush1.msra.mxu0 %v784
    %3470 = vmatprep.subr.mxu0 %v777
    %3471 = vmatpush1.msra.mxu0 %v776
    %3472 = vmatprep.subr.mxu0 %v769
    %3473 = vmatpush1.msra.mxu0 %v768
    %3474 = vmatprep.subr.mxu0 %v761
    %3475 = vmatpush1.msra.mxu0 %v760
    %3476 = vmatprep.subr.mxu0 %v753
    %3477 = vmatpush1.msra.mxu0 %v752
    %3478 = vmatprep.subr.mxu0 %v745
    %3479 = vmatpush1.msra.mxu0 %v744
    %3480 = vmatprep.subr.mxu0 %v737
    %3481 = vmatpush1.msra.mxu0 %v736
    %3482 = vmatprep.subr.mxu0 %v729
    %3483 = vmatpush1.msra.mxu0 %v728
    %3484 = vmatprep.subr.mxu0 %v721
    %3485 = vmatpush1.msra.mxu0 %v720
    %3486 = vmatprep.subr.mxu0 %v713
    %3487 = vmatpush1.msra.mxu0 %v712
    %3488 = vmatprep.subr.mxu0 %v961
    %3489 = vmatpush2.msra.mxu0 %v960
    %3490 = vmatprep.subr.mxu0 %v953
    %3491 = vmatpush2.msra.mxu0 %v952
    %3492 = vmatprep.subr.mxu0 %v945
    %3493 = vmatpush2.msra.mxu0 %v944
    %3494 = vmatprep.subr.mxu0 %v937
    %3495 = vmatpush2.msra.mxu0 %v936
    %3496 = vmatprep.subr.mxu0 %v929
    %3497 = vmatpush2.msra.mxu0 %v928
    %3498 = vmatprep.subr.mxu0 %v921
    %3499 = vmatpush2.msra.mxu0 %v920
    %3500 = vmatprep.subr.mxu0 %v913
    %3501 = vmatpush2.msra.mxu0 %v912
    %3502 = vmatprep.subr.mxu0 %v905
    %3503 = vmatpush2.msra.mxu0 %v904
    %3504 = vmatprep.subr.mxu0 %v897
    %3505 = vmatpush2.msra.mxu0 %v896
    %3506 = vmatprep.subr.mxu0 %v889
    %3507 = vmatpush2.msra.mxu0 %v888
    %3508 = vmatprep.subr.mxu0 %v881
    %3509 = vmatpush2.msra.mxu0 %v880
    %3510 = vmatprep.subr.mxu0 %v873
    %3511 = vmatpush2.msra.mxu0 %v872
    %3512 = vmatprep.subr.mxu0 %v865
    %3513 = vmatpush2.msra.mxu0 %v864
    %3514 = vmatprep.subr.mxu0 %v857
    %3515 = vmatpush2.msra.mxu0 %v856
    %3516 = vmatprep.subr.mxu0 %v849
    %3517 = vmatpush2.msra.mxu0 %v848
    %3518 = vmatprep.subr.mxu0 %v841
    %3519 = vmatpush2.msra.mxu0 %v840
    %3520 = vmatprep.mubr.f32.mxu0 %v181
    %3521 = vmatmul.mubr.f32.gmra.mxu0 %v180
    %v3522 = vpop.f32.mrf.mxu0
    %v3523 = vadd.f32 %v3452, %v3522
    %v3524 = vpop.f32.mrf.mxu0
    %v3525 = vadd.f32 %v3454, %v3524
    %3526 = vdwg.mxu0
    %3527 = vmatprep.subr.mxu0 %v1089
    %3528 = vmatpush1.msra.mxu0 %v1088
    %3529 = vmatprep.subr.mxu0 %v1081
    %3530 = vmatpush1.msra.mxu0 %v1080
    %3531 = vmatprep.subr.mxu0 %v1073
    %3532 = vmatpush1.msra.mxu0 %v1072
    %3533 = vmatprep.subr.mxu0 %v1065
    %3534 = vmatpush1.msra.mxu0 %v1064
    %3535 = vmatprep.subr.mxu0 %v1057
    %3536 = vmatpush1.msra.mxu0 %v1056
    %3537 = vmatprep.subr.mxu0 %v1049
    %3538 = vmatpush1.msra.mxu0 %v1048
    %3539 = vmatprep.subr.mxu0 %v1041
    %3540 = vmatpush1.msra.mxu0 %v1040
    %3541 = vmatprep.subr.mxu0 %v1033
    %3542 = vmatpush1.msra.mxu0 %v1032
    %3543 = vmatprep.subr.mxu0 %v1025
    %3544 = vmatpush1.msra.mxu0 %v1024
    %3545 = vmatprep.subr.mxu0 %v1017
    %3546 = vmatpush1.msra.mxu0 %v1016
    %3547 = vmatprep.subr.mxu0 %v1009
    %3548 = vmatpush1.msra.mxu0 %v1008
    %3549 = vmatprep.subr.mxu0 %v1001
    %3550 = vmatpush1.msra.mxu0 %v1000
    %3551 = vmatprep.subr.mxu0 %v993
    %3552 = vmatpush1.msra.mxu0 %v992
    %3553 = vmatprep.subr.mxu0 %v985
    %3554 = vmatpush1.msra.mxu0 %v984
    %3555 = vmatprep.subr.mxu0 %v977
    %3556 = vmatpush1.msra.mxu0 %v976
    %3557 = vmatprep.subr.mxu0 %v969
    %3558 = vmatpush1.msra.mxu0 %v968
    %3559 = vmatprep.subr.mxu0 %v1217
    %3560 = vmatpush2.msra.mxu0 %v1216
    %3561 = vmatprep.subr.mxu0 %v1209
    %3562 = vmatpush2.msra.mxu0 %v1208
    %3563 = vmatprep.subr.mxu0 %v1201
    %3564 = vmatpush2.msra.mxu0 %v1200
    %3565 = vmatprep.subr.mxu0 %v1193
    %3566 = vmatpush2.msra.mxu0 %v1192
    %3567 = vmatprep.subr.mxu0 %v1185
    %3568 = vmatpush2.msra.mxu0 %v1184
    %3569 = vmatprep.subr.mxu0 %v1177
    %3570 = vmatpush2.msra.mxu0 %v1176
    %3571 = vmatprep.subr.mxu0 %v1169
    %3572 = vmatpush2.msra.mxu0 %v1168
    %3573 = vmatprep.subr.mxu0 %v1161
    %3574 = vmatpush2.msra.mxu0 %v1160
    %3575 = vmatprep.subr.mxu0 %v1153
    %3576 = vmatpush2.msra.mxu0 %v1152
    %3577 = vmatprep.subr.mxu0 %v1145
    %3578 = vmatpush2.msra.mxu0 %v1144
    %3579 = vmatprep.subr.mxu0 %v1137
    %3580 = vmatpush2.msra.mxu0 %v1136
    %3581 = vmatprep.subr.mxu0 %v1129
    %3582 = vmatpush2.msra.mxu0 %v1128
    %3583 = vmatprep.subr.mxu0 %v1121
    %3584 = vmatpush2.msra.mxu0 %v1120
    %3585 = vmatprep.subr.mxu0 %v1113
    %3586 = vmatpush2.msra.mxu0 %v1112
    %3587 = vmatprep.subr.mxu0 %v1105
    %3588 = vmatpush2.msra.mxu0 %v1104
    %3589 = vmatprep.subr.mxu0 %v1097
    %3590 = vmatpush2.msra.mxu0 %v1096
    %3591 = vmatprep.mubr.f32.mxu0 %v183
    %3592 = vmatmul.mubr.f32.gmra.mxu0 %v182
    %v3593 = vpop.f32.mrf.mxu0
    %v3594 = vadd.f32 %v3523, %v3593
    %v3595 = vpop.f32.mrf.mxu0
    %v3596 = vadd.f32 %v3525, %v3595
    %3597 = vdwg.mxu0
    %3598 = vmatprep.subr.mxu0 %v1345
    %3599 = vmatpush1.msra.mxu0 %v1344
    %3600 = vmatprep.subr.mxu0 %v1337
    %3601 = vmatpush1.msra.mxu0 %v1336
    %3602 = vmatprep.subr.mxu0 %v1329
    %3603 = vmatpush1.msra.mxu0 %v1328
    %3604 = vmatprep.subr.mxu0 %v1321
    %3605 = vmatpush1.msra.mxu0 %v1320
    %3606 = vmatprep.subr.mxu0 %v1313
    %3607 = vmatpush1.msra.mxu0 %v1312
    %3608 = vmatprep.subr.mxu0 %v1305
    %3609 = vmatpush1.msra.mxu0 %v1304
    %3610 = vmatprep.subr.mxu0 %v1297
    %3611 = vmatpush1.msra.mxu0 %v1296
    %3612 = vmatprep.subr.mxu0 %v1289
    %3613 = vmatpush1.msra.mxu0 %v1288
    %3614 = vmatprep.subr.mxu0 %v1281
    %3615 = vmatpush1.msra.mxu0 %v1280
    %3616 = vmatprep.subr.mxu0 %v1273
    %3617 = vmatpush1.msra.mxu0 %v1272
    %3618 = vmatprep.subr.mxu0 %v1265
    %3619 = vmatpush1.msra.mxu0 %v1264
    %3620 = vmatprep.subr.mxu0 %v1257
    %3621 = vmatpush1.msra.mxu0 %v1256
    %3622 = vmatprep.subr.mxu0 %v1249
    %3623 = vmatpush1.msra.mxu0 %v1248
    %3624 = vmatprep.subr.mxu0 %v1241
    %3625 = vmatpush1.msra.mxu0 %v1240
    %3626 = vmatprep.subr.mxu0 %v1233
    %3627 = vmatpush1.msra.mxu0 %v1232
    %3628 = vmatprep.subr.mxu0 %v1225
    %3629 = vmatpush1.msra.mxu0 %v1224
    %3630 = vmatprep.subr.mxu0 %v1473
    %3631 = vmatpush2.msra.mxu0 %v1472
    %3632 = vmatprep.subr.mxu0 %v1465
    %3633 = vmatpush2.msra.mxu0 %v1464
    %3634 = vmatprep.subr.mxu0 %v1457
    %3635 = vmatpush2.msra.mxu0 %v1456
    %3636 = vmatprep.subr.mxu0 %v1449
    %3637 = vmatpush2.msra.mxu0 %v1448
    %3638 = vmatprep.subr.mxu0 %v1441
    %3639 = vmatpush2.msra.mxu0 %v1440
    %3640 = vmatprep.subr.mxu0 %v1433
    %3641 = vmatpush2.msra.mxu0 %v1432
    %3642 = vmatprep.subr.mxu0 %v1425
    %3643 = vmatpush2.msra.mxu0 %v1424
    %3644 = vmatprep.subr.mxu0 %v1417
    %3645 = vmatpush2.msra.mxu0 %v1416
    %3646 = vmatprep.subr.mxu0 %v1409
    %3647 = vmatpush2.msra.mxu0 %v1408
    %3648 = vmatprep.subr.mxu0 %v1401
    %3649 = vmatpush2.msra.mxu0 %v1400
    %3650 = vmatprep.subr.mxu0 %v1393
    %3651 = vmatpush2.msra.mxu0 %v1392
    %3652 = vmatprep.subr.mxu0 %v1385
    %3653 = vmatpush2.msra.mxu0 %v1384
    %3654 = vmatprep.subr.mxu0 %v1377
    %3655 = vmatpush2.msra.mxu0 %v1376
    %3656 = vmatprep.subr.mxu0 %v1369
    %3657 = vmatpush2.msra.mxu0 %v1368
    %3658 = vmatprep.subr.mxu0 %v1361
    %3659 = vmatpush2.msra.mxu0 %v1360
    %3660 = vmatprep.subr.mxu0 %v1353
    %3661 = vmatpush2.msra.mxu0 %v1352
    %3662 = vmatprep.mubr.f32.mxu0 %v185
    %3663 = vmatmul.mubr.f32.gmra.mxu0 %v184
    %v3664 = vpop.f32.mrf.mxu0
    %v3665 = vadd.f32 %v3594, %v3664
    %v3666 = vpop.f32.mrf.mxu0
    %v3667 = vadd.f32 %v3596, %v3666
    %3668 = vdwg.mxu0
    %3669 = vmatprep.subr.mxu0 %v1601
    %3670 = vmatpush1.msra.mxu0 %v1600
    %3671 = vmatprep.subr.mxu0 %v1593
    %3672 = vmatpush1.msra.mxu0 %v1592
    %3673 = vmatprep.subr.mxu0 %v1585
    %3674 = vmatpush1.msra.mxu0 %v1584
    %3675 = vmatprep.subr.mxu0 %v1577
    %3676 = vmatpush1.msra.mxu0 %v1576
    %3677 = vmatprep.subr.mxu0 %v1569
    %3678 = vmatpush1.msra.mxu0 %v1568
    %3679 = vmatprep.subr.mxu0 %v1561
    %3680 = vmatpush1.msra.mxu0 %v1560
    %3681 = vmatprep.subr.mxu0 %v1553
    %3682 = vmatpush1.msra.mxu0 %v1552
    %3683 = vmatprep.subr.mxu0 %v1545
    %3684 = vmatpush1.msra.mxu0 %v1544
    %3685 = vmatprep.subr.mxu0 %v1537
    %3686 = vmatpush1.msra.mxu0 %v1536
    %3687 = vmatprep.subr.mxu0 %v1529
    %3688 = vmatpush1.msra.mxu0 %v1528
    %3689 = vmatprep.subr.mxu0 %v1521
    %3690 = vmatpush1.msra.mxu0 %v1520
    %3691 = vmatprep.subr.mxu0 %v1513
    %3692 = vmatpush1.msra.mxu0 %v1512
    %3693 = vmatprep.subr.mxu0 %v1505
    %3694 = vmatpush1.msra.mxu0 %v1504
    %3695 = vmatprep.subr.mxu0 %v1497
    %3696 = vmatpush1.msra.mxu0 %v1496
    %3697 = vmatprep.subr.mxu0 %v1489
    %3698 = vmatpush1.msra.mxu0 %v1488
    %3699 = vmatprep.subr.mxu0 %v1481
    %3700 = vmatpush1.msra.mxu0 %v1480
    %3701 = vmatprep.subr.mxu0 %v1729
    %3702 = vmatpush2.msra.mxu0 %v1728
    %3703 = vmatprep.subr.mxu0 %v1721
    %3704 = vmatpush2.msra.mxu0 %v1720
    %3705 = vmatprep.subr.mxu0 %v1713
    %3706 = vmatpush2.msra.mxu0 %v1712
    %3707 = vmatprep.subr.mxu0 %v1705
    %3708 = vmatpush2.msra.mxu0 %v1704
    %3709 = vmatprep.subr.mxu0 %v1697
    %3710 = vmatpush2.msra.mxu0 %v1696
    %3711 = vmatprep.subr.mxu0 %v1689
    %3712 = vmatpush2.msra.mxu0 %v1688
    %3713 = vmatprep.subr.mxu0 %v1681
    %3714 = vmatpush2.msra.mxu0 %v1680
    %3715 = vmatprep.subr.mxu0 %v1673
    %3716 = vmatpush2.msra.mxu0 %v1672
    %3717 = vmatprep.subr.mxu0 %v1665
    %3718 = vmatpush2.msra.mxu0 %v1664
    %3719 = vmatprep.subr.mxu0 %v1657
    %3720 = vmatpush2.msra.mxu0 %v1656
    %3721 = vmatprep.subr.mxu0 %v1649
    %3722 = vmatpush2.msra.mxu0 %v1648
    %3723 = vmatprep.subr.mxu0 %v1641
    %3724 = vmatpush2.msra.mxu0 %v1640
    %3725 = vmatprep.subr.mxu0 %v1633
    %3726 = vmatpush2.msra.mxu0 %v1632
    %3727 = vmatprep.subr.mxu0 %v1625
    %3728 = vmatpush2.msra.mxu0 %v1624
    %3729 = vmatprep.subr.mxu0 %v1617
    %3730 = vmatpush2.msra.mxu0 %v1616
    %3731 = vmatprep.subr.mxu0 %v1609
    %3732 = vmatpush2.msra.mxu0 %v1608
    %3733 = vmatprep.mubr.f32.mxu0 %v187
    %3734 = vmatmul.mubr.f32.gmra.mxu0 %v186
    %v3735 = vpop.f32.mrf.mxu0
    %v3736 = vadd.f32 %v3665, %v3735
    %v3737 = vpop.f32.mrf.mxu0
    %v3738 = vadd.f32 %v3667, %v3737
    %3739 = vdwg.mxu0
    %3740 = vmatprep.subr.mxu0 %v1857
    %3741 = vmatpush1.msra.mxu0 %v1856
    %3742 = vmatprep.subr.mxu0 %v1849
    %3743 = vmatpush1.msra.mxu0 %v1848
    %3744 = vmatprep.subr.mxu0 %v1841
    %3745 = vmatpush1.msra.mxu0 %v1840
    %3746 = vmatprep.subr.mxu0 %v1833
    %3747 = vmatpush1.msra.mxu0 %v1832
    %3748 = vmatprep.subr.mxu0 %v1825
    %3749 = vmatpush1.msra.mxu0 %v1824
    %3750 = vmatprep.subr.mxu0 %v1817
    %3751 = vmatpush1.msra.mxu0 %v1816
    %3752 = vmatprep.subr.mxu0 %v1809
    %3753 = vmatpush1.msra.mxu0 %v1808
    %3754 = vmatprep.subr.mxu0 %v1801
    %3755 = vmatpush1.msra.mxu0 %v1800
    %3756 = vmatprep.subr.mxu0 %v1793
    %3757 = vmatpush1.msra.mxu0 %v1792
    %3758 = vmatprep.subr.mxu0 %v1785
    %3759 = vmatpush1.msra.mxu0 %v1784
    %3760 = vmatprep.subr.mxu0 %v1777
    %3761 = vmatpush1.msra.mxu0 %v1776
    %3762 = vmatprep.subr.mxu0 %v1769
    %3763 = vmatpush1.msra.mxu0 %v1768
    %3764 = vmatprep.subr.mxu0 %v1761
    %3765 = vmatpush1.msra.mxu0 %v1760
    %3766 = vmatprep.subr.mxu0 %v1753
    %3767 = vmatpush1.msra.mxu0 %v1752
    %3768 = vmatprep.subr.mxu0 %v1745
    %3769 = vmatpush1.msra.mxu0 %v1744
    %3770 = vmatprep.subr.mxu0 %v1737
    %3771 = vmatpush1.msra.mxu0 %v1736
    %3772 = vmatprep.subr.mxu0 %v1985
    %3773 = vmatpush2.msra.mxu0 %v1984
    %3774 = vmatprep.subr.mxu0 %v1977
    %3775 = vmatpush2.msra.mxu0 %v1976
    %3776 = vmatprep.subr.mxu0 %v1969
    %3777 = vmatpush2.msra.mxu0 %v1968
    %3778 = vmatprep.subr.mxu0 %v1961
    %3779 = vmatpush2.msra.mxu0 %v1960
    %3780 = vmatprep.subr.mxu0 %v1953
    %3781 = vmatpush2.msra.mxu0 %v1952
    %3782 = vmatprep.subr.mxu0 %v1945
    %3783 = vmatpush2.msra.mxu0 %v1944
    %3784 = vmatprep.subr.mxu0 %v1937
    %3785 = vmatpush2.msra.mxu0 %v1936
    %3786 = vmatprep.subr.mxu0 %v1929
    %3787 = vmatpush2.msra.mxu0 %v1928
    %3788 = vmatprep.subr.mxu0 %v1921
    %3789 = vmatpush2.msra.mxu0 %v1920
    %3790 = vmatprep.subr.mxu0 %v1913
    %3791 = vmatpush2.msra.mxu0 %v1912
    %3792 = vmatprep.subr.mxu0 %v1905
    %3793 = vmatpush2.msra.mxu0 %v1904
    %3794 = vmatprep.subr.mxu0 %v1897
    %3795 = vmatpush2.msra.mxu0 %v1896
    %3796 = vmatprep.subr.mxu0 %v1889
    %3797 = vmatpush2.msra.mxu0 %v1888
    %3798 = vmatprep.subr.mxu0 %v1881
    %3799 = vmatpush2.msra.mxu0 %v1880
    %3800 = vmatprep.subr.mxu0 %v1873
    %3801 = vmatpush2.msra.mxu0 %v1872
    %3802 = vmatprep.subr.mxu0 %v1865
    %3803 = vmatpush2.msra.mxu0 %v1864
    %3804 = vmatprep.mubr.f32.mxu0 %v189
    %3805 = vmatmul.mubr.f32.gmra.mxu0 %v188
    %v3806 = vpop.f32.mrf.mxu0
    %v3807 = vadd.f32 %v3736, %v3806
    %v3808 = vpop.f32.mrf.mxu0
    %v3809 = vadd.f32 %v3738, %v3808
    %3810 = vdwg.mxu0
    %3811 = vmatprep.subr.mxu0 %v2113
    %3812 = vmatpush1.msra.mxu0 %v2112
    %3813 = vmatprep.subr.mxu0 %v2105
    %3814 = vmatpush1.msra.mxu0 %v2104
    %3815 = vmatprep.subr.mxu0 %v2097
    %3816 = vmatpush1.msra.mxu0 %v2096
    %3817 = vmatprep.subr.mxu0 %v2089
    %3818 = vmatpush1.msra.mxu0 %v2088
    %3819 = vmatprep.subr.mxu0 %v2081
    %3820 = vmatpush1.msra.mxu0 %v2080
    %3821 = vmatprep.subr.mxu0 %v2073
    %3822 = vmatpush1.msra.mxu0 %v2072
    %3823 = vmatprep.subr.mxu0 %v2065
    %3824 = vmatpush1.msra.mxu0 %v2064
    %3825 = vmatprep.subr.mxu0 %v2057
    %3826 = vmatpush1.msra.mxu0 %v2056
    %3827 = vmatprep.subr.mxu0 %v2049
    %3828 = vmatpush1.msra.mxu0 %v2048
    %3829 = vmatprep.subr.mxu0 %v2041
    %3830 = vmatpush1.msra.mxu0 %v2040
    %3831 = vmatprep.subr.mxu0 %v2033
    %3832 = vmatpush1.msra.mxu0 %v2032
    %3833 = vmatprep.subr.mxu0 %v2025
    %3834 = vmatpush1.msra.mxu0 %v2024
    %3835 = vmatprep.subr.mxu0 %v2017
    %3836 = vmatpush1.msra.mxu0 %v2016
    %3837 = vmatprep.subr.mxu0 %v2009
    %3838 = vmatpush1.msra.mxu0 %v2008
    %3839 = vmatprep.subr.mxu0 %v2001
    %3840 = vmatpush1.msra.mxu0 %v2000
    %3841 = vmatprep.subr.mxu0 %v1993
    %3842 = vmatpush1.msra.mxu0 %v1992
    %3843 = vmatprep.subr.mxu0 %v2241
    %3844 = vmatpush2.msra.mxu0 %v2240
    %3845 = vmatprep.subr.mxu0 %v2233
    %3846 = vmatpush2.msra.mxu0 %v2232
    %3847 = vmatprep.subr.mxu0 %v2225
    %3848 = vmatpush2.msra.mxu0 %v2224
    %3849 = vmatprep.subr.mxu0 %v2217
    %3850 = vmatpush2.msra.mxu0 %v2216
    %3851 = vmatprep.subr.mxu0 %v2209
    %3852 = vmatpush2.msra.mxu0 %v2208
    %3853 = vmatprep.subr.mxu0 %v2201
    %3854 = vmatpush2.msra.mxu0 %v2200
    %3855 = vmatprep.subr.mxu0 %v2193
    %3856 = vmatpush2.msra.mxu0 %v2192
    %3857 = vmatprep.subr.mxu0 %v2185
    %3858 = vmatpush2.msra.mxu0 %v2184
    %3859 = vmatprep.subr.mxu0 %v2177
    %3860 = vmatpush2.msra.mxu0 %v2176
    %3861 = vmatprep.subr.mxu0 %v2169
    %3862 = vmatpush2.msra.mxu0 %v2168
    %3863 = vmatprep.subr.mxu0 %v2161
    %3864 = vmatpush2.msra.mxu0 %v2160
    %3865 = vmatprep.subr.mxu0 %v2153
    %3866 = vmatpush2.msra.mxu0 %v2152
    %3867 = vmatprep.subr.mxu0 %v2145
    %3868 = vmatpush2.msra.mxu0 %v2144
    %3869 = vmatprep.subr.mxu0 %v2137
    %3870 = vmatpush2.msra.mxu0 %v2136
    %3871 = vmatprep.subr.mxu0 %v2129
    %3872 = vmatpush2.msra.mxu0 %v2128
    %3873 = vmatprep.subr.mxu0 %v2121
    %3874 = vmatpush2.msra.mxu0 %v2120
    %3875 = vmatprep.mubr.f32.mxu0 %v191
    %3876 = vmatmul.mubr.f32.gmra.mxu0 %v190
    %v3877 = vpop.f32.mrf.mxu0
    %v3878 = vadd.f32 %v3807, %v3877
    %v3879 = vpop.f32.mrf.mxu0
    %v3880 = vadd.f32 %v3809, %v3879
    %3881 = vdwg.mxu0
    %3882 = vmatprep.subr.mxu0 %v2369
    %3883 = vmatpush1.msra.mxu0 %v2368
    %3884 = vmatprep.subr.mxu0 %v2361
    %3885 = vmatpush1.msra.mxu0 %v2360
    %3886 = vmatprep.subr.mxu0 %v2353
    %3887 = vmatpush1.msra.mxu0 %v2352
    %3888 = vmatprep.subr.mxu0 %v2345
    %3889 = vmatpush1.msra.mxu0 %v2344
    %3890 = vmatprep.subr.mxu0 %v2337
    %3891 = vmatpush1.msra.mxu0 %v2336
    %3892 = vmatprep.subr.mxu0 %v2329
    %3893 = vmatpush1.msra.mxu0 %v2328
    %3894 = vmatprep.subr.mxu0 %v2321
    %3895 = vmatpush1.msra.mxu0 %v2320
    %3896 = vmatprep.subr.mxu0 %v2313
    %3897 = vmatpush1.msra.mxu0 %v2312
    %3898 = vmatprep.subr.mxu0 %v2305
    %3899 = vmatpush1.msra.mxu0 %v2304
    %3900 = vmatprep.subr.mxu0 %v2297
    %3901 = vmatpush1.msra.mxu0 %v2296
    %3902 = vmatprep.subr.mxu0 %v2289
    %3903 = vmatpush1.msra.mxu0 %v2288
    %3904 = vmatprep.subr.mxu0 %v2281
    %3905 = vmatpush1.msra.mxu0 %v2280
    %3906 = vmatprep.subr.mxu0 %v2273
    %3907 = vmatpush1.msra.mxu0 %v2272
    %3908 = vmatprep.subr.mxu0 %v2265
    %3909 = vmatpush1.msra.mxu0 %v2264
    %3910 = vmatprep.subr.mxu0 %v2257
    %3911 = vmatpush1.msra.mxu0 %v2256
    %3912 = vmatprep.subr.mxu0 %v2249
    %3913 = vmatpush1.msra.mxu0 %v2248
    %3914 = vmatprep.subr.mxu0 %v2497
    %3915 = vmatpush2.msra.mxu0 %v2496
    %3916 = vmatprep.subr.mxu0 %v2489
    %3917 = vmatpush2.msra.mxu0 %v2488
    %3918 = vmatprep.subr.mxu0 %v2481
    %3919 = vmatpush2.msra.mxu0 %v2480
    %3920 = vmatprep.subr.mxu0 %v2473
    %3921 = vmatpush2.msra.mxu0 %v2472
    %3922 = vmatprep.subr.mxu0 %v2465
    %3923 = vmatpush2.msra.mxu0 %v2464
    %3924 = vmatprep.subr.mxu0 %v2457
    %3925 = vmatpush2.msra.mxu0 %v2456
    %3926 = vmatprep.subr.mxu0 %v2449
    %3927 = vmatpush2.msra.mxu0 %v2448
    %3928 = vmatprep.subr.mxu0 %v2441
    %3929 = vmatpush2.msra.mxu0 %v2440
    %3930 = vmatprep.subr.mxu0 %v2433
    %3931 = vmatpush2.msra.mxu0 %v2432
    %3932 = vmatprep.subr.mxu0 %v2425
    %3933 = vmatpush2.msra.mxu0 %v2424
    %3934 = vmatprep.subr.mxu0 %v2417
    %3935 = vmatpush2.msra.mxu0 %v2416
    %3936 = vmatprep.subr.mxu0 %v2409
    %3937 = vmatpush2.msra.mxu0 %v2408
    %3938 = vmatprep.subr.mxu0 %v2401
    %3939 = vmatpush2.msra.mxu0 %v2400
    %3940 = vmatprep.subr.mxu0 %v2393
    %3941 = vmatpush2.msra.mxu0 %v2392
    %3942 = vmatprep.subr.mxu0 %v2385
    %3943 = vmatpush2.msra.mxu0 %v2384
    %3944 = vmatprep.subr.mxu0 %v2377
    %3945 = vmatpush2.msra.mxu0 %v2376
    %3946 = vmatprep.mubr.f32.mxu0 %v193
    %3947 = vmatmul.mubr.f32.gmra.mxu0 %v192
    %v3948 = vpop.f32.mrf.mxu0
    %v3949 = vadd.f32 %v3878, %v3948
    %v3950 = vpop.f32.mrf.mxu0
    %v3951 = vadd.f32 %v3880, %v3950
    %3952 = vdwg.mxu0
    %3953 = vmatprep.subr.mxu0 %v2625
    %3954 = vmatpush1.msra.mxu0 %v2624
    %3955 = vmatprep.subr.mxu0 %v2617
    %3956 = vmatpush1.msra.mxu0 %v2616
    %3957 = vmatprep.subr.mxu0 %v2609
    %3958 = vmatpush1.msra.mxu0 %v2608
    %3959 = vmatprep.subr.mxu0 %v2601
    %3960 = vmatpush1.msra.mxu0 %v2600
    %3961 = vmatprep.subr.mxu0 %v2593
    %3962 = vmatpush1.msra.mxu0 %v2592
    %3963 = vmatprep.subr.mxu0 %v2585
    %3964 = vmatpush1.msra.mxu0 %v2584
    %3965 = vmatprep.subr.mxu0 %v2577
    %3966 = vmatpush1.msra.mxu0 %v2576
    %3967 = vmatprep.subr.mxu0 %v2569
    %3968 = vmatpush1.msra.mxu0 %v2568
    %3969 = vmatprep.subr.mxu0 %v2561
    %3970 = vmatpush1.msra.mxu0 %v2560
    %3971 = vmatprep.subr.mxu0 %v2553
    %3972 = vmatpush1.msra.mxu0 %v2552
    %3973 = vmatprep.subr.mxu0 %v2545
    %3974 = vmatpush1.msra.mxu0 %v2544
    %3975 = vmatprep.subr.mxu0 %v2537
    %3976 = vmatpush1.msra.mxu0 %v2536
    %3977 = vmatprep.subr.mxu0 %v2529
    %3978 = vmatpush1.msra.mxu0 %v2528
    %3979 = vmatprep.subr.mxu0 %v2521
    %3980 = vmatpush1.msra.mxu0 %v2520
    %3981 = vmatprep.subr.mxu0 %v2513
    %3982 = vmatpush1.msra.mxu0 %v2512
    %3983 = vmatprep.subr.mxu0 %v2505
    %3984 = vmatpush1.msra.mxu0 %v2504
    %3985 = vmatprep.subr.mxu0 %v2753
    %3986 = vmatpush2.msra.mxu0 %v2752
    %3987 = vmatprep.subr.mxu0 %v2745
    %3988 = vmatpush2.msra.mxu0 %v2744
    %3989 = vmatprep.subr.mxu0 %v2737
    %3990 = vmatpush2.msra.mxu0 %v2736
    %3991 = vmatprep.subr.mxu0 %v2729
    %3992 = vmatpush2.msra.mxu0 %v2728
    %3993 = vmatprep.subr.mxu0 %v2721
    %3994 = vmatpush2.msra.mxu0 %v2720
    %3995 = vmatprep.subr.mxu0 %v2713
    %3996 = vmatpush2.msra.mxu0 %v2712
    %3997 = vmatprep.subr.mxu0 %v2705
    %3998 = vmatpush2.msra.mxu0 %v2704
    %3999 = vmatprep.subr.mxu0 %v2697
    %4000 = vmatpush2.msra.mxu0 %v2696
    %4001 = vmatprep.subr.mxu0 %v2689
    %4002 = vmatpush2.msra.mxu0 %v2688
    %4003 = vmatprep.subr.mxu0 %v2681
    %4004 = vmatpush2.msra.mxu0 %v2680
    %4005 = vmatprep.subr.mxu0 %v2673
    %4006 = vmatpush2.msra.mxu0 %v2672
    %4007 = vmatprep.subr.mxu0 %v2665
    %4008 = vmatpush2.msra.mxu0 %v2664
    %4009 = vmatprep.subr.mxu0 %v2657
    %4010 = vmatpush2.msra.mxu0 %v2656
    %4011 = vmatprep.subr.mxu0 %v2649
    %4012 = vmatpush2.msra.mxu0 %v2648
    %4013 = vmatprep.subr.mxu0 %v2641
    %4014 = vmatpush2.msra.mxu0 %v2640
    %4015 = vmatprep.subr.mxu0 %v2633
    %4016 = vmatpush2.msra.mxu0 %v2632
    %4017 = vmatprep.mubr.f32.mxu0 %v195
    %4018 = vmatmul.mubr.f32.gmra.mxu0 %v194
    %v4019 = vpop.f32.mrf.mxu0
    %v4020 = vadd.f32 %v3949, %v4019
    %v4021 = vpop.f32.mrf.mxu0
    %v4022 = vadd.f32 %v3951, %v4021
    %4023 = vdwg.mxu0
    %4024 = vmatprep.subr.mxu0 %v2881
    %4025 = vmatpush1.msra.mxu0 %v2880
    %4026 = vmatprep.subr.mxu0 %v2873
    %4027 = vmatpush1.msra.mxu0 %v2872
    %4028 = vmatprep.subr.mxu0 %v2865
    %4029 = vmatpush1.msra.mxu0 %v2864
    %4030 = vmatprep.subr.mxu0 %v2857
    %4031 = vmatpush1.msra.mxu0 %v2856
    %4032 = vmatprep.subr.mxu0 %v2849
    %4033 = vmatpush1.msra.mxu0 %v2848
    %4034 = vmatprep.subr.mxu0 %v2841
    %4035 = vmatpush1.msra.mxu0 %v2840
    %4036 = vmatprep.subr.mxu0 %v2833
    %4037 = vmatpush1.msra.mxu0 %v2832
    %4038 = vmatprep.subr.mxu0 %v2825
    %4039 = vmatpush1.msra.mxu0 %v2824
    %4040 = vmatprep.subr.mxu0 %v2817
    %4041 = vmatpush1.msra.mxu0 %v2816
    %4042 = vmatprep.subr.mxu0 %v2809
    %4043 = vmatpush1.msra.mxu0 %v2808
    %4044 = vmatprep.subr.mxu0 %v2801
    %4045 = vmatpush1.msra.mxu0 %v2800
    %4046 = vmatprep.subr.mxu0 %v2793
    %4047 = vmatpush1.msra.mxu0 %v2792
    %4048 = vmatprep.subr.mxu0 %v2785
    %4049 = vmatpush1.msra.mxu0 %v2784
    %4050 = vmatprep.subr.mxu0 %v2777
    %4051 = vmatpush1.msra.mxu0 %v2776
    %4052 = vmatprep.subr.mxu0 %v2769
    %4053 = vmatpush1.msra.mxu0 %v2768
    %4054 = vmatprep.subr.mxu0 %v2761
    %4055 = vmatpush1.msra.mxu0 %v2760
    %4056 = vmatprep.subr.mxu0 %v3009
    %4057 = vmatpush2.msra.mxu0 %v3008
    %4058 = vmatprep.subr.mxu0 %v3001
    %4059 = vmatpush2.msra.mxu0 %v3000
    %4060 = vmatprep.subr.mxu0 %v2993
    %4061 = vmatpush2.msra.mxu0 %v2992
    %4062 = vmatprep.subr.mxu0 %v2985
    %4063 = vmatpush2.msra.mxu0 %v2984
    %4064 = vmatprep.subr.mxu0 %v2977
    %4065 = vmatpush2.msra.mxu0 %v2976
    %4066 = vmatprep.subr.mxu0 %v2969
    %4067 = vmatpush2.msra.mxu0 %v2968
    %4068 = vmatprep.subr.mxu0 %v2961
    %4069 = vmatpush2.msra.mxu0 %v2960
    %4070 = vmatprep.subr.mxu0 %v2953
    %4071 = vmatpush2.msra.mxu0 %v2952
    %4072 = vmatprep.subr.mxu0 %v2945
    %4073 = vmatpush2.msra.mxu0 %v2944
    %4074 = vmatprep.subr.mxu0 %v2937
    %4075 = vmatpush2.msra.mxu0 %v2936
    %4076 = vmatprep.subr.mxu0 %v2929
    %4077 = vmatpush2.msra.mxu0 %v2928
    %4078 = vmatprep.subr.mxu0 %v2921
    %4079 = vmatpush2.msra.mxu0 %v2920
    %4080 = vmatprep.subr.mxu0 %v2913
    %4081 = vmatpush2.msra.mxu0 %v2912
    %4082 = vmatprep.subr.mxu0 %v2905
    %4083 = vmatpush2.msra.mxu0 %v2904
    %4084 = vmatprep.subr.mxu0 %v2897
    %4085 = vmatpush2.msra.mxu0 %v2896
    %4086 = vmatprep.subr.mxu0 %v2889
    %4087 = vmatpush2.msra.mxu0 %v2888
    %4088 = vmatprep.mubr.f32.mxu0 %v197
    %4089 = vmatmul.mubr.f32.gmra.mxu0 %v196
    %v4090 = vpop.f32.mrf.mxu0
    %v4091 = vadd.f32 %v4020, %v4090
    %v4092 = vpop.f32.mrf.mxu0
    %v4093 = vadd.f32 %v4022, %v4092
    %4094 = vdwg.mxu0
    %4095 = vmatprep.subr.mxu0 %v3137
    %4096 = vmatpush1.msra.mxu0 %v3136
    %4097 = vmatprep.subr.mxu0 %v3129
    %4098 = vmatpush1.msra.mxu0 %v3128
    %4099 = vmatprep.subr.mxu0 %v3121
    %4100 = vmatpush1.msra.mxu0 %v3120
    %4101 = vmatprep.subr.mxu0 %v3113
    %4102 = vmatpush1.msra.mxu0 %v3112
    %4103 = vmatprep.subr.mxu0 %v3105
    %4104 = vmatpush1.msra.mxu0 %v3104
    %4105 = vmatprep.subr.mxu0 %v3097
    %4106 = vmatpush1.msra.mxu0 %v3096
    %4107 = vmatprep.subr.mxu0 %v3089
    %4108 = vmatpush1.msra.mxu0 %v3088
    %4109 = vmatprep.subr.mxu0 %v3081
    %4110 = vmatpush1.msra.mxu0 %v3080
    %4111 = vmatprep.subr.mxu0 %v3073
    %4112 = vmatpush1.msra.mxu0 %v3072
    %4113 = vmatprep.subr.mxu0 %v3065
    %4114 = vmatpush1.msra.mxu0 %v3064
    %4115 = vmatprep.subr.mxu0 %v3057
    %4116 = vmatpush1.msra.mxu0 %v3056
    %4117 = vmatprep.subr.mxu0 %v3049
    %4118 = vmatpush1.msra.mxu0 %v3048
    %4119 = vmatprep.subr.mxu0 %v3041
    %4120 = vmatpush1.msra.mxu0 %v3040
    %4121 = vmatprep.subr.mxu0 %v3033
    %4122 = vmatpush1.msra.mxu0 %v3032
    %4123 = vmatprep.subr.mxu0 %v3025
    %4124 = vmatpush1.msra.mxu0 %v3024
    %4125 = vmatprep.subr.mxu0 %v3017
    %4126 = vmatpush1.msra.mxu0 %v3016
    %4127 = vmatprep.subr.mxu0 %v3265
    %4128 = vmatpush2.msra.mxu0 %v3264
    %4129 = vmatprep.subr.mxu0 %v3257
    %4130 = vmatpush2.msra.mxu0 %v3256
    %4131 = vmatprep.subr.mxu0 %v3249
    %4132 = vmatpush2.msra.mxu0 %v3248
    %4133 = vmatprep.subr.mxu0 %v3241
    %4134 = vmatpush2.msra.mxu0 %v3240
    %4135 = vmatprep.subr.mxu0 %v3233
    %4136 = vmatpush2.msra.mxu0 %v3232
    %4137 = vmatprep.subr.mxu0 %v3225
    %4138 = vmatpush2.msra.mxu0 %v3224
    %4139 = vmatprep.subr.mxu0 %v3217
    %4140 = vmatpush2.msra.mxu0 %v3216
    %4141 = vmatprep.subr.mxu0 %v3209
    %4142 = vmatpush2.msra.mxu0 %v3208
    %4143 = vmatprep.subr.mxu0 %v3201
    %4144 = vmatpush2.msra.mxu0 %v3200
    %4145 = vmatprep.subr.mxu0 %v3193
    %4146 = vmatpush2.msra.mxu0 %v3192
    %4147 = vmatprep.subr.mxu0 %v3185
    %4148 = vmatpush2.msra.mxu0 %v3184
    %4149 = vmatprep.subr.mxu0 %v3177
    %4150 = vmatpush2.msra.mxu0 %v3176
    %4151 = vmatprep.subr.mxu0 %v3169
    %4152 = vmatpush2.msra.mxu0 %v3168
    %4153 = vmatprep.subr.mxu0 %v3161
    %4154 = vmatpush2.msra.mxu0 %v3160
    %4155 = vmatprep.subr.mxu0 %v3153
    %4156 = vmatpush2.msra.mxu0 %v3152
    %4157 = vmatprep.subr.mxu0 %v3145
    %4158 = vmatpush2.msra.mxu0 %v3144
    %4159 = vmatprep.mubr.f32.mxu0 %v199
    %4160 = vmatmul.mubr.f32.gmra.mxu0 %v198
    %v4161 = vpop.f32.mrf.mxu0
    %v4162 = vadd.f32 %v4091, %v4161
    %v4163 = vpop.f32.mrf.mxu0
    %v4164 = vadd.f32 %v4093, %v4163
    %4165 = vdwg.mxu0
    %4166 = vmatprep.subr.mxu0 %v323
    %4167 = vmatpush1.msra.mxu0 %v322
    %4168 = vmatprep.subr.mxu0 %v315
    %4169 = vmatpush1.msra.mxu0 %v314
    %4170 = vmatprep.subr.mxu0 %v307
    %4171 = vmatpush1.msra.mxu0 %v306
    %4172 = vmatprep.subr.mxu0 %v299
    %4173 = vmatpush1.msra.mxu0 %v298
    %4174 = vmatprep.subr.mxu0 %v291
    %4175 = vmatpush1.msra.mxu0 %v290
    %4176 = vmatprep.subr.mxu0 %v283
    %4177 = vmatpush1.msra.mxu0 %v282
    %4178 = vmatprep.subr.mxu0 %v275
    %4179 = vmatpush1.msra.mxu0 %v274
    %4180 = vmatprep.subr.mxu0 %v267
    %4181 = vmatpush1.msra.mxu0 %v266
    %4182 = vmatprep.subr.mxu0 %v259
    %4183 = vmatpush1.msra.mxu0 %v258
    %4184 = vmatprep.subr.mxu0 %v251
    %4185 = vmatpush1.msra.mxu0 %v250
    %4186 = vmatprep.subr.mxu0 %v243
    %4187 = vmatpush1.msra.mxu0 %v242
    %4188 = vmatprep.subr.mxu0 %v235
    %4189 = vmatpush1.msra.mxu0 %v234
    %4190 = vmatprep.subr.mxu0 %v227
    %4191 = vmatpush1.msra.mxu0 %v226
    %4192 = vmatprep.subr.mxu0 %v219
    %4193 = vmatpush1.msra.mxu0 %v218
    %4194 = vmatprep.subr.mxu0 %v211
    %4195 = vmatpush1.msra.mxu0 %v210
    %4196 = vmatprep.subr.mxu0 %v203
    %4197 = vmatpush1.msra.mxu0 %v202
    %4198 = vmatprep.subr.mxu0 %v451
    %4199 = vmatpush2.msra.mxu0 %v450
    %4200 = vmatprep.subr.mxu0 %v443
    %4201 = vmatpush2.msra.mxu0 %v442
    %4202 = vmatprep.subr.mxu0 %v435
    %4203 = vmatpush2.msra.mxu0 %v434
    %4204 = vmatprep.subr.mxu0 %v427
    %4205 = vmatpush2.msra.mxu0 %v426
    %4206 = vmatprep.subr.mxu0 %v419
    %4207 = vmatpush2.msra.mxu0 %v418
    %4208 = vmatprep.subr.mxu0 %v411
    %4209 = vmatpush2.msra.mxu0 %v410
    %4210 = vmatprep.subr.mxu0 %v403
    %4211 = vmatpush2.msra.mxu0 %v402
    %4212 = vmatprep.subr.mxu0 %v395
    %4213 = vmatpush2.msra.mxu0 %v394
    %4214 = vmatprep.subr.mxu0 %v387
    %4215 = vmatpush2.msra.mxu0 %v386
    %4216 = vmatprep.subr.mxu0 %v379
    %4217 = vmatpush2.msra.mxu0 %v378
    %4218 = vmatprep.subr.mxu0 %v371
    %4219 = vmatpush2.msra.mxu0 %v370
    %4220 = vmatprep.subr.mxu0 %v363
    %4221 = vmatpush2.msra.mxu0 %v362
    %4222 = vmatprep.subr.mxu0 %v355
    %4223 = vmatpush2.msra.mxu0 %v354
    %4224 = vmatprep.subr.mxu0 %v347
    %4225 = vmatpush2.msra.mxu0 %v346
    %4226 = vmatprep.subr.mxu0 %v339
    %4227 = vmatpush2.msra.mxu0 %v338
    %4228 = vmatprep.subr.mxu0 %v331
    %4229 = vmatpush2.msra.mxu0 %v330
    %4230 = vmatprep.mubr.f32.mxu0 %v177
    %4231 = vmatmul.mubr.f32.gmra.mxu0 %v176
    %v4232 = vpop.f32.mrf.mxu0
    %v4233 = vadd.f32 %v3285, %v4232
    %v4234 = vpop.f32.mrf.mxu0
    %v4235 = vadd.f32 %v3289, %v4234
    %4236 = vdwg.mxu0
    %4237 = vmatprep.subr.mxu0 %v579
    %4238 = vmatpush1.msra.mxu0 %v578
    %4239 = vmatprep.subr.mxu0 %v571
    %4240 = vmatpush1.msra.mxu0 %v570
    %4241 = vmatprep.subr.mxu0 %v563
    %4242 = vmatpush1.msra.mxu0 %v562
    %4243 = vmatprep.subr.mxu0 %v555
    %4244 = vmatpush1.msra.mxu0 %v554
    %4245 = vmatprep.subr.mxu0 %v547
    %4246 = vmatpush1.msra.mxu0 %v546
    %4247 = vmatprep.subr.mxu0 %v539
    %4248 = vmatpush1.msra.mxu0 %v538
    %4249 = vmatprep.subr.mxu0 %v531
    %4250 = vmatpush1.msra.mxu0 %v530
    %4251 = vmatprep.subr.mxu0 %v523
    %4252 = vmatpush1.msra.mxu0 %v522
    %4253 = vmatprep.subr.mxu0 %v515
    %4254 = vmatpush1.msra.mxu0 %v514
    %4255 = vmatprep.subr.mxu0 %v507
    %4256 = vmatpush1.msra.mxu0 %v506
    %4257 = vmatprep.subr.mxu0 %v499
    %4258 = vmatpush1.msra.mxu0 %v498
    %4259 = vmatprep.subr.mxu0 %v491
    %4260 = vmatpush1.msra.mxu0 %v490
    %4261 = vmatprep.subr.mxu0 %v483
    %4262 = vmatpush1.msra.mxu0 %v482
    %4263 = vmatprep.subr.mxu0 %v475
    %4264 = vmatpush1.msra.mxu0 %v474
    %4265 = vmatprep.subr.mxu0 %v467
    %4266 = vmatpush1.msra.mxu0 %v466
    %4267 = vmatprep.subr.mxu0 %v459
    %4268 = vmatpush1.msra.mxu0 %v458
    %4269 = vmatprep.subr.mxu0 %v707
    %4270 = vmatpush2.msra.mxu0 %v706
    %4271 = vmatprep.subr.mxu0 %v699
    %4272 = vmatpush2.msra.mxu0 %v698
    %4273 = vmatprep.subr.mxu0 %v691
    %4274 = vmatpush2.msra.mxu0 %v690
    %4275 = vmatprep.subr.mxu0 %v683
    %4276 = vmatpush2.msra.mxu0 %v682
    %4277 = vmatprep.subr.mxu0 %v675
    %4278 = vmatpush2.msra.mxu0 %v674
    %4279 = vmatprep.subr.mxu0 %v667
    %4280 = vmatpush2.msra.mxu0 %v666
    %4281 = vmatprep.subr.mxu0 %v659
    %4282 = vmatpush2.msra.mxu0 %v658
    %4283 = vmatprep.subr.mxu0 %v651
    %4284 = vmatpush2.msra.mxu0 %v650
    %4285 = vmatprep.subr.mxu0 %v643
    %4286 = vmatpush2.msra.mxu0 %v642
    %4287 = vmatprep.subr.mxu0 %v635
    %4288 = vmatpush2.msra.mxu0 %v634
    %4289 = vmatprep.subr.mxu0 %v627
    %4290 = vmatpush2.msra.mxu0 %v626
    %4291 = vmatprep.subr.mxu0 %v619
    %4292 = vmatpush2.msra.mxu0 %v618
    %4293 = vmatprep.subr.mxu0 %v611
    %4294 = vmatpush2.msra.mxu0 %v610
    %4295 = vmatprep.subr.mxu0 %v603
    %4296 = vmatpush2.msra.mxu0 %v602
    %4297 = vmatprep.subr.mxu0 %v595
    %4298 = vmatpush2.msra.mxu0 %v594
    %4299 = vmatprep.subr.mxu0 %v587
    %4300 = vmatpush2.msra.mxu0 %v586
    %4301 = vmatprep.mubr.f32.mxu0 %v179
    %4302 = vmatmul.mubr.f32.gmra.mxu0 %v178
    %v4303 = vpop.f32.mrf.mxu0
    %v4304 = vadd.f32 %v4233, %v4303
    %v4305 = vpop.f32.mrf.mxu0
    %v4306 = vadd.f32 %v4235, %v4305
    %4307 = vdwg.mxu0
    %4308 = vmatprep.subr.mxu0 %v835
    %4309 = vmatpush1.msra.mxu0 %v834
    %4310 = vmatprep.subr.mxu0 %v827
    %4311 = vmatpush1.msra.mxu0 %v826
    %4312 = vmatprep.subr.mxu0 %v819
    %4313 = vmatpush1.msra.mxu0 %v818
    %4314 = vmatprep.subr.mxu0 %v811
    %4315 = vmatpush1.msra.mxu0 %v810
    %4316 = vmatprep.subr.mxu0 %v803
    %4317 = vmatpush1.msra.mxu0 %v802
    %4318 = vmatprep.subr.mxu0 %v795
    %4319 = vmatpush1.msra.mxu0 %v794
    %4320 = vmatprep.subr.mxu0 %v787
    %4321 = vmatpush1.msra.mxu0 %v786
    %4322 = vmatprep.subr.mxu0 %v779
    %4323 = vmatpush1.msra.mxu0 %v778
    %4324 = vmatprep.subr.mxu0 %v771
    %4325 = vmatpush1.msra.mxu0 %v770
    %4326 = vmatprep.subr.mxu0 %v763
    %4327 = vmatpush1.msra.mxu0 %v762
    %4328 = vmatprep.subr.mxu0 %v755
    %4329 = vmatpush1.msra.mxu0 %v754
    %4330 = vmatprep.subr.mxu0 %v747
    %4331 = vmatpush1.msra.mxu0 %v746
    %4332 = vmatprep.subr.mxu0 %v739
    %4333 = vmatpush1.msra.mxu0 %v738
    %4334 = vmatprep.subr.mxu0 %v731
    %4335 = vmatpush1.msra.mxu0 %v730
    %4336 = vmatprep.subr.mxu0 %v723
    %4337 = vmatpush1.msra.mxu0 %v722
    %4338 = vmatprep.subr.mxu0 %v715
    %4339 = vmatpush1.msra.mxu0 %v714
    %4340 = vmatprep.subr.mxu0 %v963
    %4341 = vmatpush2.msra.mxu0 %v962
    %4342 = vmatprep.subr.mxu0 %v955
    %4343 = vmatpush2.msra.mxu0 %v954
    %4344 = vmatprep.subr.mxu0 %v947
    %4345 = vmatpush2.msra.mxu0 %v946
    %4346 = vmatprep.subr.mxu0 %v939
    %4347 = vmatpush2.msra.mxu0 %v938
    %4348 = vmatprep.subr.mxu0 %v931
    %4349 = vmatpush2.msra.mxu0 %v930
    %4350 = vmatprep.subr.mxu0 %v923
    %4351 = vmatpush2.msra.mxu0 %v922
    %4352 = vmatprep.subr.mxu0 %v915
    %4353 = vmatpush2.msra.mxu0 %v914
    %4354 = vmatprep.subr.mxu0 %v907
    %4355 = vmatpush2.msra.mxu0 %v906
    %4356 = vmatprep.subr.mxu0 %v899
    %4357 = vmatpush2.msra.mxu0 %v898
    %4358 = vmatprep.subr.mxu0 %v891
    %4359 = vmatpush2.msra.mxu0 %v890
    %4360 = vmatprep.subr.mxu0 %v883
    %4361 = vmatpush2.msra.mxu0 %v882
    %4362 = vmatprep.subr.mxu0 %v875
    %4363 = vmatpush2.msra.mxu0 %v874
    %4364 = vmatprep.subr.mxu0 %v867
    %4365 = vmatpush2.msra.mxu0 %v866
    %4366 = vmatprep.subr.mxu0 %v859
    %4367 = vmatpush2.msra.mxu0 %v858
    %4368 = vmatprep.subr.mxu0 %v851
    %4369 = vmatpush2.msra.mxu0 %v850
    %4370 = vmatprep.subr.mxu0 %v843
    %4371 = vmatpush2.msra.mxu0 %v842
    %4372 = vmatprep.mubr.f32.mxu0 %v181
    %4373 = vmatmul.mubr.f32.gmra.mxu0 %v180
    %v4374 = vpop.f32.mrf.mxu0
    %v4375 = vadd.f32 %v4304, %v4374
    %v4376 = vpop.f32.mrf.mxu0
    %v4377 = vadd.f32 %v4306, %v4376
    %4378 = vdwg.mxu0
    %4379 = vmatprep.subr.mxu0 %v1091
    %4380 = vmatpush1.msra.mxu0 %v1090
    %4381 = vmatprep.subr.mxu0 %v1083
    %4382 = vmatpush1.msra.mxu0 %v1082
    %4383 = vmatprep.subr.mxu0 %v1075
    %4384 = vmatpush1.msra.mxu0 %v1074
    %4385 = vmatprep.subr.mxu0 %v1067
    %4386 = vmatpush1.msra.mxu0 %v1066
    %4387 = vmatprep.subr.mxu0 %v1059
    %4388 = vmatpush1.msra.mxu0 %v1058
    %4389 = vmatprep.subr.mxu0 %v1051
    %4390 = vmatpush1.msra.mxu0 %v1050
    %4391 = vmatprep.subr.mxu0 %v1043
    %4392 = vmatpush1.msra.mxu0 %v1042
    %4393 = vmatprep.subr.mxu0 %v1035
    %4394 = vmatpush1.msra.mxu0 %v1034
    %4395 = vmatprep.subr.mxu0 %v1027
    %4396 = vmatpush1.msra.mxu0 %v1026
    %4397 = vmatprep.subr.mxu0 %v1019
    %4398 = vmatpush1.msra.mxu0 %v1018
    %4399 = vmatprep.subr.mxu0 %v1011
    %4400 = vmatpush1.msra.mxu0 %v1010
    %4401 = vmatprep.subr.mxu0 %v1003
    %4402 = vmatpush1.msra.mxu0 %v1002
    %4403 = vmatprep.subr.mxu0 %v995
    %4404 = vmatpush1.msra.mxu0 %v994
    %4405 = vmatprep.subr.mxu0 %v987
    %4406 = vmatpush1.msra.mxu0 %v986
    %4407 = vmatprep.subr.mxu0 %v979
    %4408 = vmatpush1.msra.mxu0 %v978
    %4409 = vmatprep.subr.mxu0 %v971
    %4410 = vmatpush1.msra.mxu0 %v970
    %4411 = vmatprep.subr.mxu0 %v1219
    %4412 = vmatpush2.msra.mxu0 %v1218
    %4413 = vmatprep.subr.mxu0 %v1211
    %4414 = vmatpush2.msra.mxu0 %v1210
    %4415 = vmatprep.subr.mxu0 %v1203
    %4416 = vmatpush2.msra.mxu0 %v1202
    %4417 = vmatprep.subr.mxu0 %v1195
    %4418 = vmatpush2.msra.mxu0 %v1194
    %4419 = vmatprep.subr.mxu0 %v1187
    %4420 = vmatpush2.msra.mxu0 %v1186
    %4421 = vmatprep.subr.mxu0 %v1179
    %4422 = vmatpush2.msra.mxu0 %v1178
    %4423 = vmatprep.subr.mxu0 %v1171
    %4424 = vmatpush2.msra.mxu0 %v1170
    %4425 = vmatprep.subr.mxu0 %v1163
    %4426 = vmatpush2.msra.mxu0 %v1162
    %4427 = vmatprep.subr.mxu0 %v1155
    %4428 = vmatpush2.msra.mxu0 %v1154
    %4429 = vmatprep.subr.mxu0 %v1147
    %4430 = vmatpush2.msra.mxu0 %v1146
    %4431 = vmatprep.subr.mxu0 %v1139
    %4432 = vmatpush2.msra.mxu0 %v1138
    %4433 = vmatprep.subr.mxu0 %v1131
    %4434 = vmatpush2.msra.mxu0 %v1130
    %4435 = vmatprep.subr.mxu0 %v1123
    %4436 = vmatpush2.msra.mxu0 %v1122
    %4437 = vmatprep.subr.mxu0 %v1115
    %4438 = vmatpush2.msra.mxu0 %v1114
    %4439 = vmatprep.subr.mxu0 %v1107
    %4440 = vmatpush2.msra.mxu0 %v1106
    %4441 = vmatprep.subr.mxu0 %v1099
    %4442 = vmatpush2.msra.mxu0 %v1098
    %4443 = vmatprep.mubr.f32.mxu0 %v183
    %4444 = vmatmul.mubr.f32.gmra.mxu0 %v182
    %v4445 = vpop.f32.mrf.mxu0
    %v4446 = vadd.f32 %v4375, %v4445
    %v4447 = vpop.f32.mrf.mxu0
    %v4448 = vadd.f32 %v4377, %v4447
    %4449 = vdwg.mxu0
    %4450 = vmatprep.subr.mxu0 %v1347
    %4451 = vmatpush1.msra.mxu0 %v1346
    %4452 = vmatprep.subr.mxu0 %v1339
    %4453 = vmatpush1.msra.mxu0 %v1338
    %4454 = vmatprep.subr.mxu0 %v1331
    %4455 = vmatpush1.msra.mxu0 %v1330
    %4456 = vmatprep.subr.mxu0 %v1323
    %4457 = vmatpush1.msra.mxu0 %v1322
    %4458 = vmatprep.subr.mxu0 %v1315
    %4459 = vmatpush1.msra.mxu0 %v1314
    %4460 = vmatprep.subr.mxu0 %v1307
    %4461 = vmatpush1.msra.mxu0 %v1306
    %4462 = vmatprep.subr.mxu0 %v1299
    %4463 = vmatpush1.msra.mxu0 %v1298
    %4464 = vmatprep.subr.mxu0 %v1291
    %4465 = vmatpush1.msra.mxu0 %v1290
    %4466 = vmatprep.subr.mxu0 %v1283
    %4467 = vmatpush1.msra.mxu0 %v1282
    %4468 = vmatprep.subr.mxu0 %v1275
    %4469 = vmatpush1.msra.mxu0 %v1274
    %4470 = vmatprep.subr.mxu0 %v1267
    %4471 = vmatpush1.msra.mxu0 %v1266
    %4472 = vmatprep.subr.mxu0 %v1259
    %4473 = vmatpush1.msra.mxu0 %v1258
    %4474 = vmatprep.subr.mxu0 %v1251
    %4475 = vmatpush1.msra.mxu0 %v1250
    %4476 = vmatprep.subr.mxu0 %v1243
    %4477 = vmatpush1.msra.mxu0 %v1242
    %4478 = vmatprep.subr.mxu0 %v1235
    %4479 = vmatpush1.msra.mxu0 %v1234
    %4480 = vmatprep.subr.mxu0 %v1227
    %4481 = vmatpush1.msra.mxu0 %v1226
    %4482 = vmatprep.subr.mxu0 %v1475
    %4483 = vmatpush2.msra.mxu0 %v1474
    %4484 = vmatprep.subr.mxu0 %v1467
    %4485 = vmatpush2.msra.mxu0 %v1466
    %4486 = vmatprep.subr.mxu0 %v1459
    %4487 = vmatpush2.msra.mxu0 %v1458
    %4488 = vmatprep.subr.mxu0 %v1451
    %4489 = vmatpush2.msra.mxu0 %v1450
    %4490 = vmatprep.subr.mxu0 %v1443
    %4491 = vmatpush2.msra.mxu0 %v1442
    %4492 = vmatprep.subr.mxu0 %v1435
    %4493 = vmatpush2.msra.mxu0 %v1434
    %4494 = vmatprep.subr.mxu0 %v1427
    %4495 = vmatpush2.msra.mxu0 %v1426
    %4496 = vmatprep.subr.mxu0 %v1419
    %4497 = vmatpush2.msra.mxu0 %v1418
    %4498 = vmatprep.subr.mxu0 %v1411
    %4499 = vmatpush2.msra.mxu0 %v1410
    %4500 = vmatprep.subr.mxu0 %v1403
    %4501 = vmatpush2.msra.mxu0 %v1402
    %4502 = vmatprep.subr.mxu0 %v1395
    %4503 = vmatpush2.msra.mxu0 %v1394
    %4504 = vmatprep.subr.mxu0 %v1387
    %4505 = vmatpush2.msra.mxu0 %v1386
    %4506 = vmatprep.subr.mxu0 %v1379
    %4507 = vmatpush2.msra.mxu0 %v1378
    %4508 = vmatprep.subr.mxu0 %v1371
    %4509 = vmatpush2.msra.mxu0 %v1370
    %4510 = vmatprep.subr.mxu0 %v1363
    %4511 = vmatpush2.msra.mxu0 %v1362
    %4512 = vmatprep.subr.mxu0 %v1355
    %4513 = vmatpush2.msra.mxu0 %v1354
    %4514 = vmatprep.mubr.f32.mxu0 %v185
    %4515 = vmatmul.mubr.f32.gmra.mxu0 %v184
    %v4516 = vpop.f32.mrf.mxu0
    %v4517 = vadd.f32 %v4446, %v4516
    %v4518 = vpop.f32.mrf.mxu0
    %v4519 = vadd.f32 %v4448, %v4518
    %4520 = vdwg.mxu0
    %4521 = vmatprep.subr.mxu0 %v1603
    %4522 = vmatpush1.msra.mxu0 %v1602
    %4523 = vmatprep.subr.mxu0 %v1595
    %4524 = vmatpush1.msra.mxu0 %v1594
    %4525 = vmatprep.subr.mxu0 %v1587
    %4526 = vmatpush1.msra.mxu0 %v1586
    %4527 = vmatprep.subr.mxu0 %v1579
    %4528 = vmatpush1.msra.mxu0 %v1578
    %4529 = vmatprep.subr.mxu0 %v1571
    %4530 = vmatpush1.msra.mxu0 %v1570
    %4531 = vmatprep.subr.mxu0 %v1563
    %4532 = vmatpush1.msra.mxu0 %v1562
    %4533 = vmatprep.subr.mxu0 %v1555
    %4534 = vmatpush1.msra.mxu0 %v1554
    %4535 = vmatprep.subr.mxu0 %v1547
    %4536 = vmatpush1.msra.mxu0 %v1546
    %4537 = vmatprep.subr.mxu0 %v1539
    %4538 = vmatpush1.msra.mxu0 %v1538
    %4539 = vmatprep.subr.mxu0 %v1531
    %4540 = vmatpush1.msra.mxu0 %v1530
    %4541 = vmatprep.subr.mxu0 %v1523
    %4542 = vmatpush1.msra.mxu0 %v1522
    %4543 = vmatprep.subr.mxu0 %v1515
    %4544 = vmatpush1.msra.mxu0 %v1514
    %4545 = vmatprep.subr.mxu0 %v1507
    %4546 = vmatpush1.msra.mxu0 %v1506
    %4547 = vmatprep.subr.mxu0 %v1499
    %4548 = vmatpush1.msra.mxu0 %v1498
    %4549 = vmatprep.subr.mxu0 %v1491
    %4550 = vmatpush1.msra.mxu0 %v1490
    %4551 = vmatprep.subr.mxu0 %v1483
    %4552 = vmatpush1.msra.mxu0 %v1482
    %4553 = vmatprep.subr.mxu0 %v1731
    %4554 = vmatpush2.msra.mxu0 %v1730
    %4555 = vmatprep.subr.mxu0 %v1723
    %4556 = vmatpush2.msra.mxu0 %v1722
    %4557 = vmatprep.subr.mxu0 %v1715
    %4558 = vmatpush2.msra.mxu0 %v1714
    %4559 = vmatprep.subr.mxu0 %v1707
    %4560 = vmatpush2.msra.mxu0 %v1706
    %4561 = vmatprep.subr.mxu0 %v1699
    %4562 = vmatpush2.msra.mxu0 %v1698
    %4563 = vmatprep.subr.mxu0 %v1691
    %4564 = vmatpush2.msra.mxu0 %v1690
    %4565 = vmatprep.subr.mxu0 %v1683
    %4566 = vmatpush2.msra.mxu0 %v1682
    %4567 = vmatprep.subr.mxu0 %v1675
    %4568 = vmatpush2.msra.mxu0 %v1674
    %4569 = vmatprep.subr.mxu0 %v1667
    %4570 = vmatpush2.msra.mxu0 %v1666
    %4571 = vmatprep.subr.mxu0 %v1659
    %4572 = vmatpush2.msra.mxu0 %v1658
    %4573 = vmatprep.subr.mxu0 %v1651
    %4574 = vmatpush2.msra.mxu0 %v1650
    %4575 = vmatprep.subr.mxu0 %v1643
    %4576 = vmatpush2.msra.mxu0 %v1642
    %4577 = vmatprep.subr.mxu0 %v1635
    %4578 = vmatpush2.msra.mxu0 %v1634
    %4579 = vmatprep.subr.mxu0 %v1627
    %4580 = vmatpush2.msra.mxu0 %v1626
    %4581 = vmatprep.subr.mxu0 %v1619
    %4582 = vmatpush2.msra.mxu0 %v1618
    %4583 = vmatprep.subr.mxu0 %v1611
    %4584 = vmatpush2.msra.mxu0 %v1610
    %4585 = vmatprep.mubr.f32.mxu0 %v187
    %4586 = vmatmul.mubr.f32.gmra.mxu0 %v186
    %v4587 = vpop.f32.mrf.mxu0
    %v4588 = vadd.f32 %v4517, %v4587
    %v4589 = vpop.f32.mrf.mxu0
    %v4590 = vadd.f32 %v4519, %v4589
    %4591 = vdwg.mxu0
    %4592 = vmatprep.subr.mxu0 %v1859
    %4593 = vmatpush1.msra.mxu0 %v1858
    %4594 = vmatprep.subr.mxu0 %v1851
    %4595 = vmatpush1.msra.mxu0 %v1850
    %4596 = vmatprep.subr.mxu0 %v1843
    %4597 = vmatpush1.msra.mxu0 %v1842
    %4598 = vmatprep.subr.mxu0 %v1835
    %4599 = vmatpush1.msra.mxu0 %v1834
    %4600 = vmatprep.subr.mxu0 %v1827
    %4601 = vmatpush1.msra.mxu0 %v1826
    %4602 = vmatprep.subr.mxu0 %v1819
    %4603 = vmatpush1.msra.mxu0 %v1818
    %4604 = vmatprep.subr.mxu0 %v1811
    %4605 = vmatpush1.msra.mxu0 %v1810
    %4606 = vmatprep.subr.mxu0 %v1803
    %4607 = vmatpush1.msra.mxu0 %v1802
    %4608 = vmatprep.subr.mxu0 %v1795
    %4609 = vmatpush1.msra.mxu0 %v1794
    %4610 = vmatprep.subr.mxu0 %v1787
    %4611 = vmatpush1.msra.mxu0 %v1786
    %4612 = vmatprep.subr.mxu0 %v1779
    %4613 = vmatpush1.msra.mxu0 %v1778
    %4614 = vmatprep.subr.mxu0 %v1771
    %4615 = vmatpush1.msra.mxu0 %v1770
    %4616 = vmatprep.subr.mxu0 %v1763
    %4617 = vmatpush1.msra.mxu0 %v1762
    %4618 = vmatprep.subr.mxu0 %v1755
    %4619 = vmatpush1.msra.mxu0 %v1754
    %4620 = vmatprep.subr.mxu0 %v1747
    %4621 = vmatpush1.msra.mxu0 %v1746
    %4622 = vmatprep.subr.mxu0 %v1739
    %4623 = vmatpush1.msra.mxu0 %v1738
    %4624 = vmatprep.subr.mxu0 %v1987
    %4625 = vmatpush2.msra.mxu0 %v1986
    %4626 = vmatprep.subr.mxu0 %v1979
    %4627 = vmatpush2.msra.mxu0 %v1978
    %4628 = vmatprep.subr.mxu0 %v1971
    %4629 = vmatpush2.msra.mxu0 %v1970
    %4630 = vmatprep.subr.mxu0 %v1963
    %4631 = vmatpush2.msra.mxu0 %v1962
    %4632 = vmatprep.subr.mxu0 %v1955
    %4633 = vmatpush2.msra.mxu0 %v1954
    %4634 = vmatprep.subr.mxu0 %v1947
    %4635 = vmatpush2.msra.mxu0 %v1946
    %4636 = vmatprep.subr.mxu0 %v1939
    %4637 = vmatpush2.msra.mxu0 %v1938
    %4638 = vmatprep.subr.mxu0 %v1931
    %4639 = vmatpush2.msra.mxu0 %v1930
    %4640 = vmatprep.subr.mxu0 %v1923
    %4641 = vmatpush2.msra.mxu0 %v1922
    %4642 = vmatprep.subr.mxu0 %v1915
    %4643 = vmatpush2.msra.mxu0 %v1914
    %4644 = vmatprep.subr.mxu0 %v1907
    %4645 = vmatpush2.msra.mxu0 %v1906
    %4646 = vmatprep.subr.mxu0 %v1899
    %4647 = vmatpush2.msra.mxu0 %v1898
    %4648 = vmatprep.subr.mxu0 %v1891
    %4649 = vmatpush2.msra.mxu0 %v1890
    %4650 = vmatprep.subr.mxu0 %v1883
    %4651 = vmatpush2.msra.mxu0 %v1882
    %4652 = vmatprep.subr.mxu0 %v1875
    %4653 = vmatpush2.msra.mxu0 %v1874
    %4654 = vmatprep.subr.mxu0 %v1867
    %4655 = vmatpush2.msra.mxu0 %v1866
    %4656 = vmatprep.mubr.f32.mxu0 %v189
    %4657 = vmatmul.mubr.f32.gmra.mxu0 %v188
    %v4658 = vpop.f32.mrf.mxu0
    %v4659 = vadd.f32 %v4588, %v4658
    %v4660 = vpop.f32.mrf.mxu0
    %v4661 = vadd.f32 %v4590, %v4660
    %4662 = vdwg.mxu0
    %4663 = vmatprep.subr.mxu0 %v2115
    %4664 = vmatpush1.msra.mxu0 %v2114
    %4665 = vmatprep.subr.mxu0 %v2107
    %4666 = vmatpush1.msra.mxu0 %v2106
    %4667 = vmatprep.subr.mxu0 %v2099
    %4668 = vmatpush1.msra.mxu0 %v2098
    %4669 = vmatprep.subr.mxu0 %v2091
    %4670 = vmatpush1.msra.mxu0 %v2090
    %4671 = vmatprep.subr.mxu0 %v2083
    %4672 = vmatpush1.msra.mxu0 %v2082
    %4673 = vmatprep.subr.mxu0 %v2075
    %4674 = vmatpush1.msra.mxu0 %v2074
    %4675 = vmatprep.subr.mxu0 %v2067
    %4676 = vmatpush1.msra.mxu0 %v2066
    %4677 = vmatprep.subr.mxu0 %v2059
    %4678 = vmatpush1.msra.mxu0 %v2058
    %4679 = vmatprep.subr.mxu0 %v2051
    %4680 = vmatpush1.msra.mxu0 %v2050
    %4681 = vmatprep.subr.mxu0 %v2043
    %4682 = vmatpush1.msra.mxu0 %v2042
    %4683 = vmatprep.subr.mxu0 %v2035
    %4684 = vmatpush1.msra.mxu0 %v2034
    %4685 = vmatprep.subr.mxu0 %v2027
    %4686 = vmatpush1.msra.mxu0 %v2026
    %4687 = vmatprep.subr.mxu0 %v2019
    %4688 = vmatpush1.msra.mxu0 %v2018
    %4689 = vmatprep.subr.mxu0 %v2011
    %4690 = vmatpush1.msra.mxu0 %v2010
    %4691 = vmatprep.subr.mxu0 %v2003
    %4692 = vmatpush1.msra.mxu0 %v2002
    %4693 = vmatprep.subr.mxu0 %v1995
    %4694 = vmatpush1.msra.mxu0 %v1994
    %4695 = vmatprep.subr.mxu0 %v2243
    %4696 = vmatpush2.msra.mxu0 %v2242
    %4697 = vmatprep.subr.mxu0 %v2235
    %4698 = vmatpush2.msra.mxu0 %v2234
    %4699 = vmatprep.subr.mxu0 %v2227
    %4700 = vmatpush2.msra.mxu0 %v2226
    %4701 = vmatprep.subr.mxu0 %v2219
    %4702 = vmatpush2.msra.mxu0 %v2218
    %4703 = vmatprep.subr.mxu0 %v2211
    %4704 = vmatpush2.msra.mxu0 %v2210
    %4705 = vmatprep.subr.mxu0 %v2203
    %4706 = vmatpush2.msra.mxu0 %v2202
    %4707 = vmatprep.subr.mxu0 %v2195
    %4708 = vmatpush2.msra.mxu0 %v2194
    %4709 = vmatprep.subr.mxu0 %v2187
    %4710 = vmatpush2.msra.mxu0 %v2186
    %4711 = vmatprep.subr.mxu0 %v2179
    %4712 = vmatpush2.msra.mxu0 %v2178
    %4713 = vmatprep.subr.mxu0 %v2171
    %4714 = vmatpush2.msra.mxu0 %v2170
    %4715 = vmatprep.subr.mxu0 %v2163
    %4716 = vmatpush2.msra.mxu0 %v2162
    %4717 = vmatprep.subr.mxu0 %v2155
    %4718 = vmatpush2.msra.mxu0 %v2154
    %4719 = vmatprep.subr.mxu0 %v2147
    %4720 = vmatpush2.msra.mxu0 %v2146
    %4721 = vmatprep.subr.mxu0 %v2139
    %4722 = vmatpush2.msra.mxu0 %v2138
    %4723 = vmatprep.subr.mxu0 %v2131
    %4724 = vmatpush2.msra.mxu0 %v2130
    %4725 = vmatprep.subr.mxu0 %v2123
    %4726 = vmatpush2.msra.mxu0 %v2122
    %4727 = vmatprep.mubr.f32.mxu0 %v191
    %4728 = vmatmul.mubr.f32.gmra.mxu0 %v190
    %v4729 = vpop.f32.mrf.mxu0
    %v4730 = vadd.f32 %v4659, %v4729
    %v4731 = vpop.f32.mrf.mxu0
    %v4732 = vadd.f32 %v4661, %v4731
    %4733 = vdwg.mxu0
    %4734 = vmatprep.subr.mxu0 %v2371
    %4735 = vmatpush1.msra.mxu0 %v2370
    %4736 = vmatprep.subr.mxu0 %v2363
    %4737 = vmatpush1.msra.mxu0 %v2362
    %4738 = vmatprep.subr.mxu0 %v2355
    %4739 = vmatpush1.msra.mxu0 %v2354
    %4740 = vmatprep.subr.mxu0 %v2347
    %4741 = vmatpush1.msra.mxu0 %v2346
    %4742 = vmatprep.subr.mxu0 %v2339
    %4743 = vmatpush1.msra.mxu0 %v2338
    %4744 = vmatprep.subr.mxu0 %v2331
    %4745 = vmatpush1.msra.mxu0 %v2330
    %4746 = vmatprep.subr.mxu0 %v2323
    %4747 = vmatpush1.msra.mxu0 %v2322
    %4748 = vmatprep.subr.mxu0 %v2315
    %4749 = vmatpush1.msra.mxu0 %v2314
    %4750 = vmatprep.subr.mxu0 %v2307
    %4751 = vmatpush1.msra.mxu0 %v2306
    %4752 = vmatprep.subr.mxu0 %v2299
    %4753 = vmatpush1.msra.mxu0 %v2298
    %4754 = vmatprep.subr.mxu0 %v2291
    %4755 = vmatpush1.msra.mxu0 %v2290
    %4756 = vmatprep.subr.mxu0 %v2283
    %4757 = vmatpush1.msra.mxu0 %v2282
    %4758 = vmatprep.subr.mxu0 %v2275
    %4759 = vmatpush1.msra.mxu0 %v2274
    %4760 = vmatprep.subr.mxu0 %v2267
    %4761 = vmatpush1.msra.mxu0 %v2266
    %4762 = vmatprep.subr.mxu0 %v2259
    %4763 = vmatpush1.msra.mxu0 %v2258
    %4764 = vmatprep.subr.mxu0 %v2251
    %4765 = vmatpush1.msra.mxu0 %v2250
    %4766 = vmatprep.subr.mxu0 %v2499
    %4767 = vmatpush2.msra.mxu0 %v2498
    %4768 = vmatprep.subr.mxu0 %v2491
    %4769 = vmatpush2.msra.mxu0 %v2490
    %4770 = vmatprep.subr.mxu0 %v2483
    %4771 = vmatpush2.msra.mxu0 %v2482
    %4772 = vmatprep.subr.mxu0 %v2475
    %4773 = vmatpush2.msra.mxu0 %v2474
    %4774 = vmatprep.subr.mxu0 %v2467
    %4775 = vmatpush2.msra.mxu0 %v2466
    %4776 = vmatprep.subr.mxu0 %v2459
    %4777 = vmatpush2.msra.mxu0 %v2458
    %4778 = vmatprep.subr.mxu0 %v2451
    %4779 = vmatpush2.msra.mxu0 %v2450
    %4780 = vmatprep.subr.mxu0 %v2443
    %4781 = vmatpush2.msra.mxu0 %v2442
    %4782 = vmatprep.subr.mxu0 %v2435
    %4783 = vmatpush2.msra.mxu0 %v2434
    %4784 = vmatprep.subr.mxu0 %v2427
    %4785 = vmatpush2.msra.mxu0 %v2426
    %4786 = vmatprep.subr.mxu0 %v2419
    %4787 = vmatpush2.msra.mxu0 %v2418
    %4788 = vmatprep.subr.mxu0 %v2411
    %4789 = vmatpush2.msra.mxu0 %v2410
    %4790 = vmatprep.subr.mxu0 %v2403
    %4791 = vmatpush2.msra.mxu0 %v2402
    %4792 = vmatprep.subr.mxu0 %v2395
    %4793 = vmatpush2.msra.mxu0 %v2394
    %4794 = vmatprep.subr.mxu0 %v2387
    %4795 = vmatpush2.msra.mxu0 %v2386
    %4796 = vmatprep.subr.mxu0 %v2379
    %4797 = vmatpush2.msra.mxu0 %v2378
    %4798 = vmatprep.mubr.f32.mxu0 %v193
    %4799 = vmatmul.mubr.f32.gmra.mxu0 %v192
    %v4800 = vpop.f32.mrf.mxu0
    %v4801 = vadd.f32 %v4730, %v4800
    %v4802 = vpop.f32.mrf.mxu0
    %v4803 = vadd.f32 %v4732, %v4802
    %4804 = vdwg.mxu0
    %4805 = vmatprep.subr.mxu0 %v2627
    %4806 = vmatpush1.msra.mxu0 %v2626
    %4807 = vmatprep.subr.mxu0 %v2619
    %4808 = vmatpush1.msra.mxu0 %v2618
    %4809 = vmatprep.subr.mxu0 %v2611
    %4810 = vmatpush1.msra.mxu0 %v2610
    %4811 = vmatprep.subr.mxu0 %v2603
    %4812 = vmatpush1.msra.mxu0 %v2602
    %4813 = vmatprep.subr.mxu0 %v2595
    %4814 = vmatpush1.msra.mxu0 %v2594
    %4815 = vmatprep.subr.mxu0 %v2587
    %4816 = vmatpush1.msra.mxu0 %v2586
    %4817 = vmatprep.subr.mxu0 %v2579
    %4818 = vmatpush1.msra.mxu0 %v2578
    %4819 = vmatprep.subr.mxu0 %v2571
    %4820 = vmatpush1.msra.mxu0 %v2570
    %4821 = vmatprep.subr.mxu0 %v2563
    %4822 = vmatpush1.msra.mxu0 %v2562
    %4823 = vmatprep.subr.mxu0 %v2555
    %4824 = vmatpush1.msra.mxu0 %v2554
    %4825 = vmatprep.subr.mxu0 %v2547
    %4826 = vmatpush1.msra.mxu0 %v2546
    %4827 = vmatprep.subr.mxu0 %v2539
    %4828 = vmatpush1.msra.mxu0 %v2538
    %4829 = vmatprep.subr.mxu0 %v2531
    %4830 = vmatpush1.msra.mxu0 %v2530
    %4831 = vmatprep.subr.mxu0 %v2523
    %4832 = vmatpush1.msra.mxu0 %v2522
    %4833 = vmatprep.subr.mxu0 %v2515
    %4834 = vmatpush1.msra.mxu0 %v2514
    %4835 = vmatprep.subr.mxu0 %v2507
    %4836 = vmatpush1.msra.mxu0 %v2506
    %4837 = vmatprep.subr.mxu0 %v2755
    %4838 = vmatpush2.msra.mxu0 %v2754
    %4839 = vmatprep.subr.mxu0 %v2747
    %4840 = vmatpush2.msra.mxu0 %v2746
    %4841 = vmatprep.subr.mxu0 %v2739
    %4842 = vmatpush2.msra.mxu0 %v2738
    %4843 = vmatprep.subr.mxu0 %v2731
    %4844 = vmatpush2.msra.mxu0 %v2730
    %4845 = vmatprep.subr.mxu0 %v2723
    %4846 = vmatpush2.msra.mxu0 %v2722
    %4847 = vmatprep.subr.mxu0 %v2715
    %4848 = vmatpush2.msra.mxu0 %v2714
    %4849 = vmatprep.subr.mxu0 %v2707
    %4850 = vmatpush2.msra.mxu0 %v2706
    %4851 = vmatprep.subr.mxu0 %v2699
    %4852 = vmatpush2.msra.mxu0 %v2698
    %4853 = vmatprep.subr.mxu0 %v2691
    %4854 = vmatpush2.msra.mxu0 %v2690
    %4855 = vmatprep.subr.mxu0 %v2683
    %4856 = vmatpush2.msra.mxu0 %v2682
    %4857 = vmatprep.subr.mxu0 %v2675
    %4858 = vmatpush2.msra.mxu0 %v2674
    %4859 = vmatprep.subr.mxu0 %v2667
    %4860 = vmatpush2.msra.mxu0 %v2666
    %4861 = vmatprep.subr.mxu0 %v2659
    %4862 = vmatpush2.msra.mxu0 %v2658
    %4863 = vmatprep.subr.mxu0 %v2651
    %4864 = vmatpush2.msra.mxu0 %v2650
    %4865 = vmatprep.subr.mxu0 %v2643
    %4866 = vmatpush2.msra.mxu0 %v2642
    %4867 = vmatprep.subr.mxu0 %v2635
    %4868 = vmatpush2.msra.mxu0 %v2634
    %4869 = vmatprep.mubr.f32.mxu0 %v195
    %4870 = vmatmul.mubr.f32.gmra.mxu0 %v194
    %v4871 = vpop.f32.mrf.mxu0
    %v4872 = vadd.f32 %v4801, %v4871
    %v4873 = vpop.f32.mrf.mxu0
    %v4874 = vadd.f32 %v4803, %v4873
    %4875 = vdwg.mxu0
    %4876 = vmatprep.subr.mxu0 %v2883
    %4877 = vmatpush1.msra.mxu0 %v2882
    %4878 = vmatprep.subr.mxu0 %v2875
    %4879 = vmatpush1.msra.mxu0 %v2874
    %4880 = vmatprep.subr.mxu0 %v2867
    %4881 = vmatpush1.msra.mxu0 %v2866
    %4882 = vmatprep.subr.mxu0 %v2859
    %4883 = vmatpush1.msra.mxu0 %v2858
    %4884 = vmatprep.subr.mxu0 %v2851
    %4885 = vmatpush1.msra.mxu0 %v2850
    %4886 = vmatprep.subr.mxu0 %v2843
    %4887 = vmatpush1.msra.mxu0 %v2842
    %4888 = vmatprep.subr.mxu0 %v2835
    %4889 = vmatpush1.msra.mxu0 %v2834
    %4890 = vmatprep.subr.mxu0 %v2827
    %4891 = vmatpush1.msra.mxu0 %v2826
    %4892 = vmatprep.subr.mxu0 %v2819
    %4893 = vmatpush1.msra.mxu0 %v2818
    %4894 = vmatprep.subr.mxu0 %v2811
    %4895 = vmatpush1.msra.mxu0 %v2810
    %4896 = vmatprep.subr.mxu0 %v2803
    %4897 = vmatpush1.msra.mxu0 %v2802
    %4898 = vmatprep.subr.mxu0 %v2795
    %4899 = vmatpush1.msra.mxu0 %v2794
    %4900 = vmatprep.subr.mxu0 %v2787
    %4901 = vmatpush1.msra.mxu0 %v2786
    %4902 = vmatprep.subr.mxu0 %v2779
    %4903 = vmatpush1.msra.mxu0 %v2778
    %4904 = vmatprep.subr.mxu0 %v2771
    %4905 = vmatpush1.msra.mxu0 %v2770
    %4906 = vmatprep.subr.mxu0 %v2763
    %4907 = vmatpush1.msra.mxu0 %v2762
    %4908 = vmatprep.subr.mxu0 %v3011
    %4909 = vmatpush2.msra.mxu0 %v3010
    %4910 = vmatprep.subr.mxu0 %v3003
    %4911 = vmatpush2.msra.mxu0 %v3002
    %4912 = vmatprep.subr.mxu0 %v2995
    %4913 = vmatpush2.msra.mxu0 %v2994
    %4914 = vmatprep.subr.mxu0 %v2987
    %4915 = vmatpush2.msra.mxu0 %v2986
    %4916 = vmatprep.subr.mxu0 %v2979
    %4917 = vmatpush2.msra.mxu0 %v2978
    %4918 = vmatprep.subr.mxu0 %v2971
    %4919 = vmatpush2.msra.mxu0 %v2970
    %4920 = vmatprep.subr.mxu0 %v2963
    %4921 = vmatpush2.msra.mxu0 %v2962
    %4922 = vmatprep.subr.mxu0 %v2955
    %4923 = vmatpush2.msra.mxu0 %v2954
    %4924 = vmatprep.subr.mxu0 %v2947
    %4925 = vmatpush2.msra.mxu0 %v2946
    %4926 = vmatprep.subr.mxu0 %v2939
    %4927 = vmatpush2.msra.mxu0 %v2938
    %4928 = vmatprep.subr.mxu0 %v2931
    %4929 = vmatpush2.msra.mxu0 %v2930
    %4930 = vmatprep.subr.mxu0 %v2923
    %4931 = vmatpush2.msra.mxu0 %v2922
    %4932 = vmatprep.subr.mxu0 %v2915
    %4933 = vmatpush2.msra.mxu0 %v2914
    %4934 = vmatprep.subr.mxu0 %v2907
    %4935 = vmatpush2.msra.mxu0 %v2906
    %4936 = vmatprep.subr.mxu0 %v2899
    %4937 = vmatpush2.msra.mxu0 %v2898
    %4938 = vmatprep.subr.mxu0 %v2891
    %4939 = vmatpush2.msra.mxu0 %v2890
    %4940 = vmatprep.mubr.f32.mxu0 %v197
    %4941 = vmatmul.mubr.f32.gmra.mxu0 %v196
    %v4942 = vpop.f32.mrf.mxu0
    %v4943 = vadd.f32 %v4872, %v4942
    %v4944 = vpop.f32.mrf.mxu0
    %v4945 = vadd.f32 %v4874, %v4944
    %4946 = vdwg.mxu0
    %4947 = vmatprep.subr.mxu0 %v3139
    %4948 = vmatpush1.msra.mxu0 %v3138
    %4949 = vmatprep.subr.mxu0 %v3131
    %4950 = vmatpush1.msra.mxu0 %v3130
    %4951 = vmatprep.subr.mxu0 %v3123
    %4952 = vmatpush1.msra.mxu0 %v3122
    %4953 = vmatprep.subr.mxu0 %v3115
    %4954 = vmatpush1.msra.mxu0 %v3114
    %4955 = vmatprep.subr.mxu0 %v3107
    %4956 = vmatpush1.msra.mxu0 %v3106
    %4957 = vmatprep.subr.mxu0 %v3099
    %4958 = vmatpush1.msra.mxu0 %v3098
    %4959 = vmatprep.subr.mxu0 %v3091
    %4960 = vmatpush1.msra.mxu0 %v3090
    %4961 = vmatprep.subr.mxu0 %v3083
    %4962 = vmatpush1.msra.mxu0 %v3082
    %4963 = vmatprep.subr.mxu0 %v3075
    %4964 = vmatpush1.msra.mxu0 %v3074
    %4965 = vmatprep.subr.mxu0 %v3067
    %4966 = vmatpush1.msra.mxu0 %v3066
    %4967 = vmatprep.subr.mxu0 %v3059
    %4968 = vmatpush1.msra.mxu0 %v3058
    %4969 = vmatprep.subr.mxu0 %v3051
    %4970 = vmatpush1.msra.mxu0 %v3050
    %4971 = vmatprep.subr.mxu0 %v3043
    %4972 = vmatpush1.msra.mxu0 %v3042
    %4973 = vmatprep.subr.mxu0 %v3035
    %4974 = vmatpush1.msra.mxu0 %v3034
    %4975 = vmatprep.subr.mxu0 %v3027
    %4976 = vmatpush1.msra.mxu0 %v3026
    %4977 = vmatprep.subr.mxu0 %v3019
    %4978 = vmatpush1.msra.mxu0 %v3018
    %4979 = vmatprep.subr.mxu0 %v3267
    %4980 = vmatpush2.msra.mxu0 %v3266
    %4981 = vmatprep.subr.mxu0 %v3259
    %4982 = vmatpush2.msra.mxu0 %v3258
    %4983 = vmatprep.subr.mxu0 %v3251
    %4984 = vmatpush2.msra.mxu0 %v3250
    %4985 = vmatprep.subr.mxu0 %v3243
    %4986 = vmatpush2.msra.mxu0 %v3242
    %4987 = vmatprep.subr.mxu0 %v3235
    %4988 = vmatpush2.msra.mxu0 %v3234
    %4989 = vmatprep.subr.mxu0 %v3227
    %4990 = vmatpush2.msra.mxu0 %v3226
    %4991 = vmatprep.subr.mxu0 %v3219
    %4992 = vmatpush2.msra.mxu0 %v3218
    %4993 = vmatprep.subr.mxu0 %v3211
    %4994 = vmatpush2.msra.mxu0 %v3210
    %4995 = vmatprep.subr.mxu0 %v3203
    %4996 = vmatpush2.msra.mxu0 %v3202
    %4997 = vmatprep.subr.mxu0 %v3195
    %4998 = vmatpush2.msra.mxu0 %v3194
    %4999 = vmatprep.subr.mxu0 %v3187
    %5000 = vmatpush2.msra.mxu0 %v3186
    %5001 = vmatprep.subr.mxu0 %v3179
    %5002 = vmatpush2.msra.mxu0 %v3178
    %5003 = vmatprep.subr.mxu0 %v3171
    %5004 = vmatpush2.msra.mxu0 %v3170
    %5005 = vmatprep.subr.mxu0 %v3163
    %5006 = vmatpush2.msra.mxu0 %v3162
    %5007 = vmatprep.subr.mxu0 %v3155
    %5008 = vmatpush2.msra.mxu0 %v3154
    %5009 = vmatprep.subr.mxu0 %v3147
    %5010 = vmatpush2.msra.mxu0 %v3146
    %5011 = vmatprep.mubr.f32.mxu0 %v199
    %5012 = vmatmul.mubr.f32.gmra.mxu0 %v198
    %v5013 = vpop.f32.mrf.mxu0
    %v5014 = vadd.f32 %v4943, %v5013
    %v5015 = vpop.f32.mrf.mxu0
    %v5016 = vadd.f32 %v4945, %v5015
    %5017 = vdwg.mxu0
    %5018 = vmatprep.subr.mxu0 %v325
    %5019 = vmatpush1.msra.mxu0 %v324
    %5020 = vmatprep.subr.mxu0 %v317
    %5021 = vmatpush1.msra.mxu0 %v316
    %5022 = vmatprep.subr.mxu0 %v309
    %5023 = vmatpush1.msra.mxu0 %v308
    %5024 = vmatprep.subr.mxu0 %v301
    %5025 = vmatpush1.msra.mxu0 %v300
    %5026 = vmatprep.subr.mxu0 %v293
    %5027 = vmatpush1.msra.mxu0 %v292
    %5028 = vmatprep.subr.mxu0 %v285
    %5029 = vmatpush1.msra.mxu0 %v284
    %5030 = vmatprep.subr.mxu0 %v277
    %5031 = vmatpush1.msra.mxu0 %v276
    %5032 = vmatprep.subr.mxu0 %v269
    %5033 = vmatpush1.msra.mxu0 %v268
    %5034 = vmatprep.subr.mxu0 %v261
    %5035 = vmatpush1.msra.mxu0 %v260
    %5036 = vmatprep.subr.mxu0 %v253
    %5037 = vmatpush1.msra.mxu0 %v252
    %5038 = vmatprep.subr.mxu0 %v245
    %5039 = vmatpush1.msra.mxu0 %v244
    %5040 = vmatprep.subr.mxu0 %v237
    %5041 = vmatpush1.msra.mxu0 %v236
    %5042 = vmatprep.subr.mxu0 %v229
    %5043 = vmatpush1.msra.mxu0 %v228
    %5044 = vmatprep.subr.mxu0 %v221
    %5045 = vmatpush1.msra.mxu0 %v220
    %5046 = vmatprep.subr.mxu0 %v213
    %5047 = vmatpush1.msra.mxu0 %v212
    %5048 = vmatprep.subr.mxu0 %v205
    %5049 = vmatpush1.msra.mxu0 %v204
    %5050 = vmatprep.subr.mxu0 %v453
    %5051 = vmatpush2.msra.mxu0 %v452
    %5052 = vmatprep.subr.mxu0 %v445
    %5053 = vmatpush2.msra.mxu0 %v444
    %5054 = vmatprep.subr.mxu0 %v437
    %5055 = vmatpush2.msra.mxu0 %v436
    %5056 = vmatprep.subr.mxu0 %v429
    %5057 = vmatpush2.msra.mxu0 %v428
    %5058 = vmatprep.subr.mxu0 %v421
    %5059 = vmatpush2.msra.mxu0 %v420
    %5060 = vmatprep.subr.mxu0 %v413
    %5061 = vmatpush2.msra.mxu0 %v412
    %5062 = vmatprep.subr.mxu0 %v405
    %5063 = vmatpush2.msra.mxu0 %v404
    %5064 = vmatprep.subr.mxu0 %v397
    %5065 = vmatpush2.msra.mxu0 %v396
    %5066 = vmatprep.subr.mxu0 %v389
    %5067 = vmatpush2.msra.mxu0 %v388
    %5068 = vmatprep.subr.mxu0 %v381
    %5069 = vmatpush2.msra.mxu0 %v380
    %5070 = vmatprep.subr.mxu0 %v373
    %5071 = vmatpush2.msra.mxu0 %v372
    %5072 = vmatprep.subr.mxu0 %v365
    %5073 = vmatpush2.msra.mxu0 %v364
    %5074 = vmatprep.subr.mxu0 %v357
    %5075 = vmatpush2.msra.mxu0 %v356
    %5076 = vmatprep.subr.mxu0 %v349
    %5077 = vmatpush2.msra.mxu0 %v348
    %5078 = vmatprep.subr.mxu0 %v341
    %5079 = vmatpush2.msra.mxu0 %v340
    %5080 = vmatprep.subr.mxu0 %v333
    %5081 = vmatpush2.msra.mxu0 %v332
    %5082 = vmatprep.mubr.f32.mxu0 %v177
    %5083 = vmatmul.mubr.f32.gmra.mxu0 %v176
    %v5084 = vpop.f32.mrf.mxu0
    %v5085 = vadd.f32 %v3293, %v5084
    %v5086 = vpop.f32.mrf.mxu0
    %v5087 = vadd.f32 %v3297, %v5086
    %5088 = vdwg.mxu0
    %5089 = vmatprep.subr.mxu0 %v581
    %5090 = vmatpush1.msra.mxu0 %v580
    %5091 = vmatprep.subr.mxu0 %v573
    %5092 = vmatpush1.msra.mxu0 %v572
    %5093 = vmatprep.subr.mxu0 %v565
    %5094 = vmatpush1.msra.mxu0 %v564
    %5095 = vmatprep.subr.mxu0 %v557
    %5096 = vmatpush1.msra.mxu0 %v556
    %5097 = vmatprep.subr.mxu0 %v549
    %5098 = vmatpush1.msra.mxu0 %v548
    %5099 = vmatprep.subr.mxu0 %v541
    %5100 = vmatpush1.msra.mxu0 %v540
    %5101 = vmatprep.subr.mxu0 %v533
    %5102 = vmatpush1.msra.mxu0 %v532
    %5103 = vmatprep.subr.mxu0 %v525
    %5104 = vmatpush1.msra.mxu0 %v524
    %5105 = vmatprep.subr.mxu0 %v517
    %5106 = vmatpush1.msra.mxu0 %v516
    %5107 = vmatprep.subr.mxu0 %v509
    %5108 = vmatpush1.msra.mxu0 %v508
    %5109 = vmatprep.subr.mxu0 %v501
    %5110 = vmatpush1.msra.mxu0 %v500
    %5111 = vmatprep.subr.mxu0 %v493
    %5112 = vmatpush1.msra.mxu0 %v492
    %5113 = vmatprep.subr.mxu0 %v485
    %5114 = vmatpush1.msra.mxu0 %v484
    %5115 = vmatprep.subr.mxu0 %v477
    %5116 = vmatpush1.msra.mxu0 %v476
    %5117 = vmatprep.subr.mxu0 %v469
    %5118 = vmatpush1.msra.mxu0 %v468
    %5119 = vmatprep.subr.mxu0 %v461
    %5120 = vmatpush1.msra.mxu0 %v460
    %5121 = vmatprep.subr.mxu0 %v709
    %5122 = vmatpush2.msra.mxu0 %v708
    %5123 = vmatprep.subr.mxu0 %v701
    %5124 = vmatpush2.msra.mxu0 %v700
    %5125 = vmatprep.subr.mxu0 %v693
    %5126 = vmatpush2.msra.mxu0 %v692
    %5127 = vmatprep.subr.mxu0 %v685
    %5128 = vmatpush2.msra.mxu0 %v684
    %5129 = vmatprep.subr.mxu0 %v677
    %5130 = vmatpush2.msra.mxu0 %v676
    %5131 = vmatprep.subr.mxu0 %v669
    %5132 = vmatpush2.msra.mxu0 %v668
    %5133 = vmatprep.subr.mxu0 %v661
    %5134 = vmatpush2.msra.mxu0 %v660
    %5135 = vmatprep.subr.mxu0 %v653
    %5136 = vmatpush2.msra.mxu0 %v652
    %5137 = vmatprep.subr.mxu0 %v645
    %5138 = vmatpush2.msra.mxu0 %v644
    %5139 = vmatprep.subr.mxu0 %v637
    %5140 = vmatpush2.msra.mxu0 %v636
    %5141 = vmatprep.subr.mxu0 %v629
    %5142 = vmatpush2.msra.mxu0 %v628
    %5143 = vmatprep.subr.mxu0 %v621
    %5144 = vmatpush2.msra.mxu0 %v620
    %5145 = vmatprep.subr.mxu0 %v613
    %5146 = vmatpush2.msra.mxu0 %v612
    %5147 = vmatprep.subr.mxu0 %v605
    %5148 = vmatpush2.msra.mxu0 %v604
    %5149 = vmatprep.subr.mxu0 %v597
    %5150 = vmatpush2.msra.mxu0 %v596
    %5151 = vmatprep.subr.mxu0 %v589
    %5152 = vmatpush2.msra.mxu0 %v588
    %5153 = vmatprep.mubr.f32.mxu0 %v179
    %5154 = vmatmul.mubr.f32.gmra.mxu0 %v178
    %v5155 = vpop.f32.mrf.mxu0
    %v5156 = vadd.f32 %v5085, %v5155
    %v5157 = vpop.f32.mrf.mxu0
    %v5158 = vadd.f32 %v5087, %v5157
    %5159 = vdwg.mxu0
    %5160 = vmatprep.subr.mxu0 %v837
    %5161 = vmatpush1.msra.mxu0 %v836
    %5162 = vmatprep.subr.mxu0 %v829
    %5163 = vmatpush1.msra.mxu0 %v828
    %5164 = vmatprep.subr.mxu0 %v821
    %5165 = vmatpush1.msra.mxu0 %v820
    %5166 = vmatprep.subr.mxu0 %v813
    %5167 = vmatpush1.msra.mxu0 %v812
    %5168 = vmatprep.subr.mxu0 %v805
    %5169 = vmatpush1.msra.mxu0 %v804
    %5170 = vmatprep.subr.mxu0 %v797
    %5171 = vmatpush1.msra.mxu0 %v796
    %5172 = vmatprep.subr.mxu0 %v789
    %5173 = vmatpush1.msra.mxu0 %v788
    %5174 = vmatprep.subr.mxu0 %v781
    %5175 = vmatpush1.msra.mxu0 %v780
    %5176 = vmatprep.subr.mxu0 %v773
    %5177 = vmatpush1.msra.mxu0 %v772
    %5178 = vmatprep.subr.mxu0 %v765
    %5179 = vmatpush1.msra.mxu0 %v764
    %5180 = vmatprep.subr.mxu0 %v757
    %5181 = vmatpush1.msra.mxu0 %v756
    %5182 = vmatprep.subr.mxu0 %v749
    %5183 = vmatpush1.msra.mxu0 %v748
    %5184 = vmatprep.subr.mxu0 %v741
    %5185 = vmatpush1.msra.mxu0 %v740
    %5186 = vmatprep.subr.mxu0 %v733
    %5187 = vmatpush1.msra.mxu0 %v732
    %5188 = vmatprep.subr.mxu0 %v725
    %5189 = vmatpush1.msra.mxu0 %v724
    %5190 = vmatprep.subr.mxu0 %v717
    %5191 = vmatpush1.msra.mxu0 %v716
    %5192 = vmatprep.subr.mxu0 %v965
    %5193 = vmatpush2.msra.mxu0 %v964
    %5194 = vmatprep.subr.mxu0 %v957
    %5195 = vmatpush2.msra.mxu0 %v956
    %5196 = vmatprep.subr.mxu0 %v949
    %5197 = vmatpush2.msra.mxu0 %v948
    %5198 = vmatprep.subr.mxu0 %v941
    %5199 = vmatpush2.msra.mxu0 %v940
    %5200 = vmatprep.subr.mxu0 %v933
    %5201 = vmatpush2.msra.mxu0 %v932
    %5202 = vmatprep.subr.mxu0 %v925
    %5203 = vmatpush2.msra.mxu0 %v924
    %5204 = vmatprep.subr.mxu0 %v917
    %5205 = vmatpush2.msra.mxu0 %v916
    %5206 = vmatprep.subr.mxu0 %v909
    %5207 = vmatpush2.msra.mxu0 %v908
    %5208 = vmatprep.subr.mxu0 %v901
    %5209 = vmatpush2.msra.mxu0 %v900
    %5210 = vmatprep.subr.mxu0 %v893
    %5211 = vmatpush2.msra.mxu0 %v892
    %5212 = vmatprep.subr.mxu0 %v885
    %5213 = vmatpush2.msra.mxu0 %v884
    %5214 = vmatprep.subr.mxu0 %v877
    %5215 = vmatpush2.msra.mxu0 %v876
    %5216 = vmatprep.subr.mxu0 %v869
    %5217 = vmatpush2.msra.mxu0 %v868
    %5218 = vmatprep.subr.mxu0 %v861
    %5219 = vmatpush2.msra.mxu0 %v860
    %5220 = vmatprep.subr.mxu0 %v853
    %5221 = vmatpush2.msra.mxu0 %v852
    %5222 = vmatprep.subr.mxu0 %v845
    %5223 = vmatpush2.msra.mxu0 %v844
    %5224 = vmatprep.mubr.f32.mxu0 %v181
    %5225 = vmatmul.mubr.f32.gmra.mxu0 %v180
    %v5226 = vpop.f32.mrf.mxu0
    %v5227 = vadd.f32 %v5156, %v5226
    %v5228 = vpop.f32.mrf.mxu0
    %v5229 = vadd.f32 %v5158, %v5228
    %5230 = vdwg.mxu0
    %5231 = vmatprep.subr.mxu0 %v1093
    %5232 = vmatpush1.msra.mxu0 %v1092
    %5233 = vmatprep.subr.mxu0 %v1085
    %5234 = vmatpush1.msra.mxu0 %v1084
    %5235 = vmatprep.subr.mxu0 %v1077
    %5236 = vmatpush1.msra.mxu0 %v1076
    %5237 = vmatprep.subr.mxu0 %v1069
    %5238 = vmatpush1.msra.mxu0 %v1068
    %5239 = vmatprep.subr.mxu0 %v1061
    %5240 = vmatpush1.msra.mxu0 %v1060
    %5241 = vmatprep.subr.mxu0 %v1053
    %5242 = vmatpush1.msra.mxu0 %v1052
    %5243 = vmatprep.subr.mxu0 %v1045
    %5244 = vmatpush1.msra.mxu0 %v1044
    %5245 = vmatprep.subr.mxu0 %v1037
    %5246 = vmatpush1.msra.mxu0 %v1036
    %5247 = vmatprep.subr.mxu0 %v1029
    %5248 = vmatpush1.msra.mxu0 %v1028
    %5249 = vmatprep.subr.mxu0 %v1021
    %5250 = vmatpush1.msra.mxu0 %v1020
    %5251 = vmatprep.subr.mxu0 %v1013
    %5252 = vmatpush1.msra.mxu0 %v1012
    %5253 = vmatprep.subr.mxu0 %v1005
    %5254 = vmatpush1.msra.mxu0 %v1004
    %5255 = vmatprep.subr.mxu0 %v997
    %5256 = vmatpush1.msra.mxu0 %v996
    %5257 = vmatprep.subr.mxu0 %v989
    %5258 = vmatpush1.msra.mxu0 %v988
    %5259 = vmatprep.subr.mxu0 %v981
    %5260 = vmatpush1.msra.mxu0 %v980
    %5261 = vmatprep.subr.mxu0 %v973
    %5262 = vmatpush1.msra.mxu0 %v972
    %5263 = vmatprep.subr.mxu0 %v1221
    %5264 = vmatpush2.msra.mxu0 %v1220
    %5265 = vmatprep.subr.mxu0 %v1213
    %5266 = vmatpush2.msra.mxu0 %v1212
    %5267 = vmatprep.subr.mxu0 %v1205
    %5268 = vmatpush2.msra.mxu0 %v1204
    %5269 = vmatprep.subr.mxu0 %v1197
    %5270 = vmatpush2.msra.mxu0 %v1196
    %5271 = vmatprep.subr.mxu0 %v1189
    %5272 = vmatpush2.msra.mxu0 %v1188
    %5273 = vmatprep.subr.mxu0 %v1181
    %5274 = vmatpush2.msra.mxu0 %v1180
    %5275 = vmatprep.subr.mxu0 %v1173
    %5276 = vmatpush2.msra.mxu0 %v1172
    %5277 = vmatprep.subr.mxu0 %v1165
    %5278 = vmatpush2.msra.mxu0 %v1164
    %5279 = vmatprep.subr.mxu0 %v1157
    %5280 = vmatpush2.msra.mxu0 %v1156
    %5281 = vmatprep.subr.mxu0 %v1149
    %5282 = vmatpush2.msra.mxu0 %v1148
    %5283 = vmatprep.subr.mxu0 %v1141
    %5284 = vmatpush2.msra.mxu0 %v1140
    %5285 = vmatprep.subr.mxu0 %v1133
    %5286 = vmatpush2.msra.mxu0 %v1132
    %5287 = vmatprep.subr.mxu0 %v1125
    %5288 = vmatpush2.msra.mxu0 %v1124
    %5289 = vmatprep.subr.mxu0 %v1117
    %5290 = vmatpush2.msra.mxu0 %v1116
    %5291 = vmatprep.subr.mxu0 %v1109
    %5292 = vmatpush2.msra.mxu0 %v1108
    %5293 = vmatprep.subr.mxu0 %v1101
    %5294 = vmatpush2.msra.mxu0 %v1100
    %5295 = vmatprep.mubr.f32.mxu0 %v183
    %5296 = vmatmul.mubr.f32.gmra.mxu0 %v182
    %v5297 = vpop.f32.mrf.mxu0
    %v5298 = vadd.f32 %v5227, %v5297
    %v5299 = vpop.f32.mrf.mxu0
    %v5300 = vadd.f32 %v5229, %v5299
    %5301 = vdwg.mxu0
    %5302 = vmatprep.subr.mxu0 %v1349
    %5303 = vmatpush1.msra.mxu0 %v1348
    %5304 = vmatprep.subr.mxu0 %v1341
    %5305 = vmatpush1.msra.mxu0 %v1340
    %5306 = vmatprep.subr.mxu0 %v1333
    %5307 = vmatpush1.msra.mxu0 %v1332
    %5308 = vmatprep.subr.mxu0 %v1325
    %5309 = vmatpush1.msra.mxu0 %v1324
    %5310 = vmatprep.subr.mxu0 %v1317
    %5311 = vmatpush1.msra.mxu0 %v1316
    %5312 = vmatprep.subr.mxu0 %v1309
    %5313 = vmatpush1.msra.mxu0 %v1308
    %5314 = vmatprep.subr.mxu0 %v1301
    %5315 = vmatpush1.msra.mxu0 %v1300
    %5316 = vmatprep.subr.mxu0 %v1293
    %5317 = vmatpush1.msra.mxu0 %v1292
    %5318 = vmatprep.subr.mxu0 %v1285
    %5319 = vmatpush1.msra.mxu0 %v1284
    %5320 = vmatprep.subr.mxu0 %v1277
    %5321 = vmatpush1.msra.mxu0 %v1276
    %5322 = vmatprep.subr.mxu0 %v1269
    %5323 = vmatpush1.msra.mxu0 %v1268
    %5324 = vmatprep.subr.mxu0 %v1261
    %5325 = vmatpush1.msra.mxu0 %v1260
    %5326 = vmatprep.subr.mxu0 %v1253
    %5327 = vmatpush1.msra.mxu0 %v1252
    %5328 = vmatprep.subr.mxu0 %v1245
    %5329 = vmatpush1.msra.mxu0 %v1244
    %5330 = vmatprep.subr.mxu0 %v1237
    %5331 = vmatpush1.msra.mxu0 %v1236
    %5332 = vmatprep.subr.mxu0 %v1229
    %5333 = vmatpush1.msra.mxu0 %v1228
    %5334 = vmatprep.subr.mxu0 %v1477
    %5335 = vmatpush2.msra.mxu0 %v1476
    %5336 = vmatprep.subr.mxu0 %v1469
    %5337 = vmatpush2.msra.mxu0 %v1468
    %5338 = vmatprep.subr.mxu0 %v1461
    %5339 = vmatpush2.msra.mxu0 %v1460
    %5340 = vmatprep.subr.mxu0 %v1453
    %5341 = vmatpush2.msra.mxu0 %v1452
    %5342 = vmatprep.subr.mxu0 %v1445
    %5343 = vmatpush2.msra.mxu0 %v1444
    %5344 = vmatprep.subr.mxu0 %v1437
    %5345 = vmatpush2.msra.mxu0 %v1436
    %5346 = vmatprep.subr.mxu0 %v1429
    %5347 = vmatpush2.msra.mxu0 %v1428
    %5348 = vmatprep.subr.mxu0 %v1421
    %5349 = vmatpush2.msra.mxu0 %v1420
    %5350 = vmatprep.subr.mxu0 %v1413
    %5351 = vmatpush2.msra.mxu0 %v1412
    %5352 = vmatprep.subr.mxu0 %v1405
    %5353 = vmatpush2.msra.mxu0 %v1404
    %5354 = vmatprep.subr.mxu0 %v1397
    %5355 = vmatpush2.msra.mxu0 %v1396
    %5356 = vmatprep.subr.mxu0 %v1389
    %5357 = vmatpush2.msra.mxu0 %v1388
    %5358 = vmatprep.subr.mxu0 %v1381
    %5359 = vmatpush2.msra.mxu0 %v1380
    %5360 = vmatprep.subr.mxu0 %v1373
    %5361 = vmatpush2.msra.mxu0 %v1372
    %5362 = vmatprep.subr.mxu0 %v1365
    %5363 = vmatpush2.msra.mxu0 %v1364
    %5364 = vmatprep.subr.mxu0 %v1357
    %5365 = vmatpush2.msra.mxu0 %v1356
    %5366 = vmatprep.mubr.f32.mxu0 %v185
    %5367 = vmatmul.mubr.f32.gmra.mxu0 %v184
    %v5368 = vpop.f32.mrf.mxu0
    %v5369 = vadd.f32 %v5298, %v5368
    %v5370 = vpop.f32.mrf.mxu0
    %v5371 = vadd.f32 %v5300, %v5370
    %5372 = vdwg.mxu0
    %5373 = vmatprep.subr.mxu0 %v1605
    %5374 = vmatpush1.msra.mxu0 %v1604
    %5375 = vmatprep.subr.mxu0 %v1597
    %5376 = vmatpush1.msra.mxu0 %v1596
    %5377 = vmatprep.subr.mxu0 %v1589
    %5378 = vmatpush1.msra.mxu0 %v1588
    %5379 = vmatprep.subr.mxu0 %v1581
    %5380 = vmatpush1.msra.mxu0 %v1580
    %5381 = vmatprep.subr.mxu0 %v1573
    %5382 = vmatpush1.msra.mxu0 %v1572
    %5383 = vmatprep.subr.mxu0 %v1565
    %5384 = vmatpush1.msra.mxu0 %v1564
    %5385 = vmatprep.subr.mxu0 %v1557
    %5386 = vmatpush1.msra.mxu0 %v1556
    %5387 = vmatprep.subr.mxu0 %v1549
    %5388 = vmatpush1.msra.mxu0 %v1548
    %5389 = vmatprep.subr.mxu0 %v1541
    %5390 = vmatpush1.msra.mxu0 %v1540
    %5391 = vmatprep.subr.mxu0 %v1533
    %5392 = vmatpush1.msra.mxu0 %v1532
    %5393 = vmatprep.subr.mxu0 %v1525
    %5394 = vmatpush1.msra.mxu0 %v1524
    %5395 = vmatprep.subr.mxu0 %v1517
    %5396 = vmatpush1.msra.mxu0 %v1516
    %5397 = vmatprep.subr.mxu0 %v1509
    %5398 = vmatpush1.msra.mxu0 %v1508
    %5399 = vmatprep.subr.mxu0 %v1501
    %5400 = vmatpush1.msra.mxu0 %v1500
    %5401 = vmatprep.subr.mxu0 %v1493
    %5402 = vmatpush1.msra.mxu0 %v1492
    %5403 = vmatprep.subr.mxu0 %v1485
    %5404 = vmatpush1.msra.mxu0 %v1484
    %5405 = vmatprep.subr.mxu0 %v1733
    %5406 = vmatpush2.msra.mxu0 %v1732
    %5407 = vmatprep.subr.mxu0 %v1725
    %5408 = vmatpush2.msra.mxu0 %v1724
    %5409 = vmatprep.subr.mxu0 %v1717
    %5410 = vmatpush2.msra.mxu0 %v1716
    %5411 = vmatprep.subr.mxu0 %v1709
    %5412 = vmatpush2.msra.mxu0 %v1708
    %5413 = vmatprep.subr.mxu0 %v1701
    %5414 = vmatpush2.msra.mxu0 %v1700
    %5415 = vmatprep.subr.mxu0 %v1693
    %5416 = vmatpush2.msra.mxu0 %v1692
    %5417 = vmatprep.subr.mxu0 %v1685
    %5418 = vmatpush2.msra.mxu0 %v1684
    %5419 = vmatprep.subr.mxu0 %v1677
    %5420 = vmatpush2.msra.mxu0 %v1676
    %5421 = vmatprep.subr.mxu0 %v1669
    %5422 = vmatpush2.msra.mxu0 %v1668
    %5423 = vmatprep.subr.mxu0 %v1661
    %5424 = vmatpush2.msra.mxu0 %v1660
    %5425 = vmatprep.subr.mxu0 %v1653
    %5426 = vmatpush2.msra.mxu0 %v1652
    %5427 = vmatprep.subr.mxu0 %v1645
    %5428 = vmatpush2.msra.mxu0 %v1644
    %5429 = vmatprep.subr.mxu0 %v1637
    %5430 = vmatpush2.msra.mxu0 %v1636
    %5431 = vmatprep.subr.mxu0 %v1629
    %5432 = vmatpush2.msra.mxu0 %v1628
    %5433 = vmatprep.subr.mxu0 %v1621
    %5434 = vmatpush2.msra.mxu0 %v1620
    %5435 = vmatprep.subr.mxu0 %v1613
    %5436 = vmatpush2.msra.mxu0 %v1612
    %5437 = vmatprep.mubr.f32.mxu0 %v187
    %5438 = vmatmul.mubr.f32.gmra.mxu0 %v186
    %v5439 = vpop.f32.mrf.mxu0
    %v5440 = vadd.f32 %v5369, %v5439
    %v5441 = vpop.f32.mrf.mxu0
    %v5442 = vadd.f32 %v5371, %v5441
    %5443 = vdwg.mxu0
    %5444 = vmatprep.subr.mxu0 %v1861
    %5445 = vmatpush1.msra.mxu0 %v1860
    %5446 = vmatprep.subr.mxu0 %v1853
    %5447 = vmatpush1.msra.mxu0 %v1852
    %5448 = vmatprep.subr.mxu0 %v1845
    %5449 = vmatpush1.msra.mxu0 %v1844
    %5450 = vmatprep.subr.mxu0 %v1837
    %5451 = vmatpush1.msra.mxu0 %v1836
    %5452 = vmatprep.subr.mxu0 %v1829
    %5453 = vmatpush1.msra.mxu0 %v1828
    %5454 = vmatprep.subr.mxu0 %v1821
    %5455 = vmatpush1.msra.mxu0 %v1820
    %5456 = vmatprep.subr.mxu0 %v1813
    %5457 = vmatpush1.msra.mxu0 %v1812
    %5458 = vmatprep.subr.mxu0 %v1805
    %5459 = vmatpush1.msra.mxu0 %v1804
    %5460 = vmatprep.subr.mxu0 %v1797
    %5461 = vmatpush1.msra.mxu0 %v1796
    %5462 = vmatprep.subr.mxu0 %v1789
    %5463 = vmatpush1.msra.mxu0 %v1788
    %5464 = vmatprep.subr.mxu0 %v1781
    %5465 = vmatpush1.msra.mxu0 %v1780
    %5466 = vmatprep.subr.mxu0 %v1773
    %5467 = vmatpush1.msra.mxu0 %v1772
    %5468 = vmatprep.subr.mxu0 %v1765
    %5469 = vmatpush1.msra.mxu0 %v1764
    %5470 = vmatprep.subr.mxu0 %v1757
    %5471 = vmatpush1.msra.mxu0 %v1756
    %5472 = vmatprep.subr.mxu0 %v1749
    %5473 = vmatpush1.msra.mxu0 %v1748
    %5474 = vmatprep.subr.mxu0 %v1741
    %5475 = vmatpush1.msra.mxu0 %v1740
    %5476 = vmatprep.subr.mxu0 %v1989
    %5477 = vmatpush2.msra.mxu0 %v1988
    %5478 = vmatprep.subr.mxu0 %v1981
    %5479 = vmatpush2.msra.mxu0 %v1980
    %5480 = vmatprep.subr.mxu0 %v1973
    %5481 = vmatpush2.msra.mxu0 %v1972
    %5482 = vmatprep.subr.mxu0 %v1965
    %5483 = vmatpush2.msra.mxu0 %v1964
    %5484 = vmatprep.subr.mxu0 %v1957
    %5485 = vmatpush2.msra.mxu0 %v1956
    %5486 = vmatprep.subr.mxu0 %v1949
    %5487 = vmatpush2.msra.mxu0 %v1948
    %5488 = vmatprep.subr.mxu0 %v1941
    %5489 = vmatpush2.msra.mxu0 %v1940
    %5490 = vmatprep.subr.mxu0 %v1933
    %5491 = vmatpush2.msra.mxu0 %v1932
    %5492 = vmatprep.subr.mxu0 %v1925
    %5493 = vmatpush2.msra.mxu0 %v1924
    %5494 = vmatprep.subr.mxu0 %v1917
    %5495 = vmatpush2.msra.mxu0 %v1916
    %5496 = vmatprep.subr.mxu0 %v1909
    %5497 = vmatpush2.msra.mxu0 %v1908
    %5498 = vmatprep.subr.mxu0 %v1901
    %5499 = vmatpush2.msra.mxu0 %v1900
    %5500 = vmatprep.subr.mxu0 %v1893
    %5501 = vmatpush2.msra.mxu0 %v1892
    %5502 = vmatprep.subr.mxu0 %v1885
    %5503 = vmatpush2.msra.mxu0 %v1884
    %5504 = vmatprep.subr.mxu0 %v1877
    %5505 = vmatpush2.msra.mxu0 %v1876
    %5506 = vmatprep.subr.mxu0 %v1869
    %5507 = vmatpush2.msra.mxu0 %v1868
    %5508 = vmatprep.mubr.f32.mxu0 %v189
    %5509 = vmatmul.mubr.f32.gmra.mxu0 %v188
    %v5510 = vpop.f32.mrf.mxu0
    %v5511 = vadd.f32 %v5440, %v5510
    %v5512 = vpop.f32.mrf.mxu0
    %v5513 = vadd.f32 %v5442, %v5512
    %5514 = vdwg.mxu0
    %5515 = vmatprep.subr.mxu0 %v2117
    %5516 = vmatpush1.msra.mxu0 %v2116
    %5517 = vmatprep.subr.mxu0 %v2109
    %5518 = vmatpush1.msra.mxu0 %v2108
    %5519 = vmatprep.subr.mxu0 %v2101
    %5520 = vmatpush1.msra.mxu0 %v2100
    %5521 = vmatprep.subr.mxu0 %v2093
    %5522 = vmatpush1.msra.mxu0 %v2092
    %5523 = vmatprep.subr.mxu0 %v2085
    %5524 = vmatpush1.msra.mxu0 %v2084
    %5525 = vmatprep.subr.mxu0 %v2077
    %5526 = vmatpush1.msra.mxu0 %v2076
    %5527 = vmatprep.subr.mxu0 %v2069
    %5528 = vmatpush1.msra.mxu0 %v2068
    %5529 = vmatprep.subr.mxu0 %v2061
    %5530 = vmatpush1.msra.mxu0 %v2060
    %5531 = vmatprep.subr.mxu0 %v2053
    %5532 = vmatpush1.msra.mxu0 %v2052
    %5533 = vmatprep.subr.mxu0 %v2045
    %5534 = vmatpush1.msra.mxu0 %v2044
    %5535 = vmatprep.subr.mxu0 %v2037
    %5536 = vmatpush1.msra.mxu0 %v2036
    %5537 = vmatprep.subr.mxu0 %v2029
    %5538 = vmatpush1.msra.mxu0 %v2028
    %5539 = vmatprep.subr.mxu0 %v2021
    %5540 = vmatpush1.msra.mxu0 %v2020
    %5541 = vmatprep.subr.mxu0 %v2013
    %5542 = vmatpush1.msra.mxu0 %v2012
    %5543 = vmatprep.subr.mxu0 %v2005
    %5544 = vmatpush1.msra.mxu0 %v2004
    %5545 = vmatprep.subr.mxu0 %v1997
    %5546 = vmatpush1.msra.mxu0 %v1996
    %5547 = vmatprep.subr.mxu0 %v2245
    %5548 = vmatpush2.msra.mxu0 %v2244
    %5549 = vmatprep.subr.mxu0 %v2237
    %5550 = vmatpush2.msra.mxu0 %v2236
    %5551 = vmatprep.subr.mxu0 %v2229
    %5552 = vmatpush2.msra.mxu0 %v2228
    %5553 = vmatprep.subr.mxu0 %v2221
    %5554 = vmatpush2.msra.mxu0 %v2220
    %5555 = vmatprep.subr.mxu0 %v2213
    %5556 = vmatpush2.msra.mxu0 %v2212
    %5557 = vmatprep.subr.mxu0 %v2205
    %5558 = vmatpush2.msra.mxu0 %v2204
    %5559 = vmatprep.subr.mxu0 %v2197
    %5560 = vmatpush2.msra.mxu0 %v2196
    %5561 = vmatprep.subr.mxu0 %v2189
    %5562 = vmatpush2.msra.mxu0 %v2188
    %5563 = vmatprep.subr.mxu0 %v2181
    %5564 = vmatpush2.msra.mxu0 %v2180
    %5565 = vmatprep.subr.mxu0 %v2173
    %5566 = vmatpush2.msra.mxu0 %v2172
    %5567 = vmatprep.subr.mxu0 %v2165
    %5568 = vmatpush2.msra.mxu0 %v2164
    %5569 = vmatprep.subr.mxu0 %v2157
    %5570 = vmatpush2.msra.mxu0 %v2156
    %5571 = vmatprep.subr.mxu0 %v2149
    %5572 = vmatpush2.msra.mxu0 %v2148
    %5573 = vmatprep.subr.mxu0 %v2141
    %5574 = vmatpush2.msra.mxu0 %v2140
    %5575 = vmatprep.subr.mxu0 %v2133
    %5576 = vmatpush2.msra.mxu0 %v2132
    %5577 = vmatprep.subr.mxu0 %v2125
    %5578 = vmatpush2.msra.mxu0 %v2124
    %5579 = vmatprep.mubr.f32.mxu0 %v191
    %5580 = vmatmul.mubr.f32.gmra.mxu0 %v190
    %v5581 = vpop.f32.mrf.mxu0
    %v5582 = vadd.f32 %v5511, %v5581
    %v5583 = vpop.f32.mrf.mxu0
    %v5584 = vadd.f32 %v5513, %v5583
    %5585 = vdwg.mxu0
    %5586 = vmatprep.subr.mxu0 %v2373
    %5587 = vmatpush1.msra.mxu0 %v2372
    %5588 = vmatprep.subr.mxu0 %v2365
    %5589 = vmatpush1.msra.mxu0 %v2364
    %5590 = vmatprep.subr.mxu0 %v2357
    %5591 = vmatpush1.msra.mxu0 %v2356
    %5592 = vmatprep.subr.mxu0 %v2349
    %5593 = vmatpush1.msra.mxu0 %v2348
    %5594 = vmatprep.subr.mxu0 %v2341
    %5595 = vmatpush1.msra.mxu0 %v2340
    %5596 = vmatprep.subr.mxu0 %v2333
    %5597 = vmatpush1.msra.mxu0 %v2332
    %5598 = vmatprep.subr.mxu0 %v2325
    %5599 = vmatpush1.msra.mxu0 %v2324
    %5600 = vmatprep.subr.mxu0 %v2317
    %5601 = vmatpush1.msra.mxu0 %v2316
    %5602 = vmatprep.subr.mxu0 %v2309
    %5603 = vmatpush1.msra.mxu0 %v2308
    %5604 = vmatprep.subr.mxu0 %v2301
    %5605 = vmatpush1.msra.mxu0 %v2300
    %5606 = vmatprep.subr.mxu0 %v2293
    %5607 = vmatpush1.msra.mxu0 %v2292
    %5608 = vmatprep.subr.mxu0 %v2285
    %5609 = vmatpush1.msra.mxu0 %v2284
    %5610 = vmatprep.subr.mxu0 %v2277
    %5611 = vmatpush1.msra.mxu0 %v2276
    %5612 = vmatprep.subr.mxu0 %v2269
    %5613 = vmatpush1.msra.mxu0 %v2268
    %5614 = vmatprep.subr.mxu0 %v2261
    %5615 = vmatpush1.msra.mxu0 %v2260
    %5616 = vmatprep.subr.mxu0 %v2253
    %5617 = vmatpush1.msra.mxu0 %v2252
    %5618 = vmatprep.subr.mxu0 %v2501
    %5619 = vmatpush2.msra.mxu0 %v2500
    %5620 = vmatprep.subr.mxu0 %v2493
    %5621 = vmatpush2.msra.mxu0 %v2492
    %5622 = vmatprep.subr.mxu0 %v2485
    %5623 = vmatpush2.msra.mxu0 %v2484
    %5624 = vmatprep.subr.mxu0 %v2477
    %5625 = vmatpush2.msra.mxu0 %v2476
    %5626 = vmatprep.subr.mxu0 %v2469
    %5627 = vmatpush2.msra.mxu0 %v2468
    %5628 = vmatprep.subr.mxu0 %v2461
    %5629 = vmatpush2.msra.mxu0 %v2460
    %5630 = vmatprep.subr.mxu0 %v2453
    %5631 = vmatpush2.msra.mxu0 %v2452
    %5632 = vmatprep.subr.mxu0 %v2445
    %5633 = vmatpush2.msra.mxu0 %v2444
    %5634 = vmatprep.subr.mxu0 %v2437
    %5635 = vmatpush2.msra.mxu0 %v2436
    %5636 = vmatprep.subr.mxu0 %v2429
    %5637 = vmatpush2.msra.mxu0 %v2428
    %5638 = vmatprep.subr.mxu0 %v2421
    %5639 = vmatpush2.msra.mxu0 %v2420
    %5640 = vmatprep.subr.mxu0 %v2413
    %5641 = vmatpush2.msra.mxu0 %v2412
    %5642 = vmatprep.subr.mxu0 %v2405
    %5643 = vmatpush2.msra.mxu0 %v2404
    %5644 = vmatprep.subr.mxu0 %v2397
    %5645 = vmatpush2.msra.mxu0 %v2396
    %5646 = vmatprep.subr.mxu0 %v2389
    %5647 = vmatpush2.msra.mxu0 %v2388
    %5648 = vmatprep.subr.mxu0 %v2381
    %5649 = vmatpush2.msra.mxu0 %v2380
    %5650 = vmatprep.mubr.f32.mxu0 %v193
    %5651 = vmatmul.mubr.f32.gmra.mxu0 %v192
    %v5652 = vpop.f32.mrf.mxu0
    %v5653 = vadd.f32 %v5582, %v5652
    %v5654 = vpop.f32.mrf.mxu0
    %v5655 = vadd.f32 %v5584, %v5654
    %5656 = vdwg.mxu0
    %5657 = vmatprep.subr.mxu0 %v2629
    %5658 = vmatpush1.msra.mxu0 %v2628
    %5659 = vmatprep.subr.mxu0 %v2621
    %5660 = vmatpush1.msra.mxu0 %v2620
    %5661 = vmatprep.subr.mxu0 %v2613
    %5662 = vmatpush1.msra.mxu0 %v2612
    %5663 = vmatprep.subr.mxu0 %v2605
    %5664 = vmatpush1.msra.mxu0 %v2604
    %5665 = vmatprep.subr.mxu0 %v2597
    %5666 = vmatpush1.msra.mxu0 %v2596
    %5667 = vmatprep.subr.mxu0 %v2589
    %5668 = vmatpush1.msra.mxu0 %v2588
    %5669 = vmatprep.subr.mxu0 %v2581
    %5670 = vmatpush1.msra.mxu0 %v2580
    %5671 = vmatprep.subr.mxu0 %v2573
    %5672 = vmatpush1.msra.mxu0 %v2572
    %5673 = vmatprep.subr.mxu0 %v2565
    %5674 = vmatpush1.msra.mxu0 %v2564
    %5675 = vmatprep.subr.mxu0 %v2557
    %5676 = vmatpush1.msra.mxu0 %v2556
    %5677 = vmatprep.subr.mxu0 %v2549
    %5678 = vmatpush1.msra.mxu0 %v2548
    %5679 = vmatprep.subr.mxu0 %v2541
    %5680 = vmatpush1.msra.mxu0 %v2540
    %5681 = vmatprep.subr.mxu0 %v2533
    %5682 = vmatpush1.msra.mxu0 %v2532
    %5683 = vmatprep.subr.mxu0 %v2525
    %5684 = vmatpush1.msra.mxu0 %v2524
    %5685 = vmatprep.subr.mxu0 %v2517
    %5686 = vmatpush1.msra.mxu0 %v2516
    %5687 = vmatprep.subr.mxu0 %v2509
    %5688 = vmatpush1.msra.mxu0 %v2508
    %5689 = vmatprep.subr.mxu0 %v2757
    %5690 = vmatpush2.msra.mxu0 %v2756
    %5691 = vmatprep.subr.mxu0 %v2749
    %5692 = vmatpush2.msra.mxu0 %v2748
    %5693 = vmatprep.subr.mxu0 %v2741
    %5694 = vmatpush2.msra.mxu0 %v2740
    %5695 = vmatprep.subr.mxu0 %v2733
    %5696 = vmatpush2.msra.mxu0 %v2732
    %5697 = vmatprep.subr.mxu0 %v2725
    %5698 = vmatpush2.msra.mxu0 %v2724
    %5699 = vmatprep.subr.mxu0 %v2717
    %5700 = vmatpush2.msra.mxu0 %v2716
    %5701 = vmatprep.subr.mxu0 %v2709
    %5702 = vmatpush2.msra.mxu0 %v2708
    %5703 = vmatprep.subr.mxu0 %v2701
    %5704 = vmatpush2.msra.mxu0 %v2700
    %5705 = vmatprep.subr.mxu0 %v2693
    %5706 = vmatpush2.msra.mxu0 %v2692
    %5707 = vmatprep.subr.mxu0 %v2685
    %5708 = vmatpush2.msra.mxu0 %v2684
    %5709 = vmatprep.subr.mxu0 %v2677
    %5710 = vmatpush2.msra.mxu0 %v2676
    %5711 = vmatprep.subr.mxu0 %v2669
    %5712 = vmatpush2.msra.mxu0 %v2668
    %5713 = vmatprep.subr.mxu0 %v2661
    %5714 = vmatpush2.msra.mxu0 %v2660
    %5715 = vmatprep.subr.mxu0 %v2653
    %5716 = vmatpush2.msra.mxu0 %v2652
    %5717 = vmatprep.subr.mxu0 %v2645
    %5718 = vmatpush2.msra.mxu0 %v2644
    %5719 = vmatprep.subr.mxu0 %v2637
    %5720 = vmatpush2.msra.mxu0 %v2636
    %5721 = vmatprep.mubr.f32.mxu0 %v195
    %5722 = vmatmul.mubr.f32.gmra.mxu0 %v194
    %v5723 = vpop.f32.mrf.mxu0
    %v5724 = vadd.f32 %v5653, %v5723
    %v5725 = vpop.f32.mrf.mxu0
    %v5726 = vadd.f32 %v5655, %v5725
    %5727 = vdwg.mxu0
    %5728 = vmatprep.subr.mxu0 %v2885
    %5729 = vmatpush1.msra.mxu0 %v2884
    %5730 = vmatprep.subr.mxu0 %v2877
    %5731 = vmatpush1.msra.mxu0 %v2876
    %5732 = vmatprep.subr.mxu0 %v2869
    %5733 = vmatpush1.msra.mxu0 %v2868
    %5734 = vmatprep.subr.mxu0 %v2861
    %5735 = vmatpush1.msra.mxu0 %v2860
    %5736 = vmatprep.subr.mxu0 %v2853
    %5737 = vmatpush1.msra.mxu0 %v2852
    %5738 = vmatprep.subr.mxu0 %v2845
    %5739 = vmatpush1.msra.mxu0 %v2844
    %5740 = vmatprep.subr.mxu0 %v2837
    %5741 = vmatpush1.msra.mxu0 %v2836
    %5742 = vmatprep.subr.mxu0 %v2829
    %5743 = vmatpush1.msra.mxu0 %v2828
    %5744 = vmatprep.subr.mxu0 %v2821
    %5745 = vmatpush1.msra.mxu0 %v2820
    %5746 = vmatprep.subr.mxu0 %v2813
    %5747 = vmatpush1.msra.mxu0 %v2812
    %5748 = vmatprep.subr.mxu0 %v2805
    %5749 = vmatpush1.msra.mxu0 %v2804
    %5750 = vmatprep.subr.mxu0 %v2797
    %5751 = vmatpush1.msra.mxu0 %v2796
    %5752 = vmatprep.subr.mxu0 %v2789
    %5753 = vmatpush1.msra.mxu0 %v2788
    %5754 = vmatprep.subr.mxu0 %v2781
    %5755 = vmatpush1.msra.mxu0 %v2780
    %5756 = vmatprep.subr.mxu0 %v2773
    %5757 = vmatpush1.msra.mxu0 %v2772
    %5758 = vmatprep.subr.mxu0 %v2765
    %5759 = vmatpush1.msra.mxu0 %v2764
    %5760 = vmatprep.subr.mxu0 %v3013
    %5761 = vmatpush2.msra.mxu0 %v3012
    %5762 = vmatprep.subr.mxu0 %v3005
    %5763 = vmatpush2.msra.mxu0 %v3004
    %5764 = vmatprep.subr.mxu0 %v2997
    %5765 = vmatpush2.msra.mxu0 %v2996
    %5766 = vmatprep.subr.mxu0 %v2989
    %5767 = vmatpush2.msra.mxu0 %v2988
    %5768 = vmatprep.subr.mxu0 %v2981
    %5769 = vmatpush2.msra.mxu0 %v2980
    %5770 = vmatprep.subr.mxu0 %v2973
    %5771 = vmatpush2.msra.mxu0 %v2972
    %5772 = vmatprep.subr.mxu0 %v2965
    %5773 = vmatpush2.msra.mxu0 %v2964
    %5774 = vmatprep.subr.mxu0 %v2957
    %5775 = vmatpush2.msra.mxu0 %v2956
    %5776 = vmatprep.subr.mxu0 %v2949
    %5777 = vmatpush2.msra.mxu0 %v2948
    %5778 = vmatprep.subr.mxu0 %v2941
    %5779 = vmatpush2.msra.mxu0 %v2940
    %5780 = vmatprep.subr.mxu0 %v2933
    %5781 = vmatpush2.msra.mxu0 %v2932
    %5782 = vmatprep.subr.mxu0 %v2925
    %5783 = vmatpush2.msra.mxu0 %v2924
    %5784 = vmatprep.subr.mxu0 %v2917
    %5785 = vmatpush2.msra.mxu0 %v2916
    %5786 = vmatprep.subr.mxu0 %v2909
    %5787 = vmatpush2.msra.mxu0 %v2908
    %5788 = vmatprep.subr.mxu0 %v2901
    %5789 = vmatpush2.msra.mxu0 %v2900
    %5790 = vmatprep.subr.mxu0 %v2893
    %5791 = vmatpush2.msra.mxu0 %v2892
    %5792 = vmatprep.mubr.f32.mxu0 %v197
    %5793 = vmatmul.mubr.f32.gmra.mxu0 %v196
    %v5794 = vpop.f32.mrf.mxu0
    %v5795 = vadd.f32 %v5724, %v5794
    %v5796 = vpop.f32.mrf.mxu0
    %v5797 = vadd.f32 %v5726, %v5796
    %5798 = vdwg.mxu0
    %5799 = vmatprep.subr.mxu0 %v3141
    %5800 = vmatpush1.msra.mxu0 %v3140
    %5801 = vmatprep.subr.mxu0 %v3133
    %5802 = vmatpush1.msra.mxu0 %v3132
    %5803 = vmatprep.subr.mxu0 %v3125
    %5804 = vmatpush1.msra.mxu0 %v3124
    %5805 = vmatprep.subr.mxu0 %v3117
    %5806 = vmatpush1.msra.mxu0 %v3116
    %5807 = vmatprep.subr.mxu0 %v3109
    %5808 = vmatpush1.msra.mxu0 %v3108
    %5809 = vmatprep.subr.mxu0 %v3101
    %5810 = vmatpush1.msra.mxu0 %v3100
    %5811 = vmatprep.subr.mxu0 %v3093
    %5812 = vmatpush1.msra.mxu0 %v3092
    %5813 = vmatprep.subr.mxu0 %v3085
    %5814 = vmatpush1.msra.mxu0 %v3084
    %5815 = vmatprep.subr.mxu0 %v3077
    %5816 = vmatpush1.msra.mxu0 %v3076
    %5817 = vmatprep.subr.mxu0 %v3069
    %5818 = vmatpush1.msra.mxu0 %v3068
    %5819 = vmatprep.subr.mxu0 %v3061
    %5820 = vmatpush1.msra.mxu0 %v3060
    %5821 = vmatprep.subr.mxu0 %v3053
    %5822 = vmatpush1.msra.mxu0 %v3052
    %5823 = vmatprep.subr.mxu0 %v3045
    %5824 = vmatpush1.msra.mxu0 %v3044
    %5825 = vmatprep.subr.mxu0 %v3037
    %5826 = vmatpush1.msra.mxu0 %v3036
    %5827 = vmatprep.subr.mxu0 %v3029
    %5828 = vmatpush1.msra.mxu0 %v3028
    %5829 = vmatprep.subr.mxu0 %v3021
    %5830 = vmatpush1.msra.mxu0 %v3020
    %5831 = vmatprep.subr.mxu0 %v3269
    %5832 = vmatpush2.msra.mxu0 %v3268
    %5833 = vmatprep.subr.mxu0 %v3261
    %5834 = vmatpush2.msra.mxu0 %v3260
    %5835 = vmatprep.subr.mxu0 %v3253
    %5836 = vmatpush2.msra.mxu0 %v3252
    %5837 = vmatprep.subr.mxu0 %v3245
    %5838 = vmatpush2.msra.mxu0 %v3244
    %5839 = vmatprep.subr.mxu0 %v3237
    %5840 = vmatpush2.msra.mxu0 %v3236
    %5841 = vmatprep.subr.mxu0 %v3229
    %5842 = vmatpush2.msra.mxu0 %v3228
    %5843 = vmatprep.subr.mxu0 %v3221
    %5844 = vmatpush2.msra.mxu0 %v3220
    %5845 = vmatprep.subr.mxu0 %v3213
    %5846 = vmatpush2.msra.mxu0 %v3212
    %5847 = vmatprep.subr.mxu0 %v3205
    %5848 = vmatpush2.msra.mxu0 %v3204
    %5849 = vmatprep.subr.mxu0 %v3197
    %5850 = vmatpush2.msra.mxu0 %v3196
    %5851 = vmatprep.subr.mxu0 %v3189
    %5852 = vmatpush2.msra.mxu0 %v3188
    %5853 = vmatprep.subr.mxu0 %v3181
    %5854 = vmatpush2.msra.mxu0 %v3180
    %5855 = vmatprep.subr.mxu0 %v3173
    %5856 = vmatpush2.msra.mxu0 %v3172
    %5857 = vmatprep.subr.mxu0 %v3165
    %5858 = vmatpush2.msra.mxu0 %v3164
    %5859 = vmatprep.subr.mxu0 %v3157
    %5860 = vmatpush2.msra.mxu0 %v3156
    %5861 = vmatprep.subr.mxu0 %v3149
    %5862 = vmatpush2.msra.mxu0 %v3148
    %5863 = vmatprep.mubr.f32.mxu0 %v199
    %5864 = vmatmul.mubr.f32.gmra.mxu0 %v198
    %v5865 = vpop.f32.mrf.mxu0
    %v5866 = vadd.f32 %v5795, %v5865
    %v5867 = vpop.f32.mrf.mxu0
    %v5868 = vadd.f32 %v5797, %v5867
    %5869 = vdwg.mxu0
    %5870 = vmatprep.subr.mxu0 %v327
    %5871 = vmatpush1.msra.mxu0 %v326
    %5872 = vmatprep.subr.mxu0 %v319
    %5873 = vmatpush1.msra.mxu0 %v318
    %5874 = vmatprep.subr.mxu0 %v311
    %5875 = vmatpush1.msra.mxu0 %v310
    %5876 = vmatprep.subr.mxu0 %v303
    %5877 = vmatpush1.msra.mxu0 %v302
    %5878 = vmatprep.subr.mxu0 %v295
    %5879 = vmatpush1.msra.mxu0 %v294
    %5880 = vmatprep.subr.mxu0 %v287
    %5881 = vmatpush1.msra.mxu0 %v286
    %5882 = vmatprep.subr.mxu0 %v279
    %5883 = vmatpush1.msra.mxu0 %v278
    %5884 = vmatprep.subr.mxu0 %v271
    %5885 = vmatpush1.msra.mxu0 %v270
    %5886 = vmatprep.subr.mxu0 %v263
    %5887 = vmatpush1.msra.mxu0 %v262
    %5888 = vmatprep.subr.mxu0 %v255
    %5889 = vmatpush1.msra.mxu0 %v254
    %5890 = vmatprep.subr.mxu0 %v247
    %5891 = vmatpush1.msra.mxu0 %v246
    %5892 = vmatprep.subr.mxu0 %v239
    %5893 = vmatpush1.msra.mxu0 %v238
    %5894 = vmatprep.subr.mxu0 %v231
    %5895 = vmatpush1.msra.mxu0 %v230
    %5896 = vmatprep.subr.mxu0 %v223
    %5897 = vmatpush1.msra.mxu0 %v222
    %5898 = vmatprep.subr.mxu0 %v215
    %5899 = vmatpush1.msra.mxu0 %v214
    %5900 = vmatprep.subr.mxu0 %v207
    %5901 = vmatpush1.msra.mxu0 %v206
    %5902 = vmatprep.subr.mxu0 %v455
    %5903 = vmatpush2.msra.mxu0 %v454
    %5904 = vmatprep.subr.mxu0 %v447
    %5905 = vmatpush2.msra.mxu0 %v446
    %5906 = vmatprep.subr.mxu0 %v439
    %5907 = vmatpush2.msra.mxu0 %v438
    %5908 = vmatprep.subr.mxu0 %v431
    %5909 = vmatpush2.msra.mxu0 %v430
    %5910 = vmatprep.subr.mxu0 %v423
    %5911 = vmatpush2.msra.mxu0 %v422
    %5912 = vmatprep.subr.mxu0 %v415
    %5913 = vmatpush2.msra.mxu0 %v414
    %5914 = vmatprep.subr.mxu0 %v407
    %5915 = vmatpush2.msra.mxu0 %v406
    %5916 = vmatprep.subr.mxu0 %v399
    %5917 = vmatpush2.msra.mxu0 %v398
    %5918 = vmatprep.subr.mxu0 %v391
    %5919 = vmatpush2.msra.mxu0 %v390
    %5920 = vmatprep.subr.mxu0 %v383
    %5921 = vmatpush2.msra.mxu0 %v382
    %5922 = vmatprep.subr.mxu0 %v375
    %5923 = vmatpush2.msra.mxu0 %v374
    %5924 = vmatprep.subr.mxu0 %v367
    %5925 = vmatpush2.msra.mxu0 %v366
    %5926 = vmatprep.subr.mxu0 %v359
    %5927 = vmatpush2.msra.mxu0 %v358
    %5928 = vmatprep.subr.mxu0 %v351
    %5929 = vmatpush2.msra.mxu0 %v350
    %5930 = vmatprep.subr.mxu0 %v343
    %5931 = vmatpush2.msra.mxu0 %v342
    %5932 = vmatprep.subr.mxu0 %v335
    %5933 = vmatpush2.msra.mxu0 %v334
    %5934 = vmatprep.mubr.f32.mxu0 %v177
    %5935 = vmatmul.mubr.f32.gmra.mxu0 %v176
    %v5936 = vpop.f32.mrf.mxu0
    %v5937 = vadd.f32 %v3301, %v5936
    %v5938 = vpop.f32.mrf.mxu0
    %v5939 = vadd.f32 %v3305, %v5938
    %5940 = vdwg.mxu0
    %5941 = vmatprep.subr.mxu0 %v583
    %5942 = vmatpush1.msra.mxu0 %v582
    %5943 = vmatprep.subr.mxu0 %v575
    %5944 = vmatpush1.msra.mxu0 %v574
    %5945 = vmatprep.subr.mxu0 %v567
    %5946 = vmatpush1.msra.mxu0 %v566
    %5947 = vmatprep.subr.mxu0 %v559
    %5948 = vmatpush1.msra.mxu0 %v558
    %5949 = vmatprep.subr.mxu0 %v551
    %5950 = vmatpush1.msra.mxu0 %v550
    %5951 = vmatprep.subr.mxu0 %v543
    %5952 = vmatpush1.msra.mxu0 %v542
    %5953 = vmatprep.subr.mxu0 %v535
    %5954 = vmatpush1.msra.mxu0 %v534
    %5955 = vmatprep.subr.mxu0 %v527
    %5956 = vmatpush1.msra.mxu0 %v526
    %5957 = vmatprep.subr.mxu0 %v519
    %5958 = vmatpush1.msra.mxu0 %v518
    %5959 = vmatprep.subr.mxu0 %v511
    %5960 = vmatpush1.msra.mxu0 %v510
    %5961 = vmatprep.subr.mxu0 %v503
    %5962 = vmatpush1.msra.mxu0 %v502
    %5963 = vmatprep.subr.mxu0 %v495
    %5964 = vmatpush1.msra.mxu0 %v494
    %5965 = vmatprep.subr.mxu0 %v487
    %5966 = vmatpush1.msra.mxu0 %v486
    %5967 = vmatprep.subr.mxu0 %v479
    %5968 = vmatpush1.msra.mxu0 %v478
    %5969 = vmatprep.subr.mxu0 %v471
    %5970 = vmatpush1.msra.mxu0 %v470
    %5971 = vmatprep.subr.mxu0 %v463
    %5972 = vmatpush1.msra.mxu0 %v462
    %5973 = vmatprep.subr.mxu0 %v711
    %5974 = vmatpush2.msra.mxu0 %v710
    %5975 = vmatprep.subr.mxu0 %v703
    %5976 = vmatpush2.msra.mxu0 %v702
    %5977 = vmatprep.subr.mxu0 %v695
    %5978 = vmatpush2.msra.mxu0 %v694
    %5979 = vmatprep.subr.mxu0 %v687
    %5980 = vmatpush2.msra.mxu0 %v686
    %5981 = vmatprep.subr.mxu0 %v679
    %5982 = vmatpush2.msra.mxu0 %v678
    %5983 = vmatprep.subr.mxu0 %v671
    %5984 = vmatpush2.msra.mxu0 %v670
    %5985 = vmatprep.subr.mxu0 %v663
    %5986 = vmatpush2.msra.mxu0 %v662
    %5987 = vmatprep.subr.mxu0 %v655
    %5988 = vmatpush2.msra.mxu0 %v654
    %5989 = vmatprep.subr.mxu0 %v647
    %5990 = vmatpush2.msra.mxu0 %v646
    %5991 = vmatprep.subr.mxu0 %v639
    %5992 = vmatpush2.msra.mxu0 %v638
    %5993 = vmatprep.subr.mxu0 %v631
    %5994 = vmatpush2.msra.mxu0 %v630
    %5995 = vmatprep.subr.mxu0 %v623
    %5996 = vmatpush2.msra.mxu0 %v622
    %5997 = vmatprep.subr.mxu0 %v615
    %5998 = vmatpush2.msra.mxu0 %v614
    %5999 = vmatprep.subr.mxu0 %v607
    %6000 = vmatpush2.msra.mxu0 %v606
    %6001 = vmatprep.subr.mxu0 %v599
    %6002 = vmatpush2.msra.mxu0 %v598
    %6003 = vmatprep.subr.mxu0 %v591
    %6004 = vmatpush2.msra.mxu0 %v590
    %6005 = vmatprep.mubr.f32.mxu0 %v179
    %6006 = vmatmul.mubr.f32.gmra.mxu0 %v178
    %v6007 = vpop.f32.mrf.mxu0
    %v6008 = vadd.f32 %v5937, %v6007
    %v6009 = vpop.f32.mrf.mxu0
    %v6010 = vadd.f32 %v5939, %v6009
    %6011 = vdwg.mxu0
    %6012 = vmatprep.subr.mxu0 %v839
    %6013 = vmatpush1.msra.mxu0 %v838
    %6014 = vmatprep.subr.mxu0 %v831
    %6015 = vmatpush1.msra.mxu0 %v830
    %6016 = vmatprep.subr.mxu0 %v823
    %6017 = vmatpush1.msra.mxu0 %v822
    %6018 = vmatprep.subr.mxu0 %v815
    %6019 = vmatpush1.msra.mxu0 %v814
    %6020 = vmatprep.subr.mxu0 %v807
    %6021 = vmatpush1.msra.mxu0 %v806
    %6022 = vmatprep.subr.mxu0 %v799
    %6023 = vmatpush1.msra.mxu0 %v798
    %6024 = vmatprep.subr.mxu0 %v791
    %6025 = vmatpush1.msra.mxu0 %v790
    %6026 = vmatprep.subr.mxu0 %v783
    %6027 = vmatpush1.msra.mxu0 %v782
    %6028 = vmatprep.subr.mxu0 %v775
    %6029 = vmatpush1.msra.mxu0 %v774
    %6030 = vmatprep.subr.mxu0 %v767
    %6031 = vmatpush1.msra.mxu0 %v766
    %6032 = vmatprep.subr.mxu0 %v759
    %6033 = vmatpush1.msra.mxu0 %v758
    %6034 = vmatprep.subr.mxu0 %v751
    %6035 = vmatpush1.msra.mxu0 %v750
    %6036 = vmatprep.subr.mxu0 %v743
    %6037 = vmatpush1.msra.mxu0 %v742
    %6038 = vmatprep.subr.mxu0 %v735
    %6039 = vmatpush1.msra.mxu0 %v734
    %6040 = vmatprep.subr.mxu0 %v727
    %6041 = vmatpush1.msra.mxu0 %v726
    %6042 = vmatprep.subr.mxu0 %v719
    %6043 = vmatpush1.msra.mxu0 %v718
    %6044 = vmatprep.subr.mxu0 %v967
    %6045 = vmatpush2.msra.mxu0 %v966
    %6046 = vmatprep.subr.mxu0 %v959
    %6047 = vmatpush2.msra.mxu0 %v958
    %6048 = vmatprep.subr.mxu0 %v951
    %6049 = vmatpush2.msra.mxu0 %v950
    %6050 = vmatprep.subr.mxu0 %v943
    %6051 = vmatpush2.msra.mxu0 %v942
    %6052 = vmatprep.subr.mxu0 %v935
    %6053 = vmatpush2.msra.mxu0 %v934
    %6054 = vmatprep.subr.mxu0 %v927
    %6055 = vmatpush2.msra.mxu0 %v926
    %6056 = vmatprep.subr.mxu0 %v919
    %6057 = vmatpush2.msra.mxu0 %v918
    %6058 = vmatprep.subr.mxu0 %v911
    %6059 = vmatpush2.msra.mxu0 %v910
    %6060 = vmatprep.subr.mxu0 %v903
    %6061 = vmatpush2.msra.mxu0 %v902
    %6062 = vmatprep.subr.mxu0 %v895
    %6063 = vmatpush2.msra.mxu0 %v894
    %6064 = vmatprep.subr.mxu0 %v887
    %6065 = vmatpush2.msra.mxu0 %v886
    %6066 = vmatprep.subr.mxu0 %v879
    %6067 = vmatpush2.msra.mxu0 %v878
    %6068 = vmatprep.subr.mxu0 %v871
    %6069 = vmatpush2.msra.mxu0 %v870
    %6070 = vmatprep.subr.mxu0 %v863
    %6071 = vmatpush2.msra.mxu0 %v862
    %6072 = vmatprep.subr.mxu0 %v855
    %6073 = vmatpush2.msra.mxu0 %v854
    %6074 = vmatprep.subr.mxu0 %v847
    %6075 = vmatpush2.msra.mxu0 %v846
    %6076 = vmatprep.mubr.f32.mxu0 %v181
    %6077 = vmatmul.mubr.f32.gmra.mxu0 %v180
    %v6078 = vpop.f32.mrf.mxu0
    %v6079 = vadd.f32 %v6008, %v6078
    %v6080 = vpop.f32.mrf.mxu0
    %v6081 = vadd.f32 %v6010, %v6080
    %6082 = vdwg.mxu0
    %6083 = vmatprep.subr.mxu0 %v1095
    %6084 = vmatpush1.msra.mxu0 %v1094
    %6085 = vmatprep.subr.mxu0 %v1087
    %6086 = vmatpush1.msra.mxu0 %v1086
    %6087 = vmatprep.subr.mxu0 %v1079
    %6088 = vmatpush1.msra.mxu0 %v1078
    %6089 = vmatprep.subr.mxu0 %v1071
    %6090 = vmatpush1.msra.mxu0 %v1070
    %6091 = vmatprep.subr.mxu0 %v1063
    %6092 = vmatpush1.msra.mxu0 %v1062
    %6093 = vmatprep.subr.mxu0 %v1055
    %6094 = vmatpush1.msra.mxu0 %v1054
    %6095 = vmatprep.subr.mxu0 %v1047
    %6096 = vmatpush1.msra.mxu0 %v1046
    %6097 = vmatprep.subr.mxu0 %v1039
    %6098 = vmatpush1.msra.mxu0 %v1038
    %6099 = vmatprep.subr.mxu0 %v1031
    %6100 = vmatpush1.msra.mxu0 %v1030
    %6101 = vmatprep.subr.mxu0 %v1023
    %6102 = vmatpush1.msra.mxu0 %v1022
    %6103 = vmatprep.subr.mxu0 %v1015
    %6104 = vmatpush1.msra.mxu0 %v1014
    %6105 = vmatprep.subr.mxu0 %v1007
    %6106 = vmatpush1.msra.mxu0 %v1006
    %6107 = vmatprep.subr.mxu0 %v999
    %6108 = vmatpush1.msra.mxu0 %v998
    %6109 = vmatprep.subr.mxu0 %v991
    %6110 = vmatpush1.msra.mxu0 %v990
    %6111 = vmatprep.subr.mxu0 %v983
    %6112 = vmatpush1.msra.mxu0 %v982
    %6113 = vmatprep.subr.mxu0 %v975
    %6114 = vmatpush1.msra.mxu0 %v974
    %6115 = vmatprep.subr.mxu0 %v1223
    %6116 = vmatpush2.msra.mxu0 %v1222
    %6117 = vmatprep.subr.mxu0 %v1215
    %6118 = vmatpush2.msra.mxu0 %v1214
    %6119 = vmatprep.subr.mxu0 %v1207
    %6120 = vmatpush2.msra.mxu0 %v1206
    %6121 = vmatprep.subr.mxu0 %v1199
    %6122 = vmatpush2.msra.mxu0 %v1198
    %6123 = vmatprep.subr.mxu0 %v1191
    %6124 = vmatpush2.msra.mxu0 %v1190
    %6125 = vmatprep.subr.mxu0 %v1183
    %6126 = vmatpush2.msra.mxu0 %v1182
    %6127 = vmatprep.subr.mxu0 %v1175
    %6128 = vmatpush2.msra.mxu0 %v1174
    %6129 = vmatprep.subr.mxu0 %v1167
    %6130 = vmatpush2.msra.mxu0 %v1166
    %6131 = vmatprep.subr.mxu0 %v1159
    %6132 = vmatpush2.msra.mxu0 %v1158
    %6133 = vmatprep.subr.mxu0 %v1151
    %6134 = vmatpush2.msra.mxu0 %v1150
    %6135 = vmatprep.subr.mxu0 %v1143
    %6136 = vmatpush2.msra.mxu0 %v1142
    %6137 = vmatprep.subr.mxu0 %v1135
    %6138 = vmatpush2.msra.mxu0 %v1134
    %6139 = vmatprep.subr.mxu0 %v1127
    %6140 = vmatpush2.msra.mxu0 %v1126
    %6141 = vmatprep.subr.mxu0 %v1119
    %6142 = vmatpush2.msra.mxu0 %v1118
    %6143 = vmatprep.subr.mxu0 %v1111
    %6144 = vmatpush2.msra.mxu0 %v1110
    %6145 = vmatprep.subr.mxu0 %v1103
    %6146 = vmatpush2.msra.mxu0 %v1102
    %6147 = vmatprep.mubr.f32.mxu0 %v183
    %6148 = vmatmul.mubr.f32.gmra.mxu0 %v182
    %v6149 = vpop.f32.mrf.mxu0
    %v6150 = vadd.f32 %v6079, %v6149
    %v6151 = vpop.f32.mrf.mxu0
    %v6152 = vadd.f32 %v6081, %v6151
    %6153 = vdwg.mxu0
    %6154 = vmatprep.subr.mxu0 %v1351
    %6155 = vmatpush1.msra.mxu0 %v1350
    %6156 = vmatprep.subr.mxu0 %v1343
    %6157 = vmatpush1.msra.mxu0 %v1342
    %6158 = vmatprep.subr.mxu0 %v1335
    %6159 = vmatpush1.msra.mxu0 %v1334
    %6160 = vmatprep.subr.mxu0 %v1327
    %6161 = vmatpush1.msra.mxu0 %v1326
    %6162 = vmatprep.subr.mxu0 %v1319
    %6163 = vmatpush1.msra.mxu0 %v1318
    %6164 = vmatprep.subr.mxu0 %v1311
    %6165 = vmatpush1.msra.mxu0 %v1310
    %6166 = vmatprep.subr.mxu0 %v1303
    %6167 = vmatpush1.msra.mxu0 %v1302
    %6168 = vmatprep.subr.mxu0 %v1295
    %6169 = vmatpush1.msra.mxu0 %v1294
    %6170 = vmatprep.subr.mxu0 %v1287
    %6171 = vmatpush1.msra.mxu0 %v1286
    %6172 = vmatprep.subr.mxu0 %v1279
    %6173 = vmatpush1.msra.mxu0 %v1278
    %6174 = vmatprep.subr.mxu0 %v1271
    %6175 = vmatpush1.msra.mxu0 %v1270
    %6176 = vmatprep.subr.mxu0 %v1263
    %6177 = vmatpush1.msra.mxu0 %v1262
    %6178 = vmatprep.subr.mxu0 %v1255
    %6179 = vmatpush1.msra.mxu0 %v1254
    %6180 = vmatprep.subr.mxu0 %v1247
    %6181 = vmatpush1.msra.mxu0 %v1246
    %6182 = vmatprep.subr.mxu0 %v1239
    %6183 = vmatpush1.msra.mxu0 %v1238
    %6184 = vmatprep.subr.mxu0 %v1231
    %6185 = vmatpush1.msra.mxu0 %v1230
    %6186 = vmatprep.subr.mxu0 %v1479
    %6187 = vmatpush2.msra.mxu0 %v1478
    %6188 = vmatprep.subr.mxu0 %v1471
    %6189 = vmatpush2.msra.mxu0 %v1470
    %6190 = vmatprep.subr.mxu0 %v1463
    %6191 = vmatpush2.msra.mxu0 %v1462
    %6192 = vmatprep.subr.mxu0 %v1455
    %6193 = vmatpush2.msra.mxu0 %v1454
    %6194 = vmatprep.subr.mxu0 %v1447
    %6195 = vmatpush2.msra.mxu0 %v1446
    %6196 = vmatprep.subr.mxu0 %v1439
    %6197 = vmatpush2.msra.mxu0 %v1438
    %6198 = vmatprep.subr.mxu0 %v1431
    %6199 = vmatpush2.msra.mxu0 %v1430
    %6200 = vmatprep.subr.mxu0 %v1423
    %6201 = vmatpush2.msra.mxu0 %v1422
    %6202 = vmatprep.subr.mxu0 %v1415
    %6203 = vmatpush2.msra.mxu0 %v1414
    %6204 = vmatprep.subr.mxu0 %v1407
    %6205 = vmatpush2.msra.mxu0 %v1406
    %6206 = vmatprep.subr.mxu0 %v1399
    %6207 = vmatpush2.msra.mxu0 %v1398
    %6208 = vmatprep.subr.mxu0 %v1391
    %6209 = vmatpush2.msra.mxu0 %v1390
    %6210 = vmatprep.subr.mxu0 %v1383
    %6211 = vmatpush2.msra.mxu0 %v1382
    %6212 = vmatprep.subr.mxu0 %v1375
    %6213 = vmatpush2.msra.mxu0 %v1374
    %6214 = vmatprep.subr.mxu0 %v1367
    %6215 = vmatpush2.msra.mxu0 %v1366
    %6216 = vmatprep.subr.mxu0 %v1359
    %6217 = vmatpush2.msra.mxu0 %v1358
    %6218 = vmatprep.mubr.f32.mxu0 %v185
    %6219 = vmatmul.mubr.f32.gmra.mxu0 %v184
    %v6220 = vpop.f32.mrf.mxu0
    %v6221 = vadd.f32 %v6150, %v6220
    %v6222 = vpop.f32.mrf.mxu0
    %v6223 = vadd.f32 %v6152, %v6222
    %6224 = vdwg.mxu0
    %6225 = vmatprep.subr.mxu0 %v1607
    %6226 = vmatpush1.msra.mxu0 %v1606
    %6227 = vmatprep.subr.mxu0 %v1599
    %6228 = vmatpush1.msra.mxu0 %v1598
    %6229 = vmatprep.subr.mxu0 %v1591
    %6230 = vmatpush1.msra.mxu0 %v1590
    %6231 = vmatprep.subr.mxu0 %v1583
    %6232 = vmatpush1.msra.mxu0 %v1582
    %6233 = vmatprep.subr.mxu0 %v1575
    %6234 = vmatpush1.msra.mxu0 %v1574
    %6235 = vmatprep.subr.mxu0 %v1567
    %6236 = vmatpush1.msra.mxu0 %v1566
    %6237 = vmatprep.subr.mxu0 %v1559
    %6238 = vmatpush1.msra.mxu0 %v1558
    %6239 = vmatprep.subr.mxu0 %v1551
    %6240 = vmatpush1.msra.mxu0 %v1550
    %6241 = vmatprep.subr.mxu0 %v1543
    %6242 = vmatpush1.msra.mxu0 %v1542
    %6243 = vmatprep.subr.mxu0 %v1535
    %6244 = vmatpush1.msra.mxu0 %v1534
    %6245 = vmatprep.subr.mxu0 %v1527
    %6246 = vmatpush1.msra.mxu0 %v1526
    %6247 = vmatprep.subr.mxu0 %v1519
    %6248 = vmatpush1.msra.mxu0 %v1518
    %6249 = vmatprep.subr.mxu0 %v1511
    %6250 = vmatpush1.msra.mxu0 %v1510
    %6251 = vmatprep.subr.mxu0 %v1503
    %6252 = vmatpush1.msra.mxu0 %v1502
    %6253 = vmatprep.subr.mxu0 %v1495
    %6254 = vmatpush1.msra.mxu0 %v1494
    %6255 = vmatprep.subr.mxu0 %v1487
    %6256 = vmatpush1.msra.mxu0 %v1486
    %6257 = vmatprep.subr.mxu0 %v1735
    %6258 = vmatpush2.msra.mxu0 %v1734
    %6259 = vmatprep.subr.mxu0 %v1727
    %6260 = vmatpush2.msra.mxu0 %v1726
    %6261 = vmatprep.subr.mxu0 %v1719
    %6262 = vmatpush2.msra.mxu0 %v1718
    %6263 = vmatprep.subr.mxu0 %v1711
    %6264 = vmatpush2.msra.mxu0 %v1710
    %6265 = vmatprep.subr.mxu0 %v1703
    %6266 = vmatpush2.msra.mxu0 %v1702
    %6267 = vmatprep.subr.mxu0 %v1695
    %6268 = vmatpush2.msra.mxu0 %v1694
    %6269 = vmatprep.subr.mxu0 %v1687
    %6270 = vmatpush2.msra.mxu0 %v1686
    %6271 = vmatprep.subr.mxu0 %v1679
    %6272 = vmatpush2.msra.mxu0 %v1678
    %6273 = vmatprep.subr.mxu0 %v1671
    %6274 = vmatpush2.msra.mxu0 %v1670
    %6275 = vmatprep.subr.mxu0 %v1663
    %6276 = vmatpush2.msra.mxu0 %v1662
    %6277 = vmatprep.subr.mxu0 %v1655
    %6278 = vmatpush2.msra.mxu0 %v1654
    %6279 = vmatprep.subr.mxu0 %v1647
    %6280 = vmatpush2.msra.mxu0 %v1646
    %6281 = vmatprep.subr.mxu0 %v1639
    %6282 = vmatpush2.msra.mxu0 %v1638
    %6283 = vmatprep.subr.mxu0 %v1631
    %6284 = vmatpush2.msra.mxu0 %v1630
    %6285 = vmatprep.subr.mxu0 %v1623
    %6286 = vmatpush2.msra.mxu0 %v1622
    %6287 = vmatprep.subr.mxu0 %v1615
    %6288 = vmatpush2.msra.mxu0 %v1614
    %6289 = vmatprep.mubr.f32.mxu0 %v187
    %6290 = vmatmul.mubr.f32.gmra.mxu0 %v186
    %v6291 = vpop.f32.mrf.mxu0
    %v6292 = vadd.f32 %v6221, %v6291
    %v6293 = vpop.f32.mrf.mxu0
    %v6294 = vadd.f32 %v6223, %v6293
    %6295 = vdwg.mxu0
    %6296 = vmatprep.subr.mxu0 %v1863
    %6297 = vmatpush1.msra.mxu0 %v1862
    %6298 = vmatprep.subr.mxu0 %v1855
    %6299 = vmatpush1.msra.mxu0 %v1854
    %6300 = vmatprep.subr.mxu0 %v1847
    %6301 = vmatpush1.msra.mxu0 %v1846
    %6302 = vmatprep.subr.mxu0 %v1839
    %6303 = vmatpush1.msra.mxu0 %v1838
    %6304 = vmatprep.subr.mxu0 %v1831
    %6305 = vmatpush1.msra.mxu0 %v1830
    %6306 = vmatprep.subr.mxu0 %v1823
    %6307 = vmatpush1.msra.mxu0 %v1822
    %6308 = vmatprep.subr.mxu0 %v1815
    %6309 = vmatpush1.msra.mxu0 %v1814
    %6310 = vmatprep.subr.mxu0 %v1807
    %6311 = vmatpush1.msra.mxu0 %v1806
    %6312 = vmatprep.subr.mxu0 %v1799
    %6313 = vmatpush1.msra.mxu0 %v1798
    %6314 = vmatprep.subr.mxu0 %v1791
    %6315 = vmatpush1.msra.mxu0 %v1790
    %6316 = vmatprep.subr.mxu0 %v1783
    %6317 = vmatpush1.msra.mxu0 %v1782
    %6318 = vmatprep.subr.mxu0 %v1775
    %6319 = vmatpush1.msra.mxu0 %v1774
    %6320 = vmatprep.subr.mxu0 %v1767
    %6321 = vmatpush1.msra.mxu0 %v1766
    %6322 = vmatprep.subr.mxu0 %v1759
    %6323 = vmatpush1.msra.mxu0 %v1758
    %6324 = vmatprep.subr.mxu0 %v1751
    %6325 = vmatpush1.msra.mxu0 %v1750
    %6326 = vmatprep.subr.mxu0 %v1743
    %6327 = vmatpush1.msra.mxu0 %v1742
    %6328 = vmatprep.subr.mxu0 %v1991
    %6329 = vmatpush2.msra.mxu0 %v1990
    %6330 = vmatprep.subr.mxu0 %v1983
    %6331 = vmatpush2.msra.mxu0 %v1982
    %6332 = vmatprep.subr.mxu0 %v1975
    %6333 = vmatpush2.msra.mxu0 %v1974
    %6334 = vmatprep.subr.mxu0 %v1967
    %6335 = vmatpush2.msra.mxu0 %v1966
    %6336 = vmatprep.subr.mxu0 %v1959
    %6337 = vmatpush2.msra.mxu0 %v1958
    %6338 = vmatprep.subr.mxu0 %v1951
    %6339 = vmatpush2.msra.mxu0 %v1950
    %6340 = vmatprep.subr.mxu0 %v1943
    %6341 = vmatpush2.msra.mxu0 %v1942
    %6342 = vmatprep.subr.mxu0 %v1935
    %6343 = vmatpush2.msra.mxu0 %v1934
    %6344 = vmatprep.subr.mxu0 %v1927
    %6345 = vmatpush2.msra.mxu0 %v1926
    %6346 = vmatprep.subr.mxu0 %v1919
    %6347 = vmatpush2.msra.mxu0 %v1918
    %6348 = vmatprep.subr.mxu0 %v1911
    %6349 = vmatpush2.msra.mxu0 %v1910
    %6350 = vmatprep.subr.mxu0 %v1903
    %6351 = vmatpush2.msra.mxu0 %v1902
    %6352 = vmatprep.subr.mxu0 %v1895
    %6353 = vmatpush2.msra.mxu0 %v1894
    %6354 = vmatprep.subr.mxu0 %v1887
    %6355 = vmatpush2.msra.mxu0 %v1886
    %6356 = vmatprep.subr.mxu0 %v1879
    %6357 = vmatpush2.msra.mxu0 %v1878
    %6358 = vmatprep.subr.mxu0 %v1871
    %6359 = vmatpush2.msra.mxu0 %v1870
    %6360 = vmatprep.mubr.f32.mxu0 %v189
    %6361 = vmatmul.mubr.f32.gmra.mxu0 %v188
    %v6362 = vpop.f32.mrf.mxu0
    %v6363 = vadd.f32 %v6292, %v6362
    %v6364 = vpop.f32.mrf.mxu0
    %v6365 = vadd.f32 %v6294, %v6364
    %6366 = vdwg.mxu0
    %6367 = vmatprep.subr.mxu0 %v2119
    %6368 = vmatpush1.msra.mxu0 %v2118
    %6369 = vmatprep.subr.mxu0 %v2111
    %6370 = vmatpush1.msra.mxu0 %v2110
    %6371 = vmatprep.subr.mxu0 %v2103
    %6372 = vmatpush1.msra.mxu0 %v2102
    %6373 = vmatprep.subr.mxu0 %v2095
    %6374 = vmatpush1.msra.mxu0 %v2094
    %6375 = vmatprep.subr.mxu0 %v2087
    %6376 = vmatpush1.msra.mxu0 %v2086
    %6377 = vmatprep.subr.mxu0 %v2079
    %6378 = vmatpush1.msra.mxu0 %v2078
    %6379 = vmatprep.subr.mxu0 %v2071
    %6380 = vmatpush1.msra.mxu0 %v2070
    %6381 = vmatprep.subr.mxu0 %v2063
    %6382 = vmatpush1.msra.mxu0 %v2062
    %6383 = vmatprep.subr.mxu0 %v2055
    %6384 = vmatpush1.msra.mxu0 %v2054
    %6385 = vmatprep.subr.mxu0 %v2047
    %6386 = vmatpush1.msra.mxu0 %v2046
    %6387 = vmatprep.subr.mxu0 %v2039
    %6388 = vmatpush1.msra.mxu0 %v2038
    %6389 = vmatprep.subr.mxu0 %v2031
    %6390 = vmatpush1.msra.mxu0 %v2030
    %6391 = vmatprep.subr.mxu0 %v2023
    %6392 = vmatpush1.msra.mxu0 %v2022
    %6393 = vmatprep.subr.mxu0 %v2015
    %6394 = vmatpush1.msra.mxu0 %v2014
    %6395 = vmatprep.subr.mxu0 %v2007
    %6396 = vmatpush1.msra.mxu0 %v2006
    %6397 = vmatprep.subr.mxu0 %v1999
    %6398 = vmatpush1.msra.mxu0 %v1998
    %6399 = vmatprep.subr.mxu0 %v2247
    %6400 = vmatpush2.msra.mxu0 %v2246
    %6401 = vmatprep.subr.mxu0 %v2239
    %6402 = vmatpush2.msra.mxu0 %v2238
    %6403 = vmatprep.subr.mxu0 %v2231
    %6404 = vmatpush2.msra.mxu0 %v2230
    %6405 = vmatprep.subr.mxu0 %v2223
    %6406 = vmatpush2.msra.mxu0 %v2222
    %6407 = vmatprep.subr.mxu0 %v2215
    %6408 = vmatpush2.msra.mxu0 %v2214
    %6409 = vmatprep.subr.mxu0 %v2207
    %6410 = vmatpush2.msra.mxu0 %v2206
    %6411 = vmatprep.subr.mxu0 %v2199
    %6412 = vmatpush2.msra.mxu0 %v2198
    %6413 = vmatprep.subr.mxu0 %v2191
    %6414 = vmatpush2.msra.mxu0 %v2190
    %6415 = vmatprep.subr.mxu0 %v2183
    %6416 = vmatpush2.msra.mxu0 %v2182
    %6417 = vmatprep.subr.mxu0 %v2175
    %6418 = vmatpush2.msra.mxu0 %v2174
    %6419 = vmatprep.subr.mxu0 %v2167
    %6420 = vmatpush2.msra.mxu0 %v2166
    %6421 = vmatprep.subr.mxu0 %v2159
    %6422 = vmatpush2.msra.mxu0 %v2158
    %6423 = vmatprep.subr.mxu0 %v2151
    %6424 = vmatpush2.msra.mxu0 %v2150
    %6425 = vmatprep.subr.mxu0 %v2143
    %6426 = vmatpush2.msra.mxu0 %v2142
    %6427 = vmatprep.subr.mxu0 %v2135
    %6428 = vmatpush2.msra.mxu0 %v2134
    %6429 = vmatprep.subr.mxu0 %v2127
    %6430 = vmatpush2.msra.mxu0 %v2126
    %6431 = vmatprep.mubr.f32.mxu0 %v191
    %6432 = vmatmul.mubr.f32.gmra.mxu0 %v190
    %v6433 = vpop.f32.mrf.mxu0
    %v6434 = vadd.f32 %v6363, %v6433
    %v6435 = vpop.f32.mrf.mxu0
    %v6436 = vadd.f32 %v6365, %v6435
    %6437 = vdwg.mxu0
    %6438 = vmatprep.subr.mxu0 %v2375
    %6439 = vmatpush1.msra.mxu0 %v2374
    %6440 = vmatprep.subr.mxu0 %v2367
    %6441 = vmatpush1.msra.mxu0 %v2366
    %6442 = vmatprep.subr.mxu0 %v2359
    %6443 = vmatpush1.msra.mxu0 %v2358
    %6444 = vmatprep.subr.mxu0 %v2351
    %6445 = vmatpush1.msra.mxu0 %v2350
    %6446 = vmatprep.subr.mxu0 %v2343
    %6447 = vmatpush1.msra.mxu0 %v2342
    %6448 = vmatprep.subr.mxu0 %v2335
    %6449 = vmatpush1.msra.mxu0 %v2334
    %6450 = vmatprep.subr.mxu0 %v2327
    %6451 = vmatpush1.msra.mxu0 %v2326
    %6452 = vmatprep.subr.mxu0 %v2319
    %6453 = vmatpush1.msra.mxu0 %v2318
    %6454 = vmatprep.subr.mxu0 %v2311
    %6455 = vmatpush1.msra.mxu0 %v2310
    %6456 = vmatprep.subr.mxu0 %v2303
    %6457 = vmatpush1.msra.mxu0 %v2302
    %6458 = vmatprep.subr.mxu0 %v2295
    %6459 = vmatpush1.msra.mxu0 %v2294
    %6460 = vmatprep.subr.mxu0 %v2287
    %6461 = vmatpush1.msra.mxu0 %v2286
    %6462 = vmatprep.subr.mxu0 %v2279
    %6463 = vmatpush1.msra.mxu0 %v2278
    %6464 = vmatprep.subr.mxu0 %v2271
    %6465 = vmatpush1.msra.mxu0 %v2270
    %6466 = vmatprep.subr.mxu0 %v2263
    %6467 = vmatpush1.msra.mxu0 %v2262
    %6468 = vmatprep.subr.mxu0 %v2255
    %6469 = vmatpush1.msra.mxu0 %v2254
    %6470 = vmatprep.subr.mxu0 %v2503
    %6471 = vmatpush2.msra.mxu0 %v2502
    %6472 = vmatprep.subr.mxu0 %v2495
    %6473 = vmatpush2.msra.mxu0 %v2494
    %6474 = vmatprep.subr.mxu0 %v2487
    %6475 = vmatpush2.msra.mxu0 %v2486
    %6476 = vmatprep.subr.mxu0 %v2479
    %6477 = vmatpush2.msra.mxu0 %v2478
    %6478 = vmatprep.subr.mxu0 %v2471
    %6479 = vmatpush2.msra.mxu0 %v2470
    %6480 = vmatprep.subr.mxu0 %v2463
    %6481 = vmatpush2.msra.mxu0 %v2462
    %6482 = vmatprep.subr.mxu0 %v2455
    %6483 = vmatpush2.msra.mxu0 %v2454
    %6484 = vmatprep.subr.mxu0 %v2447
    %6485 = vmatpush2.msra.mxu0 %v2446
    %6486 = vmatprep.subr.mxu0 %v2439
    %6487 = vmatpush2.msra.mxu0 %v2438
    %6488 = vmatprep.subr.mxu0 %v2431
    %6489 = vmatpush2.msra.mxu0 %v2430
    %6490 = vmatprep.subr.mxu0 %v2423
    %6491 = vmatpush2.msra.mxu0 %v2422
    %6492 = vmatprep.subr.mxu0 %v2415
    %6493 = vmatpush2.msra.mxu0 %v2414
    %6494 = vmatprep.subr.mxu0 %v2407
    %6495 = vmatpush2.msra.mxu0 %v2406
    %6496 = vmatprep.subr.mxu0 %v2399
    %6497 = vmatpush2.msra.mxu0 %v2398
    %6498 = vmatprep.subr.mxu0 %v2391
    %6499 = vmatpush2.msra.mxu0 %v2390
    %6500 = vmatprep.subr.mxu0 %v2383
    %6501 = vmatpush2.msra.mxu0 %v2382
    %6502 = vmatprep.mubr.f32.mxu0 %v193
    %6503 = vmatmul.mubr.f32.gmra.mxu0 %v192
    %v6504 = vpop.f32.mrf.mxu0
    %v6505 = vadd.f32 %v6434, %v6504
    %v6506 = vpop.f32.mrf.mxu0
    %v6507 = vadd.f32 %v6436, %v6506
    %6508 = vdwg.mxu0
    %6509 = vmatprep.subr.mxu0 %v2631
    %6510 = vmatpush1.msra.mxu0 %v2630
    %6511 = vmatprep.subr.mxu0 %v2623
    %6512 = vmatpush1.msra.mxu0 %v2622
    %6513 = vmatprep.subr.mxu0 %v2615
    %6514 = vmatpush1.msra.mxu0 %v2614
    %6515 = vmatprep.subr.mxu0 %v2607
    %6516 = vmatpush1.msra.mxu0 %v2606
    %6517 = vmatprep.subr.mxu0 %v2599
    %6518 = vmatpush1.msra.mxu0 %v2598
    %6519 = vmatprep.subr.mxu0 %v2591
    %6520 = vmatpush1.msra.mxu0 %v2590
    %6521 = vmatprep.subr.mxu0 %v2583
    %6522 = vmatpush1.msra.mxu0 %v2582
    %6523 = vmatprep.subr.mxu0 %v2575
    %6524 = vmatpush1.msra.mxu0 %v2574
    %6525 = vmatprep.subr.mxu0 %v2567
    %6526 = vmatpush1.msra.mxu0 %v2566
    %6527 = vmatprep.subr.mxu0 %v2559
    %6528 = vmatpush1.msra.mxu0 %v2558
    %6529 = vmatprep.subr.mxu0 %v2551
    %6530 = vmatpush1.msra.mxu0 %v2550
    %6531 = vmatprep.subr.mxu0 %v2543
    %6532 = vmatpush1.msra.mxu0 %v2542
    %6533 = vmatprep.subr.mxu0 %v2535
    %6534 = vmatpush1.msra.mxu0 %v2534
    %6535 = vmatprep.subr.mxu0 %v2527
    %6536 = vmatpush1.msra.mxu0 %v2526
    %6537 = vmatprep.subr.mxu0 %v2519
    %6538 = vmatpush1.msra.mxu0 %v2518
    %6539 = vmatprep.subr.mxu0 %v2511
    %6540 = vmatpush1.msra.mxu0 %v2510
    %6541 = vmatprep.subr.mxu0 %v2759
    %6542 = vmatpush2.msra.mxu0 %v2758
    %6543 = vmatprep.subr.mxu0 %v2751
    %6544 = vmatpush2.msra.mxu0 %v2750
    %6545 = vmatprep.subr.mxu0 %v2743
    %6546 = vmatpush2.msra.mxu0 %v2742
    %6547 = vmatprep.subr.mxu0 %v2735
    %6548 = vmatpush2.msra.mxu0 %v2734
    %6549 = vmatprep.subr.mxu0 %v2727
    %6550 = vmatpush2.msra.mxu0 %v2726
    %6551 = vmatprep.subr.mxu0 %v2719
    %6552 = vmatpush2.msra.mxu0 %v2718
    %6553 = vmatprep.subr.mxu0 %v2711
    %6554 = vmatpush2.msra.mxu0 %v2710
    %6555 = vmatprep.subr.mxu0 %v2703
    %6556 = vmatpush2.msra.mxu0 %v2702
    %6557 = vmatprep.subr.mxu0 %v2695
    %6558 = vmatpush2.msra.mxu0 %v2694
    %6559 = vmatprep.subr.mxu0 %v2687
    %6560 = vmatpush2.msra.mxu0 %v2686
    %6561 = vmatprep.subr.mxu0 %v2679
    %6562 = vmatpush2.msra.mxu0 %v2678
    %6563 = vmatprep.subr.mxu0 %v2671
    %6564 = vmatpush2.msra.mxu0 %v2670
    %6565 = vmatprep.subr.mxu0 %v2663
    %6566 = vmatpush2.msra.mxu0 %v2662
    %6567 = vmatprep.subr.mxu0 %v2655
    %6568 = vmatpush2.msra.mxu0 %v2654
    %6569 = vmatprep.subr.mxu0 %v2647
    %6570 = vmatpush2.msra.mxu0 %v2646
    %6571 = vmatprep.subr.mxu0 %v2639
    %6572 = vmatpush2.msra.mxu0 %v2638
    %6573 = vmatprep.mubr.f32.mxu0 %v195
    %6574 = vmatmul.mubr.f32.gmra.mxu0 %v194
    %v6575 = vpop.f32.mrf.mxu0
    %v6576 = vadd.f32 %v6505, %v6575
    %v6577 = vpop.f32.mrf.mxu0
    %v6578 = vadd.f32 %v6507, %v6577
    %6579 = vdwg.mxu0
    %6580 = vmatprep.subr.mxu0 %v2887
    %6581 = vmatpush1.msra.mxu0 %v2886
    %6582 = vmatprep.subr.mxu0 %v2879
    %6583 = vmatpush1.msra.mxu0 %v2878
    %6584 = vmatprep.subr.mxu0 %v2871
    %6585 = vmatpush1.msra.mxu0 %v2870
    %6586 = vmatprep.subr.mxu0 %v2863
    %6587 = vmatpush1.msra.mxu0 %v2862
    %6588 = vmatprep.subr.mxu0 %v2855
    %6589 = vmatpush1.msra.mxu0 %v2854
    %6590 = vmatprep.subr.mxu0 %v2847
    %6591 = vmatpush1.msra.mxu0 %v2846
    %6592 = vmatprep.subr.mxu0 %v2839
    %6593 = vmatpush1.msra.mxu0 %v2838
    %6594 = vmatprep.subr.mxu0 %v2831
    %6595 = vmatpush1.msra.mxu0 %v2830
    %6596 = vmatprep.subr.mxu0 %v2823
    %6597 = vmatpush1.msra.mxu0 %v2822
    %6598 = vmatprep.subr.mxu0 %v2815
    %6599 = vmatpush1.msra.mxu0 %v2814
    %6600 = vmatprep.subr.mxu0 %v2807
    %6601 = vmatpush1.msra.mxu0 %v2806
    %6602 = vmatprep.subr.mxu0 %v2799
    %6603 = vmatpush1.msra.mxu0 %v2798
    %6604 = vmatprep.subr.mxu0 %v2791
    %6605 = vmatpush1.msra.mxu0 %v2790
    %6606 = vmatprep.subr.mxu0 %v2783
    %6607 = vmatpush1.msra.mxu0 %v2782
    %6608 = vmatprep.subr.mxu0 %v2775
    %6609 = vmatpush1.msra.mxu0 %v2774
    %6610 = vmatprep.subr.mxu0 %v2767
    %6611 = vmatpush1.msra.mxu0 %v2766
    %6612 = vmatprep.subr.mxu0 %v3015
    %6613 = vmatpush2.msra.mxu0 %v3014
    %6614 = vmatprep.subr.mxu0 %v3007
    %6615 = vmatpush2.msra.mxu0 %v3006
    %6616 = vmatprep.subr.mxu0 %v2999
    %6617 = vmatpush2.msra.mxu0 %v2998
    %6618 = vmatprep.subr.mxu0 %v2991
    %6619 = vmatpush2.msra.mxu0 %v2990
    %6620 = vmatprep.subr.mxu0 %v2983
    %6621 = vmatpush2.msra.mxu0 %v2982
    %6622 = vmatprep.subr.mxu0 %v2975
    %6623 = vmatpush2.msra.mxu0 %v2974
    %6624 = vmatprep.subr.mxu0 %v2967
    %6625 = vmatpush2.msra.mxu0 %v2966
    %6626 = vmatprep.subr.mxu0 %v2959
    %6627 = vmatpush2.msra.mxu0 %v2958
    %6628 = vmatprep.subr.mxu0 %v2951
    %6629 = vmatpush2.msra.mxu0 %v2950
    %6630 = vmatprep.subr.mxu0 %v2943
    %6631 = vmatpush2.msra.mxu0 %v2942
    %6632 = vmatprep.subr.mxu0 %v2935
    %6633 = vmatpush2.msra.mxu0 %v2934
    %6634 = vmatprep.subr.mxu0 %v2927
    %6635 = vmatpush2.msra.mxu0 %v2926
    %6636 = vmatprep.subr.mxu0 %v2919
    %6637 = vmatpush2.msra.mxu0 %v2918
    %6638 = vmatprep.subr.mxu0 %v2911
    %6639 = vmatpush2.msra.mxu0 %v2910
    %6640 = vmatprep.subr.mxu0 %v2903
    %6641 = vmatpush2.msra.mxu0 %v2902
    %6642 = vmatprep.subr.mxu0 %v2895
    %6643 = vmatpush2.msra.mxu0 %v2894
    %6644 = vmatprep.mubr.f32.mxu0 %v197
    %6645 = vmatmul.mubr.f32.gmra.mxu0 %v196
    %v6646 = vpop.f32.mrf.mxu0
    %v6647 = vadd.f32 %v6576, %v6646
    %v6648 = vpop.f32.mrf.mxu0
    %v6649 = vadd.f32 %v6578, %v6648
    %6650 = vdwg.mxu0
    %6651 = vmatprep.subr.mxu0 %v3143
    %6652 = vmatpush1.msra.mxu0 %v3142
    %6653 = vmatprep.subr.mxu0 %v3135
    %6654 = vmatpush1.msra.mxu0 %v3134
    %6655 = vmatprep.subr.mxu0 %v3127
    %6656 = vmatpush1.msra.mxu0 %v3126
    %6657 = vmatprep.subr.mxu0 %v3119
    %6658 = vmatpush1.msra.mxu0 %v3118
    %6659 = vmatprep.subr.mxu0 %v3111
    %6660 = vmatpush1.msra.mxu0 %v3110
    %6661 = vmatprep.subr.mxu0 %v3103
    %6662 = vmatpush1.msra.mxu0 %v3102
    %6663 = vmatprep.subr.mxu0 %v3095
    %6664 = vmatpush1.msra.mxu0 %v3094
    %6665 = vmatprep.subr.mxu0 %v3087
    %6666 = vmatpush1.msra.mxu0 %v3086
    %6667 = vmatprep.subr.mxu0 %v3079
    %6668 = vmatpush1.msra.mxu0 %v3078
    %6669 = vmatprep.subr.mxu0 %v3071
    %6670 = vmatpush1.msra.mxu0 %v3070
    %6671 = vmatprep.subr.mxu0 %v3063
    %6672 = vmatpush1.msra.mxu0 %v3062
    %6673 = vmatprep.subr.mxu0 %v3055
    %6674 = vmatpush1.msra.mxu0 %v3054
    %6675 = vmatprep.subr.mxu0 %v3047
    %6676 = vmatpush1.msra.mxu0 %v3046
    %6677 = vmatprep.subr.mxu0 %v3039
    %6678 = vmatpush1.msra.mxu0 %v3038
    %6679 = vmatprep.subr.mxu0 %v3031
    %6680 = vmatpush1.msra.mxu0 %v3030
    %6681 = vmatprep.subr.mxu0 %v3023
    %6682 = vmatpush1.msra.mxu0 %v3022
    %6683 = vmatprep.subr.mxu0 %v3271
    %6684 = vmatpush2.msra.mxu0 %v3270
    %6685 = vmatprep.subr.mxu0 %v3263
    %6686 = vmatpush2.msra.mxu0 %v3262
    %6687 = vmatprep.subr.mxu0 %v3255
    %6688 = vmatpush2.msra.mxu0 %v3254
    %6689 = vmatprep.subr.mxu0 %v3247
    %6690 = vmatpush2.msra.mxu0 %v3246
    %6691 = vmatprep.subr.mxu0 %v3239
    %6692 = vmatpush2.msra.mxu0 %v3238
    %6693 = vmatprep.subr.mxu0 %v3231
    %6694 = vmatpush2.msra.mxu0 %v3230
    %6695 = vmatprep.subr.mxu0 %v3223
    %6696 = vmatpush2.msra.mxu0 %v3222
    %6697 = vmatprep.subr.mxu0 %v3215
    %6698 = vmatpush2.msra.mxu0 %v3214
    %6699 = vmatprep.subr.mxu0 %v3207
    %6700 = vmatpush2.msra.mxu0 %v3206
    %6701 = vmatprep.subr.mxu0 %v3199
    %6702 = vmatpush2.msra.mxu0 %v3198
    %6703 = vmatprep.subr.mxu0 %v3191
    %6704 = vmatpush2.msra.mxu0 %v3190
    %6705 = vmatprep.subr.mxu0 %v3183
    %6706 = vmatpush2.msra.mxu0 %v3182
    %6707 = vmatprep.subr.mxu0 %v3175
    %6708 = vmatpush2.msra.mxu0 %v3174
    %6709 = vmatprep.subr.mxu0 %v3167
    %6710 = vmatpush2.msra.mxu0 %v3166
    %6711 = vmatprep.subr.mxu0 %v3159
    %6712 = vmatpush2.msra.mxu0 %v3158
    %6713 = vmatprep.subr.mxu0 %v3151
    %6714 = vmatpush2.msra.mxu0 %v3150
    %6715 = vmatprep.mubr.f32.mxu0 %v199
    %6716 = vmatmul.mubr.f32.gmra.mxu0 %v198
    %v6717 = vpop.f32.mrf.mxu0
    %v6718 = vadd.f32 %v6647, %v6717
    %v6719 = vpop.f32.mrf.mxu0
    %v6720 = vadd.f32 %v6649, %v6719
    %6721 = vdwg.mxu0
    %v6722 = vmax.f32 %v4162, 0.0
    %v6723 = vmax.f32 %v4164, 0.0
    %v6724 = vmax.f32 %v5014, 0.0
    %v6725 = vmax.f32 %v5016, 0.0
    %v6726 = vmax.f32 %v5866, 0.0
    %v6727 = vmax.f32 %v5868, 0.0
    %v6728 = vmax.f32 %v6718, 0.0
    %v6729 = vmax.f32 %v6720, 0.0
    %v6730 = vld [vmem:[#allocation8] sm:$0xff]
    %v6731 = vld [vmem:[#allocation8 + $0x8] sm:$0xff]
    %v6732 = vld [vmem:[#allocation8 + $0x10] sm:$0xff]
    %v6733 = vld [vmem:[#allocation8 + $0x18] sm:$0xff]
    %v6734 = vld [vmem:[#allocation8 + $0x20] sm:$0xff]
    %v6735 = vld [vmem:[#allocation8 + $0x28] sm:$0xff]
    %v6736 = vld [vmem:[#allocation8 + $0x30] sm:$0xff]
    %v6737 = vld [vmem:[#allocation8 + $0x38] sm:$0xff]
    %v6738 = vld [vmem:[#allocation8 + $0x40] sm:$0xff]
    %v6739 = vld [vmem:[#allocation8 + $0x48] sm:$0xff]
    %v6740 = vld [vmem:[#allocation8 + $0x50] sm:$0xff]
    %v6741 = vld [vmem:[#allocation8 + $0x58] sm:$0xff]
    %v6742 = vld [vmem:[#allocation8 + $0x60] sm:$0xff]
    %v6743 = vld [vmem:[#allocation8 + $0x68] sm:$0xff]
    %v6744 = vld [vmem:[#allocation8 + $0x70] sm:$0xff]
    %v6745 = vld [vmem:[#allocation8 + $0x78] sm:$0xff]
    %v6746 = vld [vmem:[#allocation8 + $0x80] sm:$0xff]
    %v6747 = vld [vmem:[#allocation8 + $0x88] sm:$0xff]
    %v6748 = vld [vmem:[#allocation8 + $0x90] sm:$0xff]
    %v6749 = vld [vmem:[#allocation8 + $0x98] sm:$0xff]
    %v6750 = vld [vmem:[#allocation8 + $0xa0] sm:$0xff]
    %v6751 = vld [vmem:[#allocation8 + $0xa8] sm:$0xff]
    %v6752 = vld [vmem:[#allocation8 + $0xb0] sm:$0xff]
    %v6753 = vld [vmem:[#allocation8 + $0xb8] sm:$0xff]
    %v6754 = vld [vmem:[#allocation8 + $0xc0] sm:$0xff]
    %v6755 = vld [vmem:[#allocation8 + $0xc8] sm:$0xff]
    %v6756 = vld [vmem:[#allocation8 + $0xd0] sm:$0xff]
    %v6757 = vld [vmem:[#allocation8 + $0xd8] sm:$0xff]
    %v6758 = vld [vmem:[#allocation8 + $0xe0] sm:$0xff]
    %v6759 = vld [vmem:[#allocation8 + $0xe8] sm:$0xff]
    %v6760 = vld [vmem:[#allocation8 + $0xf0] sm:$0xff]
    %v6761 = vld [vmem:[#allocation8 + $0xf8] sm:$0xff]
    %v6762 = vld [vmem:[#allocation8 + $0x100] sm:$0xff]
    %v6763 = vld [vmem:[#allocation8 + $0x108] sm:$0xff]
    %v6764 = vld [vmem:[#allocation8 + $0x110] sm:$0xff]
    %v6765 = vld [vmem:[#allocation8 + $0x118] sm:$0xff]
    %v6766 = vld [vmem:[#allocation8 + $0x120] sm:$0xff]
    %v6767 = vld [vmem:[#allocation8 + $0x128] sm:$0xff]
    %v6768 = vld [vmem:[#allocation8 + $0x130] sm:$0xff]
    %v6769 = vld [vmem:[#allocation8 + $0x138] sm:$0xff]
    %v6770 = vld [vmem:[#allocation8 + $0x140] sm:$0xff]
    %v6771 = vld [vmem:[#allocation8 + $0x148] sm:$0xff]
    %v6772 = vld [vmem:[#allocation8 + $0x150] sm:$0xff]
    %v6773 = vld [vmem:[#allocation8 + $0x158] sm:$0xff]
    %v6774 = vld [vmem:[#allocation8 + $0x160] sm:$0xff]
    %v6775 = vld [vmem:[#allocation8 + $0x168] sm:$0xff]
    %v6776 = vld [vmem:[#allocation8 + $0x170] sm:$0xff]
    %v6777 = vld [vmem:[#allocation8 + $0x178] sm:$0xff]
    %v6778 = vld [vmem:[#allocation8 + $0x180] sm:$0xff]
    %v6779 = vld [vmem:[#allocation8 + $0x188] sm:$0xff]
    %v6780 = vld [vmem:[#allocation8 + $0x190] sm:$0xff]
    %v6781 = vld [vmem:[#allocation8 + $0x198] sm:$0xff]
    %v6782 = vld [vmem:[#allocation8 + $0x1a0] sm:$0xff]
    %v6783 = vld [vmem:[#allocation8 + $0x1a8] sm:$0xff]
    %v6784 = vld [vmem:[#allocation8 + $0x1b0] sm:$0xff]
    %v6785 = vld [vmem:[#allocation8 + $0x1b8] sm:$0xff]
    %v6786 = vld [vmem:[#allocation8 + $0x1c0] sm:$0xff]
    %v6787 = vld [vmem:[#allocation8 + $0x1c8] sm:$0xff]
    %v6788 = vld [vmem:[#allocation8 + $0x1d0] sm:$0xff]
    %v6789 = vld [vmem:[#allocation8 + $0x1d8] sm:$0xff]
    %v6790 = vld [vmem:[#allocation8 + $0x1e0] sm:$0xff]
    %v6791 = vld [vmem:[#allocation8 + $0x1e8] sm:$0xff]
    %v6792 = vld [vmem:[#allocation8 + $0x1f0] sm:$0xff]
    %v6793 = vld [vmem:[#allocation8 + $0x1f8] sm:$0xff]
    %v6794 = vld [vmem:[#allocation8 + $0x200] sm:$0xff]
    %v6795 = vld [vmem:[#allocation8 + $0x208] sm:$0xff]
    %v6796 = vld [vmem:[#allocation8 + $0x210] sm:$0xff]
    %v6797 = vld [vmem:[#allocation8 + $0x218] sm:$0xff]
    %v6798 = vld [vmem:[#allocation8 + $0x220] sm:$0xff]
    %v6799 = vld [vmem:[#allocation8 + $0x228] sm:$0xff]
    %v6800 = vld [vmem:[#allocation8 + $0x230] sm:$0xff]
    %v6801 = vld [vmem:[#allocation8 + $0x238] sm:$0xff]
    %v6802 = vld [vmem:[#allocation8 + $0x240] sm:$0xff]
    %v6803 = vld [vmem:[#allocation8 + $0x248] sm:$0xff]
    %v6804 = vld [vmem:[#allocation8 + $0x250] sm:$0xff]
    %v6805 = vld [vmem:[#allocation8 + $0x258] sm:$0xff]
    %v6806 = vld [vmem:[#allocation8 + $0x260] sm:$0xff]
    %v6807 = vld [vmem:[#allocation8 + $0x268] sm:$0xff]
    %v6808 = vld [vmem:[#allocation8 + $0x270] sm:$0xff]
    %v6809 = vld [vmem:[#allocation8 + $0x278] sm:$0xff]
    %v6810 = vld [vmem:[#allocation8 + $0x280] sm:$0xff]
    %v6811 = vld [vmem:[#allocation8 + $0x288] sm:$0xff]
    %v6812 = vld [vmem:[#allocation8 + $0x290] sm:$0xff]
    %v6813 = vld [vmem:[#allocation8 + $0x298] sm:$0xff]
    %v6814 = vld [vmem:[#allocation8 + $0x2a0] sm:$0xff]
    %v6815 = vld [vmem:[#allocation8 + $0x2a8] sm:$0xff]
    %v6816 = vld [vmem:[#allocation8 + $0x2b0] sm:$0xff]
    %v6817 = vld [vmem:[#allocation8 + $0x2b8] sm:$0xff]
    %v6818 = vld [vmem:[#allocation8 + $0x2c0] sm:$0xff]
    %v6819 = vld [vmem:[#allocation8 + $0x2c8] sm:$0xff]
    %v6820 = vld [vmem:[#allocation8 + $0x2d0] sm:$0xff]
    %v6821 = vld [vmem:[#allocation8 + $0x2d8] sm:$0xff]
    %v6822 = vld [vmem:[#allocation8 + $0x2e0] sm:$0xff]
    %v6823 = vld [vmem:[#allocation8 + $0x2e8] sm:$0xff]
    %v6824 = vld [vmem:[#allocation8 + $0x2f0] sm:$0xff]
    %v6825 = vld [vmem:[#allocation8 + $0x2f8] sm:$0xff]
    %v6826 = vld [vmem:[#allocation8 + $0x300] sm:$0xff]
    %v6827 = vld [vmem:[#allocation8 + $0x308] sm:$0xff]
    %v6828 = vld [vmem:[#allocation8 + $0x310] sm:$0xff]
    %v6829 = vld [vmem:[#allocation8 + $0x318] sm:$0xff]
    %v6830 = vld [vmem:[#allocation8 + $0x320] sm:$0xff]
    %v6831 = vld [vmem:[#allocation8 + $0x328] sm:$0xff]
    %v6832 = vld [vmem:[#allocation8 + $0x330] sm:$0xff]
    %v6833 = vld [vmem:[#allocation8 + $0x338] sm:$0xff]
    %v6834 = vld [vmem:[#allocation8 + $0x340] sm:$0xff]
    %v6835 = vld [vmem:[#allocation8 + $0x348] sm:$0xff]
    %v6836 = vld [vmem:[#allocation8 + $0x350] sm:$0xff]
    %v6837 = vld [vmem:[#allocation8 + $0x358] sm:$0xff]
    %v6838 = vld [vmem:[#allocation8 + $0x360] sm:$0xff]
    %v6839 = vld [vmem:[#allocation8 + $0x368] sm:$0xff]
    %v6840 = vld [vmem:[#allocation8 + $0x370] sm:$0xff]
    %v6841 = vld [vmem:[#allocation8 + $0x378] sm:$0xff]
    %v6842 = vld [vmem:[#allocation8 + $0x380] sm:$0xff]
    %v6843 = vld [vmem:[#allocation8 + $0x388] sm:$0xff]
    %v6844 = vld [vmem:[#allocation8 + $0x390] sm:$0xff]
    %v6845 = vld [vmem:[#allocation8 + $0x398] sm:$0xff]
    %v6846 = vld [vmem:[#allocation8 + $0x3a0] sm:$0xff]
    %v6847 = vld [vmem:[#allocation8 + $0x3a8] sm:$0xff]
    %v6848 = vld [vmem:[#allocation8 + $0x3b0] sm:$0xff]
    %v6849 = vld [vmem:[#allocation8 + $0x3b8] sm:$0xff]
    %v6850 = vld [vmem:[#allocation8 + $0x3c0] sm:$0xff]
    %v6851 = vld [vmem:[#allocation8 + $0x3c8] sm:$0xff]
    %v6852 = vld [vmem:[#allocation8 + $0x3d0] sm:$0xff]
    %v6853 = vld [vmem:[#allocation8 + $0x3d8] sm:$0xff]
    %v6854 = vld [vmem:[#allocation8 + $0x3e0] sm:$0xff]
    %v6855 = vld [vmem:[#allocation8 + $0x3e8] sm:$0xff]
    %v6856 = vld [vmem:[#allocation8 + $0x3f0] sm:$0xff]
    %v6857 = vld [vmem:[#allocation8 + $0x3f8] sm:$0xff]
    %v6858 = vld [vmem:[#allocation8 + $0x400] sm:$0xff]
    %v6859 = vld [vmem:[#allocation8 + $0x408] sm:$0xff]
    %v6860 = vld [vmem:[#allocation8 + $0x410] sm:$0xff]
    %v6861 = vld [vmem:[#allocation8 + $0x418] sm:$0xff]
    %v6862 = vld [vmem:[#allocation8 + $0x420] sm:$0xff]
    %v6863 = vld [vmem:[#allocation8 + $0x428] sm:$0xff]
    %v6864 = vld [vmem:[#allocation8 + $0x430] sm:$0xff]
    %v6865 = vld [vmem:[#allocation8 + $0x438] sm:$0xff]
    %v6866 = vld [vmem:[#allocation8 + $0x440] sm:$0xff]
    %v6867 = vld [vmem:[#allocation8 + $0x448] sm:$0xff]
    %v6868 = vld [vmem:[#allocation8 + $0x450] sm:$0xff]
    %v6869 = vld [vmem:[#allocation8 + $0x458] sm:$0xff]
    %v6870 = vld [vmem:[#allocation8 + $0x460] sm:$0xff]
    %v6871 = vld [vmem:[#allocation8 + $0x468] sm:$0xff]
    %v6872 = vld [vmem:[#allocation8 + $0x470] sm:$0xff]
    %v6873 = vld [vmem:[#allocation8 + $0x478] sm:$0xff]
    %v6874 = vld [vmem:[#allocation8 + $0x480] sm:$0xff]
    %v6875 = vld [vmem:[#allocation8 + $0x488] sm:$0xff]
    %v6876 = vld [vmem:[#allocation8 + $0x490] sm:$0xff]
    %v6877 = vld [vmem:[#allocation8 + $0x498] sm:$0xff]
    %v6878 = vld [vmem:[#allocation8 + $0x4a0] sm:$0xff]
    %v6879 = vld [vmem:[#allocation8 + $0x4a8] sm:$0xff]
    %v6880 = vld [vmem:[#allocation8 + $0x4b0] sm:$0xff]
    %v6881 = vld [vmem:[#allocation8 + $0x4b8] sm:$0xff]
    %v6882 = vld [vmem:[#allocation8 + $0x4c0] sm:$0xff]
    %v6883 = vld [vmem:[#allocation8 + $0x4c8] sm:$0xff]
    %v6884 = vld [vmem:[#allocation8 + $0x4d0] sm:$0xff]
    %v6885 = vld [vmem:[#allocation8 + $0x4d8] sm:$0xff]
    %v6886 = vld [vmem:[#allocation8 + $0x4e0] sm:$0xff]
    %v6887 = vld [vmem:[#allocation8 + $0x4e8] sm:$0xff]
    %v6888 = vld [vmem:[#allocation8 + $0x4f0] sm:$0xff]
    %v6889 = vld [vmem:[#allocation8 + $0x4f8] sm:$0xff]
    %v6890 = vld [vmem:[#allocation8 + $0x500] sm:$0xff]
    %v6891 = vld [vmem:[#allocation8 + $0x508] sm:$0xff]
    %v6892 = vld [vmem:[#allocation8 + $0x510] sm:$0xff]
    %v6893 = vld [vmem:[#allocation8 + $0x518] sm:$0xff]
    %v6894 = vld [vmem:[#allocation8 + $0x520] sm:$0xff]
    %v6895 = vld [vmem:[#allocation8 + $0x528] sm:$0xff]
    %v6896 = vld [vmem:[#allocation8 + $0x530] sm:$0xff]
    %v6897 = vld [vmem:[#allocation8 + $0x538] sm:$0xff]
    %v6898 = vld [vmem:[#allocation8 + $0x540] sm:$0xff]
    %v6899 = vld [vmem:[#allocation8 + $0x548] sm:$0xff]
    %v6900 = vld [vmem:[#allocation8 + $0x550] sm:$0xff]
    %v6901 = vld [vmem:[#allocation8 + $0x558] sm:$0xff]
    %v6902 = vld [vmem:[#allocation8 + $0x560] sm:$0xff]
    %v6903 = vld [vmem:[#allocation8 + $0x568] sm:$0xff]
    %v6904 = vld [vmem:[#allocation8 + $0x570] sm:$0xff]
    %v6905 = vld [vmem:[#allocation8 + $0x578] sm:$0xff]
    %v6906 = vld [vmem:[#allocation8 + $0x580] sm:$0xff]
    %v6907 = vld [vmem:[#allocation8 + $0x588] sm:$0xff]
    %v6908 = vld [vmem:[#allocation8 + $0x590] sm:$0xff]
    %v6909 = vld [vmem:[#allocation8 + $0x598] sm:$0xff]
    %v6910 = vld [vmem:[#allocation8 + $0x5a0] sm:$0xff]
    %v6911 = vld [vmem:[#allocation8 + $0x5a8] sm:$0xff]
    %v6912 = vld [vmem:[#allocation8 + $0x5b0] sm:$0xff]
    %v6913 = vld [vmem:[#allocation8 + $0x5b8] sm:$0xff]
    %v6914 = vld [vmem:[#allocation8 + $0x5c0] sm:$0xff]
    %v6915 = vld [vmem:[#allocation8 + $0x5c8] sm:$0xff]
    %v6916 = vld [vmem:[#allocation8 + $0x5d0] sm:$0xff]
    %v6917 = vld [vmem:[#allocation8 + $0x5d8] sm:$0xff]
    %v6918 = vld [vmem:[#allocation8 + $0x5e0] sm:$0xff]
    %v6919 = vld [vmem:[#allocation8 + $0x5e8] sm:$0xff]
    %v6920 = vld [vmem:[#allocation8 + $0x5f0] sm:$0xff]
    %v6921 = vld [vmem:[#allocation8 + $0x5f8] sm:$0xff]
    %v6922 = vld [vmem:[#allocation8 + $0x600] sm:$0xff]
    %v6923 = vld [vmem:[#allocation8 + $0x608] sm:$0xff]
    %v6924 = vld [vmem:[#allocation8 + $0x610] sm:$0xff]
    %v6925 = vld [vmem:[#allocation8 + $0x618] sm:$0xff]
    %v6926 = vld [vmem:[#allocation8 + $0x620] sm:$0xff]
    %v6927 = vld [vmem:[#allocation8 + $0x628] sm:$0xff]
    %v6928 = vld [vmem:[#allocation8 + $0x630] sm:$0xff]
    %v6929 = vld [vmem:[#allocation8 + $0x638] sm:$0xff]
    %v6930 = vld [vmem:[#allocation8 + $0x640] sm:$0xff]
    %v6931 = vld [vmem:[#allocation8 + $0x648] sm:$0xff]
    %v6932 = vld [vmem:[#allocation8 + $0x650] sm:$0xff]
    %v6933 = vld [vmem:[#allocation8 + $0x658] sm:$0xff]
    %v6934 = vld [vmem:[#allocation8 + $0x660] sm:$0xff]
    %v6935 = vld [vmem:[#allocation8 + $0x668] sm:$0xff]
    %v6936 = vld [vmem:[#allocation8 + $0x670] sm:$0xff]
    %v6937 = vld [vmem:[#allocation8 + $0x678] sm:$0xff]
    %v6938 = vld [vmem:[#allocation8 + $0x680] sm:$0xff]
    %v6939 = vld [vmem:[#allocation8 + $0x688] sm:$0xff]
    %v6940 = vld [vmem:[#allocation8 + $0x690] sm:$0xff]
    %v6941 = vld [vmem:[#allocation8 + $0x698] sm:$0xff]
    %v6942 = vld [vmem:[#allocation8 + $0x6a0] sm:$0xff]
    %v6943 = vld [vmem:[#allocation8 + $0x6a8] sm:$0xff]
    %v6944 = vld [vmem:[#allocation8 + $0x6b0] sm:$0xff]
    %v6945 = vld [vmem:[#allocation8 + $0x6b8] sm:$0xff]
    %v6946 = vld [vmem:[#allocation8 + $0x6c0] sm:$0xff]
    %v6947 = vld [vmem:[#allocation8 + $0x6c8] sm:$0xff]
    %v6948 = vld [vmem:[#allocation8 + $0x6d0] sm:$0xff]
    %v6949 = vld [vmem:[#allocation8 + $0x6d8] sm:$0xff]
    %v6950 = vld [vmem:[#allocation8 + $0x6e0] sm:$0xff]
    %v6951 = vld [vmem:[#allocation8 + $0x6e8] sm:$0xff]
    %v6952 = vld [vmem:[#allocation8 + $0x6f0] sm:$0xff]
    %v6953 = vld [vmem:[#allocation8 + $0x6f8] sm:$0xff]
    %v6954 = vld [vmem:[#allocation8 + $0x700] sm:$0xff]
    %v6955 = vld [vmem:[#allocation8 + $0x708] sm:$0xff]
    %v6956 = vld [vmem:[#allocation8 + $0x710] sm:$0xff]
    %v6957 = vld [vmem:[#allocation8 + $0x718] sm:$0xff]
    %v6958 = vld [vmem:[#allocation8 + $0x720] sm:$0xff]
    %v6959 = vld [vmem:[#allocation8 + $0x728] sm:$0xff]
    %v6960 = vld [vmem:[#allocation8 + $0x730] sm:$0xff]
    %v6961 = vld [vmem:[#allocation8 + $0x738] sm:$0xff]
    %v6962 = vld [vmem:[#allocation8 + $0x740] sm:$0xff]
    %v6963 = vld [vmem:[#allocation8 + $0x748] sm:$0xff]
    %v6964 = vld [vmem:[#allocation8 + $0x750] sm:$0xff]
    %v6965 = vld [vmem:[#allocation8 + $0x758] sm:$0xff]
    %v6966 = vld [vmem:[#allocation8 + $0x760] sm:$0xff]
    %v6967 = vld [vmem:[#allocation8 + $0x768] sm:$0xff]
    %v6968 = vld [vmem:[#allocation8 + $0x770] sm:$0xff]
    %v6969 = vld [vmem:[#allocation8 + $0x778] sm:$0xff]
    %v6970 = vld [vmem:[#allocation8 + $0x780] sm:$0xff]
    %v6971 = vld [vmem:[#allocation8 + $0x788] sm:$0xff]
    %v6972 = vld [vmem:[#allocation8 + $0x790] sm:$0xff]
    %v6973 = vld [vmem:[#allocation8 + $0x798] sm:$0xff]
    %v6974 = vld [vmem:[#allocation8 + $0x7a0] sm:$0xff]
    %v6975 = vld [vmem:[#allocation8 + $0x7a8] sm:$0xff]
    %v6976 = vld [vmem:[#allocation8 + $0x7b0] sm:$0xff]
    %v6977 = vld [vmem:[#allocation8 + $0x7b8] sm:$0xff]
    %v6978 = vld [vmem:[#allocation8 + $0x7c0] sm:$0xff]
    %v6979 = vld [vmem:[#allocation8 + $0x7c8] sm:$0xff]
    %v6980 = vld [vmem:[#allocation8 + $0x7d0] sm:$0xff]
    %v6981 = vld [vmem:[#allocation8 + $0x7d8] sm:$0xff]
    %v6982 = vld [vmem:[#allocation8 + $0x7e0] sm:$0xff]
    %v6983 = vld [vmem:[#allocation8 + $0x7e8] sm:$0xff]
    %v6984 = vld [vmem:[#allocation8 + $0x7f0] sm:$0xff]
    %v6985 = vld [vmem:[#allocation8 + $0x7f8] sm:$0xff]
    %v6986 = vld [vmem:[#allocation8 + $0x800] sm:$0xff]
    %v6987 = vld [vmem:[#allocation8 + $0x808] sm:$0xff]
    %v6988 = vld [vmem:[#allocation8 + $0x810] sm:$0xff]
    %v6989 = vld [vmem:[#allocation8 + $0x818] sm:$0xff]
    %v6990 = vld [vmem:[#allocation8 + $0x820] sm:$0xff]
    %v6991 = vld [vmem:[#allocation8 + $0x828] sm:$0xff]
    %v6992 = vld [vmem:[#allocation8 + $0x830] sm:$0xff]
    %v6993 = vld [vmem:[#allocation8 + $0x838] sm:$0xff]
    %v6994 = vld [vmem:[#allocation8 + $0x840] sm:$0xff]
    %v6995 = vld [vmem:[#allocation8 + $0x848] sm:$0xff]
    %v6996 = vld [vmem:[#allocation8 + $0x850] sm:$0xff]
    %v6997 = vld [vmem:[#allocation8 + $0x858] sm:$0xff]
    %v6998 = vld [vmem:[#allocation8 + $0x860] sm:$0xff]
    %v6999 = vld [vmem:[#allocation8 + $0x868] sm:$0xff]
    %v7000 = vld [vmem:[#allocation8 + $0x870] sm:$0xff]
    %v7001 = vld [vmem:[#allocation8 + $0x878] sm:$0xff]
    %v7002 = vld [vmem:[#allocation8 + $0x880] sm:$0xff]
    %v7003 = vld [vmem:[#allocation8 + $0x888] sm:$0xff]
    %v7004 = vld [vmem:[#allocation8 + $0x890] sm:$0xff]
    %v7005 = vld [vmem:[#allocation8 + $0x898] sm:$0xff]
    %v7006 = vld [vmem:[#allocation8 + $0x8a0] sm:$0xff]
    %v7007 = vld [vmem:[#allocation8 + $0x8a8] sm:$0xff]
    %v7008 = vld [vmem:[#allocation8 + $0x8b0] sm:$0xff]
    %v7009 = vld [vmem:[#allocation8 + $0x8b8] sm:$0xff]
    %v7010 = vld [vmem:[#allocation8 + $0x8c0] sm:$0xff]
    %v7011 = vld [vmem:[#allocation8 + $0x8c8] sm:$0xff]
    %v7012 = vld [vmem:[#allocation8 + $0x8d0] sm:$0xff]
    %v7013 = vld [vmem:[#allocation8 + $0x8d8] sm:$0xff]
    %v7014 = vld [vmem:[#allocation8 + $0x8e0] sm:$0xff]
    %v7015 = vld [vmem:[#allocation8 + $0x8e8] sm:$0xff]
    %v7016 = vld [vmem:[#allocation8 + $0x8f0] sm:$0xff]
    %v7017 = vld [vmem:[#allocation8 + $0x8f8] sm:$0xff]
    %v7018 = vld [vmem:[#allocation8 + $0x900] sm:$0xff]
    %v7019 = vld [vmem:[#allocation8 + $0x908] sm:$0xff]
    %v7020 = vld [vmem:[#allocation8 + $0x910] sm:$0xff]
    %v7021 = vld [vmem:[#allocation8 + $0x918] sm:$0xff]
    %v7022 = vld [vmem:[#allocation8 + $0x920] sm:$0xff]
    %v7023 = vld [vmem:[#allocation8 + $0x928] sm:$0xff]
    %v7024 = vld [vmem:[#allocation8 + $0x930] sm:$0xff]
    %v7025 = vld [vmem:[#allocation8 + $0x938] sm:$0xff]
    %v7026 = vld [vmem:[#allocation8 + $0x940] sm:$0xff]
    %v7027 = vld [vmem:[#allocation8 + $0x948] sm:$0xff]
    %v7028 = vld [vmem:[#allocation8 + $0x950] sm:$0xff]
    %v7029 = vld [vmem:[#allocation8 + $0x958] sm:$0xff]
    %v7030 = vld [vmem:[#allocation8 + $0x960] sm:$0xff]
    %v7031 = vld [vmem:[#allocation8 + $0x968] sm:$0xff]
    %v7032 = vld [vmem:[#allocation8 + $0x970] sm:$0xff]
    %v7033 = vld [vmem:[#allocation8 + $0x978] sm:$0xff]
    %v7034 = vld [vmem:[#allocation8 + $0x980] sm:$0xff]
    %v7035 = vld [vmem:[#allocation8 + $0x988] sm:$0xff]
    %v7036 = vld [vmem:[#allocation8 + $0x990] sm:$0xff]
    %v7037 = vld [vmem:[#allocation8 + $0x998] sm:$0xff]
    %v7038 = vld [vmem:[#allocation8 + $0x9a0] sm:$0xff]
    %v7039 = vld [vmem:[#allocation8 + $0x9a8] sm:$0xff]
    %v7040 = vld [vmem:[#allocation8 + $0x9b0] sm:$0xff]
    %v7041 = vld [vmem:[#allocation8 + $0x9b8] sm:$0xff]
    %v7042 = vld [vmem:[#allocation8 + $0x9c0] sm:$0xff]
    %v7043 = vld [vmem:[#allocation8 + $0x9c8] sm:$0xff]
    %v7044 = vld [vmem:[#allocation8 + $0x9d0] sm:$0xff]
    %v7045 = vld [vmem:[#allocation8 + $0x9d8] sm:$0xff]
    %v7046 = vld [vmem:[#allocation8 + $0x9e0] sm:$0xff]
    %v7047 = vld [vmem:[#allocation8 + $0x9e8] sm:$0xff]
    %v7048 = vld [vmem:[#allocation8 + $0x9f0] sm:$0xff]
    %v7049 = vld [vmem:[#allocation8 + $0x9f8] sm:$0xff]
    %v7050 = vld [vmem:[#allocation8 + $0xa00] sm:$0xff]
    %v7051 = vld [vmem:[#allocation8 + $0xa08] sm:$0xff]
    %v7052 = vld [vmem:[#allocation8 + $0xa10] sm:$0xff]
    %v7053 = vld [vmem:[#allocation8 + $0xa18] sm:$0xff]
    %v7054 = vld [vmem:[#allocation8 + $0xa20] sm:$0xff]
    %v7055 = vld [vmem:[#allocation8 + $0xa28] sm:$0xff]
    %v7056 = vld [vmem:[#allocation8 + $0xa30] sm:$0xff]
    %v7057 = vld [vmem:[#allocation8 + $0xa38] sm:$0xff]
    %v7058 = vld [vmem:[#allocation8 + $0xa40] sm:$0xff]
    %v7059 = vld [vmem:[#allocation8 + $0xa48] sm:$0xff]
    %v7060 = vld [vmem:[#allocation8 + $0xa50] sm:$0xff]
    %v7061 = vld [vmem:[#allocation8 + $0xa58] sm:$0xff]
    %v7062 = vld [vmem:[#allocation8 + $0xa60] sm:$0xff]
    %v7063 = vld [vmem:[#allocation8 + $0xa68] sm:$0xff]
    %v7064 = vld [vmem:[#allocation8 + $0xa70] sm:$0xff]
    %v7065 = vld [vmem:[#allocation8 + $0xa78] sm:$0xff]
    %v7066 = vld [vmem:[#allocation8 + $0xa80] sm:$0xff]
    %v7067 = vld [vmem:[#allocation8 + $0xa88] sm:$0xff]
    %v7068 = vld [vmem:[#allocation8 + $0xa90] sm:$0xff]
    %v7069 = vld [vmem:[#allocation8 + $0xa98] sm:$0xff]
    %v7070 = vld [vmem:[#allocation8 + $0xaa0] sm:$0xff]
    %v7071 = vld [vmem:[#allocation8 + $0xaa8] sm:$0xff]
    %v7072 = vld [vmem:[#allocation8 + $0xab0] sm:$0xff]
    %v7073 = vld [vmem:[#allocation8 + $0xab8] sm:$0xff]
    %v7074 = vld [vmem:[#allocation8 + $0xac0] sm:$0xff]
    %v7075 = vld [vmem:[#allocation8 + $0xac8] sm:$0xff]
    %v7076 = vld [vmem:[#allocation8 + $0xad0] sm:$0xff]
    %v7077 = vld [vmem:[#allocation8 + $0xad8] sm:$0xff]
    %v7078 = vld [vmem:[#allocation8 + $0xae0] sm:$0xff]
    %v7079 = vld [vmem:[#allocation8 + $0xae8] sm:$0xff]
    %v7080 = vld [vmem:[#allocation8 + $0xaf0] sm:$0xff]
    %v7081 = vld [vmem:[#allocation8 + $0xaf8] sm:$0xff]
    %v7082 = vld [vmem:[#allocation8 + $0xb00] sm:$0xff]
    %v7083 = vld [vmem:[#allocation8 + $0xb08] sm:$0xff]
    %v7084 = vld [vmem:[#allocation8 + $0xb10] sm:$0xff]
    %v7085 = vld [vmem:[#allocation8 + $0xb18] sm:$0xff]
    %v7086 = vld [vmem:[#allocation8 + $0xb20] sm:$0xff]
    %v7087 = vld [vmem:[#allocation8 + $0xb28] sm:$0xff]
    %v7088 = vld [vmem:[#allocation8 + $0xb30] sm:$0xff]
    %v7089 = vld [vmem:[#allocation8 + $0xb38] sm:$0xff]
    %v7090 = vld [vmem:[#allocation8 + $0xb40] sm:$0xff]
    %v7091 = vld [vmem:[#allocation8 + $0xb48] sm:$0xff]
    %v7092 = vld [vmem:[#allocation8 + $0xb50] sm:$0xff]
    %v7093 = vld [vmem:[#allocation8 + $0xb58] sm:$0xff]
    %v7094 = vld [vmem:[#allocation8 + $0xb60] sm:$0xff]
    %v7095 = vld [vmem:[#allocation8 + $0xb68] sm:$0xff]
    %v7096 = vld [vmem:[#allocation8 + $0xb70] sm:$0xff]
    %v7097 = vld [vmem:[#allocation8 + $0xb78] sm:$0xff]
    %v7098 = vld [vmem:[#allocation8 + $0xb80] sm:$0xff]
    %v7099 = vld [vmem:[#allocation8 + $0xb88] sm:$0xff]
    %v7100 = vld [vmem:[#allocation8 + $0xb90] sm:$0xff]
    %v7101 = vld [vmem:[#allocation8 + $0xb98] sm:$0xff]
    %v7102 = vld [vmem:[#allocation8 + $0xba0] sm:$0xff]
    %v7103 = vld [vmem:[#allocation8 + $0xba8] sm:$0xff]
    %v7104 = vld [vmem:[#allocation8 + $0xbb0] sm:$0xff]
    %v7105 = vld [vmem:[#allocation8 + $0xbb8] sm:$0xff]
    %v7106 = vld [vmem:[#allocation8 + $0xbc0] sm:$0xff]
    %v7107 = vld [vmem:[#allocation8 + $0xbc8] sm:$0xff]
    %v7108 = vld [vmem:[#allocation8 + $0xbd0] sm:$0xff]
    %v7109 = vld [vmem:[#allocation8 + $0xbd8] sm:$0xff]
    %v7110 = vld [vmem:[#allocation8 + $0xbe0] sm:$0xff]
    %v7111 = vld [vmem:[#allocation8 + $0xbe8] sm:$0xff]
    %v7112 = vld [vmem:[#allocation8 + $0xbf0] sm:$0xff]
    %v7113 = vld [vmem:[#allocation8 + $0xbf8] sm:$0xff]
    %v7114 = vld [vmem:[#allocation8 + $0xc00] sm:$0xff]
    %v7115 = vld [vmem:[#allocation8 + $0xc08] sm:$0xff]
    %v7116 = vld [vmem:[#allocation8 + $0xc10] sm:$0xff]
    %v7117 = vld [vmem:[#allocation8 + $0xc18] sm:$0xff]
    %v7118 = vld [vmem:[#allocation8 + $0xc20] sm:$0xff]
    %v7119 = vld [vmem:[#allocation8 + $0xc28] sm:$0xff]
    %v7120 = vld [vmem:[#allocation8 + $0xc30] sm:$0xff]
    %v7121 = vld [vmem:[#allocation8 + $0xc38] sm:$0xff]
    %v7122 = vld [vmem:[#allocation8 + $0xc40] sm:$0xff]
    %v7123 = vld [vmem:[#allocation8 + $0xc48] sm:$0xff]
    %v7124 = vld [vmem:[#allocation8 + $0xc50] sm:$0xff]
    %v7125 = vld [vmem:[#allocation8 + $0xc58] sm:$0xff]
    %v7126 = vld [vmem:[#allocation8 + $0xc60] sm:$0xff]
    %v7127 = vld [vmem:[#allocation8 + $0xc68] sm:$0xff]
    %v7128 = vld [vmem:[#allocation8 + $0xc70] sm:$0xff]
    %v7129 = vld [vmem:[#allocation8 + $0xc78] sm:$0xff]
    %v7130 = vld [vmem:[#allocation8 + $0xc80] sm:$0xff]
    %v7131 = vld [vmem:[#allocation8 + $0xc88] sm:$0xff]
    %v7132 = vld [vmem:[#allocation8 + $0xc90] sm:$0xff]
    %v7133 = vld [vmem:[#allocation8 + $0xc98] sm:$0xff]
    %v7134 = vld [vmem:[#allocation8 + $0xca0] sm:$0xff]
    %v7135 = vld [vmem:[#allocation8 + $0xca8] sm:$0xff]
    %v7136 = vld [vmem:[#allocation8 + $0xcb0] sm:$0xff]
    %v7137 = vld [vmem:[#allocation8 + $0xcb8] sm:$0xff]
    %v7138 = vld [vmem:[#allocation8 + $0xcc0] sm:$0xff]
    %v7139 = vld [vmem:[#allocation8 + $0xcc8] sm:$0xff]
    %v7140 = vld [vmem:[#allocation8 + $0xcd0] sm:$0xff]
    %v7141 = vld [vmem:[#allocation8 + $0xcd8] sm:$0xff]
    %v7142 = vld [vmem:[#allocation8 + $0xce0] sm:$0xff]
    %v7143 = vld [vmem:[#allocation8 + $0xce8] sm:$0xff]
    %v7144 = vld [vmem:[#allocation8 + $0xcf0] sm:$0xff]
    %v7145 = vld [vmem:[#allocation8 + $0xcf8] sm:$0xff]
    %v7146 = vld [vmem:[#allocation8 + $0xd00] sm:$0xff]
    %v7147 = vld [vmem:[#allocation8 + $0xd08] sm:$0xff]
    %v7148 = vld [vmem:[#allocation8 + $0xd10] sm:$0xff]
    %v7149 = vld [vmem:[#allocation8 + $0xd18] sm:$0xff]
    %v7150 = vld [vmem:[#allocation8 + $0xd20] sm:$0xff]
    %v7151 = vld [vmem:[#allocation8 + $0xd28] sm:$0xff]
    %v7152 = vld [vmem:[#allocation8 + $0xd30] sm:$0xff]
    %v7153 = vld [vmem:[#allocation8 + $0xd38] sm:$0xff]
    %v7154 = vld [vmem:[#allocation8 + $0xd40] sm:$0xff]
    %v7155 = vld [vmem:[#allocation8 + $0xd48] sm:$0xff]
    %v7156 = vld [vmem:[#allocation8 + $0xd50] sm:$0xff]
    %v7157 = vld [vmem:[#allocation8 + $0xd58] sm:$0xff]
    %v7158 = vld [vmem:[#allocation8 + $0xd60] sm:$0xff]
    %v7159 = vld [vmem:[#allocation8 + $0xd68] sm:$0xff]
    %v7160 = vld [vmem:[#allocation8 + $0xd70] sm:$0xff]
    %v7161 = vld [vmem:[#allocation8 + $0xd78] sm:$0xff]
    %v7162 = vld [vmem:[#allocation8 + $0xd80] sm:$0xff]
    %v7163 = vld [vmem:[#allocation8 + $0xd88] sm:$0xff]
    %v7164 = vld [vmem:[#allocation8 + $0xd90] sm:$0xff]
    %v7165 = vld [vmem:[#allocation8 + $0xd98] sm:$0xff]
    %v7166 = vld [vmem:[#allocation8 + $0xda0] sm:$0xff]
    %v7167 = vld [vmem:[#allocation8 + $0xda8] sm:$0xff]
    %v7168 = vld [vmem:[#allocation8 + $0xdb0] sm:$0xff]
    %v7169 = vld [vmem:[#allocation8 + $0xdb8] sm:$0xff]
    %v7170 = vld [vmem:[#allocation8 + $0xdc0] sm:$0xff]
    %v7171 = vld [vmem:[#allocation8 + $0xdc8] sm:$0xff]
    %v7172 = vld [vmem:[#allocation8 + $0xdd0] sm:$0xff]
    %v7173 = vld [vmem:[#allocation8 + $0xdd8] sm:$0xff]
    %v7174 = vld [vmem:[#allocation8 + $0xde0] sm:$0xff]
    %v7175 = vld [vmem:[#allocation8 + $0xde8] sm:$0xff]
    %v7176 = vld [vmem:[#allocation8 + $0xdf0] sm:$0xff]
    %v7177 = vld [vmem:[#allocation8 + $0xdf8] sm:$0xff]
    %v7178 = vld [vmem:[#allocation8 + $0xe00] sm:$0xff]
    %v7179 = vld [vmem:[#allocation8 + $0xe08] sm:$0xff]
    %v7180 = vld [vmem:[#allocation8 + $0xe10] sm:$0xff]
    %v7181 = vld [vmem:[#allocation8 + $0xe18] sm:$0xff]
    %v7182 = vld [vmem:[#allocation8 + $0xe20] sm:$0xff]
    %v7183 = vld [vmem:[#allocation8 + $0xe28] sm:$0xff]
    %v7184 = vld [vmem:[#allocation8 + $0xe30] sm:$0xff]
    %v7185 = vld [vmem:[#allocation8 + $0xe38] sm:$0xff]
    %v7186 = vld [vmem:[#allocation8 + $0xe40] sm:$0xff]
    %v7187 = vld [vmem:[#allocation8 + $0xe48] sm:$0xff]
    %v7188 = vld [vmem:[#allocation8 + $0xe50] sm:$0xff]
    %v7189 = vld [vmem:[#allocation8 + $0xe58] sm:$0xff]
    %v7190 = vld [vmem:[#allocation8 + $0xe60] sm:$0xff]
    %v7191 = vld [vmem:[#allocation8 + $0xe68] sm:$0xff]
    %v7192 = vld [vmem:[#allocation8 + $0xe70] sm:$0xff]
    %v7193 = vld [vmem:[#allocation8 + $0xe78] sm:$0xff]
    %v7194 = vld [vmem:[#allocation8 + $0xe80] sm:$0xff]
    %v7195 = vld [vmem:[#allocation8 + $0xe88] sm:$0xff]
    %v7196 = vld [vmem:[#allocation8 + $0xe90] sm:$0xff]
    %v7197 = vld [vmem:[#allocation8 + $0xe98] sm:$0xff]
    %v7198 = vld [vmem:[#allocation8 + $0xea0] sm:$0xff]
    %v7199 = vld [vmem:[#allocation8 + $0xea8] sm:$0xff]
    %v7200 = vld [vmem:[#allocation8 + $0xeb0] sm:$0xff]
    %v7201 = vld [vmem:[#allocation8 + $0xeb8] sm:$0xff]
    %v7202 = vld [vmem:[#allocation8 + $0xec0] sm:$0xff]
    %v7203 = vld [vmem:[#allocation8 + $0xec8] sm:$0xff]
    %v7204 = vld [vmem:[#allocation8 + $0xed0] sm:$0xff]
    %v7205 = vld [vmem:[#allocation8 + $0xed8] sm:$0xff]
    %v7206 = vld [vmem:[#allocation8 + $0xee0] sm:$0xff]
    %v7207 = vld [vmem:[#allocation8 + $0xee8] sm:$0xff]
    %v7208 = vld [vmem:[#allocation8 + $0xef0] sm:$0xff]
    %v7209 = vld [vmem:[#allocation8 + $0xef8] sm:$0xff]
    %v7210 = vld [vmem:[#allocation8 + $0xf00] sm:$0xff]
    %v7211 = vld [vmem:[#allocation8 + $0xf08] sm:$0xff]
    %v7212 = vld [vmem:[#allocation8 + $0xf10] sm:$0xff]
    %v7213 = vld [vmem:[#allocation8 + $0xf18] sm:$0xff]
    %v7214 = vld [vmem:[#allocation8 + $0xf20] sm:$0xff]
    %v7215 = vld [vmem:[#allocation8 + $0xf28] sm:$0xff]
    %v7216 = vld [vmem:[#allocation8 + $0xf30] sm:$0xff]
    %v7217 = vld [vmem:[#allocation8 + $0xf38] sm:$0xff]
    %v7218 = vld [vmem:[#allocation8 + $0xf40] sm:$0xff]
    %v7219 = vld [vmem:[#allocation8 + $0xf48] sm:$0xff]
    %v7220 = vld [vmem:[#allocation8 + $0xf50] sm:$0xff]
    %v7221 = vld [vmem:[#allocation8 + $0xf58] sm:$0xff]
    %v7222 = vld [vmem:[#allocation8 + $0xf60] sm:$0xff]
    %v7223 = vld [vmem:[#allocation8 + $0xf68] sm:$0xff]
    %v7224 = vld [vmem:[#allocation8 + $0xf70] sm:$0xff]
    %v7225 = vld [vmem:[#allocation8 + $0xf78] sm:$0xff]
    %v7226 = vld [vmem:[#allocation8 + $0xf80] sm:$0xff]
    %v7227 = vld [vmem:[#allocation8 + $0xf88] sm:$0xff]
    %v7228 = vld [vmem:[#allocation8 + $0xf90] sm:$0xff]
    %v7229 = vld [vmem:[#allocation8 + $0xf98] sm:$0xff]
    %v7230 = vld [vmem:[#allocation8 + $0xfa0] sm:$0xff]
    %v7231 = vld [vmem:[#allocation8 + $0xfa8] sm:$0xff]
    %v7232 = vld [vmem:[#allocation8 + $0xfb0] sm:$0xff]
    %v7233 = vld [vmem:[#allocation8 + $0xfb8] sm:$0xff]
    %v7234 = vld [vmem:[#allocation8 + $0xfc0] sm:$0xff]
    %v7235 = vld [vmem:[#allocation8 + $0xfc8] sm:$0xff]
    %v7236 = vld [vmem:[#allocation8 + $0xfd0] sm:$0xff]
    %v7237 = vld [vmem:[#allocation8 + $0xfd8] sm:$0xff]
    %v7238 = vld [vmem:[#allocation8 + $0xfe0] sm:$0xff]
    %v7239 = vld [vmem:[#allocation8 + $0xfe8] sm:$0xff]
    %v7240 = vld [vmem:[#allocation8 + $0xff0] sm:$0xff]
    %v7241 = vld [vmem:[#allocation8 + $0xff8] sm:$0xff]
    %v7242 = vld [vmem:[#allocation10] sm:$0xf]
    %v7244 = vlaneseq
    %v7245 = vshrl.u32 %v7244, 7
    %v7246 = vsub.s32 0, %v7245
    %v7247 = vrot.slane %v7242, %v7246
    %v7248 = vlaneseq
    %v7249 = vshrl.u32 %v7248, 7
    %v7250 = vsub.s32 1, %v7249
    %v7251 = vrot.slane %v7242, %v7250
    %v7252 = vlaneseq
    %v7253 = vshrl.u32 %v7252, 7
    %v7254 = vsub.s32 2, %v7253
    %v7255 = vrot.slane %v7242, %v7254
    %v7256 = vlaneseq
    %v7257 = vshrl.u32 %v7256, 7
    %v7258 = vsub.s32 3, %v7257
    %v7259 = vrot.slane %v7242, %v7258
    %7264 = vmatprep.subr.mxu0 %v6791
    %7265 = vmatpush1.msra.mxu0 %v6790
    %7266 = vmatprep.subr.mxu0 %v6787
    %7267 = vmatpush1.msra.mxu0 %v6786
    %7268 = vmatprep.subr.mxu0 %v6783
    %7269 = vmatpush1.msra.mxu0 %v6782
    %7270 = vmatprep.subr.mxu0 %v6779
    %7271 = vmatpush1.msra.mxu0 %v6778
    %7272 = vmatprep.subr.mxu0 %v6775
    %7273 = vmatpush1.msra.mxu0 %v6774
    %7274 = vmatprep.subr.mxu0 %v6771
    %7275 = vmatpush1.msra.mxu0 %v6770
    %7276 = vmatprep.subr.mxu0 %v6767
    %7277 = vmatpush1.msra.mxu0 %v6766
    %7278 = vmatprep.subr.mxu0 %v6763
    %7279 = vmatpush1.msra.mxu0 %v6762
    %7280 = vmatprep.subr.mxu0 %v6759
    %7281 = vmatpush1.msra.mxu0 %v6758
    %7282 = vmatprep.subr.mxu0 %v6755
    %7283 = vmatpush1.msra.mxu0 %v6754
    %7284 = vmatprep.subr.mxu0 %v6751
    %7285 = vmatpush1.msra.mxu0 %v6750
    %7286 = vmatprep.subr.mxu0 %v6747
    %7287 = vmatpush1.msra.mxu0 %v6746
    %7288 = vmatprep.subr.mxu0 %v6743
    %7289 = vmatpush1.msra.mxu0 %v6742
    %7290 = vmatprep.subr.mxu0 %v6739
    %7291 = vmatpush1.msra.mxu0 %v6738
    %7292 = vmatprep.subr.mxu0 %v6735
    %7293 = vmatpush1.msra.mxu0 %v6734
    %7294 = vmatprep.subr.mxu0 %v6731
    %7295 = vmatpush1.msra.mxu0 %v6730
    %7296 = vmatprep.subr.mxu0 %v6855
    %7297 = vmatpush2.msra.mxu0 %v6854
    %7298 = vmatprep.subr.mxu0 %v6851
    %7299 = vmatpush2.msra.mxu0 %v6850
    %7300 = vmatprep.subr.mxu0 %v6847
    %7301 = vmatpush2.msra.mxu0 %v6846
    %7302 = vmatprep.subr.mxu0 %v6843
    %7303 = vmatpush2.msra.mxu0 %v6842
    %7304 = vmatprep.subr.mxu0 %v6839
    %7305 = vmatpush2.msra.mxu0 %v6838
    %7306 = vmatprep.subr.mxu0 %v6835
    %7307 = vmatpush2.msra.mxu0 %v6834
    %7308 = vmatprep.subr.mxu0 %v6831
    %7309 = vmatpush2.msra.mxu0 %v6830
    %7310 = vmatprep.subr.mxu0 %v6827
    %7311 = vmatpush2.msra.mxu0 %v6826
    %7312 = vmatprep.subr.mxu0 %v6823
    %7313 = vmatpush2.msra.mxu0 %v6822
    %7314 = vmatprep.subr.mxu0 %v6819
    %7315 = vmatpush2.msra.mxu0 %v6818
    %7316 = vmatprep.subr.mxu0 %v6815
    %7317 = vmatpush2.msra.mxu0 %v6814
    %7318 = vmatprep.subr.mxu0 %v6811
    %7319 = vmatpush2.msra.mxu0 %v6810
    %7320 = vmatprep.subr.mxu0 %v6807
    %7321 = vmatpush2.msra.mxu0 %v6806
    %7322 = vmatprep.subr.mxu0 %v6803
    %7323 = vmatpush2.msra.mxu0 %v6802
    %7324 = vmatprep.subr.mxu0 %v6799
    %7325 = vmatpush2.msra.mxu0 %v6798
    %7326 = vmatprep.subr.mxu0 %v6795
    %7327 = vmatpush2.msra.mxu0 %v6794
    %7328 = vmatprep.mubr.f32.mxu0 %v6723
    %7329 = vmatmul.mubr.f32.gmra.mxu0 %v6722
    %v7330 = vpop.f32.mrf.mxu0
    %v7331 = vadd.f32 %v7247, %v7330
    %v7332 = vpop.f32.mrf.mxu0
    %v7333 = vadd.f32 %v7251, %v7332
    %7334 = vdwg.mxu0
    %7335 = vmatprep.subr.mxu0 %v6919
    %7336 = vmatpush1.msra.mxu0 %v6918
    %7337 = vmatprep.subr.mxu0 %v6915
    %7338 = vmatpush1.msra.mxu0 %v6914
    %7339 = vmatprep.subr.mxu0 %v6911
    %7340 = vmatpush1.msra.mxu0 %v6910
    %7341 = vmatprep.subr.mxu0 %v6907
    %7342 = vmatpush1.msra.mxu0 %v6906
    %7343 = vmatprep.subr.mxu0 %v6903
    %7344 = vmatpush1.msra.mxu0 %v6902
    %7345 = vmatprep.subr.mxu0 %v6899
    %7346 = vmatpush1.msra.mxu0 %v6898
    %7347 = vmatprep.subr.mxu0 %v6895
    %7348 = vmatpush1.msra.mxu0 %v6894
    %7349 = vmatprep.subr.mxu0 %v6891
    %7350 = vmatpush1.msra.mxu0 %v6890
    %7351 = vmatprep.subr.mxu0 %v6887
    %7352 = vmatpush1.msra.mxu0 %v6886
    %7353 = vmatprep.subr.mxu0 %v6883
    %7354 = vmatpush1.msra.mxu0 %v6882
    %7355 = vmatprep.subr.mxu0 %v6879
    %7356 = vmatpush1.msra.mxu0 %v6878
    %7357 = vmatprep.subr.mxu0 %v6875
    %7358 = vmatpush1.msra.mxu0 %v6874
    %7359 = vmatprep.subr.mxu0 %v6871
    %7360 = vmatpush1.msra.mxu0 %v6870
    %7361 = vmatprep.subr.mxu0 %v6867
    %7362 = vmatpush1.msra.mxu0 %v6866
    %7363 = vmatprep.subr.mxu0 %v6863
    %7364 = vmatpush1.msra.mxu0 %v6862
    %7365 = vmatprep.subr.mxu0 %v6859
    %7366 = vmatpush1.msra.mxu0 %v6858
    %7367 = vmatprep.subr.mxu0 %v6983
    %7368 = vmatpush2.msra.mxu0 %v6982
    %7369 = vmatprep.subr.mxu0 %v6979
    %7370 = vmatpush2.msra.mxu0 %v6978
    %7371 = vmatprep.subr.mxu0 %v6975
    %7372 = vmatpush2.msra.mxu0 %v6974
    %7373 = vmatprep.subr.mxu0 %v6971
    %7374 = vmatpush2.msra.mxu0 %v6970
    %7375 = vmatprep.subr.mxu0 %v6967
    %7376 = vmatpush2.msra.mxu0 %v6966
    %7377 = vmatprep.subr.mxu0 %v6963
    %7378 = vmatpush2.msra.mxu0 %v6962
    %7379 = vmatprep.subr.mxu0 %v6959
    %7380 = vmatpush2.msra.mxu0 %v6958
    %7381 = vmatprep.subr.mxu0 %v6955
    %7382 = vmatpush2.msra.mxu0 %v6954
    %7383 = vmatprep.subr.mxu0 %v6951
    %7384 = vmatpush2.msra.mxu0 %v6950
    %7385 = vmatprep.subr.mxu0 %v6947
    %7386 = vmatpush2.msra.mxu0 %v6946
    %7387 = vmatprep.subr.mxu0 %v6943
    %7388 = vmatpush2.msra.mxu0 %v6942
    %7389 = vmatprep.subr.mxu0 %v6939
    %7390 = vmatpush2.msra.mxu0 %v6938
    %7391 = vmatprep.subr.mxu0 %v6935
    %7392 = vmatpush2.msra.mxu0 %v6934
    %7393 = vmatprep.subr.mxu0 %v6931
    %7394 = vmatpush2.msra.mxu0 %v6930
    %7395 = vmatprep.subr.mxu0 %v6927
    %7396 = vmatpush2.msra.mxu0 %v6926
    %7397 = vmatprep.subr.mxu0 %v6923
    %7398 = vmatpush2.msra.mxu0 %v6922
    %7399 = vmatprep.mubr.f32.mxu0 %v6725
    %7400 = vmatmul.mubr.f32.gmra.mxu0 %v6724
    %v7401 = vpop.f32.mrf.mxu0
    %v7402 = vadd.f32 %v7331, %v7401
    %v7403 = vpop.f32.mrf.mxu0
    %v7404 = vadd.f32 %v7333, %v7403
    %7405 = vdwg.mxu0
    %7406 = vmatprep.subr.mxu0 %v7047
    %7407 = vmatpush1.msra.mxu0 %v7046
    %7408 = vmatprep.subr.mxu0 %v7043
    %7409 = vmatpush1.msra.mxu0 %v7042
    %7410 = vmatprep.subr.mxu0 %v7039
    %7411 = vmatpush1.msra.mxu0 %v7038
    %7412 = vmatprep.subr.mxu0 %v7035
    %7413 = vmatpush1.msra.mxu0 %v7034
    %7414 = vmatprep.subr.mxu0 %v7031
    %7415 = vmatpush1.msra.mxu0 %v7030
    %7416 = vmatprep.subr.mxu0 %v7027
    %7417 = vmatpush1.msra.mxu0 %v7026
    %7418 = vmatprep.subr.mxu0 %v7023
    %7419 = vmatpush1.msra.mxu0 %v7022
    %7420 = vmatprep.subr.mxu0 %v7019
    %7421 = vmatpush1.msra.mxu0 %v7018
    %7422 = vmatprep.subr.mxu0 %v7015
    %7423 = vmatpush1.msra.mxu0 %v7014
    %7424 = vmatprep.subr.mxu0 %v7011
    %7425 = vmatpush1.msra.mxu0 %v7010
    %7426 = vmatprep.subr.mxu0 %v7007
    %7427 = vmatpush1.msra.mxu0 %v7006
    %7428 = vmatprep.subr.mxu0 %v7003
    %7429 = vmatpush1.msra.mxu0 %v7002
    %7430 = vmatprep.subr.mxu0 %v6999
    %7431 = vmatpush1.msra.mxu0 %v6998
    %7432 = vmatprep.subr.mxu0 %v6995
    %7433 = vmatpush1.msra.mxu0 %v6994
    %7434 = vmatprep.subr.mxu0 %v6991
    %7435 = vmatpush1.msra.mxu0 %v6990
    %7436 = vmatprep.subr.mxu0 %v6987
    %7437 = vmatpush1.msra.mxu0 %v6986
    %7438 = vmatprep.subr.mxu0 %v7111
    %7439 = vmatpush2.msra.mxu0 %v7110
    %7440 = vmatprep.subr.mxu0 %v7107
    %7441 = vmatpush2.msra.mxu0 %v7106
    %7442 = vmatprep.subr.mxu0 %v7103
    %7443 = vmatpush2.msra.mxu0 %v7102
    %7444 = vmatprep.subr.mxu0 %v7099
    %7445 = vmatpush2.msra.mxu0 %v7098
    %7446 = vmatprep.subr.mxu0 %v7095
    %7447 = vmatpush2.msra.mxu0 %v7094
    %7448 = vmatprep.subr.mxu0 %v7091
    %7449 = vmatpush2.msra.mxu0 %v7090
    %7450 = vmatprep.subr.mxu0 %v7087
    %7451 = vmatpush2.msra.mxu0 %v7086
    %7452 = vmatprep.subr.mxu0 %v7083
    %7453 = vmatpush2.msra.mxu0 %v7082
    %7454 = vmatprep.subr.mxu0 %v7079
    %7455 = vmatpush2.msra.mxu0 %v7078
    %7456 = vmatprep.subr.mxu0 %v7075
    %7457 = vmatpush2.msra.mxu0 %v7074
    %7458 = vmatprep.subr.mxu0 %v7071
    %7459 = vmatpush2.msra.mxu0 %v7070
    %7460 = vmatprep.subr.mxu0 %v7067
    %7461 = vmatpush2.msra.mxu0 %v7066
    %7462 = vmatprep.subr.mxu0 %v7063
    %7463 = vmatpush2.msra.mxu0 %v7062
    %7464 = vmatprep.subr.mxu0 %v7059
    %7465 = vmatpush2.msra.mxu0 %v7058
    %7466 = vmatprep.subr.mxu0 %v7055
    %7467 = vmatpush2.msra.mxu0 %v7054
    %7468 = vmatprep.subr.mxu0 %v7051
    %7469 = vmatpush2.msra.mxu0 %v7050
    %7470 = vmatprep.mubr.f32.mxu0 %v6727
    %7471 = vmatmul.mubr.f32.gmra.mxu0 %v6726
    %v7472 = vpop.f32.mrf.mxu0
    %v7473 = vadd.f32 %v7402, %v7472
    %v7474 = vpop.f32.mrf.mxu0
    %v7475 = vadd.f32 %v7404, %v7474
    %7476 = vdwg.mxu0
    %7477 = vmatprep.subr.mxu0 %v7175
    %7478 = vmatpush1.msra.mxu0 %v7174
    %7479 = vmatprep.subr.mxu0 %v7171
    %7480 = vmatpush1.msra.mxu0 %v7170
    %7481 = vmatprep.subr.mxu0 %v7167
    %7482 = vmatpush1.msra.mxu0 %v7166
    %7483 = vmatprep.subr.mxu0 %v7163
    %7484 = vmatpush1.msra.mxu0 %v7162
    %7485 = vmatprep.subr.mxu0 %v7159
    %7486 = vmatpush1.msra.mxu0 %v7158
    %7487 = vmatprep.subr.mxu0 %v7155
    %7488 = vmatpush1.msra.mxu0 %v7154
    %7489 = vmatprep.subr.mxu0 %v7151
    %7490 = vmatpush1.msra.mxu0 %v7150
    %7491 = vmatprep.subr.mxu0 %v7147
    %7492 = vmatpush1.msra.mxu0 %v7146
    %7493 = vmatprep.subr.mxu0 %v7143
    %7494 = vmatpush1.msra.mxu0 %v7142
    %7495 = vmatprep.subr.mxu0 %v7139
    %7496 = vmatpush1.msra.mxu0 %v7138
    %7497 = vmatprep.subr.mxu0 %v7135
    %7498 = vmatpush1.msra.mxu0 %v7134
    %7499 = vmatprep.subr.mxu0 %v7131
    %7500 = vmatpush1.msra.mxu0 %v7130
    %7501 = vmatprep.subr.mxu0 %v7127
    %7502 = vmatpush1.msra.mxu0 %v7126
    %7503 = vmatprep.subr.mxu0 %v7123
    %7504 = vmatpush1.msra.mxu0 %v7122
    %7505 = vmatprep.subr.mxu0 %v7119
    %7506 = vmatpush1.msra.mxu0 %v7118
    %7507 = vmatprep.subr.mxu0 %v7115
    %7508 = vmatpush1.msra.mxu0 %v7114
    %7509 = vmatprep.subr.mxu0 %v7239
    %7510 = vmatpush2.msra.mxu0 %v7238
    %7511 = vmatprep.subr.mxu0 %v7235
    %7512 = vmatpush2.msra.mxu0 %v7234
    %7513 = vmatprep.subr.mxu0 %v7231
    %7514 = vmatpush2.msra.mxu0 %v7230
    %7515 = vmatprep.subr.mxu0 %v7227
    %7516 = vmatpush2.msra.mxu0 %v7226
    %7517 = vmatprep.subr.mxu0 %v7223
    %7518 = vmatpush2.msra.mxu0 %v7222
    %7519 = vmatprep.subr.mxu0 %v7219
    %7520 = vmatpush2.msra.mxu0 %v7218
    %7521 = vmatprep.subr.mxu0 %v7215
    %7522 = vmatpush2.msra.mxu0 %v7214
    %7523 = vmatprep.subr.mxu0 %v7211
    %7524 = vmatpush2.msra.mxu0 %v7210
    %7525 = vmatprep.subr.mxu0 %v7207
    %7526 = vmatpush2.msra.mxu0 %v7206
    %7527 = vmatprep.subr.mxu0 %v7203
    %7528 = vmatpush2.msra.mxu0 %v7202
    %7529 = vmatprep.subr.mxu0 %v7199
    %7530 = vmatpush2.msra.mxu0 %v7198
    %7531 = vmatprep.subr.mxu0 %v7195
    %7532 = vmatpush2.msra.mxu0 %v7194
    %7533 = vmatprep.subr.mxu0 %v7191
    %7534 = vmatpush2.msra.mxu0 %v7190
    %7535 = vmatprep.subr.mxu0 %v7187
    %7536 = vmatpush2.msra.mxu0 %v7186
    %7537 = vmatprep.subr.mxu0 %v7183
    %7538 = vmatpush2.msra.mxu0 %v7182
    %7539 = vmatprep.subr.mxu0 %v7179
    %7540 = vmatpush2.msra.mxu0 %v7178
    %7541 = vmatprep.mubr.f32.mxu0 %v6729
    %7542 = vmatmul.mubr.f32.gmra.mxu0 %v6728
    %v7543 = vpop.f32.mrf.mxu0
    %v7544 = vadd.f32 %v7473, %v7543
    %v7545 = vpop.f32.mrf.mxu0
    %v7546 = vadd.f32 %v7475, %v7545
    %7547 = vdwg.mxu0
    %7548 = vmatprep.subr.mxu0 %v6793
    %7549 = vmatpush1.msra.mxu0 %v6792
    %7550 = vmatprep.subr.mxu0 %v6789
    %7551 = vmatpush1.msra.mxu0 %v6788
    %7552 = vmatprep.subr.mxu0 %v6785
    %7553 = vmatpush1.msra.mxu0 %v6784
    %7554 = vmatprep.subr.mxu0 %v6781
    %7555 = vmatpush1.msra.mxu0 %v6780
    %7556 = vmatprep.subr.mxu0 %v6777
    %7557 = vmatpush1.msra.mxu0 %v6776
    %7558 = vmatprep.subr.mxu0 %v6773
    %7559 = vmatpush1.msra.mxu0 %v6772
    %7560 = vmatprep.subr.mxu0 %v6769
    %7561 = vmatpush1.msra.mxu0 %v6768
    %7562 = vmatprep.subr.mxu0 %v6765
    %7563 = vmatpush1.msra.mxu0 %v6764
    %7564 = vmatprep.subr.mxu0 %v6761
    %7565 = vmatpush1.msra.mxu0 %v6760
    %7566 = vmatprep.subr.mxu0 %v6757
    %7567 = vmatpush1.msra.mxu0 %v6756
    %7568 = vmatprep.subr.mxu0 %v6753
    %7569 = vmatpush1.msra.mxu0 %v6752
    %7570 = vmatprep.subr.mxu0 %v6749
    %7571 = vmatpush1.msra.mxu0 %v6748
    %7572 = vmatprep.subr.mxu0 %v6745
    %7573 = vmatpush1.msra.mxu0 %v6744
    %7574 = vmatprep.subr.mxu0 %v6741
    %7575 = vmatpush1.msra.mxu0 %v6740
    %7576 = vmatprep.subr.mxu0 %v6737
    %7577 = vmatpush1.msra.mxu0 %v6736
    %7578 = vmatprep.subr.mxu0 %v6733
    %7579 = vmatpush1.msra.mxu0 %v6732
    %7580 = vmatprep.subr.mxu0 %v6857
    %7581 = vmatpush2.msra.mxu0 %v6856
    %7582 = vmatprep.subr.mxu0 %v6853
    %7583 = vmatpush2.msra.mxu0 %v6852
    %7584 = vmatprep.subr.mxu0 %v6849
    %7585 = vmatpush2.msra.mxu0 %v6848
    %7586 = vmatprep.subr.mxu0 %v6845
    %7587 = vmatpush2.msra.mxu0 %v6844
    %7588 = vmatprep.subr.mxu0 %v6841
    %7589 = vmatpush2.msra.mxu0 %v6840
    %7590 = vmatprep.subr.mxu0 %v6837
    %7591 = vmatpush2.msra.mxu0 %v6836
    %7592 = vmatprep.subr.mxu0 %v6833
    %7593 = vmatpush2.msra.mxu0 %v6832
    %7594 = vmatprep.subr.mxu0 %v6829
    %7595 = vmatpush2.msra.mxu0 %v6828
    %7596 = vmatprep.subr.mxu0 %v6825
    %7597 = vmatpush2.msra.mxu0 %v6824
    %7598 = vmatprep.subr.mxu0 %v6821
    %7599 = vmatpush2.msra.mxu0 %v6820
    %7600 = vmatprep.subr.mxu0 %v6817
    %7601 = vmatpush2.msra.mxu0 %v6816
    %7602 = vmatprep.subr.mxu0 %v6813
    %7603 = vmatpush2.msra.mxu0 %v6812
    %7604 = vmatprep.subr.mxu0 %v6809
    %7605 = vmatpush2.msra.mxu0 %v6808
    %7606 = vmatprep.subr.mxu0 %v6805
    %7607 = vmatpush2.msra.mxu0 %v6804
    %7608 = vmatprep.subr.mxu0 %v6801
    %7609 = vmatpush2.msra.mxu0 %v6800
    %7610 = vmatprep.subr.mxu0 %v6797
    %7611 = vmatpush2.msra.mxu0 %v6796
    %7612 = vmatprep.mubr.f32.mxu0 %v6723
    %7613 = vmatmul.mubr.f32.gmra.mxu0 %v6722
    %v7614 = vpop.f32.mrf.mxu0
    %v7615 = vadd.f32 %v7255, %v7614
    %v7616 = vpop.f32.mrf.mxu0
    %v7617 = vadd.f32 %v7259, %v7616
    %7618 = vdwg.mxu0
    %7619 = vmatprep.subr.mxu0 %v6921
    %7620 = vmatpush1.msra.mxu0 %v6920
    %7621 = vmatprep.subr.mxu0 %v6917
    %7622 = vmatpush1.msra.mxu0 %v6916
    %7623 = vmatprep.subr.mxu0 %v6913
    %7624 = vmatpush1.msra.mxu0 %v6912
    %7625 = vmatprep.subr.mxu0 %v6909
    %7626 = vmatpush1.msra.mxu0 %v6908
    %7627 = vmatprep.subr.mxu0 %v6905
    %7628 = vmatpush1.msra.mxu0 %v6904
    %7629 = vmatprep.subr.mxu0 %v6901
    %7630 = vmatpush1.msra.mxu0 %v6900
    %7631 = vmatprep.subr.mxu0 %v6897
    %7632 = vmatpush1.msra.mxu0 %v6896
    %7633 = vmatprep.subr.mxu0 %v6893
    %7634 = vmatpush1.msra.mxu0 %v6892
    %7635 = vmatprep.subr.mxu0 %v6889
    %7636 = vmatpush1.msra.mxu0 %v6888
    %7637 = vmatprep.subr.mxu0 %v6885
    %7638 = vmatpush1.msra.mxu0 %v6884
    %7639 = vmatprep.subr.mxu0 %v6881
    %7640 = vmatpush1.msra.mxu0 %v6880
    %7641 = vmatprep.subr.mxu0 %v6877
    %7642 = vmatpush1.msra.mxu0 %v6876
    %7643 = vmatprep.subr.mxu0 %v6873
    %7644 = vmatpush1.msra.mxu0 %v6872
    %7645 = vmatprep.subr.mxu0 %v6869
    %7646 = vmatpush1.msra.mxu0 %v6868
    %7647 = vmatprep.subr.mxu0 %v6865
    %7648 = vmatpush1.msra.mxu0 %v6864
    %7649 = vmatprep.subr.mxu0 %v6861
    %7650 = vmatpush1.msra.mxu0 %v6860
    %7651 = vmatprep.subr.mxu0 %v6985
    %7652 = vmatpush2.msra.mxu0 %v6984
    %7653 = vmatprep.subr.mxu0 %v6981
    %7654 = vmatpush2.msra.mxu0 %v6980
    %7655 = vmatprep.subr.mxu0 %v6977
    %7656 = vmatpush2.msra.mxu0 %v6976
    %7657 = vmatprep.subr.mxu0 %v6973
    %7658 = vmatpush2.msra.mxu0 %v6972
    %7659 = vmatprep.subr.mxu0 %v6969
    %7660 = vmatpush2.msra.mxu0 %v6968
    %7661 = vmatprep.subr.mxu0 %v6965
    %7662 = vmatpush2.msra.mxu0 %v6964
    %7663 = vmatprep.subr.mxu0 %v6961
    %7664 = vmatpush2.msra.mxu0 %v6960
    %7665 = vmatprep.subr.mxu0 %v6957
    %7666 = vmatpush2.msra.mxu0 %v6956
    %7667 = vmatprep.subr.mxu0 %v6953
    %7668 = vmatpush2.msra.mxu0 %v6952
    %7669 = vmatprep.subr.mxu0 %v6949
    %7670 = vmatpush2.msra.mxu0 %v6948
    %7671 = vmatprep.subr.mxu0 %v6945
    %7672 = vmatpush2.msra.mxu0 %v6944
    %7673 = vmatprep.subr.mxu0 %v6941
    %7674 = vmatpush2.msra.mxu0 %v6940
    %7675 = vmatprep.subr.mxu0 %v6937
    %7676 = vmatpush2.msra.mxu0 %v6936
    %7677 = vmatprep.subr.mxu0 %v6933
    %7678 = vmatpush2.msra.mxu0 %v6932
    %7679 = vmatprep.subr.mxu0 %v6929
    %7680 = vmatpush2.msra.mxu0 %v6928
    %7681 = vmatprep.subr.mxu0 %v6925
    %7682 = vmatpush2.msra.mxu0 %v6924
    %7683 = vmatprep.mubr.f32.mxu0 %v6725
    %7684 = vmatmul.mubr.f32.gmra.mxu0 %v6724
    %v7685 = vpop.f32.mrf.mxu0
    %v7686 = vadd.f32 %v7615, %v7685
    %v7687 = vpop.f32.mrf.mxu0
    %v7688 = vadd.f32 %v7617, %v7687
    %7689 = vdwg.mxu0
    %7690 = vmatprep.subr.mxu0 %v7049
    %7691 = vmatpush1.msra.mxu0 %v7048
    %7692 = vmatprep.subr.mxu0 %v7045
    %7693 = vmatpush1.msra.mxu0 %v7044
    %7694 = vmatprep.subr.mxu0 %v7041
    %7695 = vmatpush1.msra.mxu0 %v7040
    %7696 = vmatprep.subr.mxu0 %v7037
    %7697 = vmatpush1.msra.mxu0 %v7036
    %7698 = vmatprep.subr.mxu0 %v7033
    %7699 = vmatpush1.msra.mxu0 %v7032
    %7700 = vmatprep.subr.mxu0 %v7029
    %7701 = vmatpush1.msra.mxu0 %v7028
    %7702 = vmatprep.subr.mxu0 %v7025
    %7703 = vmatpush1.msra.mxu0 %v7024
    %7704 = vmatprep.subr.mxu0 %v7021
    %7705 = vmatpush1.msra.mxu0 %v7020
    %7706 = vmatprep.subr.mxu0 %v7017
    %7707 = vmatpush1.msra.mxu0 %v7016
    %7708 = vmatprep.subr.mxu0 %v7013
    %7709 = vmatpush1.msra.mxu0 %v7012
    %7710 = vmatprep.subr.mxu0 %v7009
    %7711 = vmatpush1.msra.mxu0 %v7008
    %7712 = vmatprep.subr.mxu0 %v7005
    %7713 = vmatpush1.msra.mxu0 %v7004
    %7714 = vmatprep.subr.mxu0 %v7001
    %7715 = vmatpush1.msra.mxu0 %v7000
    %7716 = vmatprep.subr.mxu0 %v6997
    %7717 = vmatpush1.msra.mxu0 %v6996
    %7718 = vmatprep.subr.mxu0 %v6993
    %7719 = vmatpush1.msra.mxu0 %v6992
    %7720 = vmatprep.subr.mxu0 %v6989
    %7721 = vmatpush1.msra.mxu0 %v6988
    %7722 = vmatprep.subr.mxu0 %v7113
    %7723 = vmatpush2.msra.mxu0 %v7112
    %7724 = vmatprep.subr.mxu0 %v7109
    %7725 = vmatpush2.msra.mxu0 %v7108
    %7726 = vmatprep.subr.mxu0 %v7105
    %7727 = vmatpush2.msra.mxu0 %v7104
    %7728 = vmatprep.subr.mxu0 %v7101
    %7729 = vmatpush2.msra.mxu0 %v7100
    %7730 = vmatprep.subr.mxu0 %v7097
    %7731 = vmatpush2.msra.mxu0 %v7096
    %7732 = vmatprep.subr.mxu0 %v7093
    %7733 = vmatpush2.msra.mxu0 %v7092
    %7734 = vmatprep.subr.mxu0 %v7089
    %7735 = vmatpush2.msra.mxu0 %v7088
    %7736 = vmatprep.subr.mxu0 %v7085
    %7737 = vmatpush2.msra.mxu0 %v7084
    %7738 = vmatprep.subr.mxu0 %v7081
    %7739 = vmatpush2.msra.mxu0 %v7080
    %7740 = vmatprep.subr.mxu0 %v7077
    %7741 = vmatpush2.msra.mxu0 %v7076
    %7742 = vmatprep.subr.mxu0 %v7073
    %7743 = vmatpush2.msra.mxu0 %v7072
    %7744 = vmatprep.subr.mxu0 %v7069
    %7745 = vmatpush2.msra.mxu0 %v7068
    %7746 = vmatprep.subr.mxu0 %v7065
    %7747 = vmatpush2.msra.mxu0 %v7064
    %7748 = vmatprep.subr.mxu0 %v7061
    %7749 = vmatpush2.msra.mxu0 %v7060
    %7750 = vmatprep.subr.mxu0 %v7057
    %7751 = vmatpush2.msra.mxu0 %v7056
    %7752 = vmatprep.subr.mxu0 %v7053
    %7753 = vmatpush2.msra.mxu0 %v7052
    %7754 = vmatprep.mubr.f32.mxu0 %v6727
    %7755 = vmatmul.mubr.f32.gmra.mxu0 %v6726
    %v7756 = vpop.f32.mrf.mxu0
    %v7757 = vadd.f32 %v7686, %v7756
    %v7758 = vpop.f32.mrf.mxu0
    %v7759 = vadd.f32 %v7688, %v7758
    %7760 = vdwg.mxu0
    %7761 = vmatprep.subr.mxu0 %v7177
    %7762 = vmatpush1.msra.mxu0 %v7176
    %7763 = vmatprep.subr.mxu0 %v7173
    %7764 = vmatpush1.msra.mxu0 %v7172
    %7765 = vmatprep.subr.mxu0 %v7169
    %7766 = vmatpush1.msra.mxu0 %v7168
    %7767 = vmatprep.subr.mxu0 %v7165
    %7768 = vmatpush1.msra.mxu0 %v7164
    %7769 = vmatprep.subr.mxu0 %v7161
    %7770 = vmatpush1.msra.mxu0 %v7160
    %7771 = vmatprep.subr.mxu0 %v7157
    %7772 = vmatpush1.msra.mxu0 %v7156
    %7773 = vmatprep.subr.mxu0 %v7153
    %7774 = vmatpush1.msra.mxu0 %v7152
    %7775 = vmatprep.subr.mxu0 %v7149
    %7776 = vmatpush1.msra.mxu0 %v7148
    %7777 = vmatprep.subr.mxu0 %v7145
    %7778 = vmatpush1.msra.mxu0 %v7144
    %7779 = vmatprep.subr.mxu0 %v7141
    %7780 = vmatpush1.msra.mxu0 %v7140
    %7781 = vmatprep.subr.mxu0 %v7137
    %7782 = vmatpush1.msra.mxu0 %v7136
    %7783 = vmatprep.subr.mxu0 %v7133
    %7784 = vmatpush1.msra.mxu0 %v7132
    %7785 = vmatprep.subr.mxu0 %v7129
    %7786 = vmatpush1.msra.mxu0 %v7128
    %7787 = vmatprep.subr.mxu0 %v7125
    %7788 = vmatpush1.msra.mxu0 %v7124
    %7789 = vmatprep.subr.mxu0 %v7121
    %7790 = vmatpush1.msra.mxu0 %v7120
    %7791 = vmatprep.subr.mxu0 %v7117
    %7792 = vmatpush1.msra.mxu0 %v7116
    %7793 = vmatprep.subr.mxu0 %v7241
    %7794 = vmatpush2.msra.mxu0 %v7240
    %7795 = vmatprep.subr.mxu0 %v7237
    %7796 = vmatpush2.msra.mxu0 %v7236
    %7797 = vmatprep.subr.mxu0 %v7233
    %7798 = vmatpush2.msra.mxu0 %v7232
    %7799 = vmatprep.subr.mxu0 %v7229
    %7800 = vmatpush2.msra.mxu0 %v7228
    %7801 = vmatprep.subr.mxu0 %v7225
    %7802 = vmatpush2.msra.mxu0 %v7224
    %7803 = vmatprep.subr.mxu0 %v7221
    %7804 = vmatpush2.msra.mxu0 %v7220
    %7805 = vmatprep.subr.mxu0 %v7217
    %7806 = vmatpush2.msra.mxu0 %v7216
    %7807 = vmatprep.subr.mxu0 %v7213
    %7808 = vmatpush2.msra.mxu0 %v7212
    %7809 = vmatprep.subr.mxu0 %v7209
    %7810 = vmatpush2.msra.mxu0 %v7208
    %7811 = vmatprep.subr.mxu0 %v7205
    %7812 = vmatpush2.msra.mxu0 %v7204
    %7813 = vmatprep.subr.mxu0 %v7201
    %7814 = vmatpush2.msra.mxu0 %v7200
    %7815 = vmatprep.subr.mxu0 %v7197
    %7816 = vmatpush2.msra.mxu0 %v7196
    %7817 = vmatprep.subr.mxu0 %v7193
    %7818 = vmatpush2.msra.mxu0 %v7192
    %7819 = vmatprep.subr.mxu0 %v7189
    %7820 = vmatpush2.msra.mxu0 %v7188
    %7821 = vmatprep.subr.mxu0 %v7185
    %7822 = vmatpush2.msra.mxu0 %v7184
    %7823 = vmatprep.subr.mxu0 %v7181
    %7824 = vmatpush2.msra.mxu0 %v7180
    %7825 = vmatprep.mubr.f32.mxu0 %v6729
    %7826 = vmatmul.mubr.f32.gmra.mxu0 %v6728
    %v7827 = vpop.f32.mrf.mxu0
    %v7828 = vadd.f32 %v7757, %v7827
    %v7829 = vpop.f32.mrf.mxu0
    %v7830 = vadd.f32 %v7759, %v7829
    %7831 = vdwg.mxu0
    %v7832 = vmax.f32 %v7544, 0.0
    %v7833 = vmax.f32 %v7546, 0.0
    %v7834 = vmax.f32 %v7828, 0.0
    %v7835 = vmax.f32 %v7830, 0.0
    %v7836 = vld [vmem:[#allocation11] sm:$0xff]
    %v7837 = vld [vmem:[#allocation11 + $0x8] sm:$0xff]
    %v7838 = vld [vmem:[#allocation11 + $0x10] sm:$0xff]
    %v7839 = vld [vmem:[#allocation11 + $0x18] sm:$0xff]
    %v7840 = vld [vmem:[#allocation11 + $0x20] sm:$0xff]
    %v7841 = vld [vmem:[#allocation11 + $0x28] sm:$0xff]
    %v7842 = vld [vmem:[#allocation11 + $0x30] sm:$0xff]
    %v7843 = vld [vmem:[#allocation11 + $0x38] sm:$0xff]
    %v7844 = vld [vmem:[#allocation11 + $0x40] sm:$0xff]
    %v7845 = vld [vmem:[#allocation11 + $0x48] sm:$0xff]
    %v7846 = vld [vmem:[#allocation11 + $0x50] sm:$0xff]
    %v7847 = vld [vmem:[#allocation11 + $0x58] sm:$0xff]
    %v7848 = vld [vmem:[#allocation11 + $0x60] sm:$0xff]
    %v7849 = vld [vmem:[#allocation11 + $0x68] sm:$0xff]
    %v7850 = vld [vmem:[#allocation11 + $0x70] sm:$0xff]
    %v7851 = vld [vmem:[#allocation11 + $0x78] sm:$0xff]
    %v7852 = vld [vmem:[#allocation11 + $0x80] sm:$0xff]
    %v7853 = vld [vmem:[#allocation11 + $0x88] sm:$0xff]
    %v7854 = vld [vmem:[#allocation11 + $0x90] sm:$0xff]
    %v7855 = vld [vmem:[#allocation11 + $0x98] sm:$0xff]
    %v7856 = vld [vmem:[#allocation11 + $0xa0] sm:$0xff]
    %v7857 = vld [vmem:[#allocation11 + $0xa8] sm:$0xff]
    %v7858 = vld [vmem:[#allocation11 + $0xb0] sm:$0xff]
    %v7859 = vld [vmem:[#allocation11 + $0xb8] sm:$0xff]
    %v7860 = vld [vmem:[#allocation11 + $0xc0] sm:$0xff]
    %v7861 = vld [vmem:[#allocation11 + $0xc8] sm:$0xff]
    %v7862 = vld [vmem:[#allocation11 + $0xd0] sm:$0xff]
    %v7863 = vld [vmem:[#allocation11 + $0xd8] sm:$0xff]
    %v7864 = vld [vmem:[#allocation11 + $0xe0] sm:$0xff]
    %v7865 = vld [vmem:[#allocation11 + $0xe8] sm:$0xff]
    %v7866 = vld [vmem:[#allocation11 + $0xf0] sm:$0xff]
    %v7867 = vld [vmem:[#allocation11 + $0xf8] sm:$0xff]
    %v7868 = vld [vmem:[#allocation11 + $0x100] sm:$0xff]
    %v7869 = vld [vmem:[#allocation11 + $0x108] sm:$0xff]
    %v7870 = vld [vmem:[#allocation11 + $0x110] sm:$0xff]
    %v7871 = vld [vmem:[#allocation11 + $0x118] sm:$0xff]
    %v7872 = vld [vmem:[#allocation11 + $0x120] sm:$0xff]
    %v7873 = vld [vmem:[#allocation11 + $0x128] sm:$0xff]
    %v7874 = vld [vmem:[#allocation11 + $0x130] sm:$0xff]
    %v7875 = vld [vmem:[#allocation11 + $0x138] sm:$0xff]
    %v7876 = vld [vmem:[#allocation11 + $0x140] sm:$0xff]
    %v7877 = vld [vmem:[#allocation11 + $0x148] sm:$0xff]
    %v7878 = vld [vmem:[#allocation11 + $0x150] sm:$0xff]
    %v7879 = vld [vmem:[#allocation11 + $0x158] sm:$0xff]
    %v7880 = vld [vmem:[#allocation11 + $0x160] sm:$0xff]
    %v7881 = vld [vmem:[#allocation11 + $0x168] sm:$0xff]
    %v7882 = vld [vmem:[#allocation11 + $0x170] sm:$0xff]
    %v7883 = vld [vmem:[#allocation11 + $0x178] sm:$0xff]
    %v7884 = vld [vmem:[#allocation11 + $0x180] sm:$0xff]
    %v7885 = vld [vmem:[#allocation11 + $0x188] sm:$0xff]
    %v7886 = vld [vmem:[#allocation11 + $0x190] sm:$0xff]
    %v7887 = vld [vmem:[#allocation11 + $0x198] sm:$0xff]
    %v7888 = vld [vmem:[#allocation11 + $0x1a0] sm:$0xff]
    %v7889 = vld [vmem:[#allocation11 + $0x1a8] sm:$0xff]
    %v7890 = vld [vmem:[#allocation11 + $0x1b0] sm:$0xff]
    %v7891 = vld [vmem:[#allocation11 + $0x1b8] sm:$0xff]
    %v7892 = vld [vmem:[#allocation11 + $0x1c0] sm:$0xff]
    %v7893 = vld [vmem:[#allocation11 + $0x1c8] sm:$0xff]
    %v7894 = vld [vmem:[#allocation11 + $0x1d0] sm:$0xff]
    %v7895 = vld [vmem:[#allocation11 + $0x1d8] sm:$0xff]
    %v7896 = vld [vmem:[#allocation11 + $0x1e0] sm:$0xff]
    %v7897 = vld [vmem:[#allocation11 + $0x1e8] sm:$0xff]
    %v7898 = vld [vmem:[#allocation11 + $0x1f0] sm:$0xff]
    %v7899 = vld [vmem:[#allocation11 + $0x1f8] sm:$0xff]
    %v7900 = vld [vmem:[#allocation11 + $0x200] sm:$0xff]
    %v7901 = vld [vmem:[#allocation11 + $0x208] sm:$0xff]
    %v7902 = vld [vmem:[#allocation11 + $0x210] sm:$0xff]
    %v7903 = vld [vmem:[#allocation11 + $0x218] sm:$0xff]
    %v7904 = vld [vmem:[#allocation11 + $0x220] sm:$0xff]
    %v7905 = vld [vmem:[#allocation11 + $0x228] sm:$0xff]
    %v7906 = vld [vmem:[#allocation11 + $0x230] sm:$0xff]
    %v7907 = vld [vmem:[#allocation11 + $0x238] sm:$0xff]
    %v7908 = vld [vmem:[#allocation11 + $0x240] sm:$0xff]
    %v7909 = vld [vmem:[#allocation11 + $0x248] sm:$0xff]
    %v7910 = vld [vmem:[#allocation11 + $0x250] sm:$0xff]
    %v7911 = vld [vmem:[#allocation11 + $0x258] sm:$0xff]
    %v7912 = vld [vmem:[#allocation11 + $0x260] sm:$0xff]
    %v7913 = vld [vmem:[#allocation11 + $0x268] sm:$0xff]
    %v7914 = vld [vmem:[#allocation11 + $0x270] sm:$0xff]
    %v7915 = vld [vmem:[#allocation11 + $0x278] sm:$0xff]
    %v7916 = vld [vmem:[#allocation11 + $0x280] sm:$0xff]
    %v7917 = vld [vmem:[#allocation11 + $0x288] sm:$0xff]
    %v7918 = vld [vmem:[#allocation11 + $0x290] sm:$0xff]
    %v7919 = vld [vmem:[#allocation11 + $0x298] sm:$0xff]
    %v7920 = vld [vmem:[#allocation11 + $0x2a0] sm:$0xff]
    %v7921 = vld [vmem:[#allocation11 + $0x2a8] sm:$0xff]
    %v7922 = vld [vmem:[#allocation11 + $0x2b0] sm:$0xff]
    %v7923 = vld [vmem:[#allocation11 + $0x2b8] sm:$0xff]
    %v7924 = vld [vmem:[#allocation11 + $0x2c0] sm:$0xff]
    %v7925 = vld [vmem:[#allocation11 + $0x2c8] sm:$0xff]
    %v7926 = vld [vmem:[#allocation11 + $0x2d0] sm:$0xff]
    %v7927 = vld [vmem:[#allocation11 + $0x2d8] sm:$0xff]
    %v7928 = vld [vmem:[#allocation11 + $0x2e0] sm:$0xff]
    %v7929 = vld [vmem:[#allocation11 + $0x2e8] sm:$0xff]
    %v7930 = vld [vmem:[#allocation11 + $0x2f0] sm:$0xff]
    %v7931 = vld [vmem:[#allocation11 + $0x2f8] sm:$0xff]
    %v7932 = vld [vmem:[#allocation11 + $0x300] sm:$0xff]
    %v7933 = vld [vmem:[#allocation11 + $0x308] sm:$0xff]
    %v7934 = vld [vmem:[#allocation11 + $0x310] sm:$0xff]
    %v7935 = vld [vmem:[#allocation11 + $0x318] sm:$0xff]
    %v7936 = vld [vmem:[#allocation11 + $0x320] sm:$0xff]
    %v7937 = vld [vmem:[#allocation11 + $0x328] sm:$0xff]
    %v7938 = vld [vmem:[#allocation11 + $0x330] sm:$0xff]
    %v7939 = vld [vmem:[#allocation11 + $0x338] sm:$0xff]
    %v7940 = vld [vmem:[#allocation11 + $0x340] sm:$0xff]
    %v7941 = vld [vmem:[#allocation11 + $0x348] sm:$0xff]
    %v7942 = vld [vmem:[#allocation11 + $0x350] sm:$0xff]
    %v7943 = vld [vmem:[#allocation11 + $0x358] sm:$0xff]
    %v7944 = vld [vmem:[#allocation11 + $0x360] sm:$0xff]
    %v7945 = vld [vmem:[#allocation11 + $0x368] sm:$0xff]
    %v7946 = vld [vmem:[#allocation11 + $0x370] sm:$0xff]
    %v7947 = vld [vmem:[#allocation11 + $0x378] sm:$0xff]
    %v7948 = vld [vmem:[#allocation11 + $0x380] sm:$0xff]
    %v7949 = vld [vmem:[#allocation11 + $0x388] sm:$0xff]
    %v7950 = vld [vmem:[#allocation11 + $0x390] sm:$0xff]
    %v7951 = vld [vmem:[#allocation11 + $0x398] sm:$0xff]
    %v7952 = vld [vmem:[#allocation11 + $0x3a0] sm:$0xff]
    %v7953 = vld [vmem:[#allocation11 + $0x3a8] sm:$0xff]
    %v7954 = vld [vmem:[#allocation11 + $0x3b0] sm:$0xff]
    %v7955 = vld [vmem:[#allocation11 + $0x3b8] sm:$0xff]
    %v7956 = vld [vmem:[#allocation11 + $0x3c0] sm:$0xff]
    %v7957 = vld [vmem:[#allocation11 + $0x3c8] sm:$0xff]
    %v7958 = vld [vmem:[#allocation11 + $0x3d0] sm:$0xff]
    %v7959 = vld [vmem:[#allocation11 + $0x3d8] sm:$0xff]
    %v7960 = vld [vmem:[#allocation11 + $0x3e0] sm:$0xff]
    %v7961 = vld [vmem:[#allocation11 + $0x3e8] sm:$0xff]
    %v7962 = vld [vmem:[#allocation11 + $0x3f0] sm:$0xff]
    %v7963 = vld [vmem:[#allocation11 + $0x3f8] sm:$0xff]
    %v7964 = vld [vmem:[#allocation13] sm:$0x3]
    %v7966 = vlaneseq
    %v7967 = vshrl.u32 %v7966, 7
    %v7968 = vsub.s32 0, %v7967
    %v7969 = vrot.slane %v7964, %v7968
    %v7970 = vlaneseq
    %v7971 = vshrl.u32 %v7970, 7
    %v7972 = vsub.s32 1, %v7971
    %v7973 = vrot.slane %v7964, %v7972
    %7976 = vmatprep.subr.mxu0 %v7867
    %7977 = vmatpush1.msra.mxu0 %v7866
    %7978 = vmatprep.subr.mxu0 %v7865
    %7979 = vmatpush1.msra.mxu0 %v7864
    %7980 = vmatprep.subr.mxu0 %v7863
    %7981 = vmatpush1.msra.mxu0 %v7862
    %7982 = vmatprep.subr.mxu0 %v7861
    %7983 = vmatpush1.msra.mxu0 %v7860
    %7984 = vmatprep.subr.mxu0 %v7859
    %7985 = vmatpush1.msra.mxu0 %v7858
    %7986 = vmatprep.subr.mxu0 %v7857
    %7987 = vmatpush1.msra.mxu0 %v7856
    %7988 = vmatprep.subr.mxu0 %v7855
    %7989 = vmatpush1.msra.mxu0 %v7854
    %7990 = vmatprep.subr.mxu0 %v7853
    %7991 = vmatpush1.msra.mxu0 %v7852
    %7992 = vmatprep.subr.mxu0 %v7851
    %7993 = vmatpush1.msra.mxu0 %v7850
    %7994 = vmatprep.subr.mxu0 %v7849
    %7995 = vmatpush1.msra.mxu0 %v7848
    %7996 = vmatprep.subr.mxu0 %v7847
    %7997 = vmatpush1.msra.mxu0 %v7846
    %7998 = vmatprep.subr.mxu0 %v7845
    %7999 = vmatpush1.msra.mxu0 %v7844
    %8000 = vmatprep.subr.mxu0 %v7843
    %8001 = vmatpush1.msra.mxu0 %v7842
    %8002 = vmatprep.subr.mxu0 %v7841
    %8003 = vmatpush1.msra.mxu0 %v7840
    %8004 = vmatprep.subr.mxu0 %v7839
    %8005 = vmatpush1.msra.mxu0 %v7838
    %8006 = vmatprep.subr.mxu0 %v7837
    %8007 = vmatpush1.msra.mxu0 %v7836
    %8008 = vmatprep.subr.mxu0 %v7899
    %8009 = vmatpush2.msra.mxu0 %v7898
    %8010 = vmatprep.subr.mxu0 %v7897
    %8011 = vmatpush2.msra.mxu0 %v7896
    %8012 = vmatprep.subr.mxu0 %v7895
    %8013 = vmatpush2.msra.mxu0 %v7894
    %8014 = vmatprep.subr.mxu0 %v7893
    %8015 = vmatpush2.msra.mxu0 %v7892
    %8016 = vmatprep.subr.mxu0 %v7891
    %8017 = vmatpush2.msra.mxu0 %v7890
    %8018 = vmatprep.subr.mxu0 %v7889
    %8019 = vmatpush2.msra.mxu0 %v7888
    %8020 = vmatprep.subr.mxu0 %v7887
    %8021 = vmatpush2.msra.mxu0 %v7886
    %8022 = vmatprep.subr.mxu0 %v7885
    %8023 = vmatpush2.msra.mxu0 %v7884
    %8024 = vmatprep.subr.mxu0 %v7883
    %8025 = vmatpush2.msra.mxu0 %v7882
    %8026 = vmatprep.subr.mxu0 %v7881
    %8027 = vmatpush2.msra.mxu0 %v7880
    %8028 = vmatprep.subr.mxu0 %v7879
    %8029 = vmatpush2.msra.mxu0 %v7878
    %8030 = vmatprep.subr.mxu0 %v7877
    %8031 = vmatpush2.msra.mxu0 %v7876
    %8032 = vmatprep.subr.mxu0 %v7875
    %8033 = vmatpush2.msra.mxu0 %v7874
    %8034 = vmatprep.subr.mxu0 %v7873
    %8035 = vmatpush2.msra.mxu0 %v7872
    %8036 = vmatprep.subr.mxu0 %v7871
    %8037 = vmatpush2.msra.mxu0 %v7870
    %8038 = vmatprep.subr.mxu0 %v7869
    %8039 = vmatpush2.msra.mxu0 %v7868
    %8040 = vmatprep.mubr.f32.mxu0 %v7833
    %8041 = vmatmul.mubr.f32.gmra.mxu0 %v7832
    %v8042 = vpop.f32.mrf.mxu0
    %v8043 = vadd.f32 %v7969, %v8042
    %v8044 = vpop.f32.mrf.mxu0
    %v8045 = vadd.f32 %v7973, %v8044
    %8046 = vdwg.mxu0
    %8047 = vmatprep.subr.mxu0 %v7931
    %8048 = vmatpush1.msra.mxu0 %v7930
    %8049 = vmatprep.subr.mxu0 %v7929
    %8050 = vmatpush1.msra.mxu0 %v7928
    %8051 = vmatprep.subr.mxu0 %v7927
    %8052 = vmatpush1.msra.mxu0 %v7926
    %8053 = vmatprep.subr.mxu0 %v7925
    %8054 = vmatpush1.msra.mxu0 %v7924
    %8055 = vmatprep.subr.mxu0 %v7923
    %8056 = vmatpush1.msra.mxu0 %v7922
    %8057 = vmatprep.subr.mxu0 %v7921
    %8058 = vmatpush1.msra.mxu0 %v7920
    %8059 = vmatprep.subr.mxu0 %v7919
    %8060 = vmatpush1.msra.mxu0 %v7918
    %8061 = vmatprep.subr.mxu0 %v7917
    %8062 = vmatpush1.msra.mxu0 %v7916
    %8063 = vmatprep.subr.mxu0 %v7915
    %8064 = vmatpush1.msra.mxu0 %v7914
    %8065 = vmatprep.subr.mxu0 %v7913
    %8066 = vmatpush1.msra.mxu0 %v7912
    %8067 = vmatprep.subr.mxu0 %v7911
    %8068 = vmatpush1.msra.mxu0 %v7910
    %8069 = vmatprep.subr.mxu0 %v7909
    %8070 = vmatpush1.msra.mxu0 %v7908
    %8071 = vmatprep.subr.mxu0 %v7907
    %8072 = vmatpush1.msra.mxu0 %v7906
    %8073 = vmatprep.subr.mxu0 %v7905
    %8074 = vmatpush1.msra.mxu0 %v7904
    %8075 = vmatprep.subr.mxu0 %v7903
    %8076 = vmatpush1.msra.mxu0 %v7902
    %8077 = vmatprep.subr.mxu0 %v7901
    %8078 = vmatpush1.msra.mxu0 %v7900
    %8079 = vmatprep.subr.mxu0 %v7963
    %8080 = vmatpush2.msra.mxu0 %v7962
    %8081 = vmatprep.subr.mxu0 %v7961
    %8082 = vmatpush2.msra.mxu0 %v7960
    %8083 = vmatprep.subr.mxu0 %v7959
    %8084 = vmatpush2.msra.mxu0 %v7958
    %8085 = vmatprep.subr.mxu0 %v7957
    %8086 = vmatpush2.msra.mxu0 %v7956
    %8087 = vmatprep.subr.mxu0 %v7955
    %8088 = vmatpush2.msra.mxu0 %v7954
    %8089 = vmatprep.subr.mxu0 %v7953
    %8090 = vmatpush2.msra.mxu0 %v7952
    %8091 = vmatprep.subr.mxu0 %v7951
    %8092 = vmatpush2.msra.mxu0 %v7950
    %8093 = vmatprep.subr.mxu0 %v7949
    %8094 = vmatpush2.msra.mxu0 %v7948
    %8095 = vmatprep.subr.mxu0 %v7947
    %8096 = vmatpush2.msra.mxu0 %v7946
    %8097 = vmatprep.subr.mxu0 %v7945
    %8098 = vmatpush2.msra.mxu0 %v7944
    %8099 = vmatprep.subr.mxu0 %v7943
    %8100 = vmatpush2.msra.mxu0 %v7942
    %8101 = vmatprep.subr.mxu0 %v7941
    %8102 = vmatpush2.msra.mxu0 %v7940
    %8103 = vmatprep.subr.mxu0 %v7939
    %8104 = vmatpush2.msra.mxu0 %v7938
    %8105 = vmatprep.subr.mxu0 %v7937
    %8106 = vmatpush2.msra.mxu0 %v7936
    %8107 = vmatprep.subr.mxu0 %v7935
    %8108 = vmatpush2.msra.mxu0 %v7934
    %8109 = vmatprep.subr.mxu0 %v7933
    %8110 = vmatpush2.msra.mxu0 %v7932
    %8111 = vmatprep.mubr.f32.mxu0 %v7835
    %8112 = vmatmul.mubr.f32.gmra.mxu0 %v7834
    %v8113 = vpop.f32.mrf.mxu0
    %v8114 = vadd.f32 %v8043, %v8113
    %v8115 = vpop.f32.mrf.mxu0
    %v8116 = vadd.f32 %v8045, %v8115
    %8117 = vdwg.mxu0
    %v8118 = vmax.f32 %v8114, 0.0
    %v8119 = vmax.f32 %v8116, 0.0
    %v8120 = vld [vmem:[#allocation14] sm:$0xff]
    %v8121 = vld [vmem:[#allocation14 + $0x8] sm:$0xff]
    %v8122 = vld [vmem:[#allocation14 + $0x10] sm:$0xff]
    %v8123 = vld [vmem:[#allocation14 + $0x18] sm:$0xff]
    %v8124 = vld [vmem:[#allocation14 + $0x20] sm:$0xff]
    %v8125 = vld [vmem:[#allocation14 + $0x28] sm:$0xff]
    %v8126 = vld [vmem:[#allocation14 + $0x30] sm:$0xff]
    %v8127 = vld [vmem:[#allocation14 + $0x38] sm:$0xff]
    %v8128 = vld [vmem:[#allocation14 + $0x40] sm:$0xff]
    %v8129 = vld [vmem:[#allocation14 + $0x48] sm:$0xff]
    %v8130 = vld [vmem:[#allocation14 + $0x50] sm:$0xff]
    %v8131 = vld [vmem:[#allocation14 + $0x58] sm:$0xff]
    %v8132 = vld [vmem:[#allocation14 + $0x60] sm:$0xff]
    %v8133 = vld [vmem:[#allocation14 + $0x68] sm:$0xff]
    %v8134 = vld [vmem:[#allocation14 + $0x70] sm:$0xff]
    %v8135 = vld [vmem:[#allocation14 + $0x78] sm:$0xff]
    %v8136 = vld [vmem:[#allocation14 + $0x80] sm:$0xff]
    %v8137 = vld [vmem:[#allocation14 + $0x88] sm:$0xff]
    %v8138 = vld [vmem:[#allocation14 + $0x90] sm:$0xff]
    %v8139 = vld [vmem:[#allocation14 + $0x98] sm:$0xff]
    %v8140 = vld [vmem:[#allocation14 + $0xa0] sm:$0xff]
    %v8141 = vld [vmem:[#allocation14 + $0xa8] sm:$0xff]
    %v8142 = vld [vmem:[#allocation14 + $0xb0] sm:$0xff]
    %v8143 = vld [vmem:[#allocation14 + $0xb8] sm:$0xff]
    %v8144 = vld [vmem:[#allocation14 + $0xc0] sm:$0xff]
    %v8145 = vld [vmem:[#allocation14 + $0xc8] sm:$0xff]
    %v8146 = vld [vmem:[#allocation14 + $0xd0] sm:$0xff]
    %v8147 = vld [vmem:[#allocation14 + $0xd8] sm:$0xff]
    %v8148 = vld [vmem:[#allocation14 + $0xe0] sm:$0xff]
    %v8149 = vld [vmem:[#allocation14 + $0xe8] sm:$0xff]
    %v8150 = vld [vmem:[#allocation14 + $0xf0] sm:$0xff]
    %v8151 = vld [vmem:[#allocation14 + $0xf8] sm:$0xff]
    %v8152 = vld [vmem:[#allocation16] sm:$0x1]
    %v8154 = vlaneseq
    %v8155 = vshrl.u32 %v8154, 7
    %v8156 = vsub.s32 0, %v8155
    %v8157 = vrot.slane %v8152, %v8156
    %8159 = vmatprep.subr.mxu0 0.0
    %8160 = vmatpush1.msra.mxu0 %v8135
    %8161 = vmatprep.subr.mxu0 0.0
    %8162 = vmatpush1.msra.mxu0 %v8134
    %8163 = vmatprep.subr.mxu0 0.0
    %8164 = vmatpush1.msra.mxu0 %v8133
    %8165 = vmatprep.subr.mxu0 0.0
    %8166 = vmatpush1.msra.mxu0 %v8132
    %8167 = vmatprep.subr.mxu0 0.0
    %8168 = vmatpush1.msra.mxu0 %v8131
    %8169 = vmatprep.subr.mxu0 0.0
    %8170 = vmatpush1.msra.mxu0 %v8130
    %8171 = vmatprep.subr.mxu0 0.0
    %8172 = vmatpush1.msra.mxu0 %v8129
    %8173 = vmatprep.subr.mxu0 0.0
    %8174 = vmatpush1.msra.mxu0 %v8128
    %8175 = vmatprep.subr.mxu0 0.0
    %8176 = vmatpush1.msra.mxu0 %v8127
    %8177 = vmatprep.subr.mxu0 0.0
    %8178 = vmatpush1.msra.mxu0 %v8126
    %8179 = vmatprep.subr.mxu0 0.0
    %8180 = vmatpush1.msra.mxu0 %v8125
    %8181 = vmatprep.subr.mxu0 0.0
    %8182 = vmatpush1.msra.mxu0 %v8124
    %8183 = vmatprep.subr.mxu0 0.0
    %8184 = vmatpush1.msra.mxu0 %v8123
    %8185 = vmatprep.subr.mxu0 0.0
    %8186 = vmatpush1.msra.mxu0 %v8122
    %8187 = vmatprep.subr.mxu0 0.0
    %8188 = vmatpush1.msra.mxu0 %v8121
    %8189 = vmatprep.subr.mxu0 0.0
    %8190 = vmatpush1.msra.mxu0 %v8120
    %8191 = vmatprep.subr.mxu0 0.0
    %8192 = vmatpush2.msra.mxu0 %v8151
    %8193 = vmatprep.subr.mxu0 0.0
    %8194 = vmatpush2.msra.mxu0 %v8150
    %8195 = vmatprep.subr.mxu0 0.0
    %8196 = vmatpush2.msra.mxu0 %v8149
    %8197 = vmatprep.subr.mxu0 0.0
    %8198 = vmatpush2.msra.mxu0 %v8148
    %8199 = vmatprep.subr.mxu0 0.0
    %8200 = vmatpush2.msra.mxu0 %v8147
    %8201 = vmatprep.subr.mxu0 0.0
    %8202 = vmatpush2.msra.mxu0 %v8146
    %8203 = vmatprep.subr.mxu0 0.0
    %8204 = vmatpush2.msra.mxu0 %v8145
    %8205 = vmatprep.subr.mxu0 0.0
    %8206 = vmatpush2.msra.mxu0 %v8144
    %8207 = vmatprep.subr.mxu0 0.0
    %8208 = vmatpush2.msra.mxu0 %v8143
    %8209 = vmatprep.subr.mxu0 0.0
    %8210 = vmatpush2.msra.mxu0 %v8142
    %8211 = vmatprep.subr.mxu0 0.0
    %8212 = vmatpush2.msra.mxu0 %v8141
    %8213 = vmatprep.subr.mxu0 0.0
    %8214 = vmatpush2.msra.mxu0 %v8140
    %8215 = vmatprep.subr.mxu0 0.0
    %8216 = vmatpush2.msra.mxu0 %v8139
    %8217 = vmatprep.subr.mxu0 0.0
    %8218 = vmatpush2.msra.mxu0 %v8138
    %8219 = vmatprep.subr.mxu0 0.0
    %8220 = vmatpush2.msra.mxu0 %v8137
    %8221 = vmatprep.subr.mxu0 0.0
    %8222 = vmatpush2.msra.mxu0 %v8136
    %8223 = vmatprep.mubr.f32.mxu0 %v8119
    %8224 = vmatmul.mubr.f32.gmra.mxu0 %v8118
    %v8225 = vpop.f32.mrf.mxu0
    %v8226 = vadd.f32 %v8157, %v8225
    %v8227 = vpop.f32.mrf.mxu0
    %8228 = vdwg.mxu0
    %v8229 = vmax.f32 %v8226, 0.0
    %v8230 = vld [vmem:[#allocation17] sm:$0xff]
    %v8231 = vld [vmem:[#allocation17 + $0x8] sm:$0xff]
    %v8232 = vld [vmem:[#allocation17 + $0x10] sm:$0xff]
    %v8233 = vld [vmem:[#allocation17 + $0x18] sm:$0xff]
    %v8234 = vld [vmem:[#allocation17 + $0x20] sm:$0xff]
    %v8235 = vld [vmem:[#allocation17 + $0x28] sm:$0xff]
    %v8236 = vld [vmem:[#allocation17 + $0x30] sm:$0xff]
    %v8237 = vld [vmem:[#allocation17 + $0x38] sm:$0xff]
    %v8238 = vld [vmem:[#allocation17 + $0x40] sm:$0xff]
    %v8239 = vld [vmem:[#allocation17 + $0x48] sm:$0xff]
    %v8240 = vld [vmem:[#allocation17 + $0x50] sm:$0xff]
    %v8241 = vld [vmem:[#allocation17 + $0x58] sm:$0xff]
    %v8242 = vld [vmem:[#allocation17 + $0x60] sm:$0xff]
    %v8243 = vld [vmem:[#allocation17 + $0x68] sm:$0xff]
    %v8244 = vld [vmem:[#allocation17 + $0x70] sm:$0xff]
    %v8245 = vld [vmem:[#allocation17 + $0x78] sm:$0xff]
    %v8246 = vld [vmem:[#allocation19] sm:$0x1]
    %v8248 = vlaneseq
    %v8249 = vshrl.u32 %v8248, 7
    %v8250 = vsub.s32 0, %v8249
    %v8251 = vrot.slane %v8246, %v8250
    %8253 = vmatprep.subr.mxu0 0.0
    %8254 = vmatpush1.msra.mxu0 %v8245
    %8255 = vmatprep.subr.mxu0 0.0
    %8256 = vmatpush1.msra.mxu0 %v8244
    %8257 = vmatprep.subr.mxu0 0.0
    %8258 = vmatpush1.msra.mxu0 %v8243
    %8259 = vmatprep.subr.mxu0 0.0
    %8260 = vmatpush1.msra.mxu0 %v8242
    %8261 = vmatprep.subr.mxu0 0.0
    %8262 = vmatpush1.msra.mxu0 %v8241
    %8263 = vmatprep.subr.mxu0 0.0
    %8264 = vmatpush1.msra.mxu0 %v8240
    %8265 = vmatprep.subr.mxu0 0.0
    %8266 = vmatpush1.msra.mxu0 %v8239
    %8267 = vmatprep.subr.mxu0 0.0
    %8268 = vmatpush1.msra.mxu0 %v8238
    %8269 = vmatprep.subr.mxu0 0.0
    %8270 = vmatpush1.msra.mxu0 %v8237
    %8271 = vmatprep.subr.mxu0 0.0
    %8272 = vmatpush1.msra.mxu0 %v8236
    %8273 = vmatprep.subr.mxu0 0.0
    %8274 = vmatpush1.msra.mxu0 %v8235
    %8275 = vmatprep.subr.mxu0 0.0
    %8276 = vmatpush1.msra.mxu0 %v8234
    %8277 = vmatprep.subr.mxu0 0.0
    %8278 = vmatpush1.msra.mxu0 %v8233
    %8279 = vmatprep.subr.mxu0 0.0
    %8280 = vmatpush1.msra.mxu0 %v8232
    %8281 = vmatprep.subr.mxu0 0.0
    %8282 = vmatpush1.msra.mxu0 %v8231
    %8283 = vmatprep.subr.mxu0 0.0
    %8284 = vmatpush1.msra.mxu0 %v8230
    %8285 = vmatprep.subr.mxu0 0.0
    %8286 = vmatpush2.msra.mxu0 0.0
    %8287 = vmatprep.subr.mxu0 0.0
    %8288 = vmatpush2.msra.mxu0 0.0
    %8289 = vmatprep.subr.mxu0 0.0
    %8290 = vmatpush2.msra.mxu0 0.0
    %8291 = vmatprep.subr.mxu0 0.0
    %8292 = vmatpush2.msra.mxu0 0.0
    %8293 = vmatprep.subr.mxu0 0.0
    %8294 = vmatpush2.msra.mxu0 0.0
    %8295 = vmatprep.subr.mxu0 0.0
    %8296 = vmatpush2.msra.mxu0 0.0
    %8297 = vmatprep.subr.mxu0 0.0
    %8298 = vmatpush2.msra.mxu0 0.0
    %8299 = vmatprep.subr.mxu0 0.0
    %8300 = vmatpush2.msra.mxu0 0.0
    %8301 = vmatprep.subr.mxu0 0.0
    %8302 = vmatpush2.msra.mxu0 0.0
    %8303 = vmatprep.subr.mxu0 0.0
    %8304 = vmatpush2.msra.mxu0 0.0
    %8305 = vmatprep.subr.mxu0 0.0
    %8306 = vmatpush2.msra.mxu0 0.0
    %8307 = vmatprep.subr.mxu0 0.0
    %8308 = vmatpush2.msra.mxu0 0.0
    %8309 = vmatprep.subr.mxu0 0.0
    %8310 = vmatpush2.msra.mxu0 0.0
    %8311 = vmatprep.subr.mxu0 0.0
    %8312 = vmatpush2.msra.mxu0 0.0
    %8313 = vmatprep.subr.mxu0 0.0
    %8314 = vmatpush2.msra.mxu0 0.0
    %8315 = vmatprep.subr.mxu0 0.0
    %8316 = vmatpush2.msra.mxu0 0.0
    %8317 = vmatprep.mubr.f32.mxu0 0.0
    %8318 = vmatmul.mubr.f32.gmra.mxu0 %v8229
    %v8319 = vpop.f32.mrf.mxu0
    %v8320 = vadd.f32 %v8251, %v8319
    %v8321 = vpop.f32.mrf.mxu0
    %8322 = vdwg.mxu0
    %8323 = vst [vmem:[#allocation20] sm:$0xff] %v8320
    // Predicated region
    $region90: #{tpu_custom_call.1} parent=1 // pred_check
      _
    $region91: #{tpu_custom_call.1} parent=1 // pred_check_branch
      %8325 = sbr.rel (0) target = $region93
    $region92: #{tpu_custom_call.1} parent=1 // pred_region
      %s8327 = ssub.s32 128, 128
      %8328 = vsyncadd [#allocation4], %s8327
      %s8330 = sshll.u32 [#allocation20], 4
      %s8331 = int_to_ptr.vmem [resolvable:$true] %s8330
      %8333 = dma.vmem_to_hbm [thread:$0]  %s8331, 128, %s11, [#allocation4]
    $region93: #{tpu_custom_call.1} parent=1 // pred_fallthru
      _
    // Predicated region
    $region94: #{tpu_custom_call.1} parent=1 // pred_check
      _
    $region95: #{tpu_custom_call.1} parent=1 // pred_check_branch
      %8335 = sbr.rel (0) target = $region97
    $region96: #{tpu_custom_call.1} parent=1 // pred_region
      %8336 = dma.done [#allocation4], 128
    $region97: #{tpu_custom_call.1} parent=1 // pred_fallthru
      _
    %8337 = vsyncpa [#allocation3], 1
    %8338 = vsyncpa [#allocation6], 1
    %8339 = vsyncpa [#allocation9], 1
    %8340 = vsyncpa [#allocation12], 1
    %8341 = vsyncpa [#allocation15], 1
    %8342 = vsyncpa [#allocation18], 1
    %8343 = vsyncpa [#allocation4], 1

</llo_original>
